<compile_context>
chip_gen: v5e
topology: v5e:2x2
jax: 0.10.0
libtpu: 0.0.40
codegen_flags: <defaults>
</compile_context>

<pallas_src>
import functools

import jax
import jax.numpy as jnp
from jax.experimental import pallas as pl
from jax.experimental.pallas import tpu as pltpu


def _round_up(v, m):
    return ((v + m - 1) // m) * m


def _pad_to(a, shape):
    pads = [(0, s - d) for d, s in zip(a.shape, shape)]
    return jnp.pad(a, pads)


# ----------------------------------------------------------------------------
# Fused kernel: per grid step (one image) run
#   stem conv3x3(pad=1)  ->  [conv3x3(dilated) -> ReLU -> conv1x1 -> +res] * L
# Activation carry lives in a f32 VMEM scratch; conv operands are bf16.
# ----------------------------------------------------------------------------
def _tcn_fused_kernel(x_ref, stem_w_ref, stem_b_ref, *rest, H, W,
                      block_dilations, row_off, col_off):
    L = len(block_dilations)
    blk_refs = rest[:4 * L]
    o_ref = rest[4 * L]
    xp_s_ref = rest[4 * L + 1]     # (Hp, Wp, 3)   bf16 padded stem image
    xp_ref = rest[4 * L + 2]       # (Hp, Wp, Cp)  bf16 padded block activation
    act_ref = rest[4 * L + 3]      # (H*W, Cp)     f32 activation carry
    Cp = act_ref.shape[-1]

    def zero_border(xp):
        # Only the halo frame needs zeros; the interior is fully overwritten
        # each layer.  Unconditional (no program_id gating): safe under
        # megacore grid sharding.
        Hp, Wp, Cc = xp.shape
        xp[0:row_off, :, :] = jnp.zeros((row_off, Wp, Cc), xp.dtype)
        xp[row_off + H:, :, :] = jnp.zeros((Hp - row_off - H, Wp, Cc), xp.dtype)
        xp[row_off:row_off + H, 0:col_off, :] = (
            jnp.zeros((H, col_off, Cc), xp.dtype))
        xp[row_off:row_off + H, col_off + W:, :] = (
            jnp.zeros((H, Wp - col_off - W, Cc), xp.dtype))

    def conv3x3(xp, w_ref, b_ref, d):
        # 3x3 dilated 'same' conv = 9 accumulating MXU dots.  Per dx: one
        # column-shifted view (only cheap sublane shift is unaligned); the 3
        # dy taps are sublane-aligned row windows of the flattened view.  The
        # weight tap w_ref[dy, dx] is a free untiled-dim index -> no lane
        # concatenation / relayout anywhere.
        Hp, _, Cc = xp.shape
        acc = None
        for dx in range(3):
            c0 = col_off + (dx - 1) * d
            xv = xp[:, c0:c0 + W, :].reshape(Hp * W, Cc)     # bf16
            for dy in range(3):
                r0 = (row_off + (dy - 1) * d) * W
                term = jnp.dot(xv[r0:r0 + H * W, :], w_ref[dy, dx],
                               preferred_element_type=jnp.float32)
                acc = term if acc is None else acc + term
        return acc + b_ref[...]                              # (1, Cp) broadcast

    # ---- stem: Conv2d(3 -> Cout, 3x3, padding=1), no activation ----
    zero_border(xp_s_ref)
    xp_s_ref[row_off:row_off + H, col_off:col_off + W, :] = (
        x_ref[...].astype(xp_s_ref.dtype))
    act_ref[...] = conv3x3(xp_s_ref, stem_w_ref, stem_b_ref, 1)

    # ---- residual blocks (static unroll; activation never leaves VMEM) ----
    if L:
        zero_border(xp_ref)
    for li, d in enumerate(block_dilations):
        w1_ref, b1_ref, w2_ref, b2_ref = blk_refs[4 * li: 4 * li + 4]
        # write the bf16 conv input into the padded scratch interior
        xp_ref[row_off:row_off + H, col_off:col_off + W, :] = (
            act_ref[...].reshape(H, W, Cp).astype(xp_ref.dtype))
        # conv1 (3x3 dilated) + bias -> ReLU
        h = jnp.maximum(conv3x3(xp_ref, w1_ref, b1_ref, d), 0.0)
        # conv2 (1x1) + bias + residual; residual re-read from the exact f32
        # carry so the residual path stays full precision across layers.
        out = jnp.dot(h.astype(xp_ref.dtype), w2_ref[...],
                      preferred_element_type=jnp.float32)
        act_ref[...] = out + b2_ref[...] + act_ref[...]

    o_ref[...] = act_ref[...].reshape(H, W, Cp).astype(o_ref.dtype)


# ----------------------------------------------------------------------------
# Wrapper: channel padding to a lane-dense multiple of 128, bf16 weight prep,
# single pallas_call over grid=(batch,).
# ----------------------------------------------------------------------------
def tcn_branch_forward(params, x_nchw, *, dilations):
    """x_nchw: (N, 3, H, W) float32 -> (N, C_out, H, W) float32."""
    N, Ci, H, W = x_nchw.shape
    stem_cout = params["stem_b"].shape[0]
    blocks = params["blocks"]
    final_c = blocks[-1]["b2"].shape[0] if blocks else stem_cout

    # lane-dense channel width (unmasked stores + full MXU N width)
    cmax = stem_cout
    for blk in blocks:
        cmax = max(cmax, blk["w1"].shape[2], blk["w1"].shape[3])
    Cp = max(128, _round_up(cmax, 128))

    # padded-scratch geometry, sized for the largest dilation; image interior
    # placed at a sublane-aligned column offset so all scratch stores align.
    max_pad = max([1] + list(dilations))
    row_off = max_pad
    col_off = _round_up(max_pad, 8)
    Hp = H + 2 * max_pad
    Wp = _round_up(col_off + W + max_pad, 8)

    # weights: zero-pad channels to Cp, conv operands in bf16 (f32 accumulate
    # inside the kernel); biases stay f32 and are added on the f32 accumulator.
    bf16 = jnp.bfloat16
    stem_w = _pad_to(params["stem_w"], (3, 3, Ci, Cp)).astype(bf16)
    stem_b = _pad_to(params["stem_b"].reshape(1, -1), (1, Cp))
    flat_ws = []
    for blk in blocks:
        flat_ws.append(_pad_to(blk["w1"], (3, 3, Cp, Cp)).astype(bf16))
        flat_ws.append(_pad_to(blk["b1"].reshape(1, -1), (1, Cp)))
        flat_ws.append(_pad_to(blk["w2"], (Cp, Cp)).astype(bf16))
        flat_ws.append(_pad_to(blk["b2"].reshape(1, -1), (1, Cp)))

    x = jnp.transpose(x_nchw, (0, 2, 3, 1))                  # NCHW -> NHWC

    kern = functools.partial(_tcn_fused_kernel, H=H, W=W,
                             block_dilations=tuple(dilations),
                             row_off=row_off, col_off=col_off)

    in_specs = [
        pl.BlockSpec((None, H, W, Ci), lambda n: (n, 0, 0, 0)),   # image
        pl.BlockSpec((3, 3, Ci, Cp), lambda n: (0, 0, 0, 0)),     # stem w
        pl.BlockSpec((1, Cp), lambda n: (0, 0)),                  # stem b
    ]
    for _ in blocks:
        in_specs += [
            pl.BlockSpec((3, 3, Cp, Cp), lambda n: (0, 0, 0, 0)),  # w1
            pl.BlockSpec((1, Cp), lambda n: (0, 0)),               # b1
            pl.BlockSpec((Cp, Cp), lambda n: (0, 0)),              # w2
            pl.BlockSpec((1, Cp), lambda n: (0, 0)),               # b2
        ]

    out = pl.pallas_call(
        kern,
        out_shape=jax.ShapeDtypeStruct((N, H, W, Cp), x_nchw.dtype),
        grid=(N,),
        in_specs=in_specs,
        out_specs=pl.BlockSpec((None, H, W, Cp), lambda n: (n, 0, 0, 0)),
        scratch_shapes=[
            pltpu.VMEM((Hp, Wp, Ci), bf16),         # padded stem image
            pltpu.VMEM((Hp, Wp, Cp), bf16),         # padded block activation
            pltpu.VMEM((H * W, Cp), jnp.float32),   # f32 activation carry
        ],
        compiler_params=pltpu.CompilerParams(
            dimension_semantics=("parallel",)),
    )(x, stem_w, stem_b, *flat_ws)

    # slice padded channels back and return NCHW like PyTorch
    return jnp.transpose(out[..., :final_c], (0, 3, 1, 2))


# ----------------------------------------------------------------------------
# Parameter init (deterministic, synthetic; stored at original 80-ch width).
# ----------------------------------------------------------------------------
def init_tcn_branch_params(key, in_channels, out_channels, num_layers,
                           dilation_base):
    k = key

    def nxt():
        nonlocal k
        k, sub = jax.random.split(k)
        return sub

    params = {
        # stem: nn.Conv2d(3, 80, kernel_size=3, padding=1), HWIO layout
        "stem_w": 0.05 * jax.random.normal(nxt(), (3, 3, 3, 80), jnp.float32),
        "stem_b": 0.05 * jax.random.normal(nxt(), (80,), jnp.float32),
        "blocks": [],
    }
    dilations = tuple(dilation_base ** i for i in range(num_layers))
    cin = in_channels
    for _ in range(num_layers):
        params["blocks"].append({
            "w1": 0.05 * jax.random.normal(nxt(), (3, 3, cin, out_channels),
                                           jnp.float32),
            "b1": 0.05 * jax.random.normal(nxt(), (out_channels,), jnp.float32),
            "w2": 0.05 * jax.random.normal(nxt(), (out_channels, out_channels),
                                           jnp.float32),
            "b2": 0.05 * jax.random.normal(nxt(), (out_channels,), jnp.float32),
        })
        cin = out_channels
    return params, dilations


# ----------------------------------------------------------------------------
# Pure-JAX reference (f32, HIGHEST precision) for the numerical self-check.
# ----------------------------------------------------------------------------
def _reference_forward(params, x_nchw, *, dilations):
    x = jnp.transpose(x_nchw, (0, 2, 3, 1))

    def conv(x, w, b, d):
        y = jax.lax.conv_general_dilated(
            x, w, window_strides=(1, 1), padding=[(d, d), (d, d)],
            rhs_dilation=(d, d),
            dimension_numbers=("NHWC", "HWIO", "NHWC"),
            precision=jax.lax.Precision.HIGHEST)
        return y + b

    x = conv(x, params["stem_w"], params["stem_b"], 1)
    for blk, d in zip(params["blocks"], dilations):
        h = jax.nn.relu(conv(x, blk["w1"], blk["b1"], d))
        y = jnp.einsum("nhwc,co->nhwo", h, blk["w2"],
                       precision=jax.lax.Precision.HIGHEST) + blk["b2"]
        x = y + x
    return jnp.transpose(x, (0, 3, 1, 2))


if __name__ == "__main__":
    key = jax.random.PRNGKey(0)
    kx, kp = jax.random.split(key)

    # batch=2, 3 input channels (stem requires 3), 16x16 spatial,
    # in_channels=out_channels=80 (residual add), 2 layers, dilation_base=2.
    x = jax.random.normal(kx, (2, 3, 16, 16), jnp.float32)  # NCHW like PyTorch
    params, dilations = init_tcn_branch_params(
        kp, in_channels=80, out_channels=80, num_layers=2, dilation_base=2)

    fwd = jax.jit(tcn_branch_forward, static_argnames=("dilations",))
    out = jax.block_until_ready(fwd(params, x, dilations=dilations))
    assert out.shape == (2, 80, 16, 16), out.shape
    assert out.dtype == jnp.float32

    # numerical self-check against the pure-JAX f32 reference (tolerance
    # accommodates bf16 MXU operands with f32 accumulation in the kernel).
    ref = jax.block_until_ready(
        _reference_forward(params, x, dilations=dilations))
    err = float(jnp.max(jnp.abs(out - ref)))
    assert err < 3e-2, f"max abs error vs pure-JAX reference: {err}"

    print("KERNEL_OK")
</pallas_src>

<mosaic_0001>
module attributes {stable_mosaic.version = 11 : i64} {
  func.func @_tcn_fused_kernel(%arg0: i32, %arg1: memref<1x16x16x3xf32, #tpu.memory_space<vmem>>, %arg2: memref<3x3x3x128xbf16, #tpu.memory_space<vmem>>, %arg3: memref<1x128xf32, #tpu.memory_space<vmem>>, %arg4: memref<3x3x128x128xbf16, #tpu.memory_space<vmem>>, %arg5: memref<1x128xf32, #tpu.memory_space<vmem>>, %arg6: memref<128x128xbf16, #tpu.memory_space<vmem>>, %arg7: memref<1x128xf32, #tpu.memory_space<vmem>>, %arg8: memref<3x3x128x128xbf16, #tpu.memory_space<vmem>>, %arg9: memref<1x128xf32, #tpu.memory_space<vmem>>, %arg10: memref<128x128xbf16, #tpu.memory_space<vmem>>, %arg11: memref<1x128xf32, #tpu.memory_space<vmem>>, %arg12: memref<1x16x16x128xf32, #tpu.memory_space<vmem>>, %arg13: memref<20x32x3xbf16, #tpu.memory_space<vmem>>, %arg14: memref<20x32x128xbf16, #tpu.memory_space<vmem>>, %arg15: memref<256x128xf32, #tpu.memory_space<vmem>>) attributes {dimension_semantics = [#tpu.dimension_semantics<parallel>], iteration_bounds = array<i64: 2>, scalar_prefetch = 0 : i64, scratch_operands = 3 : i64, tpu.core_type = #tpu.core_type<tc>, window_params = [{transform_indices = @transform_0, window_bounds = array<i64: 1, 16, 16, 3>}, {pipeline_mode = #tpu.pipeline_mode<synchronous>, transform_indices = @transform_1, window_bounds = array<i64: 3, 3, 3, 128>}, {pipeline_mode = #tpu.pipeline_mode<synchronous>, transform_indices = @transform_2, window_bounds = array<i64: 1, 128>}, {pipeline_mode = #tpu.pipeline_mode<synchronous>, transform_indices = @transform_3, window_bounds = array<i64: 3, 3, 128, 128>}, {pipeline_mode = #tpu.pipeline_mode<synchronous>, transform_indices = @transform_4, window_bounds = array<i64: 1, 128>}, {pipeline_mode = #tpu.pipeline_mode<synchronous>, transform_indices = @transform_5, window_bounds = array<i64: 128, 128>}, {pipeline_mode = #tpu.pipeline_mode<synchronous>, transform_indices = @transform_6, window_bounds = array<i64: 1, 128>}, {pipeline_mode = #tpu.pipeline_mode<synchronous>, transform_indices = @transform_7, window_bounds = array<i64: 3, 3, 128, 128>}, {pipeline_mode = #tpu.pipeline_mode<synchronous>, transform_indices = @transform_8, window_bounds = array<i64: 1, 128>}, {pipeline_mode = #tpu.pipeline_mode<synchronous>, transform_indices = @transform_9, window_bounds = array<i64: 128, 128>}, {pipeline_mode = #tpu.pipeline_mode<synchronous>, transform_indices = @transform_10, window_bounds = array<i64: 1, 128>}, {transform_indices = @transform_11, window_bounds = array<i64: 1, 16, 16, 128>}]} {
    %cst = arith.constant 0.000000e+00 : bf16
    %0 = vector.broadcast %cst : bf16 to vector<2x32x3xbf16>
    %c0 = arith.constant 0 : index
    %c0_0 = arith.constant 0 : index
    %c0_1 = arith.constant 0 : index
    %1 = vector.load %arg13[%c0, %c0_0, %c0_1] : memref<20x32x3xbf16, #tpu.memory_space<vmem>>, vector<2x32x3xbf16>
    tpu.vector_store %arg13[%c0, %c0_0, %c0_1], %0 {strides = array<i32>} : memref<20x32x3xbf16, #tpu.memory_space<vmem>>, vector<2x32x3xbf16>,
    %cst_2 = arith.constant 0.000000e+00 : bf16
    %2 = vector.broadcast %cst_2 : bf16 to vector<2x32x3xbf16>
    %c18 = arith.constant 18 : index
    %c0_3 = arith.constant 0 : index
    %c0_4 = arith.constant 0 : index
    %3 = vector.load %arg13[%c18, %c0_3, %c0_4] : memref<20x32x3xbf16, #tpu.memory_space<vmem>>, vector<2x32x3xbf16>
    tpu.vector_store %arg13[%c18, %c0_3, %c0_4], %2 {strides = array<i32>} : memref<20x32x3xbf16, #tpu.memory_space<vmem>>, vector<2x32x3xbf16>,
    %cst_5 = arith.constant 0.000000e+00 : bf16
    %4 = vector.broadcast %cst_5 : bf16 to vector<16x8x3xbf16>
    %c2 = arith.constant 2 : index
    %c0_6 = arith.constant 0 : index
    %c0_7 = arith.constant 0 : index
    %5 = vector.load %arg13[%c2, %c0_6, %c0_7] : memref<20x32x3xbf16, #tpu.memory_space<vmem>>, vector<16x8x3xbf16>
    tpu.vector_store %arg13[%c2, %c0_6, %c0_7], %4 {strides = array<i32>} : memref<20x32x3xbf16, #tpu.memory_space<vmem>>, vector<16x8x3xbf16>,
    %cst_8 = arith.constant 0.000000e+00 : bf16
    %6 = vector.broadcast %cst_8 : bf16 to vector<16x8x3xbf16>
    %c2_9 = arith.constant 2 : index
    %c24 = arith.constant 24 : index
    %c0_10 = arith.constant 0 : index
    %7 = vector.load %arg13[%c2_9, %c24, %c0_10] : memref<20x32x3xbf16, #tpu.memory_space<vmem>>, vector<16x8x3xbf16>
    tpu.vector_store %arg13[%c2_9, %c24, %c0_10], %6 {strides = array<i32>} : memref<20x32x3xbf16, #tpu.memory_space<vmem>>, vector<16x8x3xbf16>,
    %c0_11 = arith.constant 0 : index
    %c0_12 = arith.constant 0 : index
    %c0_13 = arith.constant 0 : index
    %c0_14 = arith.constant 0 : index
    %8 = vector.load %arg1[%c0_11, %c0_12, %c0_13, %c0_14] : memref<1x16x16x3xf32, #tpu.memory_space<vmem>>, vector<1x16x16x3xf32>
    %9 = vector.shape_cast %8 : vector<1x16x16x3xf32> to vector<16x16x3xf32>
    %10 = arith.truncf %9 : vector<16x16x3xf32> to vector<16x16x3xbf16>
    %c2_15 = arith.constant 2 : index
    %c8 = arith.constant 8 : index
    %c0_16 = arith.constant 0 : index
    %11 = vector.load %arg13[%c2_15, %c8, %c0_16] : memref<20x32x3xbf16, #tpu.memory_space<vmem>>, vector<16x16x3xbf16>
    tpu.vector_store %arg13[%c2_15, %c8, %c0_16], %10 {strides = array<i32>} : memref<20x32x3xbf16, #tpu.memory_space<vmem>>, vector<16x16x3xbf16>,
    %c0_17 = arith.constant 0 : index
    %c7 = arith.constant 7 : index
    %c0_18 = arith.constant 0 : index
    %12 = vector.load %arg13[%c0_17, %c7, %c0_18] : memref<20x32x3xbf16, #tpu.memory_space<vmem>>, vector<20x16x3xbf16>
    %13 = vector.shape_cast %12 : vector<20x16x3xbf16> to vector<320x3xbf16>
    %14 = vector.extract_strided_slice %13 {offsets = [16, 0], sizes = [256, 3], strides = [1, 1]} : vector<320x3xbf16> to vector<256x3xbf16>
    %c0_19 = arith.constant 0 : index
    %c0_20 = arith.constant 0 : index
    %c0_21 = arith.constant 0 : index
    %c0_22 = arith.constant 0 : index
    %15 = vector.load %arg2[%c0_19, %c0_20, %c0_21, %c0_22] : memref<3x3x3x128xbf16, #tpu.memory_space<vmem>>, vector<1x1x3x128xbf16>
    %16 = vector.shape_cast %15 : vector<1x1x3x128xbf16> to vector<3x128xbf16>
    %cst_23 = arith.constant dense<0.000000e+00> : vector<256x128xf32>
    %17 = tpu.matmul %14, %16, %cst_23 {dimension_numbers = #tpu.dot_dimension_numbers<[1], [0], [0], [1], [0, 0, 1, 1], [], []>} : vector<256x3xbf16>, vector<3x128xbf16>, vector<256x128xf32> -> vector<256x128xf32>
    %18 = vector.extract_strided_slice %13 {offsets = [32, 0], sizes = [256, 3], strides = [1, 1]} : vector<320x3xbf16> to vector<256x3xbf16>
    %c1 = arith.constant 1 : index
    %c0_24 = arith.constant 0 : index
    %c0_25 = arith.constant 0 : index
    %c0_26 = arith.constant 0 : index
    %19 = vector.load %arg2[%c1, %c0_24, %c0_25, %c0_26] : memref<3x3x3x128xbf16, #tpu.memory_space<vmem>>, vector<1x1x3x128xbf16>
    %20 = vector.shape_cast %19 : vector<1x1x3x128xbf16> to vector<3x128xbf16>
    %cst_27 = arith.constant dense<0.000000e+00> : vector<256x128xf32>
    %21 = tpu.matmul %18, %20, %cst_27 {dimension_numbers = #tpu.dot_dimension_numbers<[1], [0], [0], [1], [0, 0, 1, 1], [], []>} : vector<256x3xbf16>, vector<3x128xbf16>, vector<256x128xf32> -> vector<256x128xf32>
    %22 = arith.addf %17, %21 : vector<256x128xf32>
    %23 = vector.extract_strided_slice %13 {offsets = [48, 0], sizes = [256, 3], strides = [1, 1]} : vector<320x3xbf16> to vector<256x3xbf16>
    %c2_28 = arith.constant 2 : index
    %c0_29 = arith.constant 0 : index
    %c0_30 = arith.constant 0 : index
    %c0_31 = arith.constant 0 : index
    %24 = vector.load %arg2[%c2_28, %c0_29, %c0_30, %c0_31] : memref<3x3x3x128xbf16, #tpu.memory_space<vmem>>, vector<1x1x3x128xbf16>
    %25 = vector.shape_cast %24 : vector<1x1x3x128xbf16> to vector<3x128xbf16>
    %cst_32 = arith.constant dense<0.000000e+00> : vector<256x128xf32>
    %26 = tpu.matmul %23, %25, %cst_32 {dimension_numbers = #tpu.dot_dimension_numbers<[1], [0], [0], [1], [0, 0, 1, 1], [], []>} : vector<256x3xbf16>, vector<3x128xbf16>, vector<256x128xf32> -> vector<256x128xf32>
    %27 = arith.addf %22, %26 : vector<256x128xf32>
    %c0_33 = arith.constant 0 : index
    %c8_34 = arith.constant 8 : index
    %c0_35 = arith.constant 0 : index
    %28 = vector.load %arg13[%c0_33, %c8_34, %c0_35] : memref<20x32x3xbf16, #tpu.memory_space<vmem>>, vector<20x16x3xbf16>
    %29 = vector.shape_cast %28 : vector<20x16x3xbf16> to vector<320x3xbf16>
    %30 = vector.extract_strided_slice %29 {offsets = [16, 0], sizes = [256, 3], strides = [1, 1]} : vector<320x3xbf16> to vector<256x3xbf16>
    %c0_36 = arith.constant 0 : index
    %c1_37 = arith.constant 1 : index
    %c0_38 = arith.constant 0 : index
    %c0_39 = arith.constant 0 : index
    %31 = vector.load %arg2[%c0_36, %c1_37, %c0_38, %c0_39] : memref<3x3x3x128xbf16, #tpu.memory_space<vmem>>, vector<1x1x3x128xbf16>
    %32 = vector.shape_cast %31 : vector<1x1x3x128xbf16> to vector<3x128xbf16>
    %cst_40 = arith.constant dense<0.000000e+00> : vector<256x128xf32>
    %33 = tpu.matmul %30, %32, %cst_40 {dimension_numbers = #tpu.dot_dimension_numbers<[1], [0], [0], [1], [0, 0, 1, 1], [], []>} : vector<256x3xbf16>, vector<3x128xbf16>, vector<256x128xf32> -> vector<256x128xf32>
    %34 = arith.addf %27, %33 : vector<256x128xf32>
    %35 = vector.extract_strided_slice %29 {offsets = [32, 0], sizes = [256, 3], strides = [1, 1]} : vector<320x3xbf16> to vector<256x3xbf16>
    %c1_41 = arith.constant 1 : index
    %c1_42 = arith.constant 1 : index
    %c0_43 = arith.constant 0 : index
    %c0_44 = arith.constant 0 : index
    %36 = vector.load %arg2[%c1_41, %c1_42, %c0_43, %c0_44] : memref<3x3x3x128xbf16, #tpu.memory_space<vmem>>, vector<1x1x3x128xbf16>
    %37 = vector.shape_cast %36 : vector<1x1x3x128xbf16> to vector<3x128xbf16>
    %cst_45 = arith.constant dense<0.000000e+00> : vector<256x128xf32>
    %38 = tpu.matmul %35, %37, %cst_45 {dimension_numbers = #tpu.dot_dimension_numbers<[1], [0], [0], [1], [0, 0, 1, 1], [], []>} : vector<256x3xbf16>, vector<3x128xbf16>, vector<256x128xf32> -> vector<256x128xf32>
    %39 = arith.addf %34, %38 : vector<256x128xf32>
    %40 = vector.extract_strided_slice %29 {offsets = [48, 0], sizes = [256, 3], strides = [1, 1]} : vector<320x3xbf16> to vector<256x3xbf16>
    %c2_46 = arith.constant 2 : index
    %c1_47 = arith.constant 1 : index
    %c0_48 = arith.constant 0 : index
    %c0_49 = arith.constant 0 : index
    %41 = vector.load %arg2[%c2_46, %c1_47, %c0_48, %c0_49] : memref<3x3x3x128xbf16, #tpu.memory_space<vmem>>, vector<1x1x3x128xbf16>
    %42 = vector.shape_cast %41 : vector<1x1x3x128xbf16> to vector<3x128xbf16>
    %cst_50 = arith.constant dense<0.000000e+00> : vector<256x128xf32>
    %43 = tpu.matmul %40, %42, %cst_50 {dimension_numbers = #tpu.dot_dimension_numbers<[1], [0], [0], [1], [0, 0, 1, 1], [], []>} : vector<256x3xbf16>, vector<3x128xbf16>, vector<256x128xf32> -> vector<256x128xf32>
    %44 = arith.addf %39, %43 : vector<256x128xf32>
    %c0_51 = arith.constant 0 : index
    %c9 = arith.constant 9 : index
    %c0_52 = arith.constant 0 : index
    %45 = vector.load %arg13[%c0_51, %c9, %c0_52] : memref<20x32x3xbf16, #tpu.memory_space<vmem>>, vector<20x16x3xbf16>
    %46 = vector.shape_cast %45 : vector<20x16x3xbf16> to vector<320x3xbf16>
    %47 = vector.extract_strided_slice %46 {offsets = [16, 0], sizes = [256, 3], strides = [1, 1]} : vector<320x3xbf16> to vector<256x3xbf16>
    %c0_53 = arith.constant 0 : index
    %c2_54 = arith.constant 2 : index
    %c0_55 = arith.constant 0 : index
    %c0_56 = arith.constant 0 : index
    %48 = vector.load %arg2[%c0_53, %c2_54, %c0_55, %c0_56] : memref<3x3x3x128xbf16, #tpu.memory_space<vmem>>, vector<1x1x3x128xbf16>
    %49 = vector.shape_cast %48 : vector<1x1x3x128xbf16> to vector<3x128xbf16>
    %cst_57 = arith.constant dense<0.000000e+00> : vector<256x128xf32>
    %50 = tpu.matmul %47, %49, %cst_57 {dimension_numbers = #tpu.dot_dimension_numbers<[1], [0], [0], [1], [0, 0, 1, 1], [], []>} : vector<256x3xbf16>, vector<3x128xbf16>, vector<256x128xf32> -> vector<256x128xf32>
    %51 = arith.addf %44, %50 : vector<256x128xf32>
    %52 = vector.extract_strided_slice %46 {offsets = [32, 0], sizes = [256, 3], strides = [1, 1]} : vector<320x3xbf16> to vector<256x3xbf16>
    %c1_58 = arith.constant 1 : index
    %c2_59 = arith.constant 2 : index
    %c0_60 = arith.constant 0 : index
    %c0_61 = arith.constant 0 : index
    %53 = vector.load %arg2[%c1_58, %c2_59, %c0_60, %c0_61] : memref<3x3x3x128xbf16, #tpu.memory_space<vmem>>, vector<1x1x3x128xbf16>
    %54 = vector.shape_cast %53 : vector<1x1x3x128xbf16> to vector<3x128xbf16>
    %cst_62 = arith.constant dense<0.000000e+00> : vector<256x128xf32>
    %55 = tpu.matmul %52, %54, %cst_62 {dimension_numbers = #tpu.dot_dimension_numbers<[1], [0], [0], [1], [0, 0, 1, 1], [], []>} : vector<256x3xbf16>, vector<3x128xbf16>, vector<256x128xf32> -> vector<256x128xf32>
    %56 = arith.addf %51, %55 : vector<256x128xf32>
    %57 = vector.extract_strided_slice %46 {offsets = [48, 0], sizes = [256, 3], strides = [1, 1]} : vector<320x3xbf16> to vector<256x3xbf16>
    %c2_63 = arith.constant 2 : index
    %c2_64 = arith.constant 2 : index
    %c0_65 = arith.constant 0 : index
    %c0_66 = arith.constant 0 : index
    %58 = vector.load %arg2[%c2_63, %c2_64, %c0_65, %c0_66] : memref<3x3x3x128xbf16, #tpu.memory_space<vmem>>, vector<1x1x3x128xbf16>
    %59 = vector.shape_cast %58 : vector<1x1x3x128xbf16> to vector<3x128xbf16>
    %cst_67 = arith.constant dense<0.000000e+00> : vector<256x128xf32>
    %60 = tpu.matmul %57, %59, %cst_67 {dimension_numbers = #tpu.dot_dimension_numbers<[1], [0], [0], [1], [0, 0, 1, 1], [], []>} : vector<256x3xbf16>, vector<3x128xbf16>, vector<256x128xf32> -> vector<256x128xf32>
    %61 = arith.addf %56, %60 : vector<256x128xf32>
    %c0_68 = arith.constant 0 : index
    %c0_69 = arith.constant 0 : index
    %62 = vector.load %arg3[%c0_68, %c0_69] : memref<1x128xf32, #tpu.memory_space<vmem>>, vector<1x128xf32>
    %63 = vector.broadcast %62 : vector<1x128xf32> to vector<256x128xf32>
    %64 = arith.addf %61, %63 : vector<256x128xf32>
    %c0_70 = arith.constant 0 : index
    %c0_71 = arith.constant 0 : index
    %65 = vector.load %arg15[%c0_70, %c0_71] : memref<256x128xf32, #tpu.memory_space<vmem>>, vector<256x128xf32>
    tpu.vector_store %arg15[%c0_70, %c0_71], %64 {strides = array<i32>} : memref<256x128xf32, #tpu.memory_space<vmem>>, vector<256x128xf32>,
    %cst_72 = arith.constant 0.000000e+00 : bf16
    %66 = vector.broadcast %cst_72 : bf16 to vector<2x32x128xbf16>
    %c0_73 = arith.constant 0 : index
    %c0_74 = arith.constant 0 : index
    %c0_75 = arith.constant 0 : index
    %67 = vector.load %arg14[%c0_73, %c0_74, %c0_75] : memref<20x32x128xbf16, #tpu.memory_space<vmem>>, vector<2x32x128xbf16>
    tpu.vector_store %arg14[%c0_73, %c0_74, %c0_75], %66 {strides = array<i32>} : memref<20x32x128xbf16, #tpu.memory_space<vmem>>, vector<2x32x128xbf16>,
    %cst_76 = arith.constant 0.000000e+00 : bf16
    %68 = vector.broadcast %cst_76 : bf16 to vector<2x32x128xbf16>
    %c18_77 = arith.constant 18 : index
    %c0_78 = arith.constant 0 : index
    %c0_79 = arith.constant 0 : index
    %69 = vector.load %arg14[%c18_77, %c0_78, %c0_79] : memref<20x32x128xbf16, #tpu.memory_space<vmem>>, vector<2x32x128xbf16>
    tpu.vector_store %arg14[%c18_77, %c0_78, %c0_79], %68 {strides = array<i32>} : memref<20x32x128xbf16, #tpu.memory_space<vmem>>, vector<2x32x128xbf16>,
    %cst_80 = arith.constant 0.000000e+00 : bf16
    %70 = vector.broadcast %cst_80 : bf16 to vector<16x8x128xbf16>
    %c2_81 = arith.constant 2 : index
    %c0_82 = arith.constant 0 : index
    %c0_83 = arith.constant 0 : index
    %71 = vector.load %arg14[%c2_81, %c0_82, %c0_83] : memref<20x32x128xbf16, #tpu.memory_space<vmem>>, vector<16x8x128xbf16>
    tpu.vector_store %arg14[%c2_81, %c0_82, %c0_83], %70 {strides = array<i32>} : memref<20x32x128xbf16, #tpu.memory_space<vmem>>, vector<16x8x128xbf16>,
    %cst_84 = arith.constant 0.000000e+00 : bf16
    %72 = vector.broadcast %cst_84 : bf16 to vector<16x8x128xbf16>
    %c2_85 = arith.constant 2 : index
    %c24_86 = arith.constant 24 : index
    %c0_87 = arith.constant 0 : index
    %73 = vector.load %arg14[%c2_85, %c24_86, %c0_87] : memref<20x32x128xbf16, #tpu.memory_space<vmem>>, vector<16x8x128xbf16>
    tpu.vector_store %arg14[%c2_85, %c24_86, %c0_87], %72 {strides = array<i32>} : memref<20x32x128xbf16, #tpu.memory_space<vmem>>, vector<16x8x128xbf16>,
    %c0_88 = arith.constant 0 : index
    %c0_89 = arith.constant 0 : index
    %74 = vector.load %arg15[%c0_88, %c0_89] : memref<256x128xf32, #tpu.memory_space<vmem>>, vector<256x128xf32>
    %75 = vector.shape_cast %74 : vector<256x128xf32> to vector<16x16x128xf32>
    %76 = arith.truncf %75 : vector<16x16x128xf32> to vector<16x16x128xbf16>
    %c2_90 = arith.constant 2 : index
    %c8_91 = arith.constant 8 : index
    %c0_92 = arith.constant 0 : index
    %77 = vector.load %arg14[%c2_90, %c8_91, %c0_92] : memref<20x32x128xbf16, #tpu.memory_space<vmem>>, vector<16x16x128xbf16>
    tpu.vector_store %arg14[%c2_90, %c8_91, %c0_92], %76 {strides = array<i32>} : memref<20x32x128xbf16, #tpu.memory_space<vmem>>, vector<16x16x128xbf16>,
    %c0_93 = arith.constant 0 : index
    %c7_94 = arith.constant 7 : index
    %c0_95 = arith.constant 0 : index
    %78 = vector.load %arg14[%c0_93, %c7_94, %c0_95] : memref<20x32x128xbf16, #tpu.memory_space<vmem>>, vector<20x16x128xbf16>
    %79 = vector.shape_cast %78 : vector<20x16x128xbf16> to vector<320x128xbf16>
    %80 = vector.extract_strided_slice %79 {offsets = [16, 0], sizes = [256, 128], strides = [1, 1]} : vector<320x128xbf16> to vector<256x128xbf16>
    %c0_96 = arith.constant 0 : index
    %c0_97 = arith.constant 0 : index
    %c0_98 = arith.constant 0 : index
    %c0_99 = arith.constant 0 : index
    %81 = vector.load %arg4[%c0_96, %c0_97, %c0_98, %c0_99] : memref<3x3x128x128xbf16, #tpu.memory_space<vmem>>, vector<1x1x128x128xbf16>
    %82 = vector.shape_cast %81 : vector<1x1x128x128xbf16> to vector<128x128xbf16>
    %cst_100 = arith.constant dense<0.000000e+00> : vector<256x128xf32>
    %83 = tpu.matmul %80, %82, %cst_100 {dimension_numbers = #tpu.dot_dimension_numbers<[1], [0], [0], [1], [0, 0, 1, 1], [], []>} : vector<256x128xbf16>, vector<128x128xbf16>, vector<256x128xf32> -> vector<256x128xf32>
    %84 = vector.extract_strided_slice %79 {offsets = [32, 0], sizes = [256, 128], strides = [1, 1]} : vector<320x128xbf16> to vector<256x128xbf16>
    %c1_101 = arith.constant 1 : index
    %c0_102 = arith.constant 0 : index
    %c0_103 = arith.constant 0 : index
    %c0_104 = arith.constant 0 : index
    %85 = vector.load %arg4[%c1_101, %c0_102, %c0_103, %c0_104] : memref<3x3x128x128xbf16, #tpu.memory_space<vmem>>, vector<1x1x128x128xbf16>
    %86 = vector.shape_cast %85 : vector<1x1x128x128xbf16> to vector<128x128xbf16>
    %cst_105 = arith.constant dense<0.000000e+00> : vector<256x128xf32>
    %87 = tpu.matmul %84, %86, %cst_105 {dimension_numbers = #tpu.dot_dimension_numbers<[1], [0], [0], [1], [0, 0, 1, 1], [], []>} : vector<256x128xbf16>, vector<128x128xbf16>, vector<256x128xf32> -> vector<256x128xf32>
    %88 = arith.addf %83, %87 : vector<256x128xf32>
    %89 = vector.extract_strided_slice %79 {offsets = [48, 0], sizes = [256, 128], strides = [1, 1]} : vector<320x128xbf16> to vector<256x128xbf16>
    %c2_106 = arith.constant 2 : index
    %c0_107 = arith.constant 0 : index
    %c0_108 = arith.constant 0 : index
    %c0_109 = arith.constant 0 : index
    %90 = vector.load %arg4[%c2_106, %c0_107, %c0_108, %c0_109] : memref<3x3x128x128xbf16, #tpu.memory_space<vmem>>, vector<1x1x128x128xbf16>
    %91 = vector.shape_cast %90 : vector<1x1x128x128xbf16> to vector<128x128xbf16>
    %cst_110 = arith.constant dense<0.000000e+00> : vector<256x128xf32>
    %92 = tpu.matmul %89, %91, %cst_110 {dimension_numbers = #tpu.dot_dimension_numbers<[1], [0], [0], [1], [0, 0, 1, 1], [], []>} : vector<256x128xbf16>, vector<128x128xbf16>, vector<256x128xf32> -> vector<256x128xf32>
    %93 = arith.addf %88, %92 : vector<256x128xf32>
    %c0_111 = arith.constant 0 : index
    %c8_112 = arith.constant 8 : index
    %c0_113 = arith.constant 0 : index
    %94 = vector.load %arg14[%c0_111, %c8_112, %c0_113] : memref<20x32x128xbf16, #tpu.memory_space<vmem>>, vector<20x16x128xbf16>
    %95 = vector.shape_cast %94 : vector<20x16x128xbf16> to vector<320x128xbf16>
    %96 = vector.extract_strided_slice %95 {offsets = [16, 0], sizes = [256, 128], strides = [1, 1]} : vector<320x128xbf16> to vector<256x128xbf16>
    %c0_114 = arith.constant 0 : index
    %c1_115 = arith.constant 1 : index
    %c0_116 = arith.constant 0 : index
    %c0_117 = arith.constant 0 : index
    %97 = vector.load %arg4[%c0_114, %c1_115, %c0_116, %c0_117] : memref<3x3x128x128xbf16, #tpu.memory_space<vmem>>, vector<1x1x128x128xbf16>
    %98 = vector.shape_cast %97 : vector<1x1x128x128xbf16> to vector<128x128xbf16>
    %cst_118 = arith.constant dense<0.000000e+00> : vector<256x128xf32>
    %99 = tpu.matmul %96, %98, %cst_118 {dimension_numbers = #tpu.dot_dimension_numbers<[1], [0], [0], [1], [0, 0, 1, 1], [], []>} : vector<256x128xbf16>, vector<128x128xbf16>, vector<256x128xf32> -> vector<256x128xf32>
    %100 = arith.addf %93, %99 : vector<256x128xf32>
    %101 = vector.extract_strided_slice %95 {offsets = [32, 0], sizes = [256, 128], strides = [1, 1]} : vector<320x128xbf16> to vector<256x128xbf16>
    %c1_119 = arith.constant 1 : index
    %c1_120 = arith.constant 1 : index
    %c0_121 = arith.constant 0 : index
    %c0_122 = arith.constant 0 : index
    %102 = vector.load %arg4[%c1_119, %c1_120, %c0_121, %c0_122] : memref<3x3x128x128xbf16, #tpu.memory_space<vmem>>, vector<1x1x128x128xbf16>
    %103 = vector.shape_cast %102 : vector<1x1x128x128xbf16> to vector<128x128xbf16>
    %cst_123 = arith.constant dense<0.000000e+00> : vector<256x128xf32>
    %104 = tpu.matmul %101, %103, %cst_123 {dimension_numbers = #tpu.dot_dimension_numbers<[1], [0], [0], [1], [0, 0, 1, 1], [], []>} : vector<256x128xbf16>, vector<128x128xbf16>, vector<256x128xf32> -> vector<256x128xf32>
    %105 = arith.addf %100, %104 : vector<256x128xf32>
    %106 = vector.extract_strided_slice %95 {offsets = [48, 0], sizes = [256, 128], strides = [1, 1]} : vector<320x128xbf16> to vector<256x128xbf16>
    %c2_124 = arith.constant 2 : index
    %c1_125 = arith.constant 1 : index
    %c0_126 = arith.constant 0 : index
    %c0_127 = arith.constant 0 : index
    %107 = vector.load %arg4[%c2_124, %c1_125, %c0_126, %c0_127] : memref<3x3x128x128xbf16, #tpu.memory_space<vmem>>, vector<1x1x128x128xbf16>
    %108 = vector.shape_cast %107 : vector<1x1x128x128xbf16> to vector<128x128xbf16>
    %cst_128 = arith.constant dense<0.000000e+00> : vector<256x128xf32>
    %109 = tpu.matmul %106, %108, %cst_128 {dimension_numbers = #tpu.dot_dimension_numbers<[1], [0], [0], [1], [0, 0, 1, 1], [], []>} : vector<256x128xbf16>, vector<128x128xbf16>, vector<256x128xf32> -> vector<256x128xf32>
    %110 = arith.addf %105, %109 : vector<256x128xf32>
    %c0_129 = arith.constant 0 : index
    %c9_130 = arith.constant 9 : index
    %c0_131 = arith.constant 0 : index
    %111 = vector.load %arg14[%c0_129, %c9_130, %c0_131] : memref<20x32x128xbf16, #tpu.memory_space<vmem>>, vector<20x16x128xbf16>
    %112 = vector.shape_cast %111 : vector<20x16x128xbf16> to vector<320x128xbf16>
    %113 = vector.extract_strided_slice %112 {offsets = [16, 0], sizes = [256, 128], strides = [1, 1]} : vector<320x128xbf16> to vector<256x128xbf16>
    %c0_132 = arith.constant 0 : index
    %c2_133 = arith.constant 2 : index
    %c0_134 = arith.constant 0 : index
    %c0_135 = arith.constant 0 : index
    %114 = vector.load %arg4[%c0_132, %c2_133, %c0_134, %c0_135] : memref<3x3x128x128xbf16, #tpu.memory_space<vmem>>, vector<1x1x128x128xbf16>
    %115 = vector.shape_cast %114 : vector<1x1x128x128xbf16> to vector<128x128xbf16>
    %cst_136 = arith.constant dense<0.000000e+00> : vector<256x128xf32>
    %116 = tpu.matmul %113, %115, %cst_136 {dimension_numbers = #tpu.dot_dimension_numbers<[1], [0], [0], [1], [0, 0, 1, 1], [], []>} : vector<256x128xbf16>, vector<128x128xbf16>, vector<256x128xf32> -> vector<256x128xf32>
    %117 = arith.addf %110, %116 : vector<256x128xf32>
    %118 = vector.extract_strided_slice %112 {offsets = [32, 0], sizes = [256, 128], strides = [1, 1]} : vector<320x128xbf16> to vector<256x128xbf16>
    %c1_137 = arith.constant 1 : index
    %c2_138 = arith.constant 2 : index
    %c0_139 = arith.constant 0 : index
    %c0_140 = arith.constant 0 : index
    %119 = vector.load %arg4[%c1_137, %c2_138, %c0_139, %c0_140] : memref<3x3x128x128xbf16, #tpu.memory_space<vmem>>, vector<1x1x128x128xbf16>
    %120 = vector.shape_cast %119 : vector<1x1x128x128xbf16> to vector<128x128xbf16>
    %cst_141 = arith.constant dense<0.000000e+00> : vector<256x128xf32>
    %121 = tpu.matmul %118, %120, %cst_141 {dimension_numbers = #tpu.dot_dimension_numbers<[1], [0], [0], [1], [0, 0, 1, 1], [], []>} : vector<256x128xbf16>, vector<128x128xbf16>, vector<256x128xf32> -> vector<256x128xf32>
    %122 = arith.addf %117, %121 : vector<256x128xf32>
    %123 = vector.extract_strided_slice %112 {offsets = [48, 0], sizes = [256, 128], strides = [1, 1]} : vector<320x128xbf16> to vector<256x128xbf16>
    %c2_142 = arith.constant 2 : index
    %c2_143 = arith.constant 2 : index
    %c0_144 = arith.constant 0 : index
    %c0_145 = arith.constant 0 : index
    %124 = vector.load %arg4[%c2_142, %c2_143, %c0_144, %c0_145] : memref<3x3x128x128xbf16, #tpu.memory_space<vmem>>, vector<1x1x128x128xbf16>
    %125 = vector.shape_cast %124 : vector<1x1x128x128xbf16> to vector<128x128xbf16>
    %cst_146 = arith.constant dense<0.000000e+00> : vector<256x128xf32>
    %126 = tpu.matmul %123, %125, %cst_146 {dimension_numbers = #tpu.dot_dimension_numbers<[1], [0], [0], [1], [0, 0, 1, 1], [], []>} : vector<256x128xbf16>, vector<128x128xbf16>, vector<256x128xf32> -> vector<256x128xf32>
    %127 = arith.addf %122, %126 : vector<256x128xf32>
    %c0_147 = arith.constant 0 : index
    %c0_148 = arith.constant 0 : index
    %128 = vector.load %arg5[%c0_147, %c0_148] : memref<1x128xf32, #tpu.memory_space<vmem>>, vector<1x128xf32>
    %129 = vector.broadcast %128 : vector<1x128xf32> to vector<256x128xf32>
    %130 = arith.addf %127, %129 : vector<256x128xf32>
    %cst_149 = arith.constant 0.000000e+00 : f32
    %131 = vector.broadcast %cst_149 : f32 to vector<256x128xf32>
    %132 = arith.maximumf %130, %131 : vector<256x128xf32>
    %133 = arith.truncf %132 : vector<256x128xf32> to vector<256x128xbf16>
    %c0_150 = arith.constant 0 : index
    %c0_151 = arith.constant 0 : index
    %134 = vector.load %arg6[%c0_150, %c0_151] : memref<128x128xbf16, #tpu.memory_space<vmem>>, vector<128x128xbf16>
    %cst_152 = arith.constant dense<0.000000e+00> : vector<256x128xf32>
    %135 = tpu.matmul %133, %134, %cst_152 {dimension_numbers = #tpu.dot_dimension_numbers<[1], [0], [0], [1], [0, 0, 1, 1], [], []>} : vector<256x128xbf16>, vector<128x128xbf16>, vector<256x128xf32> -> vector<256x128xf32>
    %c0_153 = arith.constant 0 : index
    %c0_154 = arith.constant 0 : index
    %136 = vector.load %arg7[%c0_153, %c0_154] : memref<1x128xf32, #tpu.memory_space<vmem>>, vector<1x128xf32>
    %137 = vector.broadcast %136 : vector<1x128xf32> to vector<256x128xf32>
    %138 = arith.addf %135, %137 : vector<256x128xf32>
    %c0_155 = arith.constant 0 : index
    %c0_156 = arith.constant 0 : index
    %139 = vector.load %arg15[%c0_155, %c0_156] : memref<256x128xf32, #tpu.memory_space<vmem>>, vector<256x128xf32>
    %140 = arith.addf %138, %139 : vector<256x128xf32>
    %c0_157 = arith.constant 0 : index
    %c0_158 = arith.constant 0 : index
    %141 = vector.load %arg15[%c0_157, %c0_158] : memref<256x128xf32, #tpu.memory_space<vmem>>, vector<256x128xf32>
    tpu.vector_store %arg15[%c0_157, %c0_158], %140 {strides = array<i32>} : memref<256x128xf32, #tpu.memory_space<vmem>>, vector<256x128xf32>,
    %c0_159 = arith.constant 0 : index
    %c0_160 = arith.constant 0 : index
    %142 = vector.load %arg15[%c0_159, %c0_160] : memref<256x128xf32, #tpu.memory_space<vmem>>, vector<256x128xf32>
    %143 = vector.shape_cast %142 : vector<256x128xf32> to vector<16x16x128xf32>
    %144 = arith.truncf %143 : vector<16x16x128xf32> to vector<16x16x128xbf16>
    %c2_161 = arith.constant 2 : index
    %c8_162 = arith.constant 8 : index
    %c0_163 = arith.constant 0 : index
    %145 = vector.load %arg14[%c2_161, %c8_162, %c0_163] : memref<20x32x128xbf16, #tpu.memory_space<vmem>>, vector<16x16x128xbf16>
    tpu.vector_store %arg14[%c2_161, %c8_162, %c0_163], %144 {strides = array<i32>} : memref<20x32x128xbf16, #tpu.memory_space<vmem>>, vector<16x16x128xbf16>,
    %c0_164 = arith.constant 0 : index
    %c6 = arith.constant 6 : index
    %c0_165 = arith.constant 0 : index
    %146 = vector.load %arg14[%c0_164, %c6, %c0_165] : memref<20x32x128xbf16, #tpu.memory_space<vmem>>, vector<20x16x128xbf16>
    %147 = vector.shape_cast %146 : vector<20x16x128xbf16> to vector<320x128xbf16>
    %148 = vector.extract_strided_slice %147 {offsets = [0, 0], sizes = [256, 128], strides = [1, 1]} : vector<320x128xbf16> to vector<256x128xbf16>
    %c0_166 = arith.constant 0 : index
    %c0_167 = arith.constant 0 : index
    %c0_168 = arith.constant 0 : index
    %c0_169 = arith.constant 0 : index
    %149 = vector.load %arg8[%c0_166, %c0_167, %c0_168, %c0_169] : memref<3x3x128x128xbf16, #tpu.memory_space<vmem>>, vector<1x1x128x128xbf16>
    %150 = vector.shape_cast %149 : vector<1x1x128x128xbf16> to vector<128x128xbf16>
    %cst_170 = arith.constant dense<0.000000e+00> : vector<256x128xf32>
    %151 = tpu.matmul %148, %150, %cst_170 {dimension_numbers = #tpu.dot_dimension_numbers<[1], [0], [0], [1], [0, 0, 1, 1], [], []>} : vector<256x128xbf16>, vector<128x128xbf16>, vector<256x128xf32> -> vector<256x128xf32>
    %152 = vector.extract_strided_slice %147 {offsets = [32, 0], sizes = [256, 128], strides = [1, 1]} : vector<320x128xbf16> to vector<256x128xbf16>
    %c1_171 = arith.constant 1 : index
    %c0_172 = arith.constant 0 : index
    %c0_173 = arith.constant 0 : index
    %c0_174 = arith.constant 0 : index
    %153 = vector.load %arg8[%c1_171, %c0_172, %c0_173, %c0_174] : memref<3x3x128x128xbf16, #tpu.memory_space<vmem>>, vector<1x1x128x128xbf16>
    %154 = vector.shape_cast %153 : vector<1x1x128x128xbf16> to vector<128x128xbf16>
    %cst_175 = arith.constant dense<0.000000e+00> : vector<256x128xf32>
    %155 = tpu.matmul %152, %154, %cst_175 {dimension_numbers = #tpu.dot_dimension_numbers<[1], [0], [0], [1], [0, 0, 1, 1], [], []>} : vector<256x128xbf16>, vector<128x128xbf16>, vector<256x128xf32> -> vector<256x128xf32>
    %156 = arith.addf %151, %155 : vector<256x128xf32>
    %157 = vector.extract_strided_slice %147 {offsets = [64, 0], sizes = [256, 128], strides = [1, 1]} : vector<320x128xbf16> to vector<256x128xbf16>
    %c2_176 = arith.constant 2 : index
    %c0_177 = arith.constant 0 : index
    %c0_178 = arith.constant 0 : index
    %c0_179 = arith.constant 0 : index
    %158 = vector.load %arg8[%c2_176, %c0_177, %c0_178, %c0_179] : memref<3x3x128x128xbf16, #tpu.memory_space<vmem>>, vector<1x1x128x128xbf16>
    %159 = vector.shape_cast %158 : vector<1x1x128x128xbf16> to vector<128x128xbf16>
    %cst_180 = arith.constant dense<0.000000e+00> : vector<256x128xf32>
    %160 = tpu.matmul %157, %159, %cst_180 {dimension_numbers = #tpu.dot_dimension_numbers<[1], [0], [0], [1], [0, 0, 1, 1], [], []>} : vector<256x128xbf16>, vector<128x128xbf16>, vector<256x128xf32> -> vector<256x128xf32>
    %161 = arith.addf %156, %160 : vector<256x128xf32>
    %c0_181 = arith.constant 0 : index
    %c8_182 = arith.constant 8 : index
    %c0_183 = arith.constant 0 : index
    %162 = vector.load %arg14[%c0_181, %c8_182, %c0_183] : memref<20x32x128xbf16, #tpu.memory_space<vmem>>, vector<20x16x128xbf16>
    %163 = vector.shape_cast %162 : vector<20x16x128xbf16> to vector<320x128xbf16>
    %164 = vector.extract_strided_slice %163 {offsets = [0, 0], sizes = [256, 128], strides = [1, 1]} : vector<320x128xbf16> to vector<256x128xbf16>
    %c0_184 = arith.constant 0 : index
    %c1_185 = arith.constant 1 : index
    %c0_186 = arith.constant 0 : index
    %c0_187 = arith.constant 0 : index
    %165 = vector.load %arg8[%c0_184, %c1_185, %c0_186, %c0_187] : memref<3x3x128x128xbf16, #tpu.memory_space<vmem>>, vector<1x1x128x128xbf16>
    %166 = vector.shape_cast %165 : vector<1x1x128x128xbf16> to vector<128x128xbf16>
    %cst_188 = arith.constant dense<0.000000e+00> : vector<256x128xf32>
    %167 = tpu.matmul %164, %166, %cst_188 {dimension_numbers = #tpu.dot_dimension_numbers<[1], [0], [0], [1], [0, 0, 1, 1], [], []>} : vector<256x128xbf16>, vector<128x128xbf16>, vector<256x128xf32> -> vector<256x128xf32>
    %168 = arith.addf %161, %167 : vector<256x128xf32>
    %169 = vector.extract_strided_slice %163 {offsets = [32, 0], sizes = [256, 128], strides = [1, 1]} : vector<320x128xbf16> to vector<256x128xbf16>
    %c1_189 = arith.constant 1 : index
    %c1_190 = arith.constant 1 : index
    %c0_191 = arith.constant 0 : index
    %c0_192 = arith.constant 0 : index
    %170 = vector.load %arg8[%c1_189, %c1_190, %c0_191, %c0_192] : memref<3x3x128x128xbf16, #tpu.memory_space<vmem>>, vector<1x1x128x128xbf16>
    %171 = vector.shape_cast %170 : vector<1x1x128x128xbf16> to vector<128x128xbf16>
    %cst_193 = arith.constant dense<0.000000e+00> : vector<256x128xf32>
    %172 = tpu.matmul %169, %171, %cst_193 {dimension_numbers = #tpu.dot_dimension_numbers<[1], [0], [0], [1], [0, 0, 1, 1], [], []>} : vector<256x128xbf16>, vector<128x128xbf16>, vector<256x128xf32> -> vector<256x128xf32>
    %173 = arith.addf %168, %172 : vector<256x128xf32>
    %174 = vector.extract_strided_slice %163 {offsets = [64, 0], sizes = [256, 128], strides = [1, 1]} : vector<320x128xbf16> to vector<256x128xbf16>
    %c2_194 = arith.constant 2 : index
    %c1_195 = arith.constant 1 : index
    %c0_196 = arith.constant 0 : index
    %c0_197 = arith.constant 0 : index
    %175 = vector.load %arg8[%c2_194, %c1_195, %c0_196, %c0_197] : memref<3x3x128x128xbf16, #tpu.memory_space<vmem>>, vector<1x1x128x128xbf16>
    %176 = vector.shape_cast %175 : vector<1x1x128x128xbf16> to vector<128x128xbf16>
    %cst_198 = arith.constant dense<0.000000e+00> : vector<256x128xf32>
    %177 = tpu.matmul %174, %176, %cst_198 {dimension_numbers = #tpu.dot_dimension_numbers<[1], [0], [0], [1], [0, 0, 1, 1], [], []>} : vector<256x128xbf16>, vector<128x128xbf16>, vector<256x128xf32> -> vector<256x128xf32>
    %178 = arith.addf %173, %177 : vector<256x128xf32>
    %c0_199 = arith.constant 0 : index
    %c10 = arith.constant 10 : index
    %c0_200 = arith.constant 0 : index
    %179 = vector.load %arg14[%c0_199, %c10, %c0_200] : memref<20x32x128xbf16, #tpu.memory_space<vmem>>, vector<20x16x128xbf16>
    %180 = vector.shape_cast %179 : vector<20x16x128xbf16> to vector<320x128xbf16>
    %181 = vector.extract_strided_slice %180 {offsets = [0, 0], sizes = [256, 128], strides = [1, 1]} : vector<320x128xbf16> to vector<256x128xbf16>
    %c0_201 = arith.constant 0 : index
    %c2_202 = arith.constant 2 : index
    %c0_203 = arith.constant 0 : index
    %c0_204 = arith.constant 0 : index
    %182 = vector.load %arg8[%c0_201, %c2_202, %c0_203, %c0_204] : memref<3x3x128x128xbf16, #tpu.memory_space<vmem>>, vector<1x1x128x128xbf16>
    %183 = vector.shape_cast %182 : vector<1x1x128x128xbf16> to vector<128x128xbf16>
    %cst_205 = arith.constant dense<0.000000e+00> : vector<256x128xf32>
    %184 = tpu.matmul %181, %183, %cst_205 {dimension_numbers = #tpu.dot_dimension_numbers<[1], [0], [0], [1], [0, 0, 1, 1], [], []>} : vector<256x128xbf16>, vector<128x128xbf16>, vector<256x128xf32> -> vector<256x128xf32>
    %185 = arith.addf %178, %184 : vector<256x128xf32>
    %186 = vector.extract_strided_slice %180 {offsets = [32, 0], sizes = [256, 128], strides = [1, 1]} : vector<320x128xbf16> to vector<256x128xbf16>
    %c1_206 = arith.constant 1 : index
    %c2_207 = arith.constant 2 : index
    %c0_208 = arith.constant 0 : index
    %c0_209 = arith.constant 0 : index
    %187 = vector.load %arg8[%c1_206, %c2_207, %c0_208, %c0_209] : memref<3x3x128x128xbf16, #tpu.memory_space<vmem>>, vector<1x1x128x128xbf16>
    %188 = vector.shape_cast %187 : vector<1x1x128x128xbf16> to vector<128x128xbf16>
    %cst_210 = arith.constant dense<0.000000e+00> : vector<256x128xf32>
    %189 = tpu.matmul %186, %188, %cst_210 {dimension_numbers = #tpu.dot_dimension_numbers<[1], [0], [0], [1], [0, 0, 1, 1], [], []>} : vector<256x128xbf16>, vector<128x128xbf16>, vector<256x128xf32> -> vector<256x128xf32>
    %190 = arith.addf %185, %189 : vector<256x128xf32>
    %191 = vector.extract_strided_slice %180 {offsets = [64, 0], sizes = [256, 128], strides = [1, 1]} : vector<320x128xbf16> to vector<256x128xbf16>
    %c2_211 = arith.constant 2 : index
    %c2_212 = arith.constant 2 : index
    %c0_213 = arith.constant 0 : index
    %c0_214 = arith.constant 0 : index
    %192 = vector.load %arg8[%c2_211, %c2_212, %c0_213, %c0_214] : memref<3x3x128x128xbf16, #tpu.memory_space<vmem>>, vector<1x1x128x128xbf16>
    %193 = vector.shape_cast %192 : vector<1x1x128x128xbf16> to vector<128x128xbf16>
    %cst_215 = arith.constant dense<0.000000e+00> : vector<256x128xf32>
    %194 = tpu.matmul %191, %193, %cst_215 {dimension_numbers = #tpu.dot_dimension_numbers<[1], [0], [0], [1], [0, 0, 1, 1], [], []>} : vector<256x128xbf16>, vector<128x128xbf16>, vector<256x128xf32> -> vector<256x128xf32>
    %195 = arith.addf %190, %194 : vector<256x128xf32>
    %c0_216 = arith.constant 0 : index
    %c0_217 = arith.constant 0 : index
    %196 = vector.load %arg9[%c0_216, %c0_217] : memref<1x128xf32, #tpu.memory_space<vmem>>, vector<1x128xf32>
    %197 = vector.broadcast %196 : vector<1x128xf32> to vector<256x128xf32>
    %198 = arith.addf %195, %197 : vector<256x128xf32>
    %cst_218 = arith.constant 0.000000e+00 : f32
    %199 = vector.broadcast %cst_218 : f32 to vector<256x128xf32>
    %200 = arith.maximumf %198, %199 : vector<256x128xf32>
    %201 = arith.truncf %200 : vector<256x128xf32> to vector<256x128xbf16>
    %c0_219 = arith.constant 0 : index
    %c0_220 = arith.constant 0 : index
    %202 = vector.load %arg10[%c0_219, %c0_220] : memref<128x128xbf16, #tpu.memory_space<vmem>>, vector<128x128xbf16>
    %cst_221 = arith.constant dense<0.000000e+00> : vector<256x128xf32>
    %203 = tpu.matmul %201, %202, %cst_221 {dimension_numbers = #tpu.dot_dimension_numbers<[1], [0], [0], [1], [0, 0, 1, 1], [], []>} : vector<256x128xbf16>, vector<128x128xbf16>, vector<256x128xf32> -> vector<256x128xf32>
    %c0_222 = arith.constant 0 : index
    %c0_223 = arith.constant 0 : index
    %204 = vector.load %arg11[%c0_222, %c0_223] : memref<1x128xf32, #tpu.memory_space<vmem>>, vector<1x128xf32>
    %205 = vector.broadcast %204 : vector<1x128xf32> to vector<256x128xf32>
    %206 = arith.addf %203, %205 : vector<256x128xf32>
    %c0_224 = arith.constant 0 : index
    %c0_225 = arith.constant 0 : index
    %207 = vector.load %arg15[%c0_224, %c0_225] : memref<256x128xf32, #tpu.memory_space<vmem>>, vector<256x128xf32>
    %208 = arith.addf %206, %207 : vector<256x128xf32>
    %c0_226 = arith.constant 0 : index
    %c0_227 = arith.constant 0 : index
    %209 = vector.load %arg15[%c0_226, %c0_227] : memref<256x128xf32, #tpu.memory_space<vmem>>, vector<256x128xf32>
    tpu.vector_store %arg15[%c0_226, %c0_227], %208 {strides = array<i32>} : memref<256x128xf32, #tpu.memory_space<vmem>>, vector<256x128xf32>,
    %c0_228 = arith.constant 0 : index
    %c0_229 = arith.constant 0 : index
    %210 = vector.load %arg15[%c0_228, %c0_229] : memref<256x128xf32, #tpu.memory_space<vmem>>, vector<256x128xf32>
    %211 = vector.shape_cast %210 : vector<256x128xf32> to vector<16x16x128xf32>
    %c0_230 = arith.constant 0 : index
    %c0_231 = arith.constant 0 : index
    %c0_232 = arith.constant 0 : index
    %c0_233 = arith.constant 0 : index
    %212 = vector.load %arg12[%c0_230, %c0_231, %c0_232, %c0_233] : memref<1x16x16x128xf32, #tpu.memory_space<vmem>>, vector<1x16x16x128xf32>
    %213 = vector.shape_cast %212 : vector<1x16x16x128xf32> to vector<16x16x128xf32>
    %214 = vector.shape_cast %211 : vector<16x16x128xf32> to vector<1x16x16x128xf32>
    tpu.vector_store %arg12[%c0_230, %c0_231, %c0_232, %c0_233], %214 {strides = array<i32>} : memref<1x16x16x128xf32, #tpu.memory_space<vmem>>, vector<1x16x16x128xf32>,
    return
  }
  func.func @transform_0(%arg0: i32) -> (i32, i32, i32, i32) {
    %c0_i32 = arith.constant 0 : i32
    %c0_i32_0 = arith.constant 0 : i32
    %c0_i32_1 = arith.constant 0 : i32
    %c0_i32_2 = arith.constant 0 : i32
    return %arg0, %c0_i32, %c0_i32_0, %c0_i32_1 : i32, i32, i32, i32
  }
  func.func @transform_1(%arg0: i32) -> (i32, i32, i32, i32) {
    %c0_i32 = arith.constant 0 : i32
    %c0_i32_0 = arith.constant 0 : i32
    %c0_i32_1 = arith.constant 0 : i32
    %c0_i32_2 = arith.constant 0 : i32
    %c0_i32_3 = arith.constant 0 : i32
    return %c0_i32, %c0_i32_0, %c0_i32_1, %c0_i32_2 : i32, i32, i32, i32
  }
  func.func @transform_2(%arg0: i32) -> (i32, i32) {
    %c0_i32 = arith.constant 0 : i32
    %c0_i32_0 = arith.constant 0 : i32
    %c0_i32_1 = arith.constant 0 : i32
    return %c0_i32, %c0_i32_0 : i32, i32
  }
  func.func @transform_3(%arg0: i32) -> (i32, i32, i32, i32) {
    %c0_i32 = arith.constant 0 : i32
    %c0_i32_0 = arith.constant 0 : i32
    %c0_i32_1 = arith.constant 0 : i32
    %c0_i32_2 = arith.constant 0 : i32
    %c0_i32_3 = arith.constant 0 : i32
    return %c0_i32, %c0_i32_0, %c0_i32_1, %c0_i32_2 : i32, i32, i32, i32
  }
  func.func @transform_4(%arg0: i32) -> (i32, i32) {
    %c0_i32 = arith.constant 0 : i32
    %c0_i32_0 = arith.constant 0 : i32
    %c0_i32_1 = arith.constant 0 : i32
    return %c0_i32, %c0_i32_0 : i32, i32
  }
  func.func @transform_5(%arg0: i32) -> (i32, i32) {
    %c0_i32 = arith.constant 0 : i32
    %c0_i32_0 = arith.constant 0 : i32
    %c0_i32_1 = arith.constant 0 : i32
    return %c0_i32, %c0_i32_0 : i32, i32
  }
  func.func @transform_6(%arg0: i32) -> (i32, i32) {
    %c0_i32 = arith.constant 0 : i32
    %c0_i32_0 = arith.constant 0 : i32
    %c0_i32_1 = arith.constant 0 : i32
    return %c0_i32, %c0_i32_0 : i32, i32
  }
  func.func @transform_7(%arg0: i32) -> (i32, i32, i32, i32) {
    %c0_i32 = arith.constant 0 : i32
    %c0_i32_0 = arith.constant 0 : i32
    %c0_i32_1 = arith.constant 0 : i32
    %c0_i32_2 = arith.constant 0 : i32
    %c0_i32_3 = arith.constant 0 : i32
    return %c0_i32, %c0_i32_0, %c0_i32_1, %c0_i32_2 : i32, i32, i32, i32
  }
  func.func @transform_8(%arg0: i32) -> (i32, i32) {
    %c0_i32 = arith.constant 0 : i32
    %c0_i32_0 = arith.constant 0 : i32
    %c0_i32_1 = arith.constant 0 : i32
    return %c0_i32, %c0_i32_0 : i32, i32
  }
  func.func @transform_9(%arg0: i32) -> (i32, i32) {
    %c0_i32 = arith.constant 0 : i32
    %c0_i32_0 = arith.constant 0 : i32
    %c0_i32_1 = arith.constant 0 : i32
    return %c0_i32, %c0_i32_0 : i32, i32
  }
  func.func @transform_10(%arg0: i32) -> (i32, i32) {
    %c0_i32 = arith.constant 0 : i32
    %c0_i32_0 = arith.constant 0 : i32
    %c0_i32_1 = arith.constant 0 : i32
    return %c0_i32, %c0_i32_0 : i32, i32
  }
  func.func @transform_11(%arg0: i32) -> (i32, i32, i32, i32) {
    %c0_i32 = arith.constant 0 : i32
    %c0_i32_0 = arith.constant 0 : i32
    %c0_i32_1 = arith.constant 0 : i32
    %c0_i32_2 = arith.constant 0 : i32
    return %arg0, %c0_i32, %c0_i32_0, %c0_i32_1 : i32, i32, i32, i32
  }
}

</mosaic_0001>

<llo_original>
// kernel: tcn_branch_forward.1
$region0: #{tcn_branch_forward.1}
  #allocation0 [shape = 'u32[]', space=smem, size = 0x4, offset = 0x4, fixed_abs, tag = 'smem constant byte address 0x4 - core index']
  #allocation1 [shape = 'u32[72,128]{1,0:T(1,128)}', space=vmem, size = 0x9000, scoped, tag = 'internal scratch']
  #allocation2 [shape = 'bf16[20,32,3]{2,1,0:T(8,128)(2,1)}', space=vmem, size = 0x28000, scoped, tag = 'scratch operand']
  #allocation3 [shape = 'bf16[20,32,128]{2,1,0:T(8,128)(2,1)}', space=vmem, size = 0x28000, scoped, tag = 'scratch operand']
  #allocation4 [shape = 'f32[256,128]{1,0:T(8,128)}', space=vmem, size = 0x20000, scoped, tag = 'scratch operand']
  %s0 = inlined_call_operand.vmem [shape: f32[2,16,16,3], index: 0, kind: input, shape index: {}]
  %s1 = inlined_call_operand.vmem [shape: bf16[3,3,3,128], index: 1, kind: input, shape index: {}]
  %s2 = inlined_call_operand.vmem [shape: f32[1,128], index: 2, kind: input, shape index: {}]
  %s3 = inlined_call_operand.vmem [shape: bf16[3,3,128,128], index: 3, kind: input, shape index: {}]
  %s4 = inlined_call_operand.vmem [shape: f32[1,128], index: 4, kind: input, shape index: {}]
  %s5 = inlined_call_operand.vmem [shape: bf16[128,128], index: 5, kind: input, shape index: {}]
  %s6 = inlined_call_operand.vmem [shape: f32[1,128], index: 6, kind: input, shape index: {}]
  %s7 = inlined_call_operand.vmem [shape: bf16[3,3,128,128], index: 7, kind: input, shape index: {}]
  %s8 = inlined_call_operand.vmem [shape: f32[1,128], index: 8, kind: input, shape index: {}]
  %s9 = inlined_call_operand.vmem [shape: bf16[128,128], index: 9, kind: input, shape index: {}]
  %s10 = inlined_call_operand.vmem [shape: f32[1,128], index: 10, kind: input, shape index: {}]
  %s11 = inlined_call_operand.vmem [shape: f32[2,16,16,128], index: 11, kind: output, shape index: {}]
  %s12 = sld [smem:[#allocation0]]
  $region77: #{tcn_branch_forward.1} parent=0
    _
  %s14 = ssub.s32 1, %s12
  %s15 = scalar_select 0, %s14, %s12
  loop: start=0, step=1, limit=4
  $region2: #{tcn_branch_forward.1} parent=0 // loop_pre_header
    _
  $region3: #{tcn_branch_forward.1} parent=0 // loop_header
    %s17 = sphi 0, %s21
    %p18 = scmp.ge.s32.totalorder %s17, 4
    %s27 = sphi 0, %s29
    %s30 = sphi 0, %s27
    %s31 = sphi 0, %s30
    %s47 = sphi 0, %s31
    %s51 = sphi 0, %s51
    %s53 = sphi 0, %s51
    %s54 = sphi 0, %s53
    %s68 = sphi 0, %s54
    %s72 = sphi 0, %s72
    %s74 = sphi 0, %s72
    %s75 = sphi 0, %s74
    %s89 = sphi 0, %s75
    %s93 = sphi 0, %s93
    %s95 = sphi 0, %s93
    %s96 = sphi 0, %s95
    %s110 = sphi 0, %s96
    %s114 = sphi 0, %s114
    %s116 = sphi 0, %s114
    %s117 = sphi 0, %s116
    %s131 = sphi 0, %s117
    %s135 = sphi 0, %s135
    %s137 = sphi 0, %s135
    %s138 = sphi 0, %s137
    %s152 = sphi 0, %s138
    %s156 = sphi 0, %s156
    %s158 = sphi 0, %s156
    %s159 = sphi 0, %s158
    %s173 = sphi 0, %s159
    %s177 = sphi 0, %s177
    %s179 = sphi 0, %s177
    %s180 = sphi 0, %s179
    %s194 = sphi 0, %s180
    %s198 = sphi 0, %s198
    %s200 = sphi 0, %s198
    %s201 = sphi 0, %s200
    %s215 = sphi 0, %s201
    %s219 = sphi 0, %s219
    %s221 = sphi 0, %s219
    %s222 = sphi 0, %s221
    %s236 = sphi 0, %s222
    %s240 = sphi 0, %s240
    %s242 = sphi 0, %s240
    %s243 = sphi 0, %s242
    %s257 = sphi 0, %s243
    %s263 = sphi 0, %s265
    %s266 = sphi 0, %s263
    %s267 = sphi 0, %s266
    %s283 = sphi 0, %s267
  $region4: #{tcn_branch_forward.1} parent=0 // loop_header_branch
    %20 = sbr.rel (%p18) target = $region8
  $region5: #{tcn_branch_forward.1} parent=0 // loop_body
    %s22 = ssub.s32 %s17, 1
    %s23 = ssub.s32 %s17, 2
    %s24 = sadd.s32 %s17, 1
    %s25 = ssub.s32 %s17, %s24
    %p26 = scmp.eq.s32.totalorder %s25, 0
    %s28 = sadd.s32 %s27, 1
    %s29 = scalar_select %p26, %s27, %s28
    %p32 = pneg %p26
    %p33 = scmp.eq.s32.totalorder %s17, 1
    %p34 = por %p32, %p33
    %p35 = scmp.ne.s32.totalorder %s27, %s30
    %p36 = scmp.eq.s32.totalorder %s17, 0
    %p37 = por %p35, %p36
    %p38 = scmp.ne.s32.totalorder %s27, %s30
    %p39 = scmp.eq.s32.totalorder %s22, 1
    %p40 = por %p38, %p39
    %p41 = scmp.ne.s32.totalorder %s30, %s31
    %p42 = scmp.eq.s32.totalorder %s22, 0
    %p43 = por %p41, %p42
    %p44 = scmp.ne.s32.totalorder %s30, %s31
    %p45 = scmp.eq.s32.totalorder %s23, 1
    %p46 = por %p44, %p45
    %p48 = scmp.ne.s32.totalorder %s31, %s47
    %p49 = scmp.eq.s32.totalorder %s23, 0
    %p50 = por %p48, %p49
    %s52 = sadd.s32 %s51, 1
    %p55 = scmp.eq.s32.totalorder %s17, 1
    %p56 = scmp.ne.s32.totalorder %s51, %s53
    %p57 = scmp.eq.s32.totalorder %s17, 0
    %p58 = por %p56, %p57
    %p59 = scmp.ne.s32.totalorder %s51, %s53
    %p60 = scmp.eq.s32.totalorder %s22, 1
    %p61 = por %p59, %p60
    %p62 = scmp.ne.s32.totalorder %s53, %s54
    %p63 = scmp.eq.s32.totalorder %s22, 0
    %p64 = por %p62, %p63
    %p65 = scmp.ne.s32.totalorder %s53, %s54
    %p66 = scmp.eq.s32.totalorder %s23, 1
    %p67 = por %p65, %p66
    %p69 = scmp.ne.s32.totalorder %s54, %s68
    %p70 = scmp.eq.s32.totalorder %s23, 0
    %p71 = por %p69, %p70
    %s73 = sadd.s32 %s72, 1
    %p76 = scmp.eq.s32.totalorder %s17, 1
    %p77 = scmp.ne.s32.totalorder %s72, %s74
    %p78 = scmp.eq.s32.totalorder %s17, 0
    %p79 = por %p77, %p78
    %p80 = scmp.ne.s32.totalorder %s72, %s74
    %p81 = scmp.eq.s32.totalorder %s22, 1
    %p82 = por %p80, %p81
    %p83 = scmp.ne.s32.totalorder %s74, %s75
    %p84 = scmp.eq.s32.totalorder %s22, 0
    %p85 = por %p83, %p84
    %p86 = scmp.ne.s32.totalorder %s74, %s75
    %p87 = scmp.eq.s32.totalorder %s23, 1
    %p88 = por %p86, %p87
    %p90 = scmp.ne.s32.totalorder %s75, %s89
    %p91 = scmp.eq.s32.totalorder %s23, 0
    %p92 = por %p90, %p91
    %s94 = sadd.s32 %s93, 1
    %p97 = scmp.eq.s32.totalorder %s17, 1
    %p98 = scmp.ne.s32.totalorder %s93, %s95
    %p99 = scmp.eq.s32.totalorder %s17, 0
    %p100 = por %p98, %p99
    %p101 = scmp.ne.s32.totalorder %s93, %s95
    %p102 = scmp.eq.s32.totalorder %s22, 1
    %p103 = por %p101, %p102
    %p104 = scmp.ne.s32.totalorder %s95, %s96
    %p105 = scmp.eq.s32.totalorder %s22, 0
    %p106 = por %p104, %p105
    %p107 = scmp.ne.s32.totalorder %s95, %s96
    %p108 = scmp.eq.s32.totalorder %s23, 1
    %p109 = por %p107, %p108
    %p111 = scmp.ne.s32.totalorder %s96, %s110
    %p112 = scmp.eq.s32.totalorder %s23, 0
    %p113 = por %p111, %p112
    %s115 = sadd.s32 %s114, 1
    %p118 = scmp.eq.s32.totalorder %s17, 1
    %p119 = scmp.ne.s32.totalorder %s114, %s116
    %p120 = scmp.eq.s32.totalorder %s17, 0
    %p121 = por %p119, %p120
    %p122 = scmp.ne.s32.totalorder %s114, %s116
    %p123 = scmp.eq.s32.totalorder %s22, 1
    %p124 = por %p122, %p123
    %p125 = scmp.ne.s32.totalorder %s116, %s117
    %p126 = scmp.eq.s32.totalorder %s22, 0
    %p127 = por %p125, %p126
    %p128 = scmp.ne.s32.totalorder %s116, %s117
    %p129 = scmp.eq.s32.totalorder %s23, 1
    %p130 = por %p128, %p129
    %p132 = scmp.ne.s32.totalorder %s117, %s131
    %p133 = scmp.eq.s32.totalorder %s23, 0
    %p134 = por %p132, %p133
    %s136 = sadd.s32 %s135, 1
    %p139 = scmp.eq.s32.totalorder %s17, 1
    %p140 = scmp.ne.s32.totalorder %s135, %s137
    %p141 = scmp.eq.s32.totalorder %s17, 0
    %p142 = por %p140, %p141
    %p143 = scmp.ne.s32.totalorder %s135, %s137
    %p144 = scmp.eq.s32.totalorder %s22, 1
    %p145 = por %p143, %p144
    %p146 = scmp.ne.s32.totalorder %s137, %s138
    %p147 = scmp.eq.s32.totalorder %s22, 0
    %p148 = por %p146, %p147
    %p149 = scmp.ne.s32.totalorder %s137, %s138
    %p150 = scmp.eq.s32.totalorder %s23, 1
    %p151 = por %p149, %p150
    %p153 = scmp.ne.s32.totalorder %s138, %s152
    %p154 = scmp.eq.s32.totalorder %s23, 0
    %p155 = por %p153, %p154
    %s157 = sadd.s32 %s156, 1
    %p160 = scmp.eq.s32.totalorder %s17, 1
    %p161 = scmp.ne.s32.totalorder %s156, %s158
    %p162 = scmp.eq.s32.totalorder %s17, 0
    %p163 = por %p161, %p162
    %p164 = scmp.ne.s32.totalorder %s156, %s158
    %p165 = scmp.eq.s32.totalorder %s22, 1
    %p166 = por %p164, %p165
    %p167 = scmp.ne.s32.totalorder %s158, %s159
    %p168 = scmp.eq.s32.totalorder %s22, 0
    %p169 = por %p167, %p168
    %p170 = scmp.ne.s32.totalorder %s158, %s159
    %p171 = scmp.eq.s32.totalorder %s23, 1
    %p172 = por %p170, %p171
    %p174 = scmp.ne.s32.totalorder %s159, %s173
    %p175 = scmp.eq.s32.totalorder %s23, 0
    %p176 = por %p174, %p175
    %s178 = sadd.s32 %s177, 1
    %p181 = scmp.eq.s32.totalorder %s17, 1
    %p182 = scmp.ne.s32.totalorder %s177, %s179
    %p183 = scmp.eq.s32.totalorder %s17, 0
    %p184 = por %p182, %p183
    %p185 = scmp.ne.s32.totalorder %s177, %s179
    %p186 = scmp.eq.s32.totalorder %s22, 1
    %p187 = por %p185, %p186
    %p188 = scmp.ne.s32.totalorder %s179, %s180
    %p189 = scmp.eq.s32.totalorder %s22, 0
    %p190 = por %p188, %p189
    %p191 = scmp.ne.s32.totalorder %s179, %s180
    %p192 = scmp.eq.s32.totalorder %s23, 1
    %p193 = por %p191, %p192
    %p195 = scmp.ne.s32.totalorder %s180, %s194
    %p196 = scmp.eq.s32.totalorder %s23, 0
    %p197 = por %p195, %p196
    %s199 = sadd.s32 %s198, 1
    %p202 = scmp.eq.s32.totalorder %s17, 1
    %p203 = scmp.ne.s32.totalorder %s198, %s200
    %p204 = scmp.eq.s32.totalorder %s17, 0
    %p205 = por %p203, %p204
    %p206 = scmp.ne.s32.totalorder %s198, %s200
    %p207 = scmp.eq.s32.totalorder %s22, 1
    %p208 = por %p206, %p207
    %p209 = scmp.ne.s32.totalorder %s200, %s201
    %p210 = scmp.eq.s32.totalorder %s22, 0
    %p211 = por %p209, %p210
    %p212 = scmp.ne.s32.totalorder %s200, %s201
    %p213 = scmp.eq.s32.totalorder %s23, 1
    %p214 = por %p212, %p213
    %p216 = scmp.ne.s32.totalorder %s201, %s215
    %p217 = scmp.eq.s32.totalorder %s23, 0
    %p218 = por %p216, %p217
    %s220 = sadd.s32 %s219, 1
    %p223 = scmp.eq.s32.totalorder %s17, 1
    %p224 = scmp.ne.s32.totalorder %s219, %s221
    %p225 = scmp.eq.s32.totalorder %s17, 0
    %p226 = por %p224, %p225
    %p227 = scmp.ne.s32.totalorder %s219, %s221
    %p228 = scmp.eq.s32.totalorder %s22, 1
    %p229 = por %p227, %p228
    %p230 = scmp.ne.s32.totalorder %s221, %s222
    %p231 = scmp.eq.s32.totalorder %s22, 0
    %p232 = por %p230, %p231
    %p233 = scmp.ne.s32.totalorder %s221, %s222
    %p234 = scmp.eq.s32.totalorder %s23, 1
    %p235 = por %p233, %p234
    %p237 = scmp.ne.s32.totalorder %s222, %s236
    %p238 = scmp.eq.s32.totalorder %s23, 0
    %p239 = por %p237, %p238
    %s241 = sadd.s32 %s240, 1
    %p244 = scmp.eq.s32.totalorder %s17, 1
    %p245 = scmp.ne.s32.totalorder %s240, %s242
    %p246 = scmp.eq.s32.totalorder %s17, 0
    %p247 = por %p245, %p246
    %p248 = scmp.ne.s32.totalorder %s240, %s242
    %p249 = scmp.eq.s32.totalorder %s22, 1
    %p250 = por %p248, %p249
    %p251 = scmp.ne.s32.totalorder %s242, %s243
    %p252 = scmp.eq.s32.totalorder %s22, 0
    %p253 = por %p251, %p252
    %p254 = scmp.ne.s32.totalorder %s242, %s243
    %p255 = scmp.eq.s32.totalorder %s23, 1
    %p256 = por %p254, %p255
    %p258 = scmp.ne.s32.totalorder %s243, %s257
    %p259 = scmp.eq.s32.totalorder %s23, 0
    %p260 = por %p258, %p259
    %s261 = ssub.s32 %s17, %s24
    %p262 = scmp.eq.s32.totalorder %s261, 0
    %s264 = sadd.s32 %s263, 1
    %s265 = scalar_select %p262, %s263, %s264
    %p268 = pneg %p262
    %p269 = scmp.eq.s32.totalorder %s17, 1
    %p270 = por %p268, %p269
    %p271 = scmp.ne.s32.totalorder %s263, %s266
    %p272 = scmp.eq.s32.totalorder %s17, 0
    %p273 = por %p271, %p272
    %p274 = scmp.ne.s32.totalorder %s263, %s266
    %p275 = scmp.eq.s32.totalorder %s22, 1
    %p276 = por %p274, %p275
    %p277 = scmp.ne.s32.totalorder %s266, %s267
    %p278 = scmp.eq.s32.totalorder %s22, 0
    %p279 = por %p277, %p278
    %p280 = scmp.ne.s32.totalorder %s266, %s267
    %p281 = scmp.eq.s32.totalorder %s23, 1
    %p282 = por %p280, %p281
    %p284 = scmp.ne.s32.totalorder %s267, %s283
    %p285 = scmp.eq.s32.totalorder %s23, 0
    %p286 = por %p284, %p285
    %p287 = scmp.le.s32.totalorder 1, %s17
    %p288 = scmp.lt.s32.totalorder %s17, 3
    %p289 = pnand %p287, %p288
    %p290 = pneg %p289
    // Predicated region
    $region9: #{tcn_branch_forward.1} parent=5 // pred_check
      _
    $region10: #{tcn_branch_forward.1} parent=5 // pred_check_branch
      %292 = sbr.rel (%p289) target = $region12
    $region11: #{tcn_branch_forward.1} parent=5 // pred_region
      %s293 = ssub.s32 %s17, 1
      // Predicated region
      $region13: #{tcn_branch_forward.1} parent=11 // pred_check
        %p294 = pneg %p64
      $region14: #{tcn_branch_forward.1} parent=11 // pred_check_branch
        %296 = sbr.rel (%p294) target = $region16
      $region15: #{tcn_branch_forward.1} parent=11 // pred_region
        _
      $region16: #{tcn_branch_forward.1} parent=11 // pred_fallthru
        _
      // Predicated region
      $region17: #{tcn_branch_forward.1} parent=11 // pred_check
        %p297 = pneg %p85
      $region18: #{tcn_branch_forward.1} parent=11 // pred_check_branch
        %299 = sbr.rel (%p297) target = $region20
      $region19: #{tcn_branch_forward.1} parent=11 // pred_region
        _
      $region20: #{tcn_branch_forward.1} parent=11 // pred_fallthru
        _
      // Predicated region
      $region21: #{tcn_branch_forward.1} parent=11 // pred_check
        %p300 = pneg %p106
      $region22: #{tcn_branch_forward.1} parent=11 // pred_check_branch
        %302 = sbr.rel (%p300) target = $region24
      $region23: #{tcn_branch_forward.1} parent=11 // pred_region
        _
      $region24: #{tcn_branch_forward.1} parent=11 // pred_fallthru
        _
      // Predicated region
      $region25: #{tcn_branch_forward.1} parent=11 // pred_check
        %p303 = pneg %p127
      $region26: #{tcn_branch_forward.1} parent=11 // pred_check_branch
        %305 = sbr.rel (%p303) target = $region28
      $region27: #{tcn_branch_forward.1} parent=11 // pred_region
        _
      $region28: #{tcn_branch_forward.1} parent=11 // pred_fallthru
        _
      // Predicated region
      $region29: #{tcn_branch_forward.1} parent=11 // pred_check
        %p306 = pneg %p148
      $region30: #{tcn_branch_forward.1} parent=11 // pred_check_branch
        %308 = sbr.rel (%p306) target = $region32
      $region31: #{tcn_branch_forward.1} parent=11 // pred_region
        _
      $region32: #{tcn_branch_forward.1} parent=11 // pred_fallthru
        _
      // Predicated region
      $region33: #{tcn_branch_forward.1} parent=11 // pred_check
        %p309 = pneg %p169
      $region34: #{tcn_branch_forward.1} parent=11 // pred_check_branch
        %311 = sbr.rel (%p309) target = $region36
      $region35: #{tcn_branch_forward.1} parent=11 // pred_region
        _
      $region36: #{tcn_branch_forward.1} parent=11 // pred_fallthru
        _
      // Predicated region
      $region37: #{tcn_branch_forward.1} parent=11 // pred_check
        %p312 = pneg %p190
      $region38: #{tcn_branch_forward.1} parent=11 // pred_check_branch
        %314 = sbr.rel (%p312) target = $region40
      $region39: #{tcn_branch_forward.1} parent=11 // pred_region
        _
      $region40: #{tcn_branch_forward.1} parent=11 // pred_fallthru
        _
      // Predicated region
      $region41: #{tcn_branch_forward.1} parent=11 // pred_check
        %p315 = pneg %p211
      $region42: #{tcn_branch_forward.1} parent=11 // pred_check_branch
        %317 = sbr.rel (%p315) target = $region44
      $region43: #{tcn_branch_forward.1} parent=11 // pred_region
        _
      $region44: #{tcn_branch_forward.1} parent=11 // pred_fallthru
        _
      // Predicated region
      $region45: #{tcn_branch_forward.1} parent=11 // pred_check
        %p318 = pneg %p232
      $region46: #{tcn_branch_forward.1} parent=11 // pred_check_branch
        %320 = sbr.rel (%p318) target = $region48
      $region47: #{tcn_branch_forward.1} parent=11 // pred_region
        _
      $region48: #{tcn_branch_forward.1} parent=11 // pred_fallthru
        _
      // Predicated region
      $region49: #{tcn_branch_forward.1} parent=11 // pred_check
        %p321 = pneg %p253
      $region50: #{tcn_branch_forward.1} parent=11 // pred_check_branch
        %323 = sbr.rel (%p321) target = $region52
      $region51: #{tcn_branch_forward.1} parent=11 // pred_region
        _
      $region52: #{tcn_branch_forward.1} parent=11 // pred_fallthru
        _
    $region12: #{tcn_branch_forward.1} parent=5 // pred_fallthru
      _
    %p324 = scmp.lt.s32.totalorder %s17, 2
    // Predicated region
    $region53: #{tcn_branch_forward.1} parent=5 // pred_check
      %p325 = pneg %p324
    $region54: #{tcn_branch_forward.1} parent=5 // pred_check_branch
      %327 = sbr.rel (%p325) target = $region56
    $region55: #{tcn_branch_forward.1} parent=5 // pred_region
      // Predicated region
      $region57: #{tcn_branch_forward.1} parent=55 // pred_check
        %p328 = pneg %p37
      $region58: #{tcn_branch_forward.1} parent=55 // pred_check_branch
        %330 = sbr.rel (%p328) target = $region60
      $region59: #{tcn_branch_forward.1} parent=55 // pred_region
        %p331 = scmp.lt.s32.totalorder %s17, 1
        %s332 = scalar_select %p331, %s17, 1
        %s333 = smul.addr %s332, 32
        %s334 = smul.addr %s333, 8
        %s335 = scalar_lea.vmem %s0, %s334
      $region60: #{tcn_branch_forward.1} parent=55 // pred_fallthru
        _
    $region56: #{tcn_branch_forward.1} parent=5 // pred_fallthru
      _
    %p336 = scmp.le.s32.totalorder 1, %s17
    %p337 = scmp.lt.s32.totalorder %s17, 3
    %p338 = pnand %p336, %p337
    %p339 = pneg %p338
    // Predicated region
    $region61: #{tcn_branch_forward.1} parent=5 // pred_check
      _
    $region62: #{tcn_branch_forward.1} parent=5 // pred_check_branch
      %341 = sbr.rel (%p338) target = $region64
    $region63: #{tcn_branch_forward.1} parent=5 // pred_region
      %s342 = ssub.s32 %s17, 1
      %p343 = scmp.lt.s32.totalorder %s22, 1
      %s344 = scalar_select %p343, %s22, 1
      %s345 = smul.addr %s344, 32
      %s346 = smul.addr %s345, 8
      %s347 = scalar_lea.vmem %s0, %s346
      %p348 = pneg %p43
      %p349 = pneg %p40
      %p350 = pneg %p64
      %p351 = pneg %p61
      %p352 = pneg %p85
      %p353 = pneg %p82
      %p354 = pneg %p106
      %p355 = pneg %p103
      %p356 = pneg %p127
      %p357 = pneg %p124
      %p358 = pneg %p148
      %p359 = pneg %p145
      %p360 = pneg %p169
      %p361 = pneg %p166
      %p362 = pneg %p190
      %p363 = pneg %p187
      %p364 = pneg %p211
      %p365 = pneg %p208
      %p366 = pneg %p232
      %p367 = pneg %p229
      %p368 = pneg %p253
      %p369 = pneg %p250
      %p370 = pneg %p279
      %p371 = pneg %p276
      %p372 = scmp.lt.s32.totalorder %s22, 1
      %s373 = scalar_select %p372, %s22, 1
      %s374 = smul.addr %s373, 32
      %s375 = smul.addr %s374, 8
      %s376 = scalar_lea.vmem %s11, %s375
      %p377 = scmp.lt.s32.totalorder %s22, 1
      %s378 = scalar_select %p377, %s22, 1
      %s379 = smul.addr %s378, 32
      %s380 = smul.addr %s379, 8
      %s381 = scalar_lea.vmem %s0, %s380
      %p382 = scmp.lt.s32.totalorder %s22, 1
      %s383 = scalar_select %p382, %s22, 1
      %s384 = smul.addr %s383, 32
      %s385 = smul.addr %s384, 8
      %s386 = scalar_lea.vmem %s11, %s385
      %vm388 = vcmask 19456
      %389 = vst.msk [vmem:[#allocation2] sm:$0xf] %vm388, 0
      %390 = vst.msk [vmem:[#allocation2 + $0x4] sm:$0xf] %vm388, 0
      %391 = vst.msk [vmem:[#allocation2 + $0x8] sm:$0xf] %vm388, 0
      %392 = vst.msk [vmem:[#allocation2 + $0xc] sm:$0xf] %vm388, 0
      %393 = vst.msk [vmem:[#allocation2 + $0x10] sm:$0xf] %vm388, 0
      %394 = vst.msk [vmem:[#allocation2 + $0x14] sm:$0xf] %vm388, 0
      %395 = vst.msk [vmem:[#allocation2 + $0x18] sm:$0xf] %vm388, 0
      %396 = vst.msk [vmem:[#allocation2 + $0x1c] sm:$0xf] %vm388, 0
      %s397 = scalar_lea.vmem [#allocation2], 288
      %398 = vst.msk [vmem:[%s397] sm:$0xf] %vm388, 0
      %399 = vst.msk [vmem:[%s397 + $0x4] sm:$0xf] %vm388, 0
      %400 = vst.msk [vmem:[%s397 + $0x8] sm:$0xf] %vm388, 0
      %401 = vst.msk [vmem:[%s397 + $0xc] sm:$0xf] %vm388, 0
      %402 = vst.msk [vmem:[%s397 + $0x10] sm:$0xf] %vm388, 0
      %403 = vst.msk [vmem:[%s397 + $0x14] sm:$0xf] %vm388, 0
      %404 = vst.msk [vmem:[%s397 + $0x18] sm:$0xf] %vm388, 0
      %405 = vst.msk [vmem:[%s397 + $0x1c] sm:$0xf] %vm388, 0
      %s406 = scalar_lea.vmem [#allocation2], 32
      %407 = vst.msk [vmem:[%s406] sm:$0xf] %vm388, 0
      %408 = vst.msk [vmem:[%s406 + $0x10] sm:$0xf] %vm388, 0
      %409 = vst.msk [vmem:[%s406 + $0x20] sm:$0xf] %vm388, 0
      %410 = vst.msk [vmem:[%s406 + $0x30] sm:$0xf] %vm388, 0
      %411 = vst.msk [vmem:[%s406 + $0x40] sm:$0xf] %vm388, 0
      %412 = vst.msk [vmem:[%s406 + $0x50] sm:$0xf] %vm388, 0
      %413 = vst.msk [vmem:[%s406 + $0x60] sm:$0xf] %vm388, 0
      %414 = vst.msk [vmem:[%s406 + $0x70] sm:$0xf] %vm388, 0
      %415 = vst.msk [vmem:[%s406 + $0x80] sm:$0xf] %vm388, 0
      %416 = vst.msk [vmem:[%s406 + $0x90] sm:$0xf] %vm388, 0
      %417 = vst.msk [vmem:[%s406 + $0xa0] sm:$0xf] %vm388, 0
      %418 = vst.msk [vmem:[%s406 + $0xb0] sm:$0xf] %vm388, 0
      %419 = vst.msk [vmem:[%s406 + $0xc0] sm:$0xf] %vm388, 0
      %420 = vst.msk [vmem:[%s406 + $0xd0] sm:$0xf] %vm388, 0
      %421 = vst.msk [vmem:[%s406 + $0xe0] sm:$0xf] %vm388, 0
      %422 = vst.msk [vmem:[%s406 + $0xf0] sm:$0xf] %vm388, 0
      %423 = vst.msk [vmem:[%s406 + $0xc] sm:$0xf] %vm388, 0
      %424 = vst.msk [vmem:[%s406 + $0x1c] sm:$0xf] %vm388, 0
      %425 = vst.msk [vmem:[%s406 + $0x2c] sm:$0xf] %vm388, 0
      %426 = vst.msk [vmem:[%s406 + $0x3c] sm:$0xf] %vm388, 0
      %427 = vst.msk [vmem:[%s406 + $0x4c] sm:$0xf] %vm388, 0
      %428 = vst.msk [vmem:[%s406 + $0x5c] sm:$0xf] %vm388, 0
      %429 = vst.msk [vmem:[%s406 + $0x6c] sm:$0xf] %vm388, 0
      %430 = vst.msk [vmem:[%s406 + $0x7c] sm:$0xf] %vm388, 0
      %431 = vst.msk [vmem:[%s406 + $0x8c] sm:$0xf] %vm388, 0
      %432 = vst.msk [vmem:[%s406 + $0x9c] sm:$0xf] %vm388, 0
      %433 = vst.msk [vmem:[%s406 + $0xac] sm:$0xf] %vm388, 0
      %434 = vst.msk [vmem:[%s406 + $0xbc] sm:$0xf] %vm388, 0
      %435 = vst.msk [vmem:[%s406 + $0xcc] sm:$0xf] %vm388, 0
      %436 = vst.msk [vmem:[%s406 + $0xdc] sm:$0xf] %vm388, 0
      %437 = vst.msk [vmem:[%s406 + $0xec] sm:$0xf] %vm388, 0
      %438 = vst.msk [vmem:[%s406 + $0xfc] sm:$0xf] %vm388, 0
      %v439 = vld [vmem:[%s381] sm:$0xff]
      %v440 = vld [vmem:[%s381 + $0x8] sm:$0xff]
      %v441 = vld [vmem:[%s381 + $0x10] sm:$0xff]
      %v442 = vld [vmem:[%s381 + $0x18] sm:$0xff]
      %v443 = vld [vmem:[%s381 + $0x20] sm:$0xff]
      %v444 = vld [vmem:[%s381 + $0x28] sm:$0xff]
      %v445 = vld [vmem:[%s381 + $0x30] sm:$0xff]
      %v446 = vld [vmem:[%s381 + $0x38] sm:$0xff]
      %v447 = vld [vmem:[%s381 + $0x40] sm:$0xff]
      %v448 = vld [vmem:[%s381 + $0x48] sm:$0xff]
      %v449 = vld [vmem:[%s381 + $0x50] sm:$0xff]
      %v450 = vld [vmem:[%s381 + $0x58] sm:$0xff]
      %v451 = vld [vmem:[%s381 + $0x60] sm:$0xff]
      %v452 = vld [vmem:[%s381 + $0x68] sm:$0xff]
      %v453 = vld [vmem:[%s381 + $0x70] sm:$0xff]
      %v454 = vld [vmem:[%s381 + $0x78] sm:$0xff]
      %v455 = vld [vmem:[%s381 + $0x80] sm:$0xff]
      %v456 = vld [vmem:[%s381 + $0x88] sm:$0xff]
      %v457 = vld [vmem:[%s381 + $0x90] sm:$0xff]
      %v458 = vld [vmem:[%s381 + $0x98] sm:$0xff]
      %v459 = vld [vmem:[%s381 + $0xa0] sm:$0xff]
      %v460 = vld [vmem:[%s381 + $0xa8] sm:$0xff]
      %v461 = vld [vmem:[%s381 + $0xb0] sm:$0xff]
      %v462 = vld [vmem:[%s381 + $0xb8] sm:$0xff]
      %v463 = vld [vmem:[%s381 + $0xc0] sm:$0xff]
      %v464 = vld [vmem:[%s381 + $0xc8] sm:$0xff]
      %v465 = vld [vmem:[%s381 + $0xd0] sm:$0xff]
      %v466 = vld [vmem:[%s381 + $0xd8] sm:$0xff]
      %v467 = vld [vmem:[%s381 + $0xe0] sm:$0xff]
      %v468 = vld [vmem:[%s381 + $0xe8] sm:$0xff]
      %v469 = vld [vmem:[%s381 + $0xf0] sm:$0xff]
      %v470 = vld [vmem:[%s381 + $0xf8] sm:$0xff]
      %v471 = vpack.c.bf16 %v439, %v439
      %v472 = vpack.c.bf16 %v440, %v440
      %v473 = vpack.c.bf16 %v441, %v441
      %v474 = vpack.c.bf16 %v442, %v442
      %v475 = vpack.c.bf16 %v443, %v443
      %v476 = vpack.c.bf16 %v444, %v444
      %v477 = vpack.c.bf16 %v445, %v445
      %v478 = vpack.c.bf16 %v446, %v446
      %v479 = vpack.c.bf16 %v447, %v447
      %v480 = vpack.c.bf16 %v448, %v448
      %v481 = vpack.c.bf16 %v449, %v449
      %v482 = vpack.c.bf16 %v450, %v450
      %v483 = vpack.c.bf16 %v451, %v451
      %v484 = vpack.c.bf16 %v452, %v452
      %v485 = vpack.c.bf16 %v453, %v453
      %v486 = vpack.c.bf16 %v454, %v454
      %v487 = vpack.c.bf16 %v455, %v455
      %v488 = vpack.c.bf16 %v456, %v456
      %v489 = vpack.c.bf16 %v457, %v457
      %v490 = vpack.c.bf16 %v458, %v458
      %v491 = vpack.c.bf16 %v459, %v459
      %v492 = vpack.c.bf16 %v460, %v460
      %v493 = vpack.c.bf16 %v461, %v461
      %v494 = vpack.c.bf16 %v462, %v462
      %v495 = vpack.c.bf16 %v463, %v463
      %v496 = vpack.c.bf16 %v464, %v464
      %v497 = vpack.c.bf16 %v465, %v465
      %v498 = vpack.c.bf16 %v466, %v466
      %v499 = vpack.c.bf16 %v467, %v467
      %v500 = vpack.c.bf16 %v468, %v468
      %v501 = vpack.c.bf16 %v469, %v469
      %v502 = vpack.c.bf16 %v470, %v470
      %503 = vst.msk [vmem:[%s406 + $0x4] sm:$0xf] %vm388, %v471
      %504 = vst.msk [vmem:[%s406 + $0x8] sm:$0xf] %vm388, %v472
      %505 = vst.msk [vmem:[%s406 + $0x14] sm:$0xf] %vm388, %v473
      %506 = vst.msk [vmem:[%s406 + $0x18] sm:$0xf] %vm388, %v474
      %507 = vst.msk [vmem:[%s406 + $0x24] sm:$0xf] %vm388, %v475
      %508 = vst.msk [vmem:[%s406 + $0x28] sm:$0xf] %vm388, %v476
      %509 = vst.msk [vmem:[%s406 + $0x34] sm:$0xf] %vm388, %v477
      %510 = vst.msk [vmem:[%s406 + $0x38] sm:$0xf] %vm388, %v478
      %511 = vst.msk [vmem:[%s406 + $0x44] sm:$0xf] %vm388, %v479
      %512 = vst.msk [vmem:[%s406 + $0x48] sm:$0xf] %vm388, %v480
      %513 = vst.msk [vmem:[%s406 + $0x54] sm:$0xf] %vm388, %v481
      %514 = vst.msk [vmem:[%s406 + $0x58] sm:$0xf] %vm388, %v482
      %515 = vst.msk [vmem:[%s406 + $0x64] sm:$0xf] %vm388, %v483
      %516 = vst.msk [vmem:[%s406 + $0x68] sm:$0xf] %vm388, %v484
      %517 = vst.msk [vmem:[%s406 + $0x74] sm:$0xf] %vm388, %v485
      %518 = vst.msk [vmem:[%s406 + $0x78] sm:$0xf] %vm388, %v486
      %519 = vst.msk [vmem:[%s406 + $0x84] sm:$0xf] %vm388, %v487
      %520 = vst.msk [vmem:[%s406 + $0x88] sm:$0xf] %vm388, %v488
      %521 = vst.msk [vmem:[%s406 + $0x94] sm:$0xf] %vm388, %v489
      %522 = vst.msk [vmem:[%s406 + $0x98] sm:$0xf] %vm388, %v490
      %523 = vst.msk [vmem:[%s406 + $0xa4] sm:$0xf] %vm388, %v491
      %524 = vst.msk [vmem:[%s406 + $0xa8] sm:$0xf] %vm388, %v492
      %525 = vst.msk [vmem:[%s406 + $0xb4] sm:$0xf] %vm388, %v493
      %526 = vst.msk [vmem:[%s406 + $0xb8] sm:$0xf] %vm388, %v494
      %527 = vst.msk [vmem:[%s406 + $0xc4] sm:$0xf] %vm388, %v495
      %528 = vst.msk [vmem:[%s406 + $0xc8] sm:$0xf] %vm388, %v496
      %529 = vst.msk [vmem:[%s406 + $0xd4] sm:$0xf] %vm388, %v497
      %530 = vst.msk [vmem:[%s406 + $0xd8] sm:$0xf] %vm388, %v498
      %531 = vst.msk [vmem:[%s406 + $0xe4] sm:$0xf] %vm388, %v499
      %532 = vst.msk [vmem:[%s406 + $0xe8] sm:$0xf] %vm388, %v500
      %533 = vst.msk [vmem:[%s406 + $0xf4] sm:$0xf] %vm388, %v501
      %534 = vst.msk [vmem:[%s406 + $0xf8] sm:$0xf] %vm388, %v502
      %v535 = vld [vmem:[#allocation2 + $0x10] sm:$0x8]
      %v536 = vld [vmem:[#allocation2 + $0x14] sm:$0xf]
      %v537 = vld [vmem:[#allocation2 + $0x18] sm:$0xf]
      %v538 = vld [vmem:[#allocation2 + $0x20] sm:$0x8]
      %v539 = vld [vmem:[#allocation2 + $0x24] sm:$0xf]
      %v540 = vld [vmem:[#allocation2 + $0x28] sm:$0xf]
      %v541 = vld [vmem:[#allocation2 + $0x30] sm:$0x8]
      %v542 = vld [vmem:[#allocation2 + $0x34] sm:$0xf]
      %v543 = vld [vmem:[#allocation2 + $0x38] sm:$0xf]
      %v544 = vld [vmem:[#allocation2 + $0x40] sm:$0x8]
      %v545 = vld [vmem:[#allocation2 + $0x44] sm:$0xf]
      %v546 = vld [vmem:[#allocation2 + $0x48] sm:$0xf]
      %v547 = vld [vmem:[#allocation2 + $0x50] sm:$0x8]
      %v548 = vld [vmem:[#allocation2 + $0x54] sm:$0xf]
      %v549 = vld [vmem:[#allocation2 + $0x58] sm:$0xf]
      %v550 = vld [vmem:[#allocation2 + $0x60] sm:$0x8]
      %v551 = vld [vmem:[#allocation2 + $0x64] sm:$0xf]
      %v552 = vld [vmem:[#allocation2 + $0x68] sm:$0xf]
      %v553 = vld [vmem:[#allocation2 + $0x70] sm:$0x8]
      %v554 = vld [vmem:[#allocation2 + $0x74] sm:$0xf]
      %v555 = vld [vmem:[#allocation2 + $0x78] sm:$0xf]
      %v556 = vld [vmem:[#allocation2 + $0x80] sm:$0x8]
      %v557 = vld [vmem:[#allocation2 + $0x84] sm:$0xf]
      %v558 = vld [vmem:[#allocation2 + $0x88] sm:$0xf]
      %v559 = vld [vmem:[#allocation2 + $0x90] sm:$0x8]
      %v560 = vld [vmem:[#allocation2 + $0x94] sm:$0xf]
      %v561 = vld [vmem:[#allocation2 + $0x98] sm:$0xf]
      %v562 = vld [vmem:[#allocation2 + $0xa0] sm:$0x8]
      %v563 = vld [vmem:[#allocation2 + $0xa4] sm:$0xf]
      %v564 = vld [vmem:[#allocation2 + $0xa8] sm:$0xf]
      %v565 = vld [vmem:[#allocation2 + $0xb0] sm:$0x8]
      %v566 = vld [vmem:[#allocation2 + $0xb4] sm:$0xf]
      %v567 = vld [vmem:[#allocation2 + $0xb8] sm:$0xf]
      %v568 = vld [vmem:[#allocation2 + $0xc0] sm:$0x8]
      %v569 = vld [vmem:[#allocation2 + $0xc4] sm:$0xf]
      %v570 = vld [vmem:[#allocation2 + $0xc8] sm:$0xf]
      %v571 = vld [vmem:[#allocation2 + $0xd0] sm:$0x8]
      %v572 = vld [vmem:[#allocation2 + $0xd4] sm:$0xf]
      %v573 = vld [vmem:[#allocation2 + $0xd8] sm:$0xf]
      %v574 = vld [vmem:[#allocation2 + $0xe0] sm:$0x8]
      %v575 = vld [vmem:[#allocation2 + $0xe4] sm:$0xf]
      %v576 = vld [vmem:[#allocation2 + $0xe8] sm:$0xf]
      %v577 = vld [vmem:[#allocation2 + $0xf0] sm:$0x8]
      %v578 = vld [vmem:[#allocation2 + $0xf4] sm:$0xf]
      %v579 = vld [vmem:[#allocation2 + $0xf8] sm:$0xf]
      %v580 = vld [vmem:[#allocation2 + $0x100] sm:$0x8]
      %v581 = vld [vmem:[#allocation2 + $0x104] sm:$0xf]
      %v582 = vld [vmem:[#allocation2 + $0x108] sm:$0xf]
      %v583 = vld [vmem:[#allocation2 + $0x110] sm:$0x8]
      %v584 = vld [vmem:[#allocation2 + $0x114] sm:$0xf]
      %v585 = vld [vmem:[#allocation2 + $0x118] sm:$0xf]
      %v586 = vld [vmem:[#allocation2 + $0x120] sm:$0x8]
      %v587 = vld [vmem:[#allocation2 + $0x124] sm:$0xf]
      %v588 = vld [vmem:[#allocation2 + $0x128] sm:$0xf]
      %vm589 = vsmask.f32 256
      %vm590 = vsmask.f32 4368
      %vm591 = vmor %vm589, %vm590
      %v593 = vshrl.u32 %v535, 16
      %v595 = vrot.slane %v593, 7
      %v596 = vrot.slane %v595, 4
      %v598 = vshrl.u32 %v536, 16
      %v600 = vrot.slane %v598, 7
      %v601 = vshll.u32 %v536, 16
      %v603 = vor.u32 %v600, %v601
      %v604 = vsel %vm591, %v596, %v603
      %v605 = vrot.slane %v600, 4
      %v607 = vshrl.u32 %v537, 16
      %v609 = vrot.slane %v607, 7
      %v610 = vshll.u32 %v537, 16
      %v612 = vor.u32 %v609, %v610
      %v613 = vsel %vm591, %v605, %v612
      %v615 = vshrl.u32 %v538, 16
      %v617 = vrot.slane %v615, 7
      %v618 = vrot.slane %v617, 4
      %v620 = vshrl.u32 %v539, 16
      %v622 = vrot.slane %v620, 7
      %v623 = vshll.u32 %v539, 16
      %v625 = vor.u32 %v622, %v623
      %v626 = vsel %vm591, %v618, %v625
      %v627 = vrot.slane %v622, 4
      %v629 = vshrl.u32 %v540, 16
      %v631 = vrot.slane %v629, 7
      %v632 = vshll.u32 %v540, 16
      %v634 = vor.u32 %v631, %v632
      %v635 = vsel %vm591, %v627, %v634
      %v637 = vshrl.u32 %v541, 16
      %v639 = vrot.slane %v637, 7
      %v640 = vrot.slane %v639, 4
      %v642 = vshrl.u32 %v542, 16
      %v644 = vrot.slane %v642, 7
      %v645 = vshll.u32 %v542, 16
      %v647 = vor.u32 %v644, %v645
      %v648 = vsel %vm591, %v640, %v647
      %v649 = vrot.slane %v644, 4
      %v651 = vshrl.u32 %v543, 16
      %v653 = vrot.slane %v651, 7
      %v654 = vshll.u32 %v543, 16
      %v656 = vor.u32 %v653, %v654
      %v657 = vsel %vm591, %v649, %v656
      %v659 = vshrl.u32 %v544, 16
      %v661 = vrot.slane %v659, 7
      %v662 = vrot.slane %v661, 4
      %v664 = vshrl.u32 %v545, 16
      %v666 = vrot.slane %v664, 7
      %v667 = vshll.u32 %v545, 16
      %v669 = vor.u32 %v666, %v667
      %v670 = vsel %vm591, %v662, %v669
      %v671 = vrot.slane %v666, 4
      %v673 = vshrl.u32 %v546, 16
      %v675 = vrot.slane %v673, 7
      %v676 = vshll.u32 %v546, 16
      %v678 = vor.u32 %v675, %v676
      %v679 = vsel %vm591, %v671, %v678
      %v681 = vshrl.u32 %v547, 16
      %v683 = vrot.slane %v681, 7
      %v684 = vrot.slane %v683, 4
      %v686 = vshrl.u32 %v548, 16
      %v688 = vrot.slane %v686, 7
      %v689 = vshll.u32 %v548, 16
      %v691 = vor.u32 %v688, %v689
      %v692 = vsel %vm591, %v684, %v691
      %v693 = vrot.slane %v688, 4
      %v695 = vshrl.u32 %v549, 16
      %v697 = vrot.slane %v695, 7
      %v698 = vshll.u32 %v549, 16
      %v700 = vor.u32 %v697, %v698
      %v701 = vsel %vm591, %v693, %v700
      %v703 = vshrl.u32 %v550, 16
      %v705 = vrot.slane %v703, 7
      %v706 = vrot.slane %v705, 4
      %v708 = vshrl.u32 %v551, 16
      %v710 = vrot.slane %v708, 7
      %v711 = vshll.u32 %v551, 16
      %v713 = vor.u32 %v710, %v711
      %v714 = vsel %vm591, %v706, %v713
      %v715 = vrot.slane %v710, 4
      %v717 = vshrl.u32 %v552, 16
      %v719 = vrot.slane %v717, 7
      %v720 = vshll.u32 %v552, 16
      %v722 = vor.u32 %v719, %v720
      %v723 = vsel %vm591, %v715, %v722
      %v725 = vshrl.u32 %v553, 16
      %v727 = vrot.slane %v725, 7
      %v728 = vrot.slane %v727, 4
      %v730 = vshrl.u32 %v554, 16
      %v732 = vrot.slane %v730, 7
      %v733 = vshll.u32 %v554, 16
      %v735 = vor.u32 %v732, %v733
      %v736 = vsel %vm591, %v728, %v735
      %v737 = vrot.slane %v732, 4
      %v739 = vshrl.u32 %v555, 16
      %v741 = vrot.slane %v739, 7
      %v742 = vshll.u32 %v555, 16
      %v744 = vor.u32 %v741, %v742
      %v745 = vsel %vm591, %v737, %v744
      %v747 = vshrl.u32 %v556, 16
      %v749 = vrot.slane %v747, 7
      %v750 = vrot.slane %v749, 4
      %v752 = vshrl.u32 %v557, 16
      %v754 = vrot.slane %v752, 7
      %v755 = vshll.u32 %v557, 16
      %v757 = vor.u32 %v754, %v755
      %v758 = vsel %vm591, %v750, %v757
      %v759 = vrot.slane %v754, 4
      %v761 = vshrl.u32 %v558, 16
      %v763 = vrot.slane %v761, 7
      %v764 = vshll.u32 %v558, 16
      %v766 = vor.u32 %v763, %v764
      %v767 = vsel %vm591, %v759, %v766
      %v769 = vshrl.u32 %v559, 16
      %v771 = vrot.slane %v769, 7
      %v772 = vrot.slane %v771, 4
      %v774 = vshrl.u32 %v560, 16
      %v776 = vrot.slane %v774, 7
      %v777 = vshll.u32 %v560, 16
      %v779 = vor.u32 %v776, %v777
      %v780 = vsel %vm591, %v772, %v779
      %v781 = vrot.slane %v776, 4
      %v783 = vshrl.u32 %v561, 16
      %v785 = vrot.slane %v783, 7
      %v786 = vshll.u32 %v561, 16
      %v788 = vor.u32 %v785, %v786
      %v789 = vsel %vm591, %v781, %v788
      %v791 = vshrl.u32 %v562, 16
      %v793 = vrot.slane %v791, 7
      %v794 = vrot.slane %v793, 4
      %v796 = vshrl.u32 %v563, 16
      %v798 = vrot.slane %v796, 7
      %v799 = vshll.u32 %v563, 16
      %v801 = vor.u32 %v798, %v799
      %v802 = vsel %vm591, %v794, %v801
      %v803 = vrot.slane %v798, 4
      %v805 = vshrl.u32 %v564, 16
      %v807 = vrot.slane %v805, 7
      %v808 = vshll.u32 %v564, 16
      %v810 = vor.u32 %v807, %v808
      %v811 = vsel %vm591, %v803, %v810
      %v813 = vshrl.u32 %v565, 16
      %v815 = vrot.slane %v813, 7
      %v816 = vrot.slane %v815, 4
      %v818 = vshrl.u32 %v566, 16
      %v820 = vrot.slane %v818, 7
      %v821 = vshll.u32 %v566, 16
      %v823 = vor.u32 %v820, %v821
      %v824 = vsel %vm591, %v816, %v823
      %v825 = vrot.slane %v820, 4
      %v827 = vshrl.u32 %v567, 16
      %v829 = vrot.slane %v827, 7
      %v830 = vshll.u32 %v567, 16
      %v832 = vor.u32 %v829, %v830
      %v833 = vsel %vm591, %v825, %v832
      %v835 = vshrl.u32 %v568, 16
      %v837 = vrot.slane %v835, 7
      %v838 = vrot.slane %v837, 4
      %v840 = vshrl.u32 %v569, 16
      %v842 = vrot.slane %v840, 7
      %v843 = vshll.u32 %v569, 16
      %v845 = vor.u32 %v842, %v843
      %v846 = vsel %vm591, %v838, %v845
      %v847 = vrot.slane %v842, 4
      %v849 = vshrl.u32 %v570, 16
      %v851 = vrot.slane %v849, 7
      %v852 = vshll.u32 %v570, 16
      %v854 = vor.u32 %v851, %v852
      %v855 = vsel %vm591, %v847, %v854
      %v857 = vshrl.u32 %v571, 16
      %v859 = vrot.slane %v857, 7
      %v860 = vrot.slane %v859, 4
      %v862 = vshrl.u32 %v572, 16
      %v864 = vrot.slane %v862, 7
      %v865 = vshll.u32 %v572, 16
      %v867 = vor.u32 %v864, %v865
      %v868 = vsel %vm591, %v860, %v867
      %v869 = vrot.slane %v864, 4
      %v871 = vshrl.u32 %v573, 16
      %v873 = vrot.slane %v871, 7
      %v874 = vshll.u32 %v573, 16
      %v876 = vor.u32 %v873, %v874
      %v877 = vsel %vm591, %v869, %v876
      %v879 = vshrl.u32 %v574, 16
      %v881 = vrot.slane %v879, 7
      %v882 = vrot.slane %v881, 4
      %v884 = vshrl.u32 %v575, 16
      %v886 = vrot.slane %v884, 7
      %v887 = vshll.u32 %v575, 16
      %v889 = vor.u32 %v886, %v887
      %v890 = vsel %vm591, %v882, %v889
      %v891 = vrot.slane %v886, 4
      %v893 = vshrl.u32 %v576, 16
      %v895 = vrot.slane %v893, 7
      %v896 = vshll.u32 %v576, 16
      %v898 = vor.u32 %v895, %v896
      %v899 = vsel %vm591, %v891, %v898
      %v901 = vshrl.u32 %v577, 16
      %v903 = vrot.slane %v901, 7
      %v904 = vrot.slane %v903, 4
      %v906 = vshrl.u32 %v578, 16
      %v908 = vrot.slane %v906, 7
      %v909 = vshll.u32 %v578, 16
      %v911 = vor.u32 %v908, %v909
      %v912 = vsel %vm591, %v904, %v911
      %v913 = vrot.slane %v908, 4
      %v915 = vshrl.u32 %v579, 16
      %v917 = vrot.slane %v915, 7
      %v918 = vshll.u32 %v579, 16
      %v920 = vor.u32 %v917, %v918
      %v921 = vsel %vm591, %v913, %v920
      %v923 = vshrl.u32 %v580, 16
      %v925 = vrot.slane %v923, 7
      %v926 = vrot.slane %v925, 4
      %v928 = vshrl.u32 %v581, 16
      %v930 = vrot.slane %v928, 7
      %v931 = vshll.u32 %v581, 16
      %v933 = vor.u32 %v930, %v931
      %v934 = vsel %vm591, %v926, %v933
      %v935 = vrot.slane %v930, 4
      %v937 = vshrl.u32 %v582, 16
      %v939 = vrot.slane %v937, 7
      %v940 = vshll.u32 %v582, 16
      %v942 = vor.u32 %v939, %v940
      %v943 = vsel %vm591, %v935, %v942
      %v945 = vshrl.u32 %v583, 16
      %v947 = vrot.slane %v945, 7
      %v948 = vrot.slane %v947, 4
      %v950 = vshrl.u32 %v584, 16
      %v952 = vrot.slane %v950, 7
      %v953 = vshll.u32 %v584, 16
      %v955 = vor.u32 %v952, %v953
      %v956 = vsel %vm591, %v948, %v955
      %v957 = vrot.slane %v952, 4
      %v959 = vshrl.u32 %v585, 16
      %v961 = vrot.slane %v959, 7
      %v962 = vshll.u32 %v585, 16
      %v964 = vor.u32 %v961, %v962
      %v965 = vsel %vm591, %v957, %v964
      %v967 = vshrl.u32 %v586, 16
      %v969 = vrot.slane %v967, 7
      %v970 = vrot.slane %v969, 4
      %v972 = vshrl.u32 %v587, 16
      %v974 = vrot.slane %v972, 7
      %v975 = vshll.u32 %v587, 16
      %v977 = vor.u32 %v974, %v975
      %v978 = vsel %vm591, %v970, %v977
      %v979 = vrot.slane %v974, 4
      %v981 = vshrl.u32 %v588, 16
      %v983 = vrot.slane %v981, 7
      %v984 = vshll.u32 %v588, 16
      %v986 = vor.u32 %v983, %v984
      %v987 = vsel %vm591, %v979, %v986
      %v988 = vld [vmem:[%s1] sm:$0x3]
      %s989 = scalar_lea.vmem %s1, 6
      %v990 = vld [vmem:[%s989] sm:$0x3]
      %v991 = vunpack.c.l.b16 %v626
      %v992 = vunpack.c.l.b16 %v635
      %v993 = vunpack.c.l.b16 %v648
      %v994 = vunpack.c.l.b16 %v657
      %v995 = vunpack.c.l.b16 %v670
      %v996 = vunpack.c.l.b16 %v679
      %v997 = vunpack.c.l.b16 %v692
      %v998 = vunpack.c.l.b16 %v701
      %v999 = vunpack.c.l.b16 %v714
      %v1000 = vunpack.c.l.b16 %v723
      %v1001 = vunpack.c.l.b16 %v736
      %v1002 = vunpack.c.l.b16 %v745
      %v1003 = vunpack.c.l.b16 %v758
      %v1004 = vunpack.c.l.b16 %v767
      %v1005 = vunpack.c.l.b16 %v780
      %v1006 = vunpack.c.l.b16 %v789
      %v1007 = vunpack.c.l.b16 %v802
      %v1008 = vunpack.c.l.b16 %v811
      %v1009 = vunpack.c.l.b16 %v824
      %v1010 = vunpack.c.l.b16 %v833
      %v1011 = vunpack.c.l.b16 %v846
      %v1012 = vunpack.c.l.b16 %v855
      %v1013 = vunpack.c.l.b16 %v868
      %v1014 = vunpack.c.l.b16 %v877
      %v1015 = vunpack.c.l.b16 %v890
      %v1016 = vunpack.c.l.b16 %v899
      %v1017 = vunpack.c.l.b16 %v912
      %v1018 = vunpack.c.l.b16 %v921
      %v1019 = vunpack.c.l.b16 %v934
      %v1020 = vunpack.c.l.b16 %v943
      %v1021 = vunpack.c.l.b16 %v956
      %v1022 = vunpack.c.l.b16 %v965
      %v1023 = vpack.c.b16 %v992, %v991
      %v1024 = vpack.c.b16 %v994, %v993
      %v1025 = vpack.c.b16 %v996, %v995
      %v1026 = vpack.c.b16 %v998, %v997
      %v1027 = vpack.c.b16 %v1000, %v999
      %v1028 = vpack.c.b16 %v1002, %v1001
      %v1029 = vpack.c.b16 %v1004, %v1003
      %v1030 = vpack.c.b16 %v1006, %v1005
      %v1031 = vpack.c.b16 %v1008, %v1007
      %v1032 = vpack.c.b16 %v1010, %v1009
      %v1033 = vpack.c.b16 %v1012, %v1011
      %v1034 = vpack.c.b16 %v1014, %v1013
      %v1035 = vpack.c.b16 %v1016, %v1015
      %v1036 = vpack.c.b16 %v1018, %v1017
      %v1037 = vpack.c.b16 %v1020, %v1019
      %v1038 = vpack.c.b16 %v1022, %v1021
      %vm1039 = vcmask 23552
      %v1041 = vsel %vm1039, %v1023, 0
      %v1044 = vsel %vm1039, %v1024, 0
      %v1047 = vsel %vm1039, %v1025, 0
      %v1050 = vsel %vm1039, %v1026, 0
      %v1053 = vsel %vm1039, %v1027, 0
      %v1056 = vsel %vm1039, %v1028, 0
      %v1059 = vsel %vm1039, %v1029, 0
      %v1062 = vsel %vm1039, %v1030, 0
      %v1065 = vsel %vm1039, %v1031, 0
      %v1068 = vsel %vm1039, %v1032, 0
      %v1071 = vsel %vm1039, %v1033, 0
      %v1074 = vsel %vm1039, %v1034, 0
      %v1077 = vsel %vm1039, %v1035, 0
      %v1080 = vsel %vm1039, %v1036, 0
      %v1083 = vsel %vm1039, %v1037, 0
      %v1086 = vsel %vm1039, %v1038, 0
      %vm1088 = vcmask 1040384
      %vm1089 = vcmask 1041408
      %v1090 = vsel %vm1088, 4294967295, 65535
      %v1091 = vsel %vm1089, %v1090, 0
      %v1093 = vand.u32 %v990, %v1091
      %1095 = vmatpush.bf16.msra.mxu0 0
      %1096 = vmatpush.bf16.msra.mxu0 0
      %1097 = vmatpush.bf16.msra.mxu0 0
      %1098 = vmatpush.bf16.msra.mxu0 0
      %1099 = vmatpush.bf16.msra.mxu0 0
      %1100 = vmatpush.bf16.msra.mxu0 0
      %1101 = vmatpush.bf16.msra.mxu0 0
      %1102 = vmatpush.bf16.msra.mxu0 %v1093
      %1103 = vmatmul.bf16.gmra.mxu0 %v1041
      %v1104 = vpop.f32.mrf.mxu0
      %v1105 = vadd.f32 0.0, %v1104
      %v1106 = vpop.f32.mrf.mxu0
      %v1107 = vadd.f32 0.0, %v1106
      %1108 = vmatmul.bf16.gmra.mxu0 %v1044
      %v1109 = vpop.f32.mrf.mxu0
      %v1110 = vadd.f32 0.0, %v1109
      %v1111 = vpop.f32.mrf.mxu0
      %v1112 = vadd.f32 0.0, %v1111
      %1113 = vmatmul.bf16.gmra.mxu0 %v1047
      %v1114 = vpop.f32.mrf.mxu0
      %v1115 = vadd.f32 0.0, %v1114
      %v1116 = vpop.f32.mrf.mxu0
      %v1117 = vadd.f32 0.0, %v1116
      %1118 = vmatmul.bf16.gmra.mxu0 %v1050
      %v1119 = vpop.f32.mrf.mxu0
      %v1120 = vadd.f32 0.0, %v1119
      %v1121 = vpop.f32.mrf.mxu0
      %v1122 = vadd.f32 0.0, %v1121
      %1123 = vmatmul.bf16.gmra.mxu0 %v1053
      %v1124 = vpop.f32.mrf.mxu0
      %v1125 = vadd.f32 0.0, %v1124
      %v1126 = vpop.f32.mrf.mxu0
      %v1127 = vadd.f32 0.0, %v1126
      %1128 = vmatmul.bf16.gmra.mxu0 %v1056
      %v1129 = vpop.f32.mrf.mxu0
      %v1130 = vadd.f32 0.0, %v1129
      %v1131 = vpop.f32.mrf.mxu0
      %v1132 = vadd.f32 0.0, %v1131
      %1133 = vmatmul.bf16.gmra.mxu0 %v1059
      %v1134 = vpop.f32.mrf.mxu0
      %v1135 = vadd.f32 0.0, %v1134
      %v1136 = vpop.f32.mrf.mxu0
      %v1137 = vadd.f32 0.0, %v1136
      %1138 = vmatmul.bf16.gmra.mxu0 %v1062
      %v1139 = vpop.f32.mrf.mxu0
      %v1140 = vadd.f32 0.0, %v1139
      %v1141 = vpop.f32.mrf.mxu0
      %v1142 = vadd.f32 0.0, %v1141
      %1143 = vmatmul.bf16.gmra.mxu0 %v1065
      %v1144 = vpop.f32.mrf.mxu0
      %v1145 = vadd.f32 0.0, %v1144
      %v1146 = vpop.f32.mrf.mxu0
      %v1147 = vadd.f32 0.0, %v1146
      %1148 = vmatmul.bf16.gmra.mxu0 %v1068
      %v1149 = vpop.f32.mrf.mxu0
      %v1150 = vadd.f32 0.0, %v1149
      %v1151 = vpop.f32.mrf.mxu0
      %v1152 = vadd.f32 0.0, %v1151
      %1153 = vmatmul.bf16.gmra.mxu0 %v1071
      %v1154 = vpop.f32.mrf.mxu0
      %v1155 = vadd.f32 0.0, %v1154
      %v1156 = vpop.f32.mrf.mxu0
      %v1157 = vadd.f32 0.0, %v1156
      %1158 = vmatmul.bf16.gmra.mxu0 %v1074
      %v1159 = vpop.f32.mrf.mxu0
      %v1160 = vadd.f32 0.0, %v1159
      %v1161 = vpop.f32.mrf.mxu0
      %v1162 = vadd.f32 0.0, %v1161
      %1163 = vmatmul.bf16.gmra.mxu0 %v1077
      %v1164 = vpop.f32.mrf.mxu0
      %v1165 = vadd.f32 0.0, %v1164
      %v1166 = vpop.f32.mrf.mxu0
      %v1167 = vadd.f32 0.0, %v1166
      %1168 = vmatmul.bf16.gmra.mxu0 %v1080
      %v1169 = vpop.f32.mrf.mxu0
      %v1170 = vadd.f32 0.0, %v1169
      %v1171 = vpop.f32.mrf.mxu0
      %v1172 = vadd.f32 0.0, %v1171
      %1173 = vmatmul.bf16.gmra.mxu0 %v1083
      %v1174 = vpop.f32.mrf.mxu0
      %v1175 = vadd.f32 0.0, %v1174
      %v1176 = vpop.f32.mrf.mxu0
      %v1177 = vadd.f32 0.0, %v1176
      %1178 = vmatmul.bf16.gmra.mxu0 %v1086
      %v1179 = vpop.f32.mrf.mxu0
      %v1180 = vadd.f32 0.0, %v1179
      %v1181 = vpop.f32.mrf.mxu0
      %v1182 = vadd.f32 0.0, %v1181
      %1183 = vdwg.mxu0
      %v1184 = vunpack.c.l.b16 %v604
      %v1185 = vunpack.c.l.b16 %v613
      %v1186 = vpack.c.b16 %v1185, %v1184
      %v1188 = vsel %vm1039, %v1186, 0
      %v1191 = vand.u32 %v988, %v1091
      %1193 = vmatpush.bf16.msra.mxu0 0
      %1194 = vmatpush.bf16.msra.mxu0 0
      %1195 = vmatpush.bf16.msra.mxu0 0
      %1196 = vmatpush.bf16.msra.mxu0 0
      %1197 = vmatpush.bf16.msra.mxu0 0
      %1198 = vmatpush.bf16.msra.mxu0 0
      %1199 = vmatpush.bf16.msra.mxu0 0
      %1200 = vmatpush.bf16.msra.mxu0 %v1191
      %1201 = vmatmul.bf16.gmra.mxu0 %v1188
      %v1202 = vpop.f32.mrf.mxu0
      %v1203 = vadd.f32 %v1105, %v1202
      %v1204 = vpop.f32.mrf.mxu0
      %v1205 = vadd.f32 %v1107, %v1204
      %1206 = vmatmul.bf16.gmra.mxu0 %v1041
      %v1207 = vpop.f32.mrf.mxu0
      %v1208 = vadd.f32 %v1110, %v1207
      %v1209 = vpop.f32.mrf.mxu0
      %v1210 = vadd.f32 %v1112, %v1209
      %1211 = vmatmul.bf16.gmra.mxu0 %v1044
      %v1212 = vpop.f32.mrf.mxu0
      %v1213 = vadd.f32 %v1115, %v1212
      %v1214 = vpop.f32.mrf.mxu0
      %v1215 = vadd.f32 %v1117, %v1214
      %1216 = vmatmul.bf16.gmra.mxu0 %v1047
      %v1217 = vpop.f32.mrf.mxu0
      %v1218 = vadd.f32 %v1120, %v1217
      %v1219 = vpop.f32.mrf.mxu0
      %v1220 = vadd.f32 %v1122, %v1219
      %1221 = vmatmul.bf16.gmra.mxu0 %v1050
      %v1222 = vpop.f32.mrf.mxu0
      %v1223 = vadd.f32 %v1125, %v1222
      %v1224 = vpop.f32.mrf.mxu0
      %v1225 = vadd.f32 %v1127, %v1224
      %1226 = vmatmul.bf16.gmra.mxu0 %v1053
      %v1227 = vpop.f32.mrf.mxu0
      %v1228 = vadd.f32 %v1130, %v1227
      %v1229 = vpop.f32.mrf.mxu0
      %v1230 = vadd.f32 %v1132, %v1229
      %1231 = vmatmul.bf16.gmra.mxu0 %v1056
      %v1232 = vpop.f32.mrf.mxu0
      %v1233 = vadd.f32 %v1135, %v1232
      %v1234 = vpop.f32.mrf.mxu0
      %v1235 = vadd.f32 %v1137, %v1234
      %1236 = vmatmul.bf16.gmra.mxu0 %v1059
      %v1237 = vpop.f32.mrf.mxu0
      %v1238 = vadd.f32 %v1140, %v1237
      %v1239 = vpop.f32.mrf.mxu0
      %v1240 = vadd.f32 %v1142, %v1239
      %1241 = vmatmul.bf16.gmra.mxu0 %v1062
      %v1242 = vpop.f32.mrf.mxu0
      %v1243 = vadd.f32 %v1145, %v1242
      %v1244 = vpop.f32.mrf.mxu0
      %v1245 = vadd.f32 %v1147, %v1244
      %1246 = vmatmul.bf16.gmra.mxu0 %v1065
      %v1247 = vpop.f32.mrf.mxu0
      %v1248 = vadd.f32 %v1150, %v1247
      %v1249 = vpop.f32.mrf.mxu0
      %v1250 = vadd.f32 %v1152, %v1249
      %1251 = vmatmul.bf16.gmra.mxu0 %v1068
      %v1252 = vpop.f32.mrf.mxu0
      %v1253 = vadd.f32 %v1155, %v1252
      %v1254 = vpop.f32.mrf.mxu0
      %v1255 = vadd.f32 %v1157, %v1254
      %1256 = vmatmul.bf16.gmra.mxu0 %v1071
      %v1257 = vpop.f32.mrf.mxu0
      %v1258 = vadd.f32 %v1160, %v1257
      %v1259 = vpop.f32.mrf.mxu0
      %v1260 = vadd.f32 %v1162, %v1259
      %1261 = vmatmul.bf16.gmra.mxu0 %v1074
      %v1262 = vpop.f32.mrf.mxu0
      %v1263 = vadd.f32 %v1165, %v1262
      %v1264 = vpop.f32.mrf.mxu0
      %v1265 = vadd.f32 %v1167, %v1264
      %1266 = vmatmul.bf16.gmra.mxu0 %v1077
      %v1267 = vpop.f32.mrf.mxu0
      %v1268 = vadd.f32 %v1170, %v1267
      %v1269 = vpop.f32.mrf.mxu0
      %v1270 = vadd.f32 %v1172, %v1269
      %1271 = vmatmul.bf16.gmra.mxu0 %v1080
      %v1272 = vpop.f32.mrf.mxu0
      %v1273 = vadd.f32 %v1175, %v1272
      %v1274 = vpop.f32.mrf.mxu0
      %v1275 = vadd.f32 %v1177, %v1274
      %1276 = vmatmul.bf16.gmra.mxu0 %v1083
      %v1277 = vpop.f32.mrf.mxu0
      %v1278 = vadd.f32 %v1180, %v1277
      %v1279 = vpop.f32.mrf.mxu0
      %v1280 = vadd.f32 %v1182, %v1279
      %1281 = vdwg.mxu0
      %s1282 = scalar_lea.vmem %s1, 12
      %v1283 = vld [vmem:[%s1282] sm:$0x3]
      %v1284 = vunpack.c.l.b16 %v978
      %v1285 = vunpack.c.l.b16 %v987
      %v1286 = vpack.c.b16 %v1285, %v1284
      %v1288 = vsel %vm1039, %v1286, 0
      %v1291 = vand.u32 %v1283, %v1091
      %1293 = vmatpush.bf16.msra.mxu0 0
      %1294 = vmatpush.bf16.msra.mxu0 0
      %1295 = vmatpush.bf16.msra.mxu0 0
      %1296 = vmatpush.bf16.msra.mxu0 0
      %1297 = vmatpush.bf16.msra.mxu0 0
      %1298 = vmatpush.bf16.msra.mxu0 0
      %1299 = vmatpush.bf16.msra.mxu0 0
      %1300 = vmatpush.bf16.msra.mxu0 %v1291
      %1301 = vmatmul.bf16.gmra.mxu0 %v1044
      %v1302 = vpop.f32.mrf.mxu0
      %v1303 = vadd.f32 0.0, %v1302
      %v1304 = vpop.f32.mrf.mxu0
      %v1305 = vadd.f32 0.0, %v1304
      %1306 = vmatmul.bf16.gmra.mxu0 %v1047
      %v1307 = vpop.f32.mrf.mxu0
      %v1308 = vadd.f32 0.0, %v1307
      %v1309 = vpop.f32.mrf.mxu0
      %v1310 = vadd.f32 0.0, %v1309
      %1311 = vmatmul.bf16.gmra.mxu0 %v1050
      %v1312 = vpop.f32.mrf.mxu0
      %v1313 = vadd.f32 0.0, %v1312
      %v1314 = vpop.f32.mrf.mxu0
      %v1315 = vadd.f32 0.0, %v1314
      %1316 = vmatmul.bf16.gmra.mxu0 %v1053
      %v1317 = vpop.f32.mrf.mxu0
      %v1318 = vadd.f32 0.0, %v1317
      %v1319 = vpop.f32.mrf.mxu0
      %v1320 = vadd.f32 0.0, %v1319
      %1321 = vmatmul.bf16.gmra.mxu0 %v1056
      %v1322 = vpop.f32.mrf.mxu0
      %v1323 = vadd.f32 0.0, %v1322
      %v1324 = vpop.f32.mrf.mxu0
      %v1325 = vadd.f32 0.0, %v1324
      %1326 = vmatmul.bf16.gmra.mxu0 %v1059
      %v1327 = vpop.f32.mrf.mxu0
      %v1328 = vadd.f32 0.0, %v1327
      %v1329 = vpop.f32.mrf.mxu0
      %v1330 = vadd.f32 0.0, %v1329
      %1331 = vmatmul.bf16.gmra.mxu0 %v1062
      %v1332 = vpop.f32.mrf.mxu0
      %v1333 = vadd.f32 0.0, %v1332
      %v1334 = vpop.f32.mrf.mxu0
      %v1335 = vadd.f32 0.0, %v1334
      %1336 = vmatmul.bf16.gmra.mxu0 %v1065
      %v1337 = vpop.f32.mrf.mxu0
      %v1338 = vadd.f32 0.0, %v1337
      %v1339 = vpop.f32.mrf.mxu0
      %v1340 = vadd.f32 0.0, %v1339
      %1341 = vmatmul.bf16.gmra.mxu0 %v1068
      %v1342 = vpop.f32.mrf.mxu0
      %v1343 = vadd.f32 0.0, %v1342
      %v1344 = vpop.f32.mrf.mxu0
      %v1345 = vadd.f32 0.0, %v1344
      %1346 = vmatmul.bf16.gmra.mxu0 %v1071
      %v1347 = vpop.f32.mrf.mxu0
      %v1348 = vadd.f32 0.0, %v1347
      %v1349 = vpop.f32.mrf.mxu0
      %v1350 = vadd.f32 0.0, %v1349
      %1351 = vmatmul.bf16.gmra.mxu0 %v1074
      %v1352 = vpop.f32.mrf.mxu0
      %v1353 = vadd.f32 0.0, %v1352
      %v1354 = vpop.f32.mrf.mxu0
      %v1355 = vadd.f32 0.0, %v1354
      %1356 = vmatmul.bf16.gmra.mxu0 %v1077
      %v1357 = vpop.f32.mrf.mxu0
      %v1358 = vadd.f32 0.0, %v1357
      %v1359 = vpop.f32.mrf.mxu0
      %v1360 = vadd.f32 0.0, %v1359
      %1361 = vmatmul.bf16.gmra.mxu0 %v1080
      %v1362 = vpop.f32.mrf.mxu0
      %v1363 = vadd.f32 0.0, %v1362
      %v1364 = vpop.f32.mrf.mxu0
      %v1365 = vadd.f32 0.0, %v1364
      %1366 = vmatmul.bf16.gmra.mxu0 %v1083
      %v1367 = vpop.f32.mrf.mxu0
      %v1368 = vadd.f32 0.0, %v1367
      %v1369 = vpop.f32.mrf.mxu0
      %v1370 = vadd.f32 0.0, %v1369
      %1371 = vmatmul.bf16.gmra.mxu0 %v1086
      %v1372 = vpop.f32.mrf.mxu0
      %v1373 = vadd.f32 0.0, %v1372
      %v1374 = vpop.f32.mrf.mxu0
      %v1375 = vadd.f32 0.0, %v1374
      %1376 = vmatmul.bf16.gmra.mxu0 %v1288
      %v1377 = vpop.f32.mrf.mxu0
      %v1378 = vadd.f32 0.0, %v1377
      %v1379 = vpop.f32.mrf.mxu0
      %v1380 = vadd.f32 0.0, %v1379
      %1381 = vdwg.mxu0
      %v1382 = vadd.f32 %v1203, %v1303
      %v1383 = vadd.f32 %v1205, %v1305
      %v1384 = vadd.f32 %v1208, %v1308
      %v1385 = vadd.f32 %v1210, %v1310
      %v1386 = vadd.f32 %v1213, %v1313
      %v1387 = vadd.f32 %v1215, %v1315
      %v1388 = vadd.f32 %v1218, %v1318
      %v1389 = vadd.f32 %v1220, %v1320
      %v1390 = vadd.f32 %v1223, %v1323
      %v1391 = vadd.f32 %v1225, %v1325
      %v1392 = vadd.f32 %v1228, %v1328
      %v1393 = vadd.f32 %v1230, %v1330
      %v1394 = vadd.f32 %v1233, %v1333
      %v1395 = vadd.f32 %v1235, %v1335
      %v1396 = vadd.f32 %v1238, %v1338
      %v1397 = vadd.f32 %v1240, %v1340
      %v1398 = vadd.f32 %v1243, %v1343
      %v1399 = vadd.f32 %v1245, %v1345
      %v1400 = vadd.f32 %v1248, %v1348
      %v1401 = vadd.f32 %v1250, %v1350
      %v1402 = vadd.f32 %v1253, %v1353
      %v1403 = vadd.f32 %v1255, %v1355
      %v1404 = vadd.f32 %v1258, %v1358
      %v1405 = vadd.f32 %v1260, %v1360
      %v1406 = vadd.f32 %v1263, %v1363
      %v1407 = vadd.f32 %v1265, %v1365
      %v1408 = vadd.f32 %v1268, %v1368
      %v1409 = vadd.f32 %v1270, %v1370
      %v1410 = vadd.f32 %v1273, %v1373
      %v1411 = vadd.f32 %v1275, %v1375
      %v1412 = vadd.f32 %v1278, %v1378
      %v1413 = vadd.f32 %v1280, %v1380
      %s1414 = scalar_lea.vmem %s1, 2
      %v1415 = vld [vmem:[%s1414] sm:$0x3]
      %v1448 = vunpack.c.l.b16 %v536
      %v1449 = vunpack.c.l.b16 %v537
      %v1450 = vunpack.c.l.b16 %v539
      %v1451 = vunpack.c.l.b16 %v540
      %v1452 = vunpack.c.l.b16 %v542
      %v1453 = vunpack.c.l.b16 %v543
      %v1454 = vunpack.c.l.b16 %v545
      %v1455 = vunpack.c.l.b16 %v546
      %v1456 = vunpack.c.l.b16 %v548
      %v1457 = vunpack.c.l.b16 %v549
      %v1458 = vunpack.c.l.b16 %v551
      %v1459 = vunpack.c.l.b16 %v552
      %v1460 = vunpack.c.l.b16 %v554
      %v1461 = vunpack.c.l.b16 %v555
      %v1462 = vunpack.c.l.b16 %v557
      %v1463 = vunpack.c.l.b16 %v558
      %v1464 = vunpack.c.l.b16 %v560
      %v1465 = vunpack.c.l.b16 %v561
      %v1466 = vunpack.c.l.b16 %v563
      %v1467 = vunpack.c.l.b16 %v564
      %v1468 = vunpack.c.l.b16 %v566
      %v1469 = vunpack.c.l.b16 %v567
      %v1470 = vunpack.c.l.b16 %v569
      %v1471 = vunpack.c.l.b16 %v570
      %v1472 = vunpack.c.l.b16 %v572
      %v1473 = vunpack.c.l.b16 %v573
      %v1474 = vunpack.c.l.b16 %v575
      %v1475 = vunpack.c.l.b16 %v576
      %v1476 = vunpack.c.l.b16 %v578
      %v1477 = vunpack.c.l.b16 %v579
      %v1478 = vunpack.c.l.b16 %v581
      %v1479 = vunpack.c.l.b16 %v582
      %v1480 = vpack.c.b16 %v1449, %v1448
      %v1481 = vpack.c.b16 %v1451, %v1450
      %v1482 = vpack.c.b16 %v1453, %v1452
      %v1483 = vpack.c.b16 %v1455, %v1454
      %v1484 = vpack.c.b16 %v1457, %v1456
      %v1485 = vpack.c.b16 %v1459, %v1458
      %v1486 = vpack.c.b16 %v1461, %v1460
      %v1487 = vpack.c.b16 %v1463, %v1462
      %v1488 = vpack.c.b16 %v1465, %v1464
      %v1489 = vpack.c.b16 %v1467, %v1466
      %v1490 = vpack.c.b16 %v1469, %v1468
      %v1491 = vpack.c.b16 %v1471, %v1470
      %v1492 = vpack.c.b16 %v1473, %v1472
      %v1493 = vpack.c.b16 %v1475, %v1474
      %v1494 = vpack.c.b16 %v1477, %v1476
      %v1495 = vpack.c.b16 %v1479, %v1478
      %v1497 = vsel %vm1039, %v1480, 0
      %v1500 = vsel %vm1039, %v1481, 0
      %v1503 = vsel %vm1039, %v1482, 0
      %v1506 = vsel %vm1039, %v1483, 0
      %v1509 = vsel %vm1039, %v1484, 0
      %v1512 = vsel %vm1039, %v1485, 0
      %v1515 = vsel %vm1039, %v1486, 0
      %v1518 = vsel %vm1039, %v1487, 0
      %v1521 = vsel %vm1039, %v1488, 0
      %v1524 = vsel %vm1039, %v1489, 0
      %v1527 = vsel %vm1039, %v1490, 0
      %v1530 = vsel %vm1039, %v1491, 0
      %v1533 = vsel %vm1039, %v1492, 0
      %v1536 = vsel %vm1039, %v1493, 0
      %v1539 = vsel %vm1039, %v1494, 0
      %v1542 = vsel %vm1039, %v1495, 0
      %v1545 = vand.u32 %v1415, %v1091
      %1547 = vmatpush.bf16.msra.mxu0 0
      %1548 = vmatpush.bf16.msra.mxu0 0
      %1549 = vmatpush.bf16.msra.mxu0 0
      %1550 = vmatpush.bf16.msra.mxu0 0
      %1551 = vmatpush.bf16.msra.mxu0 0
      %1552 = vmatpush.bf16.msra.mxu0 0
      %1553 = vmatpush.bf16.msra.mxu0 0
      %1554 = vmatpush.bf16.msra.mxu0 %v1545
      %1555 = vmatmul.bf16.gmra.mxu0 %v1497
      %v1556 = vpop.f32.mrf.mxu0
      %v1557 = vadd.f32 0.0, %v1556
      %v1558 = vpop.f32.mrf.mxu0
      %v1559 = vadd.f32 0.0, %v1558
      %1560 = vmatmul.bf16.gmra.mxu0 %v1500
      %v1561 = vpop.f32.mrf.mxu0
      %v1562 = vadd.f32 0.0, %v1561
      %v1563 = vpop.f32.mrf.mxu0
      %v1564 = vadd.f32 0.0, %v1563
      %1565 = vmatmul.bf16.gmra.mxu0 %v1503
      %v1566 = vpop.f32.mrf.mxu0
      %v1567 = vadd.f32 0.0, %v1566
      %v1568 = vpop.f32.mrf.mxu0
      %v1569 = vadd.f32 0.0, %v1568
      %1570 = vmatmul.bf16.gmra.mxu0 %v1506
      %v1571 = vpop.f32.mrf.mxu0
      %v1572 = vadd.f32 0.0, %v1571
      %v1573 = vpop.f32.mrf.mxu0
      %v1574 = vadd.f32 0.0, %v1573
      %1575 = vmatmul.bf16.gmra.mxu0 %v1509
      %v1576 = vpop.f32.mrf.mxu0
      %v1577 = vadd.f32 0.0, %v1576
      %v1578 = vpop.f32.mrf.mxu0
      %v1579 = vadd.f32 0.0, %v1578
      %1580 = vmatmul.bf16.gmra.mxu0 %v1512
      %v1581 = vpop.f32.mrf.mxu0
      %v1582 = vadd.f32 0.0, %v1581
      %v1583 = vpop.f32.mrf.mxu0
      %v1584 = vadd.f32 0.0, %v1583
      %1585 = vmatmul.bf16.gmra.mxu0 %v1515
      %v1586 = vpop.f32.mrf.mxu0
      %v1587 = vadd.f32 0.0, %v1586
      %v1588 = vpop.f32.mrf.mxu0
      %v1589 = vadd.f32 0.0, %v1588
      %1590 = vmatmul.bf16.gmra.mxu0 %v1518
      %v1591 = vpop.f32.mrf.mxu0
      %v1592 = vadd.f32 0.0, %v1591
      %v1593 = vpop.f32.mrf.mxu0
      %v1594 = vadd.f32 0.0, %v1593
      %1595 = vmatmul.bf16.gmra.mxu0 %v1521
      %v1596 = vpop.f32.mrf.mxu0
      %v1597 = vadd.f32 0.0, %v1596
      %v1598 = vpop.f32.mrf.mxu0
      %v1599 = vadd.f32 0.0, %v1598
      %1600 = vmatmul.bf16.gmra.mxu0 %v1524
      %v1601 = vpop.f32.mrf.mxu0
      %v1602 = vadd.f32 0.0, %v1601
      %v1603 = vpop.f32.mrf.mxu0
      %v1604 = vadd.f32 0.0, %v1603
      %1605 = vmatmul.bf16.gmra.mxu0 %v1527
      %v1606 = vpop.f32.mrf.mxu0
      %v1607 = vadd.f32 0.0, %v1606
      %v1608 = vpop.f32.mrf.mxu0
      %v1609 = vadd.f32 0.0, %v1608
      %1610 = vmatmul.bf16.gmra.mxu0 %v1530
      %v1611 = vpop.f32.mrf.mxu0
      %v1612 = vadd.f32 0.0, %v1611
      %v1613 = vpop.f32.mrf.mxu0
      %v1614 = vadd.f32 0.0, %v1613
      %1615 = vmatmul.bf16.gmra.mxu0 %v1533
      %v1616 = vpop.f32.mrf.mxu0
      %v1617 = vadd.f32 0.0, %v1616
      %v1618 = vpop.f32.mrf.mxu0
      %v1619 = vadd.f32 0.0, %v1618
      %1620 = vmatmul.bf16.gmra.mxu0 %v1536
      %v1621 = vpop.f32.mrf.mxu0
      %v1622 = vadd.f32 0.0, %v1621
      %v1623 = vpop.f32.mrf.mxu0
      %v1624 = vadd.f32 0.0, %v1623
      %1625 = vmatmul.bf16.gmra.mxu0 %v1539
      %v1626 = vpop.f32.mrf.mxu0
      %v1627 = vadd.f32 0.0, %v1626
      %v1628 = vpop.f32.mrf.mxu0
      %v1629 = vadd.f32 0.0, %v1628
      %1630 = vmatmul.bf16.gmra.mxu0 %v1542
      %v1631 = vpop.f32.mrf.mxu0
      %v1632 = vadd.f32 0.0, %v1631
      %v1633 = vpop.f32.mrf.mxu0
      %v1634 = vadd.f32 0.0, %v1633
      %1635 = vdwg.mxu0
      %v1636 = vadd.f32 %v1382, %v1557
      %v1637 = vadd.f32 %v1383, %v1559
      %v1638 = vadd.f32 %v1384, %v1562
      %v1639 = vadd.f32 %v1385, %v1564
      %v1640 = vadd.f32 %v1386, %v1567
      %v1641 = vadd.f32 %v1387, %v1569
      %v1642 = vadd.f32 %v1388, %v1572
      %v1643 = vadd.f32 %v1389, %v1574
      %v1644 = vadd.f32 %v1390, %v1577
      %v1645 = vadd.f32 %v1391, %v1579
      %v1646 = vadd.f32 %v1392, %v1582
      %v1647 = vadd.f32 %v1393, %v1584
      %v1648 = vadd.f32 %v1394, %v1587
      %v1649 = vadd.f32 %v1395, %v1589
      %v1650 = vadd.f32 %v1396, %v1592
      %v1651 = vadd.f32 %v1397, %v1594
      %v1652 = vadd.f32 %v1398, %v1597
      %v1653 = vadd.f32 %v1399, %v1599
      %v1654 = vadd.f32 %v1400, %v1602
      %v1655 = vadd.f32 %v1401, %v1604
      %v1656 = vadd.f32 %v1402, %v1607
      %v1657 = vadd.f32 %v1403, %v1609
      %v1658 = vadd.f32 %v1404, %v1612
      %v1659 = vadd.f32 %v1405, %v1614
      %v1660 = vadd.f32 %v1406, %v1617
      %v1661 = vadd.f32 %v1407, %v1619
      %v1662 = vadd.f32 %v1408, %v1622
      %v1663 = vadd.f32 %v1409, %v1624
      %v1664 = vadd.f32 %v1410, %v1627
      %v1665 = vadd.f32 %v1411, %v1629
      %v1666 = vadd.f32 %v1412, %v1632
      %v1667 = vadd.f32 %v1413, %v1634
      %s1668 = scalar_lea.vmem %s1, 8
      %v1669 = vld [vmem:[%s1668] sm:$0x3]
      %v1672 = vunpack.c.l.b16 %v584
      %v1673 = vunpack.c.l.b16 %v585
      %v1674 = vpack.c.b16 %v1673, %v1672
      %v1676 = vsel %vm1039, %v1674, 0
      %v1679 = vand.u32 %v1669, %v1091
      %1681 = vmatpush.bf16.msra.mxu0 0
      %1682 = vmatpush.bf16.msra.mxu0 0
      %1683 = vmatpush.bf16.msra.mxu0 0
      %1684 = vmatpush.bf16.msra.mxu0 0
      %1685 = vmatpush.bf16.msra.mxu0 0
      %1686 = vmatpush.bf16.msra.mxu0 0
      %1687 = vmatpush.bf16.msra.mxu0 0
      %1688 = vmatpush.bf16.msra.mxu0 %v1679
      %1689 = vmatmul.bf16.gmra.mxu0 %v1500
      %v1690 = vpop.f32.mrf.mxu0
      %v1691 = vadd.f32 0.0, %v1690
      %v1692 = vpop.f32.mrf.mxu0
      %v1693 = vadd.f32 0.0, %v1692
      %1694 = vmatmul.bf16.gmra.mxu0 %v1503
      %v1695 = vpop.f32.mrf.mxu0
      %v1696 = vadd.f32 0.0, %v1695
      %v1697 = vpop.f32.mrf.mxu0
      %v1698 = vadd.f32 0.0, %v1697
      %1699 = vmatmul.bf16.gmra.mxu0 %v1506
      %v1700 = vpop.f32.mrf.mxu0
      %v1701 = vadd.f32 0.0, %v1700
      %v1702 = vpop.f32.mrf.mxu0
      %v1703 = vadd.f32 0.0, %v1702
      %1704 = vmatmul.bf16.gmra.mxu0 %v1509
      %v1705 = vpop.f32.mrf.mxu0
      %v1706 = vadd.f32 0.0, %v1705
      %v1707 = vpop.f32.mrf.mxu0
      %v1708 = vadd.f32 0.0, %v1707
      %1709 = vmatmul.bf16.gmra.mxu0 %v1512
      %v1710 = vpop.f32.mrf.mxu0
      %v1711 = vadd.f32 0.0, %v1710
      %v1712 = vpop.f32.mrf.mxu0
      %v1713 = vadd.f32 0.0, %v1712
      %1714 = vmatmul.bf16.gmra.mxu0 %v1515
      %v1715 = vpop.f32.mrf.mxu0
      %v1716 = vadd.f32 0.0, %v1715
      %v1717 = vpop.f32.mrf.mxu0
      %v1718 = vadd.f32 0.0, %v1717
      %1719 = vmatmul.bf16.gmra.mxu0 %v1518
      %v1720 = vpop.f32.mrf.mxu0
      %v1721 = vadd.f32 0.0, %v1720
      %v1722 = vpop.f32.mrf.mxu0
      %v1723 = vadd.f32 0.0, %v1722
      %1724 = vmatmul.bf16.gmra.mxu0 %v1521
      %v1725 = vpop.f32.mrf.mxu0
      %v1726 = vadd.f32 0.0, %v1725
      %v1727 = vpop.f32.mrf.mxu0
      %v1728 = vadd.f32 0.0, %v1727
      %1729 = vmatmul.bf16.gmra.mxu0 %v1524
      %v1730 = vpop.f32.mrf.mxu0
      %v1731 = vadd.f32 0.0, %v1730
      %v1732 = vpop.f32.mrf.mxu0
      %v1733 = vadd.f32 0.0, %v1732
      %1734 = vmatmul.bf16.gmra.mxu0 %v1527
      %v1735 = vpop.f32.mrf.mxu0
      %v1736 = vadd.f32 0.0, %v1735
      %v1737 = vpop.f32.mrf.mxu0
      %v1738 = vadd.f32 0.0, %v1737
      %1739 = vmatmul.bf16.gmra.mxu0 %v1530
      %v1740 = vpop.f32.mrf.mxu0
      %v1741 = vadd.f32 0.0, %v1740
      %v1742 = vpop.f32.mrf.mxu0
      %v1743 = vadd.f32 0.0, %v1742
      %1744 = vmatmul.bf16.gmra.mxu0 %v1533
      %v1745 = vpop.f32.mrf.mxu0
      %v1746 = vadd.f32 0.0, %v1745
      %v1747 = vpop.f32.mrf.mxu0
      %v1748 = vadd.f32 0.0, %v1747
      %1749 = vmatmul.bf16.gmra.mxu0 %v1536
      %v1750 = vpop.f32.mrf.mxu0
      %v1751 = vadd.f32 0.0, %v1750
      %v1752 = vpop.f32.mrf.mxu0
      %v1753 = vadd.f32 0.0, %v1752
      %1754 = vmatmul.bf16.gmra.mxu0 %v1539
      %v1755 = vpop.f32.mrf.mxu0
      %v1756 = vadd.f32 0.0, %v1755
      %v1757 = vpop.f32.mrf.mxu0
      %v1758 = vadd.f32 0.0, %v1757
      %1759 = vmatmul.bf16.gmra.mxu0 %v1542
      %v1760 = vpop.f32.mrf.mxu0
      %v1761 = vadd.f32 0.0, %v1760
      %v1762 = vpop.f32.mrf.mxu0
      %v1763 = vadd.f32 0.0, %v1762
      %1764 = vmatmul.bf16.gmra.mxu0 %v1676
      %v1765 = vpop.f32.mrf.mxu0
      %v1766 = vadd.f32 0.0, %v1765
      %v1767 = vpop.f32.mrf.mxu0
      %v1768 = vadd.f32 0.0, %v1767
      %1769 = vdwg.mxu0
      %v1770 = vadd.f32 %v1636, %v1691
      %v1771 = vadd.f32 %v1637, %v1693
      %v1772 = vadd.f32 %v1638, %v1696
      %v1773 = vadd.f32 %v1639, %v1698
      %v1774 = vadd.f32 %v1640, %v1701
      %v1775 = vadd.f32 %v1641, %v1703
      %v1776 = vadd.f32 %v1642, %v1706
      %v1777 = vadd.f32 %v1643, %v1708
      %v1778 = vadd.f32 %v1644, %v1711
      %v1779 = vadd.f32 %v1645, %v1713
      %v1780 = vadd.f32 %v1646, %v1716
      %v1781 = vadd.f32 %v1647, %v1718
      %v1782 = vadd.f32 %v1648, %v1721
      %v1783 = vadd.f32 %v1649, %v1723
      %v1784 = vadd.f32 %v1650, %v1726
      %v1785 = vadd.f32 %v1651, %v1728
      %v1786 = vadd.f32 %v1652, %v1731
      %v1787 = vadd.f32 %v1653, %v1733
      %v1788 = vadd.f32 %v1654, %v1736
      %v1789 = vadd.f32 %v1655, %v1738
      %v1790 = vadd.f32 %v1656, %v1741
      %v1791 = vadd.f32 %v1657, %v1743
      %v1792 = vadd.f32 %v1658, %v1746
      %v1793 = vadd.f32 %v1659, %v1748
      %v1794 = vadd.f32 %v1660, %v1751
      %v1795 = vadd.f32 %v1661, %v1753
      %v1796 = vadd.f32 %v1662, %v1756
      %v1797 = vadd.f32 %v1663, %v1758
      %v1798 = vadd.f32 %v1664, %v1761
      %v1799 = vadd.f32 %v1665, %v1763
      %v1800 = vadd.f32 %v1666, %v1766
      %v1801 = vadd.f32 %v1667, %v1768
      %s1802 = scalar_lea.vmem %s1, 14
      %v1803 = vld [vmem:[%s1802] sm:$0x3]
      %v1806 = vunpack.c.l.b16 %v587
      %v1807 = vunpack.c.l.b16 %v588
      %v1808 = vpack.c.b16 %v1807, %v1806
      %v1810 = vsel %vm1039, %v1808, 0
      %v1813 = vand.u32 %v1803, %v1091
      %1815 = vmatpush.bf16.msra.mxu0 0
      %1816 = vmatpush.bf16.msra.mxu0 0
      %1817 = vmatpush.bf16.msra.mxu0 0
      %1818 = vmatpush.bf16.msra.mxu0 0
      %1819 = vmatpush.bf16.msra.mxu0 0
      %1820 = vmatpush.bf16.msra.mxu0 0
      %1821 = vmatpush.bf16.msra.mxu0 0
      %1822 = vmatpush.bf16.msra.mxu0 %v1813
      %1823 = vmatmul.bf16.gmra.mxu0 %v1503
      %v1824 = vpop.f32.mrf.mxu0
      %v1825 = vadd.f32 0.0, %v1824
      %v1826 = vpop.f32.mrf.mxu0
      %v1827 = vadd.f32 0.0, %v1826
      %1828 = vmatmul.bf16.gmra.mxu0 %v1506
      %v1829 = vpop.f32.mrf.mxu0
      %v1830 = vadd.f32 0.0, %v1829
      %v1831 = vpop.f32.mrf.mxu0
      %v1832 = vadd.f32 0.0, %v1831
      %1833 = vmatmul.bf16.gmra.mxu0 %v1509
      %v1834 = vpop.f32.mrf.mxu0
      %v1835 = vadd.f32 0.0, %v1834
      %v1836 = vpop.f32.mrf.mxu0
      %v1837 = vadd.f32 0.0, %v1836
      %1838 = vmatmul.bf16.gmra.mxu0 %v1512
      %v1839 = vpop.f32.mrf.mxu0
      %v1840 = vadd.f32 0.0, %v1839
      %v1841 = vpop.f32.mrf.mxu0
      %v1842 = vadd.f32 0.0, %v1841
      %1843 = vmatmul.bf16.gmra.mxu0 %v1515
      %v1844 = vpop.f32.mrf.mxu0
      %v1845 = vadd.f32 0.0, %v1844
      %v1846 = vpop.f32.mrf.mxu0
      %v1847 = vadd.f32 0.0, %v1846
      %1848 = vmatmul.bf16.gmra.mxu0 %v1518
      %v1849 = vpop.f32.mrf.mxu0
      %v1850 = vadd.f32 0.0, %v1849
      %v1851 = vpop.f32.mrf.mxu0
      %v1852 = vadd.f32 0.0, %v1851
      %1853 = vmatmul.bf16.gmra.mxu0 %v1521
      %v1854 = vpop.f32.mrf.mxu0
      %v1855 = vadd.f32 0.0, %v1854
      %v1856 = vpop.f32.mrf.mxu0
      %v1857 = vadd.f32 0.0, %v1856
      %1858 = vmatmul.bf16.gmra.mxu0 %v1524
      %v1859 = vpop.f32.mrf.mxu0
      %v1860 = vadd.f32 0.0, %v1859
      %v1861 = vpop.f32.mrf.mxu0
      %v1862 = vadd.f32 0.0, %v1861
      %1863 = vmatmul.bf16.gmra.mxu0 %v1527
      %v1864 = vpop.f32.mrf.mxu0
      %v1865 = vadd.f32 0.0, %v1864
      %v1866 = vpop.f32.mrf.mxu0
      %v1867 = vadd.f32 0.0, %v1866
      %1868 = vmatmul.bf16.gmra.mxu0 %v1530
      %v1869 = vpop.f32.mrf.mxu0
      %v1870 = vadd.f32 0.0, %v1869
      %v1871 = vpop.f32.mrf.mxu0
      %v1872 = vadd.f32 0.0, %v1871
      %1873 = vmatmul.bf16.gmra.mxu0 %v1533
      %v1874 = vpop.f32.mrf.mxu0
      %v1875 = vadd.f32 0.0, %v1874
      %v1876 = vpop.f32.mrf.mxu0
      %v1877 = vadd.f32 0.0, %v1876
      %1878 = vmatmul.bf16.gmra.mxu0 %v1536
      %v1879 = vpop.f32.mrf.mxu0
      %v1880 = vadd.f32 0.0, %v1879
      %v1881 = vpop.f32.mrf.mxu0
      %v1882 = vadd.f32 0.0, %v1881
      %1883 = vmatmul.bf16.gmra.mxu0 %v1539
      %v1884 = vpop.f32.mrf.mxu0
      %v1885 = vadd.f32 0.0, %v1884
      %v1886 = vpop.f32.mrf.mxu0
      %v1887 = vadd.f32 0.0, %v1886
      %1888 = vmatmul.bf16.gmra.mxu0 %v1542
      %v1889 = vpop.f32.mrf.mxu0
      %v1890 = vadd.f32 0.0, %v1889
      %v1891 = vpop.f32.mrf.mxu0
      %v1892 = vadd.f32 0.0, %v1891
      %1893 = vmatmul.bf16.gmra.mxu0 %v1676
      %v1894 = vpop.f32.mrf.mxu0
      %v1895 = vadd.f32 0.0, %v1894
      %v1896 = vpop.f32.mrf.mxu0
      %v1897 = vadd.f32 0.0, %v1896
      %1898 = vmatmul.bf16.gmra.mxu0 %v1810
      %v1899 = vpop.f32.mrf.mxu0
      %v1900 = vadd.f32 0.0, %v1899
      %v1901 = vpop.f32.mrf.mxu0
      %v1902 = vadd.f32 0.0, %v1901
      %1903 = vdwg.mxu0
      %v1904 = vadd.f32 %v1770, %v1825
      %v1905 = vadd.f32 %v1771, %v1827
      %v1906 = vadd.f32 %v1772, %v1830
      %v1907 = vadd.f32 %v1773, %v1832
      %v1908 = vadd.f32 %v1774, %v1835
      %v1909 = vadd.f32 %v1775, %v1837
      %v1910 = vadd.f32 %v1776, %v1840
      %v1911 = vadd.f32 %v1777, %v1842
      %v1912 = vadd.f32 %v1778, %v1845
      %v1913 = vadd.f32 %v1779, %v1847
      %v1914 = vadd.f32 %v1780, %v1850
      %v1915 = vadd.f32 %v1781, %v1852
      %v1916 = vadd.f32 %v1782, %v1855
      %v1917 = vadd.f32 %v1783, %v1857
      %v1918 = vadd.f32 %v1784, %v1860
      %v1919 = vadd.f32 %v1785, %v1862
      %v1920 = vadd.f32 %v1786, %v1865
      %v1921 = vadd.f32 %v1787, %v1867
      %v1922 = vadd.f32 %v1788, %v1870
      %v1923 = vadd.f32 %v1789, %v1872
      %v1924 = vadd.f32 %v1790, %v1875
      %v1925 = vadd.f32 %v1791, %v1877
      %v1926 = vadd.f32 %v1792, %v1880
      %v1927 = vadd.f32 %v1793, %v1882
      %v1928 = vadd.f32 %v1794, %v1885
      %v1929 = vadd.f32 %v1795, %v1887
      %v1930 = vadd.f32 %v1796, %v1890
      %v1931 = vadd.f32 %v1797, %v1892
      %v1932 = vadd.f32 %v1798, %v1895
      %v1933 = vadd.f32 %v1799, %v1897
      %v1934 = vadd.f32 %v1800, %v1900
      %v1935 = vadd.f32 %v1801, %v1902
      %v1936 = vld [vmem:[#allocation2 + $0x14] sm:$0xf]
      %v1937 = vld [vmem:[#allocation2 + $0x18] sm:$0xf]
      %v1938 = vld [vmem:[#allocation2 + $0x1c] sm:$0x1]
      %v1939 = vld [vmem:[#allocation2 + $0x24] sm:$0xf]
      %v1940 = vld [vmem:[#allocation2 + $0x28] sm:$0xf]
      %v1941 = vld [vmem:[#allocation2 + $0x2c] sm:$0x1]
      %v1942 = vld [vmem:[#allocation2 + $0x34] sm:$0xf]
      %v1943 = vld [vmem:[#allocation2 + $0x38] sm:$0xf]
      %v1944 = vld [vmem:[#allocation2 + $0x3c] sm:$0x1]
      %v1945 = vld [vmem:[#allocation2 + $0x44] sm:$0xf]
      %v1946 = vld [vmem:[#allocation2 + $0x48] sm:$0xf]
      %v1947 = vld [vmem:[#allocation2 + $0x4c] sm:$0x1]
      %v1948 = vld [vmem:[#allocation2 + $0x54] sm:$0xf]
      %v1949 = vld [vmem:[#allocation2 + $0x58] sm:$0xf]
      %v1950 = vld [vmem:[#allocation2 + $0x5c] sm:$0x1]
      %v1951 = vld [vmem:[#allocation2 + $0x64] sm:$0xf]
      %v1952 = vld [vmem:[#allocation2 + $0x68] sm:$0xf]
      %v1953 = vld [vmem:[#allocation2 + $0x6c] sm:$0x1]
      %v1954 = vld [vmem:[#allocation2 + $0x74] sm:$0xf]
      %v1955 = vld [vmem:[#allocation2 + $0x78] sm:$0xf]
      %v1956 = vld [vmem:[#allocation2 + $0x7c] sm:$0x1]
      %v1957 = vld [vmem:[#allocation2 + $0x84] sm:$0xf]
      %v1958 = vld [vmem:[#allocation2 + $0x88] sm:$0xf]
      %v1959 = vld [vmem:[#allocation2 + $0x8c] sm:$0x1]
      %v1960 = vld [vmem:[#allocation2 + $0x94] sm:$0xf]
      %v1961 = vld [vmem:[#allocation2 + $0x98] sm:$0xf]
      %v1962 = vld [vmem:[#allocation2 + $0x9c] sm:$0x1]
      %v1963 = vld [vmem:[#allocation2 + $0xa4] sm:$0xf]
      %v1964 = vld [vmem:[#allocation2 + $0xa8] sm:$0xf]
      %v1965 = vld [vmem:[#allocation2 + $0xac] sm:$0x1]
      %v1966 = vld [vmem:[#allocation2 + $0xb4] sm:$0xf]
      %v1967 = vld [vmem:[#allocation2 + $0xb8] sm:$0xf]
      %v1968 = vld [vmem:[#allocation2 + $0xbc] sm:$0x1]
      %v1969 = vld [vmem:[#allocation2 + $0xc4] sm:$0xf]
      %v1970 = vld [vmem:[#allocation2 + $0xc8] sm:$0xf]
      %v1971 = vld [vmem:[#allocation2 + $0xcc] sm:$0x1]
      %v1972 = vld [vmem:[#allocation2 + $0xd4] sm:$0xf]
      %v1973 = vld [vmem:[#allocation2 + $0xd8] sm:$0xf]
      %v1974 = vld [vmem:[#allocation2 + $0xdc] sm:$0x1]
      %v1975 = vld [vmem:[#allocation2 + $0xe4] sm:$0xf]
      %v1976 = vld [vmem:[#allocation2 + $0xe8] sm:$0xf]
      %v1977 = vld [vmem:[#allocation2 + $0xec] sm:$0x1]
      %v1978 = vld [vmem:[#allocation2 + $0xf4] sm:$0xf]
      %v1979 = vld [vmem:[#allocation2 + $0xf8] sm:$0xf]
      %v1980 = vld [vmem:[#allocation2 + $0xfc] sm:$0x1]
      %v1981 = vld [vmem:[#allocation2 + $0x104] sm:$0xf]
      %v1982 = vld [vmem:[#allocation2 + $0x108] sm:$0xf]
      %v1983 = vld [vmem:[#allocation2 + $0x10c] sm:$0x1]
      %v1984 = vld [vmem:[#allocation2 + $0x114] sm:$0xf]
      %v1985 = vld [vmem:[#allocation2 + $0x118] sm:$0xf]
      %v1986 = vld [vmem:[#allocation2 + $0x11c] sm:$0x1]
      %v1987 = vld [vmem:[#allocation2 + $0x124] sm:$0xf]
      %v1988 = vld [vmem:[#allocation2 + $0x128] sm:$0xf]
      %v1989 = vld [vmem:[#allocation2 + $0x12c] sm:$0x1]
      %vm1990 = vsmask.f32 3328
      %vm1991 = vsmask.f32 7440
      %vm1992 = vmor %vm1990, %vm1991
      %v1994 = vshrl.u32 %v1936, 16
      %v1996 = vrot.slane %v1994, 4
      %v1997 = vshll.u32 %v1936, 16
      %v1999 = vrot.slane %v1997, 5
      %v2000 = vor.u32 %v1996, %v1999
      %v2001 = vrot.slane %v2000, 4
      %v2003 = vshll.u32 %v1937, 16
      %v2005 = vrot.slane %v2003, 5
      %v2006 = vsel %vm1992, %v2001, %v2005
      %v2007 = vshrl.u32 %v1937, 16
      %v2009 = vrot.slane %v2007, 4
      %v2010 = vor.u32 %v2009, %v2005
      %v2011 = vrot.slane %v2010, 4
      %v2013 = vshll.u32 %v1938, 16
      %v2015 = vrot.slane %v2013, 5
      %v2016 = vsel %vm1992, %v2011, %v2015
      %v2018 = vshrl.u32 %v1939, 16
      %v2020 = vrot.slane %v2018, 4
      %v2021 = vshll.u32 %v1939, 16
      %v2023 = vrot.slane %v2021, 5
      %v2024 = vor.u32 %v2020, %v2023
      %v2025 = vrot.slane %v2024, 4
      %v2027 = vshll.u32 %v1940, 16
      %v2029 = vrot.slane %v2027, 5
      %v2030 = vsel %vm1992, %v2025, %v2029
      %v2031 = vshrl.u32 %v1940, 16
      %v2033 = vrot.slane %v2031, 4
      %v2034 = vor.u32 %v2033, %v2029
      %v2035 = vrot.slane %v2034, 4
      %v2037 = vshll.u32 %v1941, 16
      %v2039 = vrot.slane %v2037, 5
      %v2040 = vsel %vm1992, %v2035, %v2039
      %v2042 = vshrl.u32 %v1942, 16
      %v2044 = vrot.slane %v2042, 4
      %v2045 = vshll.u32 %v1942, 16
      %v2047 = vrot.slane %v2045, 5
      %v2048 = vor.u32 %v2044, %v2047
      %v2049 = vrot.slane %v2048, 4
      %v2051 = vshll.u32 %v1943, 16
      %v2053 = vrot.slane %v2051, 5
      %v2054 = vsel %vm1992, %v2049, %v2053
      %v2055 = vshrl.u32 %v1943, 16
      %v2057 = vrot.slane %v2055, 4
      %v2058 = vor.u32 %v2057, %v2053
      %v2059 = vrot.slane %v2058, 4
      %v2061 = vshll.u32 %v1944, 16
      %v2063 = vrot.slane %v2061, 5
      %v2064 = vsel %vm1992, %v2059, %v2063
      %v2066 = vshrl.u32 %v1945, 16
      %v2068 = vrot.slane %v2066, 4
      %v2069 = vshll.u32 %v1945, 16
      %v2071 = vrot.slane %v2069, 5
      %v2072 = vor.u32 %v2068, %v2071
      %v2073 = vrot.slane %v2072, 4
      %v2075 = vshll.u32 %v1946, 16
      %v2077 = vrot.slane %v2075, 5
      %v2078 = vsel %vm1992, %v2073, %v2077
      %v2079 = vshrl.u32 %v1946, 16
      %v2081 = vrot.slane %v2079, 4
      %v2082 = vor.u32 %v2081, %v2077
      %v2083 = vrot.slane %v2082, 4
      %v2085 = vshll.u32 %v1947, 16
      %v2087 = vrot.slane %v2085, 5
      %v2088 = vsel %vm1992, %v2083, %v2087
      %v2090 = vshrl.u32 %v1948, 16
      %v2092 = vrot.slane %v2090, 4
      %v2093 = vshll.u32 %v1948, 16
      %v2095 = vrot.slane %v2093, 5
      %v2096 = vor.u32 %v2092, %v2095
      %v2097 = vrot.slane %v2096, 4
      %v2099 = vshll.u32 %v1949, 16
      %v2101 = vrot.slane %v2099, 5
      %v2102 = vsel %vm1992, %v2097, %v2101
      %v2103 = vshrl.u32 %v1949, 16
      %v2105 = vrot.slane %v2103, 4
      %v2106 = vor.u32 %v2105, %v2101
      %v2107 = vrot.slane %v2106, 4
      %v2109 = vshll.u32 %v1950, 16
      %v2111 = vrot.slane %v2109, 5
      %v2112 = vsel %vm1992, %v2107, %v2111
      %v2114 = vshrl.u32 %v1951, 16
      %v2116 = vrot.slane %v2114, 4
      %v2117 = vshll.u32 %v1951, 16
      %v2119 = vrot.slane %v2117, 5
      %v2120 = vor.u32 %v2116, %v2119
      %v2121 = vrot.slane %v2120, 4
      %v2123 = vshll.u32 %v1952, 16
      %v2125 = vrot.slane %v2123, 5
      %v2126 = vsel %vm1992, %v2121, %v2125
      %v2127 = vshrl.u32 %v1952, 16
      %v2129 = vrot.slane %v2127, 4
      %v2130 = vor.u32 %v2129, %v2125
      %v2131 = vrot.slane %v2130, 4
      %v2133 = vshll.u32 %v1953, 16
      %v2135 = vrot.slane %v2133, 5
      %v2136 = vsel %vm1992, %v2131, %v2135
      %v2138 = vshrl.u32 %v1954, 16
      %v2140 = vrot.slane %v2138, 4
      %v2141 = vshll.u32 %v1954, 16
      %v2143 = vrot.slane %v2141, 5
      %v2144 = vor.u32 %v2140, %v2143
      %v2145 = vrot.slane %v2144, 4
      %v2147 = vshll.u32 %v1955, 16
      %v2149 = vrot.slane %v2147, 5
      %v2150 = vsel %vm1992, %v2145, %v2149
      %v2151 = vshrl.u32 %v1955, 16
      %v2153 = vrot.slane %v2151, 4
      %v2154 = vor.u32 %v2153, %v2149
      %v2155 = vrot.slane %v2154, 4
      %v2157 = vshll.u32 %v1956, 16
      %v2159 = vrot.slane %v2157, 5
      %v2160 = vsel %vm1992, %v2155, %v2159
      %v2162 = vshrl.u32 %v1957, 16
      %v2164 = vrot.slane %v2162, 4
      %v2165 = vshll.u32 %v1957, 16
      %v2167 = vrot.slane %v2165, 5
      %v2168 = vor.u32 %v2164, %v2167
      %v2169 = vrot.slane %v2168, 4
      %v2171 = vshll.u32 %v1958, 16
      %v2173 = vrot.slane %v2171, 5
      %v2174 = vsel %vm1992, %v2169, %v2173
      %v2175 = vshrl.u32 %v1958, 16
      %v2177 = vrot.slane %v2175, 4
      %v2178 = vor.u32 %v2177, %v2173
      %v2179 = vrot.slane %v2178, 4
      %v2181 = vshll.u32 %v1959, 16
      %v2183 = vrot.slane %v2181, 5
      %v2184 = vsel %vm1992, %v2179, %v2183
      %v2186 = vshrl.u32 %v1960, 16
      %v2188 = vrot.slane %v2186, 4
      %v2189 = vshll.u32 %v1960, 16
      %v2191 = vrot.slane %v2189, 5
      %v2192 = vor.u32 %v2188, %v2191
      %v2193 = vrot.slane %v2192, 4
      %v2195 = vshll.u32 %v1961, 16
      %v2197 = vrot.slane %v2195, 5
      %v2198 = vsel %vm1992, %v2193, %v2197
      %v2199 = vshrl.u32 %v1961, 16
      %v2201 = vrot.slane %v2199, 4
      %v2202 = vor.u32 %v2201, %v2197
      %v2203 = vrot.slane %v2202, 4
      %v2205 = vshll.u32 %v1962, 16
      %v2207 = vrot.slane %v2205, 5
      %v2208 = vsel %vm1992, %v2203, %v2207
      %v2210 = vshrl.u32 %v1963, 16
      %v2212 = vrot.slane %v2210, 4
      %v2213 = vshll.u32 %v1963, 16
      %v2215 = vrot.slane %v2213, 5
      %v2216 = vor.u32 %v2212, %v2215
      %v2217 = vrot.slane %v2216, 4
      %v2219 = vshll.u32 %v1964, 16
      %v2221 = vrot.slane %v2219, 5
      %v2222 = vsel %vm1992, %v2217, %v2221
      %v2223 = vshrl.u32 %v1964, 16
      %v2225 = vrot.slane %v2223, 4
      %v2226 = vor.u32 %v2225, %v2221
      %v2227 = vrot.slane %v2226, 4
      %v2229 = vshll.u32 %v1965, 16
      %v2231 = vrot.slane %v2229, 5
      %v2232 = vsel %vm1992, %v2227, %v2231
      %v2234 = vshrl.u32 %v1966, 16
      %v2236 = vrot.slane %v2234, 4
      %v2237 = vshll.u32 %v1966, 16
      %v2239 = vrot.slane %v2237, 5
      %v2240 = vor.u32 %v2236, %v2239
      %v2241 = vrot.slane %v2240, 4
      %v2243 = vshll.u32 %v1967, 16
      %v2245 = vrot.slane %v2243, 5
      %v2246 = vsel %vm1992, %v2241, %v2245
      %v2247 = vshrl.u32 %v1967, 16
      %v2249 = vrot.slane %v2247, 4
      %v2250 = vor.u32 %v2249, %v2245
      %v2251 = vrot.slane %v2250, 4
      %v2253 = vshll.u32 %v1968, 16
      %v2255 = vrot.slane %v2253, 5
      %v2256 = vsel %vm1992, %v2251, %v2255
      %v2258 = vshrl.u32 %v1969, 16
      %v2260 = vrot.slane %v2258, 4
      %v2261 = vshll.u32 %v1969, 16
      %v2263 = vrot.slane %v2261, 5
      %v2264 = vor.u32 %v2260, %v2263
      %v2265 = vrot.slane %v2264, 4
      %v2267 = vshll.u32 %v1970, 16
      %v2269 = vrot.slane %v2267, 5
      %v2270 = vsel %vm1992, %v2265, %v2269
      %v2271 = vshrl.u32 %v1970, 16
      %v2273 = vrot.slane %v2271, 4
      %v2274 = vor.u32 %v2273, %v2269
      %v2275 = vrot.slane %v2274, 4
      %v2277 = vshll.u32 %v1971, 16
      %v2279 = vrot.slane %v2277, 5
      %v2280 = vsel %vm1992, %v2275, %v2279
      %v2282 = vshrl.u32 %v1972, 16
      %v2284 = vrot.slane %v2282, 4
      %v2285 = vshll.u32 %v1972, 16
      %v2287 = vrot.slane %v2285, 5
      %v2288 = vor.u32 %v2284, %v2287
      %v2289 = vrot.slane %v2288, 4
      %v2291 = vshll.u32 %v1973, 16
      %v2293 = vrot.slane %v2291, 5
      %v2294 = vsel %vm1992, %v2289, %v2293
      %v2295 = vshrl.u32 %v1973, 16
      %v2297 = vrot.slane %v2295, 4
      %v2298 = vor.u32 %v2297, %v2293
      %v2299 = vrot.slane %v2298, 4
      %v2301 = vshll.u32 %v1974, 16
      %v2303 = vrot.slane %v2301, 5
      %v2304 = vsel %vm1992, %v2299, %v2303
      %v2306 = vshrl.u32 %v1975, 16
      %v2308 = vrot.slane %v2306, 4
      %v2309 = vshll.u32 %v1975, 16
      %v2311 = vrot.slane %v2309, 5
      %v2312 = vor.u32 %v2308, %v2311
      %v2313 = vrot.slane %v2312, 4
      %v2315 = vshll.u32 %v1976, 16
      %v2317 = vrot.slane %v2315, 5
      %v2318 = vsel %vm1992, %v2313, %v2317
      %v2319 = vshrl.u32 %v1976, 16
      %v2321 = vrot.slane %v2319, 4
      %v2322 = vor.u32 %v2321, %v2317
      %v2323 = vrot.slane %v2322, 4
      %v2325 = vshll.u32 %v1977, 16
      %v2327 = vrot.slane %v2325, 5
      %v2328 = vsel %vm1992, %v2323, %v2327
      %v2330 = vshrl.u32 %v1978, 16
      %v2332 = vrot.slane %v2330, 4
      %v2333 = vshll.u32 %v1978, 16
      %v2335 = vrot.slane %v2333, 5
      %v2336 = vor.u32 %v2332, %v2335
      %v2337 = vrot.slane %v2336, 4
      %v2339 = vshll.u32 %v1979, 16
      %v2341 = vrot.slane %v2339, 5
      %v2342 = vsel %vm1992, %v2337, %v2341
      %v2343 = vshrl.u32 %v1979, 16
      %v2345 = vrot.slane %v2343, 4
      %v2346 = vor.u32 %v2345, %v2341
      %v2347 = vrot.slane %v2346, 4
      %v2349 = vshll.u32 %v1980, 16
      %v2351 = vrot.slane %v2349, 5
      %v2352 = vsel %vm1992, %v2347, %v2351
      %v2354 = vshrl.u32 %v1981, 16
      %v2356 = vrot.slane %v2354, 4
      %v2357 = vshll.u32 %v1981, 16
      %v2359 = vrot.slane %v2357, 5
      %v2360 = vor.u32 %v2356, %v2359
      %v2361 = vrot.slane %v2360, 4
      %v2363 = vshll.u32 %v1982, 16
      %v2365 = vrot.slane %v2363, 5
      %v2366 = vsel %vm1992, %v2361, %v2365
      %v2367 = vshrl.u32 %v1982, 16
      %v2369 = vrot.slane %v2367, 4
      %v2370 = vor.u32 %v2369, %v2365
      %v2371 = vrot.slane %v2370, 4
      %v2373 = vshll.u32 %v1983, 16
      %v2375 = vrot.slane %v2373, 5
      %v2376 = vsel %vm1992, %v2371, %v2375
      %v2378 = vshrl.u32 %v1984, 16
      %v2380 = vrot.slane %v2378, 4
      %v2381 = vshll.u32 %v1984, 16
      %v2383 = vrot.slane %v2381, 5
      %v2384 = vor.u32 %v2380, %v2383
      %v2385 = vrot.slane %v2384, 4
      %v2387 = vshll.u32 %v1985, 16
      %v2389 = vrot.slane %v2387, 5
      %v2390 = vsel %vm1992, %v2385, %v2389
      %v2391 = vshrl.u32 %v1985, 16
      %v2393 = vrot.slane %v2391, 4
      %v2394 = vor.u32 %v2393, %v2389
      %v2395 = vrot.slane %v2394, 4
      %v2397 = vshll.u32 %v1986, 16
      %v2399 = vrot.slane %v2397, 5
      %v2400 = vsel %vm1992, %v2395, %v2399
      %v2402 = vshrl.u32 %v1987, 16
      %v2404 = vrot.slane %v2402, 4
      %v2405 = vshll.u32 %v1987, 16
      %v2407 = vrot.slane %v2405, 5
      %v2408 = vor.u32 %v2404, %v2407
      %v2409 = vrot.slane %v2408, 4
      %v2411 = vshll.u32 %v1988, 16
      %v2413 = vrot.slane %v2411, 5
      %v2414 = vsel %vm1992, %v2409, %v2413
      %v2415 = vshrl.u32 %v1988, 16
      %v2417 = vrot.slane %v2415, 4
      %v2418 = vor.u32 %v2417, %v2413
      %v2419 = vrot.slane %v2418, 4
      %v2421 = vshll.u32 %v1989, 16
      %v2423 = vrot.slane %v2421, 5
      %v2424 = vsel %vm1992, %v2419, %v2423
      %s2425 = scalar_lea.vmem %s1, 4
      %v2426 = vld [vmem:[%s2425] sm:$0x3]
      %v2427 = vunpack.c.l.b16 %v2006
      %v2428 = vunpack.c.l.b16 %v2016
      %v2429 = vunpack.c.l.b16 %v2030
      %v2430 = vunpack.c.l.b16 %v2040
      %v2431 = vunpack.c.l.b16 %v2054
      %v2432 = vunpack.c.l.b16 %v2064
      %v2433 = vunpack.c.l.b16 %v2078
      %v2434 = vunpack.c.l.b16 %v2088
      %v2435 = vunpack.c.l.b16 %v2102
      %v2436 = vunpack.c.l.b16 %v2112
      %v2437 = vunpack.c.l.b16 %v2126
      %v2438 = vunpack.c.l.b16 %v2136
      %v2439 = vunpack.c.l.b16 %v2150
      %v2440 = vunpack.c.l.b16 %v2160
      %v2441 = vunpack.c.l.b16 %v2174
      %v2442 = vunpack.c.l.b16 %v2184
      %v2443 = vunpack.c.l.b16 %v2198
      %v2444 = vunpack.c.l.b16 %v2208
      %v2445 = vunpack.c.l.b16 %v2222
      %v2446 = vunpack.c.l.b16 %v2232
      %v2447 = vunpack.c.l.b16 %v2246
      %v2448 = vunpack.c.l.b16 %v2256
      %v2449 = vunpack.c.l.b16 %v2270
      %v2450 = vunpack.c.l.b16 %v2280
      %v2451 = vunpack.c.l.b16 %v2294
      %v2452 = vunpack.c.l.b16 %v2304
      %v2453 = vunpack.c.l.b16 %v2318
      %v2454 = vunpack.c.l.b16 %v2328
      %v2455 = vunpack.c.l.b16 %v2342
      %v2456 = vunpack.c.l.b16 %v2352
      %v2457 = vunpack.c.l.b16 %v2366
      %v2458 = vunpack.c.l.b16 %v2376
      %v2459 = vpack.c.b16 %v2428, %v2427
      %v2460 = vpack.c.b16 %v2430, %v2429
      %v2461 = vpack.c.b16 %v2432, %v2431
      %v2462 = vpack.c.b16 %v2434, %v2433
      %v2463 = vpack.c.b16 %v2436, %v2435
      %v2464 = vpack.c.b16 %v2438, %v2437
      %v2465 = vpack.c.b16 %v2440, %v2439
      %v2466 = vpack.c.b16 %v2442, %v2441
      %v2467 = vpack.c.b16 %v2444, %v2443
      %v2468 = vpack.c.b16 %v2446, %v2445
      %v2469 = vpack.c.b16 %v2448, %v2447
      %v2470 = vpack.c.b16 %v2450, %v2449
      %v2471 = vpack.c.b16 %v2452, %v2451
      %v2472 = vpack.c.b16 %v2454, %v2453
      %v2473 = vpack.c.b16 %v2456, %v2455
      %v2474 = vpack.c.b16 %v2458, %v2457
      %v2476 = vsel %vm1039, %v2459, 0
      %v2479 = vsel %vm1039, %v2460, 0
      %v2482 = vsel %vm1039, %v2461, 0
      %v2485 = vsel %vm1039, %v2462, 0
      %v2488 = vsel %vm1039, %v2463, 0
      %v2491 = vsel %vm1039, %v2464, 0
      %v2494 = vsel %vm1039, %v2465, 0
      %v2497 = vsel %vm1039, %v2466, 0
      %v2500 = vsel %vm1039, %v2467, 0
      %v2503 = vsel %vm1039, %v2468, 0
      %v2506 = vsel %vm1039, %v2469, 0
      %v2509 = vsel %vm1039, %v2470, 0
      %v2512 = vsel %vm1039, %v2471, 0
      %v2515 = vsel %vm1039, %v2472, 0
      %v2518 = vsel %vm1039, %v2473, 0
      %v2521 = vsel %vm1039, %v2474, 0
      %v2524 = vand.u32 %v2426, %v1091
      %2526 = vmatpush.bf16.msra.mxu0 0
      %2527 = vmatpush.bf16.msra.mxu0 0
      %2528 = vmatpush.bf16.msra.mxu0 0
      %2529 = vmatpush.bf16.msra.mxu0 0
      %2530 = vmatpush.bf16.msra.mxu0 0
      %2531 = vmatpush.bf16.msra.mxu0 0
      %2532 = vmatpush.bf16.msra.mxu0 0
      %2533 = vmatpush.bf16.msra.mxu0 %v2524
      %2534 = vmatmul.bf16.gmra.mxu0 %v2476
      %v2535 = vpop.f32.mrf.mxu0
      %v2536 = vadd.f32 0.0, %v2535
      %v2537 = vpop.f32.mrf.mxu0
      %v2538 = vadd.f32 0.0, %v2537
      %2539 = vmatmul.bf16.gmra.mxu0 %v2479
      %v2540 = vpop.f32.mrf.mxu0
      %v2541 = vadd.f32 0.0, %v2540
      %v2542 = vpop.f32.mrf.mxu0
      %v2543 = vadd.f32 0.0, %v2542
      %2544 = vmatmul.bf16.gmra.mxu0 %v2482
      %v2545 = vpop.f32.mrf.mxu0
      %v2546 = vadd.f32 0.0, %v2545
      %v2547 = vpop.f32.mrf.mxu0
      %v2548 = vadd.f32 0.0, %v2547
      %2549 = vmatmul.bf16.gmra.mxu0 %v2485
      %v2550 = vpop.f32.mrf.mxu0
      %v2551 = vadd.f32 0.0, %v2550
      %v2552 = vpop.f32.mrf.mxu0
      %v2553 = vadd.f32 0.0, %v2552
      %2554 = vmatmul.bf16.gmra.mxu0 %v2488
      %v2555 = vpop.f32.mrf.mxu0
      %v2556 = vadd.f32 0.0, %v2555
      %v2557 = vpop.f32.mrf.mxu0
      %v2558 = vadd.f32 0.0, %v2557
      %2559 = vmatmul.bf16.gmra.mxu0 %v2491
      %v2560 = vpop.f32.mrf.mxu0
      %v2561 = vadd.f32 0.0, %v2560
      %v2562 = vpop.f32.mrf.mxu0
      %v2563 = vadd.f32 0.0, %v2562
      %2564 = vmatmul.bf16.gmra.mxu0 %v2494
      %v2565 = vpop.f32.mrf.mxu0
      %v2566 = vadd.f32 0.0, %v2565
      %v2567 = vpop.f32.mrf.mxu0
      %v2568 = vadd.f32 0.0, %v2567
      %2569 = vmatmul.bf16.gmra.mxu0 %v2497
      %v2570 = vpop.f32.mrf.mxu0
      %v2571 = vadd.f32 0.0, %v2570
      %v2572 = vpop.f32.mrf.mxu0
      %v2573 = vadd.f32 0.0, %v2572
      %2574 = vmatmul.bf16.gmra.mxu0 %v2500
      %v2575 = vpop.f32.mrf.mxu0
      %v2576 = vadd.f32 0.0, %v2575
      %v2577 = vpop.f32.mrf.mxu0
      %v2578 = vadd.f32 0.0, %v2577
      %2579 = vmatmul.bf16.gmra.mxu0 %v2503
      %v2580 = vpop.f32.mrf.mxu0
      %v2581 = vadd.f32 0.0, %v2580
      %v2582 = vpop.f32.mrf.mxu0
      %v2583 = vadd.f32 0.0, %v2582
      %2584 = vmatmul.bf16.gmra.mxu0 %v2506
      %v2585 = vpop.f32.mrf.mxu0
      %v2586 = vadd.f32 0.0, %v2585
      %v2587 = vpop.f32.mrf.mxu0
      %v2588 = vadd.f32 0.0, %v2587
      %2589 = vmatmul.bf16.gmra.mxu0 %v2509
      %v2590 = vpop.f32.mrf.mxu0
      %v2591 = vadd.f32 0.0, %v2590
      %v2592 = vpop.f32.mrf.mxu0
      %v2593 = vadd.f32 0.0, %v2592
      %2594 = vmatmul.bf16.gmra.mxu0 %v2512
      %v2595 = vpop.f32.mrf.mxu0
      %v2596 = vadd.f32 0.0, %v2595
      %v2597 = vpop.f32.mrf.mxu0
      %v2598 = vadd.f32 0.0, %v2597
      %2599 = vmatmul.bf16.gmra.mxu0 %v2515
      %v2600 = vpop.f32.mrf.mxu0
      %v2601 = vadd.f32 0.0, %v2600
      %v2602 = vpop.f32.mrf.mxu0
      %v2603 = vadd.f32 0.0, %v2602
      %2604 = vmatmul.bf16.gmra.mxu0 %v2518
      %v2605 = vpop.f32.mrf.mxu0
      %v2606 = vadd.f32 0.0, %v2605
      %v2607 = vpop.f32.mrf.mxu0
      %v2608 = vadd.f32 0.0, %v2607
      %2609 = vmatmul.bf16.gmra.mxu0 %v2521
      %v2610 = vpop.f32.mrf.mxu0
      %v2611 = vadd.f32 0.0, %v2610
      %v2612 = vpop.f32.mrf.mxu0
      %v2613 = vadd.f32 0.0, %v2612
      %2614 = vdwg.mxu0
      %v2615 = vadd.f32 %v1904, %v2536
      %v2616 = vadd.f32 %v1905, %v2538
      %v2617 = vadd.f32 %v1906, %v2541
      %v2618 = vadd.f32 %v1907, %v2543
      %v2619 = vadd.f32 %v1908, %v2546
      %v2620 = vadd.f32 %v1909, %v2548
      %v2621 = vadd.f32 %v1910, %v2551
      %v2622 = vadd.f32 %v1911, %v2553
      %v2623 = vadd.f32 %v1912, %v2556
      %v2624 = vadd.f32 %v1913, %v2558
      %v2625 = vadd.f32 %v1914, %v2561
      %v2626 = vadd.f32 %v1915, %v2563
      %v2627 = vadd.f32 %v1916, %v2566
      %v2628 = vadd.f32 %v1917, %v2568
      %v2629 = vadd.f32 %v1918, %v2571
      %v2630 = vadd.f32 %v1919, %v2573
      %v2631 = vadd.f32 %v1920, %v2576
      %v2632 = vadd.f32 %v1921, %v2578
      %v2633 = vadd.f32 %v1922, %v2581
      %v2634 = vadd.f32 %v1923, %v2583
      %v2635 = vadd.f32 %v1924, %v2586
      %v2636 = vadd.f32 %v1925, %v2588
      %v2637 = vadd.f32 %v1926, %v2591
      %v2638 = vadd.f32 %v1927, %v2593
      %v2639 = vadd.f32 %v1928, %v2596
      %v2640 = vadd.f32 %v1929, %v2598
      %v2641 = vadd.f32 %v1930, %v2601
      %v2642 = vadd.f32 %v1931, %v2603
      %v2643 = vadd.f32 %v1932, %v2606
      %v2644 = vadd.f32 %v1933, %v2608
      %v2645 = vadd.f32 %v1934, %v2611
      %v2646 = vadd.f32 %v1935, %v2613
      %s2647 = scalar_lea.vmem %s1, 10
      %v2648 = vld [vmem:[%s2647] sm:$0x3]
      %v2649 = vunpack.c.l.b16 %v2390
      %v2650 = vunpack.c.l.b16 %v2400
      %v2651 = vpack.c.b16 %v2650, %v2649
      %v2653 = vsel %vm1039, %v2651, 0
      %v2656 = vand.u32 %v2648, %v1091
      %2658 = vmatpush.bf16.msra.mxu0 0
      %2659 = vmatpush.bf16.msra.mxu0 0
      %2660 = vmatpush.bf16.msra.mxu0 0
      %2661 = vmatpush.bf16.msra.mxu0 0
      %2662 = vmatpush.bf16.msra.mxu0 0
      %2663 = vmatpush.bf16.msra.mxu0 0
      %2664 = vmatpush.bf16.msra.mxu0 0
      %2665 = vmatpush.bf16.msra.mxu0 %v2656
      %2666 = vmatmul.bf16.gmra.mxu0 %v2479
      %v2667 = vpop.f32.mrf.mxu0
      %v2668 = vadd.f32 0.0, %v2667
      %v2669 = vpop.f32.mrf.mxu0
      %v2670 = vadd.f32 0.0, %v2669
      %2671 = vmatmul.bf16.gmra.mxu0 %v2482
      %v2672 = vpop.f32.mrf.mxu0
      %v2673 = vadd.f32 0.0, %v2672
      %v2674 = vpop.f32.mrf.mxu0
      %v2675 = vadd.f32 0.0, %v2674
      %2676 = vmatmul.bf16.gmra.mxu0 %v2485
      %v2677 = vpop.f32.mrf.mxu0
      %v2678 = vadd.f32 0.0, %v2677
      %v2679 = vpop.f32.mrf.mxu0
      %v2680 = vadd.f32 0.0, %v2679
      %2681 = vmatmul.bf16.gmra.mxu0 %v2488
      %v2682 = vpop.f32.mrf.mxu0
      %v2683 = vadd.f32 0.0, %v2682
      %v2684 = vpop.f32.mrf.mxu0
      %v2685 = vadd.f32 0.0, %v2684
      %2686 = vmatmul.bf16.gmra.mxu0 %v2491
      %v2687 = vpop.f32.mrf.mxu0
      %v2688 = vadd.f32 0.0, %v2687
      %v2689 = vpop.f32.mrf.mxu0
      %v2690 = vadd.f32 0.0, %v2689
      %2691 = vmatmul.bf16.gmra.mxu0 %v2494
      %v2692 = vpop.f32.mrf.mxu0
      %v2693 = vadd.f32 0.0, %v2692
      %v2694 = vpop.f32.mrf.mxu0
      %v2695 = vadd.f32 0.0, %v2694
      %2696 = vmatmul.bf16.gmra.mxu0 %v2497
      %v2697 = vpop.f32.mrf.mxu0
      %v2698 = vadd.f32 0.0, %v2697
      %v2699 = vpop.f32.mrf.mxu0
      %v2700 = vadd.f32 0.0, %v2699
      %2701 = vmatmul.bf16.gmra.mxu0 %v2500
      %v2702 = vpop.f32.mrf.mxu0
      %v2703 = vadd.f32 0.0, %v2702
      %v2704 = vpop.f32.mrf.mxu0
      %v2705 = vadd.f32 0.0, %v2704
      %2706 = vmatmul.bf16.gmra.mxu0 %v2503
      %v2707 = vpop.f32.mrf.mxu0
      %v2708 = vadd.f32 0.0, %v2707
      %v2709 = vpop.f32.mrf.mxu0
      %v2710 = vadd.f32 0.0, %v2709
      %2711 = vmatmul.bf16.gmra.mxu0 %v2506
      %v2712 = vpop.f32.mrf.mxu0
      %v2713 = vadd.f32 0.0, %v2712
      %v2714 = vpop.f32.mrf.mxu0
      %v2715 = vadd.f32 0.0, %v2714
      %2716 = vmatmul.bf16.gmra.mxu0 %v2509
      %v2717 = vpop.f32.mrf.mxu0
      %v2718 = vadd.f32 0.0, %v2717
      %v2719 = vpop.f32.mrf.mxu0
      %v2720 = vadd.f32 0.0, %v2719
      %2721 = vmatmul.bf16.gmra.mxu0 %v2512
      %v2722 = vpop.f32.mrf.mxu0
      %v2723 = vadd.f32 0.0, %v2722
      %v2724 = vpop.f32.mrf.mxu0
      %v2725 = vadd.f32 0.0, %v2724
      %2726 = vmatmul.bf16.gmra.mxu0 %v2515
      %v2727 = vpop.f32.mrf.mxu0
      %v2728 = vadd.f32 0.0, %v2727
      %v2729 = vpop.f32.mrf.mxu0
      %v2730 = vadd.f32 0.0, %v2729
      %2731 = vmatmul.bf16.gmra.mxu0 %v2518
      %v2732 = vpop.f32.mrf.mxu0
      %v2733 = vadd.f32 0.0, %v2732
      %v2734 = vpop.f32.mrf.mxu0
      %v2735 = vadd.f32 0.0, %v2734
      %2736 = vmatmul.bf16.gmra.mxu0 %v2521
      %v2737 = vpop.f32.mrf.mxu0
      %v2738 = vadd.f32 0.0, %v2737
      %v2739 = vpop.f32.mrf.mxu0
      %v2740 = vadd.f32 0.0, %v2739
      %2741 = vmatmul.bf16.gmra.mxu0 %v2653
      %v2742 = vpop.f32.mrf.mxu0
      %v2743 = vadd.f32 0.0, %v2742
      %v2744 = vpop.f32.mrf.mxu0
      %v2745 = vadd.f32 0.0, %v2744
      %2746 = vdwg.mxu0
      %v2747 = vadd.f32 %v2615, %v2668
      %v2748 = vadd.f32 %v2616, %v2670
      %v2749 = vadd.f32 %v2617, %v2673
      %v2750 = vadd.f32 %v2618, %v2675
      %v2751 = vadd.f32 %v2619, %v2678
      %v2752 = vadd.f32 %v2620, %v2680
      %v2753 = vadd.f32 %v2621, %v2683
      %v2754 = vadd.f32 %v2622, %v2685
      %v2755 = vadd.f32 %v2623, %v2688
      %v2756 = vadd.f32 %v2624, %v2690
      %v2757 = vadd.f32 %v2625, %v2693
      %v2758 = vadd.f32 %v2626, %v2695
      %v2759 = vadd.f32 %v2627, %v2698
      %v2760 = vadd.f32 %v2628, %v2700
      %v2761 = vadd.f32 %v2629, %v2703
      %v2762 = vadd.f32 %v2630, %v2705
      %v2763 = vadd.f32 %v2631, %v2708
      %v2764 = vadd.f32 %v2632, %v2710
      %v2765 = vadd.f32 %v2633, %v2713
      %v2766 = vadd.f32 %v2634, %v2715
      %v2767 = vadd.f32 %v2635, %v2718
      %v2768 = vadd.f32 %v2636, %v2720
      %v2769 = vadd.f32 %v2637, %v2723
      %v2770 = vadd.f32 %v2638, %v2725
      %v2771 = vadd.f32 %v2639, %v2728
      %v2772 = vadd.f32 %v2640, %v2730
      %v2773 = vadd.f32 %v2641, %v2733
      %v2774 = vadd.f32 %v2642, %v2735
      %v2775 = vadd.f32 %v2643, %v2738
      %v2776 = vadd.f32 %v2644, %v2740
      %v2777 = vadd.f32 %v2645, %v2743
      %v2778 = vadd.f32 %v2646, %v2745
      %s2779 = scalar_lea.vmem %s1, 16
      %v2780 = vld [vmem:[%s2779] sm:$0x3]
      %v2781 = vunpack.c.l.b16 %v2414
      %v2782 = vunpack.c.l.b16 %v2424
      %v2783 = vpack.c.b16 %v2782, %v2781
      %v2785 = vsel %vm1039, %v2783, 0
      %v2788 = vand.u32 %v2780, %v1091
      %2790 = vmatpush.bf16.msra.mxu0 0
      %2791 = vmatpush.bf16.msra.mxu0 0
      %2792 = vmatpush.bf16.msra.mxu0 0
      %2793 = vmatpush.bf16.msra.mxu0 0
      %2794 = vmatpush.bf16.msra.mxu0 0
      %2795 = vmatpush.bf16.msra.mxu0 0
      %2796 = vmatpush.bf16.msra.mxu0 0
      %2797 = vmatpush.bf16.msra.mxu0 %v2788
      %2798 = vmatmul.bf16.gmra.mxu0 %v2482
      %v2799 = vpop.f32.mrf.mxu0
      %v2800 = vadd.f32 0.0, %v2799
      %v2801 = vpop.f32.mrf.mxu0
      %v2802 = vadd.f32 0.0, %v2801
      %2803 = vmatmul.bf16.gmra.mxu0 %v2485
      %v2804 = vpop.f32.mrf.mxu0
      %v2805 = vadd.f32 0.0, %v2804
      %v2806 = vpop.f32.mrf.mxu0
      %v2807 = vadd.f32 0.0, %v2806
      %2808 = vmatmul.bf16.gmra.mxu0 %v2488
      %v2809 = vpop.f32.mrf.mxu0
      %v2810 = vadd.f32 0.0, %v2809
      %v2811 = vpop.f32.mrf.mxu0
      %v2812 = vadd.f32 0.0, %v2811
      %2813 = vmatmul.bf16.gmra.mxu0 %v2491
      %v2814 = vpop.f32.mrf.mxu0
      %v2815 = vadd.f32 0.0, %v2814
      %v2816 = vpop.f32.mrf.mxu0
      %v2817 = vadd.f32 0.0, %v2816
      %2818 = vmatmul.bf16.gmra.mxu0 %v2494
      %v2819 = vpop.f32.mrf.mxu0
      %v2820 = vadd.f32 0.0, %v2819
      %v2821 = vpop.f32.mrf.mxu0
      %v2822 = vadd.f32 0.0, %v2821
      %2823 = vmatmul.bf16.gmra.mxu0 %v2497
      %v2824 = vpop.f32.mrf.mxu0
      %v2825 = vadd.f32 0.0, %v2824
      %v2826 = vpop.f32.mrf.mxu0
      %v2827 = vadd.f32 0.0, %v2826
      %2828 = vmatmul.bf16.gmra.mxu0 %v2500
      %v2829 = vpop.f32.mrf.mxu0
      %v2830 = vadd.f32 0.0, %v2829
      %v2831 = vpop.f32.mrf.mxu0
      %v2832 = vadd.f32 0.0, %v2831
      %2833 = vmatmul.bf16.gmra.mxu0 %v2503
      %v2834 = vpop.f32.mrf.mxu0
      %v2835 = vadd.f32 0.0, %v2834
      %v2836 = vpop.f32.mrf.mxu0
      %v2837 = vadd.f32 0.0, %v2836
      %2838 = vmatmul.bf16.gmra.mxu0 %v2506
      %v2839 = vpop.f32.mrf.mxu0
      %v2840 = vadd.f32 0.0, %v2839
      %v2841 = vpop.f32.mrf.mxu0
      %v2842 = vadd.f32 0.0, %v2841
      %2843 = vmatmul.bf16.gmra.mxu0 %v2509
      %v2844 = vpop.f32.mrf.mxu0
      %v2845 = vadd.f32 0.0, %v2844
      %v2846 = vpop.f32.mrf.mxu0
      %v2847 = vadd.f32 0.0, %v2846
      %2848 = vmatmul.bf16.gmra.mxu0 %v2512
      %v2849 = vpop.f32.mrf.mxu0
      %v2850 = vadd.f32 0.0, %v2849
      %v2851 = vpop.f32.mrf.mxu0
      %v2852 = vadd.f32 0.0, %v2851
      %2853 = vmatmul.bf16.gmra.mxu0 %v2515
      %v2854 = vpop.f32.mrf.mxu0
      %v2855 = vadd.f32 0.0, %v2854
      %v2856 = vpop.f32.mrf.mxu0
      %v2857 = vadd.f32 0.0, %v2856
      %2858 = vmatmul.bf16.gmra.mxu0 %v2518
      %v2859 = vpop.f32.mrf.mxu0
      %v2860 = vadd.f32 0.0, %v2859
      %v2861 = vpop.f32.mrf.mxu0
      %v2862 = vadd.f32 0.0, %v2861
      %2863 = vmatmul.bf16.gmra.mxu0 %v2521
      %v2864 = vpop.f32.mrf.mxu0
      %v2865 = vadd.f32 0.0, %v2864
      %v2866 = vpop.f32.mrf.mxu0
      %v2867 = vadd.f32 0.0, %v2866
      %2868 = vmatmul.bf16.gmra.mxu0 %v2653
      %v2869 = vpop.f32.mrf.mxu0
      %v2870 = vadd.f32 0.0, %v2869
      %v2871 = vpop.f32.mrf.mxu0
      %v2872 = vadd.f32 0.0, %v2871
      %2873 = vmatmul.bf16.gmra.mxu0 %v2785
      %v2874 = vpop.f32.mrf.mxu0
      %v2875 = vadd.f32 0.0, %v2874
      %v2876 = vpop.f32.mrf.mxu0
      %v2877 = vadd.f32 0.0, %v2876
      %2878 = vdwg.mxu0
      %v2879 = vadd.f32 %v2747, %v2800
      %v2880 = vadd.f32 %v2748, %v2802
      %v2881 = vadd.f32 %v2749, %v2805
      %v2882 = vadd.f32 %v2750, %v2807
      %v2883 = vadd.f32 %v2751, %v2810
      %v2884 = vadd.f32 %v2752, %v2812
      %v2885 = vadd.f32 %v2753, %v2815
      %v2886 = vadd.f32 %v2754, %v2817
      %v2887 = vadd.f32 %v2755, %v2820
      %v2888 = vadd.f32 %v2756, %v2822
      %v2889 = vadd.f32 %v2757, %v2825
      %v2890 = vadd.f32 %v2758, %v2827
      %v2891 = vadd.f32 %v2759, %v2830
      %v2892 = vadd.f32 %v2760, %v2832
      %v2893 = vadd.f32 %v2761, %v2835
      %v2894 = vadd.f32 %v2762, %v2837
      %v2895 = vadd.f32 %v2763, %v2840
      %v2896 = vadd.f32 %v2764, %v2842
      %v2897 = vadd.f32 %v2765, %v2845
      %v2898 = vadd.f32 %v2766, %v2847
      %v2899 = vadd.f32 %v2767, %v2850
      %v2900 = vadd.f32 %v2768, %v2852
      %v2901 = vadd.f32 %v2769, %v2855
      %v2902 = vadd.f32 %v2770, %v2857
      %v2903 = vadd.f32 %v2771, %v2860
      %v2904 = vadd.f32 %v2772, %v2862
      %v2905 = vadd.f32 %v2773, %v2865
      %v2906 = vadd.f32 %v2774, %v2867
      %v2907 = vadd.f32 %v2775, %v2870
      %v2908 = vadd.f32 %v2776, %v2872
      %v2909 = vadd.f32 %v2777, %v2875
      %v2910 = vadd.f32 %v2778, %v2877
      %v2911 = vld [vmem:[%s2] sm:$0x1]
      %v2913 = vperm.slane %v2911, 0
      %v2915 = vadd.f32 %v2879, %v2913
      %v2916 = vadd.f32 %v2880, %v2913
      %v2917 = vadd.f32 %v2881, %v2913
      %v2918 = vadd.f32 %v2882, %v2913
      %v2919 = vadd.f32 %v2883, %v2913
      %v2920 = vadd.f32 %v2884, %v2913
      %v2921 = vadd.f32 %v2885, %v2913
      %v2922 = vadd.f32 %v2886, %v2913
      %v2923 = vadd.f32 %v2887, %v2913
      %v2924 = vadd.f32 %v2888, %v2913
      %v2925 = vadd.f32 %v2889, %v2913
      %v2926 = vadd.f32 %v2890, %v2913
      %v2927 = vadd.f32 %v2891, %v2913
      %v2928 = vadd.f32 %v2892, %v2913
      %v2929 = vadd.f32 %v2893, %v2913
      %v2930 = vadd.f32 %v2894, %v2913
      %v2931 = vadd.f32 %v2895, %v2913
      %v2932 = vadd.f32 %v2896, %v2913
      %v2933 = vadd.f32 %v2897, %v2913
      %v2934 = vadd.f32 %v2898, %v2913
      %v2935 = vadd.f32 %v2899, %v2913
      %v2936 = vadd.f32 %v2900, %v2913
      %v2937 = vadd.f32 %v2901, %v2913
      %v2938 = vadd.f32 %v2902, %v2913
      %v2939 = vadd.f32 %v2903, %v2913
      %v2940 = vadd.f32 %v2904, %v2913
      %v2941 = vadd.f32 %v2905, %v2913
      %v2942 = vadd.f32 %v2906, %v2913
      %v2943 = vadd.f32 %v2907, %v2913
      %v2944 = vadd.f32 %v2908, %v2913
      %v2945 = vadd.f32 %v2909, %v2913
      %v2946 = vadd.f32 %v2910, %v2913
      %2947 = vst [vmem:[#allocation4] sm:$0xff] %v2915
      %2948 = vst [vmem:[#allocation4 + $0x8] sm:$0xff] %v2916
      %2949 = vst [vmem:[#allocation4 + $0x10] sm:$0xff] %v2917
      %2950 = vst [vmem:[#allocation4 + $0x18] sm:$0xff] %v2918
      %2951 = vst [vmem:[#allocation4 + $0x20] sm:$0xff] %v2919
      %2952 = vst [vmem:[#allocation4 + $0x28] sm:$0xff] %v2920
      %2953 = vst [vmem:[#allocation4 + $0x30] sm:$0xff] %v2921
      %2954 = vst [vmem:[#allocation4 + $0x38] sm:$0xff] %v2922
      %2955 = vst [vmem:[#allocation4 + $0x40] sm:$0xff] %v2923
      %2956 = vst [vmem:[#allocation4 + $0x48] sm:$0xff] %v2924
      %2957 = vst [vmem:[#allocation4 + $0x50] sm:$0xff] %v2925
      %2958 = vst [vmem:[#allocation4 + $0x58] sm:$0xff] %v2926
      %2959 = vst [vmem:[#allocation4 + $0x60] sm:$0xff] %v2927
      %2960 = vst [vmem:[#allocation4 + $0x68] sm:$0xff] %v2928
      %2961 = vst [vmem:[#allocation4 + $0x70] sm:$0xff] %v2929
      %2962 = vst [vmem:[#allocation4 + $0x78] sm:$0xff] %v2930
      %2963 = vst [vmem:[#allocation4 + $0x80] sm:$0xff] %v2931
      %2964 = vst [vmem:[#allocation4 + $0x88] sm:$0xff] %v2932
      %2965 = vst [vmem:[#allocation4 + $0x90] sm:$0xff] %v2933
      %2966 = vst [vmem:[#allocation4 + $0x98] sm:$0xff] %v2934
      %2967 = vst [vmem:[#allocation4 + $0xa0] sm:$0xff] %v2935
      %2968 = vst [vmem:[#allocation4 + $0xa8] sm:$0xff] %v2936
      %2969 = vst [vmem:[#allocation4 + $0xb0] sm:$0xff] %v2937
      %2970 = vst [vmem:[#allocation4 + $0xb8] sm:$0xff] %v2938
      %2971 = vst [vmem:[#allocation4 + $0xc0] sm:$0xff] %v2939
      %2972 = vst [vmem:[#allocation4 + $0xc8] sm:$0xff] %v2940
      %2973 = vst [vmem:[#allocation4 + $0xd0] sm:$0xff] %v2941
      %2974 = vst [vmem:[#allocation4 + $0xd8] sm:$0xff] %v2942
      %2975 = vst [vmem:[#allocation4 + $0xe0] sm:$0xff] %v2943
      %2976 = vst [vmem:[#allocation4 + $0xe8] sm:$0xff] %v2944
      %2977 = vst [vmem:[#allocation4 + $0xf0] sm:$0xff] %v2945
      %2978 = vst [vmem:[#allocation4 + $0xf8] sm:$0xff] %v2946
      %2979 = vst [vmem:[#allocation3] sm:$0xf] 0
      %2980 = vst [vmem:[#allocation3 + $0x4] sm:$0xf] 0
      %2981 = vst [vmem:[#allocation3 + $0x8] sm:$0xf] 0
      %2982 = vst [vmem:[#allocation3 + $0xc] sm:$0xf] 0
      %2983 = vst [vmem:[#allocation3 + $0x10] sm:$0xf] 0
      %2984 = vst [vmem:[#allocation3 + $0x14] sm:$0xf] 0
      %2985 = vst [vmem:[#allocation3 + $0x18] sm:$0xf] 0
      %2986 = vst [vmem:[#allocation3 + $0x1c] sm:$0xf] 0
      %s2987 = scalar_lea.vmem [#allocation3], 288
      %2988 = vst [vmem:[%s2987] sm:$0xf] 0
      %2989 = vst [vmem:[%s2987 + $0x4] sm:$0xf] 0
      %2990 = vst [vmem:[%s2987 + $0x8] sm:$0xf] 0
      %2991 = vst [vmem:[%s2987 + $0xc] sm:$0xf] 0
      %2992 = vst [vmem:[%s2987 + $0x10] sm:$0xf] 0
      %2993 = vst [vmem:[%s2987 + $0x14] sm:$0xf] 0
      %2994 = vst [vmem:[%s2987 + $0x18] sm:$0xf] 0
      %2995 = vst [vmem:[%s2987 + $0x1c] sm:$0xf] 0
      %s2996 = scalar_lea.vmem [#allocation3], 32
      %2997 = vst [vmem:[%s2996] sm:$0xf] 0
      %2998 = vst [vmem:[%s2996 + $0x10] sm:$0xf] 0
      %2999 = vst [vmem:[%s2996 + $0x20] sm:$0xf] 0
      %3000 = vst [vmem:[%s2996 + $0x30] sm:$0xf] 0
      %3001 = vst [vmem:[%s2996 + $0x40] sm:$0xf] 0
      %3002 = vst [vmem:[%s2996 + $0x50] sm:$0xf] 0
      %3003 = vst [vmem:[%s2996 + $0x60] sm:$0xf] 0
      %3004 = vst [vmem:[%s2996 + $0x70] sm:$0xf] 0
      %3005 = vst [vmem:[%s2996 + $0x80] sm:$0xf] 0
      %3006 = vst [vmem:[%s2996 + $0x90] sm:$0xf] 0
      %3007 = vst [vmem:[%s2996 + $0xa0] sm:$0xf] 0
      %3008 = vst [vmem:[%s2996 + $0xb0] sm:$0xf] 0
      %3009 = vst [vmem:[%s2996 + $0xc0] sm:$0xf] 0
      %3010 = vst [vmem:[%s2996 + $0xd0] sm:$0xf] 0
      %3011 = vst [vmem:[%s2996 + $0xe0] sm:$0xf] 0
      %3012 = vst [vmem:[%s2996 + $0xf0] sm:$0xf] 0
      %3013 = vst [vmem:[%s2996 + $0xc] sm:$0xf] 0
      %3014 = vst [vmem:[%s2996 + $0x1c] sm:$0xf] 0
      %3015 = vst [vmem:[%s2996 + $0x2c] sm:$0xf] 0
      %3016 = vst [vmem:[%s2996 + $0x3c] sm:$0xf] 0
      %3017 = vst [vmem:[%s2996 + $0x4c] sm:$0xf] 0
      %3018 = vst [vmem:[%s2996 + $0x5c] sm:$0xf] 0
      %3019 = vst [vmem:[%s2996 + $0x6c] sm:$0xf] 0
      %3020 = vst [vmem:[%s2996 + $0x7c] sm:$0xf] 0
      %3021 = vst [vmem:[%s2996 + $0x8c] sm:$0xf] 0
      %3022 = vst [vmem:[%s2996 + $0x9c] sm:$0xf] 0
      %3023 = vst [vmem:[%s2996 + $0xac] sm:$0xf] 0
      %3024 = vst [vmem:[%s2996 + $0xbc] sm:$0xf] 0
      %3025 = vst [vmem:[%s2996 + $0xcc] sm:$0xf] 0
      %3026 = vst [vmem:[%s2996 + $0xdc] sm:$0xf] 0
      %3027 = vst [vmem:[%s2996 + $0xec] sm:$0xf] 0
      %3028 = vst [vmem:[%s2996 + $0xfc] sm:$0xf] 0
      %v3029 = vld [vmem:[#allocation4] sm:$0xff]
      %v3030 = vld [vmem:[#allocation4 + $0x8] sm:$0xff]
      %v3031 = vld [vmem:[#allocation4 + $0x10] sm:$0xff]
      %v3032 = vld [vmem:[#allocation4 + $0x18] sm:$0xff]
      %v3033 = vld [vmem:[#allocation4 + $0x20] sm:$0xff]
      %v3034 = vld [vmem:[#allocation4 + $0x28] sm:$0xff]
      %v3035 = vld [vmem:[#allocation4 + $0x30] sm:$0xff]
      %v3036 = vld [vmem:[#allocation4 + $0x38] sm:$0xff]
      %v3037 = vld [vmem:[#allocation4 + $0x40] sm:$0xff]
      %v3038 = vld [vmem:[#allocation4 + $0x48] sm:$0xff]
      %v3039 = vld [vmem:[#allocation4 + $0x50] sm:$0xff]
      %v3040 = vld [vmem:[#allocation4 + $0x58] sm:$0xff]
      %v3041 = vld [vmem:[#allocation4 + $0x60] sm:$0xff]
      %v3042 = vld [vmem:[#allocation4 + $0x68] sm:$0xff]
      %v3043 = vld [vmem:[#allocation4 + $0x70] sm:$0xff]
      %v3044 = vld [vmem:[#allocation4 + $0x78] sm:$0xff]
      %v3045 = vld [vmem:[#allocation4 + $0x80] sm:$0xff]
      %v3046 = vld [vmem:[#allocation4 + $0x88] sm:$0xff]
      %v3047 = vld [vmem:[#allocation4 + $0x90] sm:$0xff]
      %v3048 = vld [vmem:[#allocation4 + $0x98] sm:$0xff]
      %v3049 = vld [vmem:[#allocation4 + $0xa0] sm:$0xff]
      %v3050 = vld [vmem:[#allocation4 + $0xa8] sm:$0xff]
      %v3051 = vld [vmem:[#allocation4 + $0xb0] sm:$0xff]
      %v3052 = vld [vmem:[#allocation4 + $0xb8] sm:$0xff]
      %v3053 = vld [vmem:[#allocation4 + $0xc0] sm:$0xff]
      %v3054 = vld [vmem:[#allocation4 + $0xc8] sm:$0xff]
      %v3055 = vld [vmem:[#allocation4 + $0xd0] sm:$0xff]
      %v3056 = vld [vmem:[#allocation4 + $0xd8] sm:$0xff]
      %v3057 = vld [vmem:[#allocation4 + $0xe0] sm:$0xff]
      %v3058 = vld [vmem:[#allocation4 + $0xe8] sm:$0xff]
      %v3059 = vld [vmem:[#allocation4 + $0xf0] sm:$0xff]
      %v3060 = vld [vmem:[#allocation4 + $0xf8] sm:$0xff]
      %v3061 = vpack.c.bf16 %v3029, %v3029
      %v3062 = vpack.c.bf16 %v3030, %v3030
      %v3063 = vpack.c.bf16 %v3031, %v3031
      %v3064 = vpack.c.bf16 %v3032, %v3032
      %v3065 = vpack.c.bf16 %v3033, %v3033
      %v3066 = vpack.c.bf16 %v3034, %v3034
      %v3067 = vpack.c.bf16 %v3035, %v3035
      %v3068 = vpack.c.bf16 %v3036, %v3036
      %v3069 = vpack.c.bf16 %v3037, %v3037
      %v3070 = vpack.c.bf16 %v3038, %v3038
      %v3071 = vpack.c.bf16 %v3039, %v3039
      %v3072 = vpack.c.bf16 %v3040, %v3040
      %v3073 = vpack.c.bf16 %v3041, %v3041
      %v3074 = vpack.c.bf16 %v3042, %v3042
      %v3075 = vpack.c.bf16 %v3043, %v3043
      %v3076 = vpack.c.bf16 %v3044, %v3044
      %v3077 = vpack.c.bf16 %v3045, %v3045
      %v3078 = vpack.c.bf16 %v3046, %v3046
      %v3079 = vpack.c.bf16 %v3047, %v3047
      %v3080 = vpack.c.bf16 %v3048, %v3048
      %v3081 = vpack.c.bf16 %v3049, %v3049
      %v3082 = vpack.c.bf16 %v3050, %v3050
      %v3083 = vpack.c.bf16 %v3051, %v3051
      %v3084 = vpack.c.bf16 %v3052, %v3052
      %v3085 = vpack.c.bf16 %v3053, %v3053
      %v3086 = vpack.c.bf16 %v3054, %v3054
      %v3087 = vpack.c.bf16 %v3055, %v3055
      %v3088 = vpack.c.bf16 %v3056, %v3056
      %v3089 = vpack.c.bf16 %v3057, %v3057
      %v3090 = vpack.c.bf16 %v3058, %v3058
      %v3091 = vpack.c.bf16 %v3059, %v3059
      %v3092 = vpack.c.bf16 %v3060, %v3060
      %3093 = vst [vmem:[%s2996 + $0x4] sm:$0xf] %v3061
      %3094 = vst [vmem:[%s2996 + $0x8] sm:$0xf] %v3062
      %3095 = vst [vmem:[%s2996 + $0x14] sm:$0xf] %v3063
      %3096 = vst [vmem:[%s2996 + $0x18] sm:$0xf] %v3064
      %3097 = vst [vmem:[%s2996 + $0x24] sm:$0xf] %v3065
      %3098 = vst [vmem:[%s2996 + $0x28] sm:$0xf] %v3066
      %3099 = vst [vmem:[%s2996 + $0x34] sm:$0xf] %v3067
      %3100 = vst [vmem:[%s2996 + $0x38] sm:$0xf] %v3068
      %3101 = vst [vmem:[%s2996 + $0x44] sm:$0xf] %v3069
      %3102 = vst [vmem:[%s2996 + $0x48] sm:$0xf] %v3070
      %3103 = vst [vmem:[%s2996 + $0x54] sm:$0xf] %v3071
      %3104 = vst [vmem:[%s2996 + $0x58] sm:$0xf] %v3072
      %3105 = vst [vmem:[%s2996 + $0x64] sm:$0xf] %v3073
      %3106 = vst [vmem:[%s2996 + $0x68] sm:$0xf] %v3074
      %3107 = vst [vmem:[%s2996 + $0x74] sm:$0xf] %v3075
      %3108 = vst [vmem:[%s2996 + $0x78] sm:$0xf] %v3076
      %3109 = vst [vmem:[%s2996 + $0x84] sm:$0xf] %v3077
      %3110 = vst [vmem:[%s2996 + $0x88] sm:$0xf] %v3078
      %3111 = vst [vmem:[%s2996 + $0x94] sm:$0xf] %v3079
      %3112 = vst [vmem:[%s2996 + $0x98] sm:$0xf] %v3080
      %3113 = vst [vmem:[%s2996 + $0xa4] sm:$0xf] %v3081
      %3114 = vst [vmem:[%s2996 + $0xa8] sm:$0xf] %v3082
      %3115 = vst [vmem:[%s2996 + $0xb4] sm:$0xf] %v3083
      %3116 = vst [vmem:[%s2996 + $0xb8] sm:$0xf] %v3084
      %3117 = vst [vmem:[%s2996 + $0xc4] sm:$0xf] %v3085
      %3118 = vst [vmem:[%s2996 + $0xc8] sm:$0xf] %v3086
      %3119 = vst [vmem:[%s2996 + $0xd4] sm:$0xf] %v3087
      %3120 = vst [vmem:[%s2996 + $0xd8] sm:$0xf] %v3088
      %3121 = vst [vmem:[%s2996 + $0xe4] sm:$0xf] %v3089
      %3122 = vst [vmem:[%s2996 + $0xe8] sm:$0xf] %v3090
      %3123 = vst [vmem:[%s2996 + $0xf4] sm:$0xf] %v3091
      %3124 = vst [vmem:[%s2996 + $0xf8] sm:$0xf] %v3092
      %v3125 = vld [vmem:[#allocation3 + $0x10] sm:$0x8]
      %v3126 = vld [vmem:[#allocation3 + $0x14] sm:$0xf]
      %v3127 = vld [vmem:[#allocation3 + $0x18] sm:$0xf]
      %v3128 = vld [vmem:[#allocation3 + $0x20] sm:$0x8]
      %v3129 = vld [vmem:[#allocation3 + $0x24] sm:$0xf]
      %v3130 = vld [vmem:[#allocation3 + $0x28] sm:$0xf]
      %v3131 = vld [vmem:[#allocation3 + $0x30] sm:$0x8]
      %v3132 = vld [vmem:[#allocation3 + $0x34] sm:$0xf]
      %v3133 = vld [vmem:[#allocation3 + $0x38] sm:$0xf]
      %v3134 = vld [vmem:[#allocation3 + $0x40] sm:$0x8]
      %v3135 = vld [vmem:[#allocation3 + $0x44] sm:$0xf]
      %v3136 = vld [vmem:[#allocation3 + $0x48] sm:$0xf]
      %v3137 = vld [vmem:[#allocation3 + $0x50] sm:$0x8]
      %v3138 = vld [vmem:[#allocation3 + $0x54] sm:$0xf]
      %v3139 = vld [vmem:[#allocation3 + $0x58] sm:$0xf]
      %v3140 = vld [vmem:[#allocation3 + $0x60] sm:$0x8]
      %v3141 = vld [vmem:[#allocation3 + $0x64] sm:$0xf]
      %v3142 = vld [vmem:[#allocation3 + $0x68] sm:$0xf]
      %v3143 = vld [vmem:[#allocation3 + $0x70] sm:$0x8]
      %v3144 = vld [vmem:[#allocation3 + $0x74] sm:$0xf]
      %v3145 = vld [vmem:[#allocation3 + $0x78] sm:$0xf]
      %v3146 = vld [vmem:[#allocation3 + $0x80] sm:$0x8]
      %v3147 = vld [vmem:[#allocation3 + $0x84] sm:$0xf]
      %v3148 = vld [vmem:[#allocation3 + $0x88] sm:$0xf]
      %v3149 = vld [vmem:[#allocation3 + $0x90] sm:$0x8]
      %v3150 = vld [vmem:[#allocation3 + $0x94] sm:$0xf]
      %v3151 = vld [vmem:[#allocation3 + $0x98] sm:$0xf]
      %v3152 = vld [vmem:[#allocation3 + $0xa0] sm:$0x8]
      %v3153 = vld [vmem:[#allocation3 + $0xa4] sm:$0xf]
      %v3154 = vld [vmem:[#allocation3 + $0xa8] sm:$0xf]
      %v3155 = vld [vmem:[#allocation3 + $0xb0] sm:$0x8]
      %v3156 = vld [vmem:[#allocation3 + $0xb4] sm:$0xf]
      %v3157 = vld [vmem:[#allocation3 + $0xb8] sm:$0xf]
      %v3158 = vld [vmem:[#allocation3 + $0xc0] sm:$0x8]
      %v3159 = vld [vmem:[#allocation3 + $0xc4] sm:$0xf]
      %v3160 = vld [vmem:[#allocation3 + $0xc8] sm:$0xf]
      %v3161 = vld [vmem:[#allocation3 + $0xd0] sm:$0x8]
      %v3162 = vld [vmem:[#allocation3 + $0xd4] sm:$0xf]
      %v3163 = vld [vmem:[#allocation3 + $0xd8] sm:$0xf]
      %v3164 = vld [vmem:[#allocation3 + $0xe0] sm:$0x8]
      %v3165 = vld [vmem:[#allocation3 + $0xe4] sm:$0xf]
      %v3166 = vld [vmem:[#allocation3 + $0xe8] sm:$0xf]
      %v3167 = vld [vmem:[#allocation3 + $0xf0] sm:$0x8]
      %v3168 = vld [vmem:[#allocation3 + $0xf4] sm:$0xf]
      %v3169 = vld [vmem:[#allocation3 + $0xf8] sm:$0xf]
      %v3170 = vld [vmem:[#allocation3 + $0x100] sm:$0x8]
      %v3171 = vld [vmem:[#allocation3 + $0x104] sm:$0xf]
      %v3172 = vld [vmem:[#allocation3 + $0x108] sm:$0xf]
      %v3173 = vld [vmem:[#allocation3 + $0x110] sm:$0x8]
      %v3174 = vld [vmem:[#allocation3 + $0x114] sm:$0xf]
      %v3175 = vld [vmem:[#allocation3 + $0x118] sm:$0xf]
      %v3176 = vld [vmem:[#allocation3 + $0x120] sm:$0x8]
      %v3177 = vld [vmem:[#allocation3 + $0x124] sm:$0xf]
      %v3178 = vld [vmem:[#allocation3 + $0x128] sm:$0xf]
      %v3180 = vshrl.u32 %v3125, 16
      %v3182 = vrot.slane %v3180, 7
      %v3183 = vrot.slane %v3182, 4
      %v3185 = vshrl.u32 %v3126, 16
      %v3187 = vrot.slane %v3185, 7
      %v3188 = vshll.u32 %v3126, 16
      %v3190 = vor.u32 %v3187, %v3188
      %v3191 = vsel %vm591, %v3183, %v3190
      %v3192 = vrot.slane %v3187, 4
      %v3194 = vshrl.u32 %v3127, 16
      %v3196 = vrot.slane %v3194, 7
      %v3197 = vshll.u32 %v3127, 16
      %v3199 = vor.u32 %v3196, %v3197
      %v3200 = vsel %vm591, %v3192, %v3199
      %v3202 = vshrl.u32 %v3128, 16
      %v3204 = vrot.slane %v3202, 7
      %v3205 = vrot.slane %v3204, 4
      %v3207 = vshrl.u32 %v3129, 16
      %v3209 = vrot.slane %v3207, 7
      %v3210 = vshll.u32 %v3129, 16
      %v3212 = vor.u32 %v3209, %v3210
      %v3213 = vsel %vm591, %v3205, %v3212
      %v3214 = vrot.slane %v3209, 4
      %v3216 = vshrl.u32 %v3130, 16
      %v3218 = vrot.slane %v3216, 7
      %v3219 = vshll.u32 %v3130, 16
      %v3221 = vor.u32 %v3218, %v3219
      %v3222 = vsel %vm591, %v3214, %v3221
      %v3224 = vshrl.u32 %v3131, 16
      %v3226 = vrot.slane %v3224, 7
      %v3227 = vrot.slane %v3226, 4
      %v3229 = vshrl.u32 %v3132, 16
      %v3231 = vrot.slane %v3229, 7
      %v3232 = vshll.u32 %v3132, 16
      %v3234 = vor.u32 %v3231, %v3232
      %v3235 = vsel %vm591, %v3227, %v3234
      %v3236 = vrot.slane %v3231, 4
      %v3238 = vshrl.u32 %v3133, 16
      %v3240 = vrot.slane %v3238, 7
      %v3241 = vshll.u32 %v3133, 16
      %v3243 = vor.u32 %v3240, %v3241
      %v3244 = vsel %vm591, %v3236, %v3243
      %v3246 = vshrl.u32 %v3134, 16
      %v3248 = vrot.slane %v3246, 7
      %v3249 = vrot.slane %v3248, 4
      %v3251 = vshrl.u32 %v3135, 16
      %v3253 = vrot.slane %v3251, 7
      %v3254 = vshll.u32 %v3135, 16
      %v3256 = vor.u32 %v3253, %v3254
      %v3257 = vsel %vm591, %v3249, %v3256
      %v3258 = vrot.slane %v3253, 4
      %v3260 = vshrl.u32 %v3136, 16
      %v3262 = vrot.slane %v3260, 7
      %v3263 = vshll.u32 %v3136, 16
      %v3265 = vor.u32 %v3262, %v3263
      %v3266 = vsel %vm591, %v3258, %v3265
      %v3268 = vshrl.u32 %v3137, 16
      %v3270 = vrot.slane %v3268, 7
      %v3271 = vrot.slane %v3270, 4
      %v3273 = vshrl.u32 %v3138, 16
      %v3275 = vrot.slane %v3273, 7
      %v3276 = vshll.u32 %v3138, 16
      %v3278 = vor.u32 %v3275, %v3276
      %v3279 = vsel %vm591, %v3271, %v3278
      %v3280 = vrot.slane %v3275, 4
      %v3282 = vshrl.u32 %v3139, 16
      %v3284 = vrot.slane %v3282, 7
      %v3285 = vshll.u32 %v3139, 16
      %v3287 = vor.u32 %v3284, %v3285
      %v3288 = vsel %vm591, %v3280, %v3287
      %v3290 = vshrl.u32 %v3140, 16
      %v3292 = vrot.slane %v3290, 7
      %v3293 = vrot.slane %v3292, 4
      %v3295 = vshrl.u32 %v3141, 16
      %v3297 = vrot.slane %v3295, 7
      %v3298 = vshll.u32 %v3141, 16
      %v3300 = vor.u32 %v3297, %v3298
      %v3301 = vsel %vm591, %v3293, %v3300
      %v3302 = vrot.slane %v3297, 4
      %v3304 = vshrl.u32 %v3142, 16
      %v3306 = vrot.slane %v3304, 7
      %v3307 = vshll.u32 %v3142, 16
      %v3309 = vor.u32 %v3306, %v3307
      %v3310 = vsel %vm591, %v3302, %v3309
      %v3312 = vshrl.u32 %v3143, 16
      %v3314 = vrot.slane %v3312, 7
      %v3315 = vrot.slane %v3314, 4
      %v3317 = vshrl.u32 %v3144, 16
      %v3319 = vrot.slane %v3317, 7
      %v3320 = vshll.u32 %v3144, 16
      %v3322 = vor.u32 %v3319, %v3320
      %v3323 = vsel %vm591, %v3315, %v3322
      %v3324 = vrot.slane %v3319, 4
      %v3326 = vshrl.u32 %v3145, 16
      %v3328 = vrot.slane %v3326, 7
      %v3329 = vshll.u32 %v3145, 16
      %v3331 = vor.u32 %v3328, %v3329
      %v3332 = vsel %vm591, %v3324, %v3331
      %v3334 = vshrl.u32 %v3146, 16
      %v3336 = vrot.slane %v3334, 7
      %v3337 = vrot.slane %v3336, 4
      %v3339 = vshrl.u32 %v3147, 16
      %v3341 = vrot.slane %v3339, 7
      %v3342 = vshll.u32 %v3147, 16
      %v3344 = vor.u32 %v3341, %v3342
      %v3345 = vsel %vm591, %v3337, %v3344
      %v3346 = vrot.slane %v3341, 4
      %v3348 = vshrl.u32 %v3148, 16
      %v3350 = vrot.slane %v3348, 7
      %v3351 = vshll.u32 %v3148, 16
      %v3353 = vor.u32 %v3350, %v3351
      %v3354 = vsel %vm591, %v3346, %v3353
      %v3356 = vshrl.u32 %v3149, 16
      %v3358 = vrot.slane %v3356, 7
      %v3359 = vrot.slane %v3358, 4
      %v3361 = vshrl.u32 %v3150, 16
      %v3363 = vrot.slane %v3361, 7
      %v3364 = vshll.u32 %v3150, 16
      %v3366 = vor.u32 %v3363, %v3364
      %v3367 = vsel %vm591, %v3359, %v3366
      %v3368 = vrot.slane %v3363, 4
      %v3370 = vshrl.u32 %v3151, 16
      %v3372 = vrot.slane %v3370, 7
      %v3373 = vshll.u32 %v3151, 16
      %v3375 = vor.u32 %v3372, %v3373
      %v3376 = vsel %vm591, %v3368, %v3375
      %v3378 = vshrl.u32 %v3152, 16
      %v3380 = vrot.slane %v3378, 7
      %v3381 = vrot.slane %v3380, 4
      %v3383 = vshrl.u32 %v3153, 16
      %v3385 = vrot.slane %v3383, 7
      %v3386 = vshll.u32 %v3153, 16
      %v3388 = vor.u32 %v3385, %v3386
      %v3389 = vsel %vm591, %v3381, %v3388
      %v3390 = vrot.slane %v3385, 4
      %v3392 = vshrl.u32 %v3154, 16
      %v3394 = vrot.slane %v3392, 7
      %v3395 = vshll.u32 %v3154, 16
      %v3397 = vor.u32 %v3394, %v3395
      %v3398 = vsel %vm591, %v3390, %v3397
      %v3400 = vshrl.u32 %v3155, 16
      %v3402 = vrot.slane %v3400, 7
      %v3403 = vrot.slane %v3402, 4
      %v3405 = vshrl.u32 %v3156, 16
      %v3407 = vrot.slane %v3405, 7
      %v3408 = vshll.u32 %v3156, 16
      %v3410 = vor.u32 %v3407, %v3408
      %v3411 = vsel %vm591, %v3403, %v3410
      %v3412 = vrot.slane %v3407, 4
      %v3414 = vshrl.u32 %v3157, 16
      %v3416 = vrot.slane %v3414, 7
      %v3417 = vshll.u32 %v3157, 16
      %v3419 = vor.u32 %v3416, %v3417
      %v3420 = vsel %vm591, %v3412, %v3419
      %v3422 = vshrl.u32 %v3158, 16
      %v3424 = vrot.slane %v3422, 7
      %v3425 = vrot.slane %v3424, 4
      %v3427 = vshrl.u32 %v3159, 16
      %v3429 = vrot.slane %v3427, 7
      %v3430 = vshll.u32 %v3159, 16
      %v3432 = vor.u32 %v3429, %v3430
      %v3433 = vsel %vm591, %v3425, %v3432
      %v3434 = vrot.slane %v3429, 4
      %v3436 = vshrl.u32 %v3160, 16
      %v3438 = vrot.slane %v3436, 7
      %v3439 = vshll.u32 %v3160, 16
      %v3441 = vor.u32 %v3438, %v3439
      %v3442 = vsel %vm591, %v3434, %v3441
      %v3444 = vshrl.u32 %v3161, 16
      %v3446 = vrot.slane %v3444, 7
      %v3447 = vrot.slane %v3446, 4
      %v3449 = vshrl.u32 %v3162, 16
      %v3451 = vrot.slane %v3449, 7
      %v3452 = vshll.u32 %v3162, 16
      %v3454 = vor.u32 %v3451, %v3452
      %v3455 = vsel %vm591, %v3447, %v3454
      %v3456 = vrot.slane %v3451, 4
      %v3458 = vshrl.u32 %v3163, 16
      %v3460 = vrot.slane %v3458, 7
      %v3461 = vshll.u32 %v3163, 16
      %v3463 = vor.u32 %v3460, %v3461
      %v3464 = vsel %vm591, %v3456, %v3463
      %v3466 = vshrl.u32 %v3164, 16
      %v3468 = vrot.slane %v3466, 7
      %v3469 = vrot.slane %v3468, 4
      %v3471 = vshrl.u32 %v3165, 16
      %v3473 = vrot.slane %v3471, 7
      %v3474 = vshll.u32 %v3165, 16
      %v3476 = vor.u32 %v3473, %v3474
      %v3477 = vsel %vm591, %v3469, %v3476
      %v3478 = vrot.slane %v3473, 4
      %v3480 = vshrl.u32 %v3166, 16
      %v3482 = vrot.slane %v3480, 7
      %v3483 = vshll.u32 %v3166, 16
      %v3485 = vor.u32 %v3482, %v3483
      %v3486 = vsel %vm591, %v3478, %v3485
      %v3488 = vshrl.u32 %v3167, 16
      %v3490 = vrot.slane %v3488, 7
      %v3491 = vrot.slane %v3490, 4
      %v3493 = vshrl.u32 %v3168, 16
      %v3495 = vrot.slane %v3493, 7
      %v3496 = vshll.u32 %v3168, 16
      %v3498 = vor.u32 %v3495, %v3496
      %v3499 = vsel %vm591, %v3491, %v3498
      %v3500 = vrot.slane %v3495, 4
      %v3502 = vshrl.u32 %v3169, 16
      %v3504 = vrot.slane %v3502, 7
      %v3505 = vshll.u32 %v3169, 16
      %v3507 = vor.u32 %v3504, %v3505
      %v3508 = vsel %vm591, %v3500, %v3507
      %v3510 = vshrl.u32 %v3170, 16
      %v3512 = vrot.slane %v3510, 7
      %v3513 = vrot.slane %v3512, 4
      %v3515 = vshrl.u32 %v3171, 16
      %v3517 = vrot.slane %v3515, 7
      %v3518 = vshll.u32 %v3171, 16
      %v3520 = vor.u32 %v3517, %v3518
      %v3521 = vsel %vm591, %v3513, %v3520
      %v3522 = vrot.slane %v3517, 4
      %v3524 = vshrl.u32 %v3172, 16
      %v3526 = vrot.slane %v3524, 7
      %v3527 = vshll.u32 %v3172, 16
      %v3529 = vor.u32 %v3526, %v3527
      %v3530 = vsel %vm591, %v3522, %v3529
      %v3532 = vshrl.u32 %v3173, 16
      %v3534 = vrot.slane %v3532, 7
      %v3535 = vrot.slane %v3534, 4
      %v3537 = vshrl.u32 %v3174, 16
      %v3539 = vrot.slane %v3537, 7
      %v3540 = vshll.u32 %v3174, 16
      %v3542 = vor.u32 %v3539, %v3540
      %v3543 = vsel %vm591, %v3535, %v3542
      %v3544 = vrot.slane %v3539, 4
      %v3546 = vshrl.u32 %v3175, 16
      %v3548 = vrot.slane %v3546, 7
      %v3549 = vshll.u32 %v3175, 16
      %v3551 = vor.u32 %v3548, %v3549
      %v3552 = vsel %vm591, %v3544, %v3551
      %v3554 = vshrl.u32 %v3176, 16
      %v3556 = vrot.slane %v3554, 7
      %v3557 = vrot.slane %v3556, 4
      %v3559 = vshrl.u32 %v3177, 16
      %v3561 = vrot.slane %v3559, 7
      %v3562 = vshll.u32 %v3177, 16
      %v3564 = vor.u32 %v3561, %v3562
      %v3565 = vsel %vm591, %v3557, %v3564
      %v3566 = vrot.slane %v3561, 4
      %v3568 = vshrl.u32 %v3178, 16
      %v3570 = vrot.slane %v3568, 7
      %v3571 = vshll.u32 %v3178, 16
      %v3573 = vor.u32 %v3570, %v3571
      %v3574 = vsel %vm591, %v3566, %v3573
      %v3575 = vld [vmem:[%s3] sm:$0xf]
      %v3576 = vld [vmem:[%s3 + $0x4] sm:$0xf]
      %v3577 = vld [vmem:[%s3 + $0x8] sm:$0xf]
      %v3578 = vld [vmem:[%s3 + $0xc] sm:$0xf]
      %v3579 = vld [vmem:[%s3 + $0x10] sm:$0xf]
      %v3580 = vld [vmem:[%s3 + $0x14] sm:$0xf]
      %v3581 = vld [vmem:[%s3 + $0x18] sm:$0xf]
      %v3582 = vld [vmem:[%s3 + $0x1c] sm:$0xf]
      %v3583 = vld [vmem:[%s3 + $0x20] sm:$0xf]
      %v3584 = vld [vmem:[%s3 + $0x24] sm:$0xf]
      %v3585 = vld [vmem:[%s3 + $0x28] sm:$0xf]
      %v3586 = vld [vmem:[%s3 + $0x2c] sm:$0xf]
      %v3587 = vld [vmem:[%s3 + $0x30] sm:$0xf]
      %v3588 = vld [vmem:[%s3 + $0x34] sm:$0xf]
      %v3589 = vld [vmem:[%s3 + $0x38] sm:$0xf]
      %v3590 = vld [vmem:[%s3 + $0x3c] sm:$0xf]
      %s3591 = scalar_lea.vmem %s3, 192
      %v3592 = vld [vmem:[%s3591] sm:$0xf]
      %v3593 = vld [vmem:[%s3591 + $0x4] sm:$0xf]
      %v3594 = vld [vmem:[%s3591 + $0x8] sm:$0xf]
      %v3595 = vld [vmem:[%s3591 + $0xc] sm:$0xf]
      %v3596 = vld [vmem:[%s3591 + $0x10] sm:$0xf]
      %v3597 = vld [vmem:[%s3591 + $0x14] sm:$0xf]
      %v3598 = vld [vmem:[%s3591 + $0x18] sm:$0xf]
      %v3599 = vld [vmem:[%s3591 + $0x1c] sm:$0xf]
      %v3600 = vld [vmem:[%s3591 + $0x20] sm:$0xf]
      %v3601 = vld [vmem:[%s3591 + $0x24] sm:$0xf]
      %v3602 = vld [vmem:[%s3591 + $0x28] sm:$0xf]
      %v3603 = vld [vmem:[%s3591 + $0x2c] sm:$0xf]
      %v3604 = vld [vmem:[%s3591 + $0x30] sm:$0xf]
      %v3605 = vld [vmem:[%s3591 + $0x34] sm:$0xf]
      %v3606 = vld [vmem:[%s3591 + $0x38] sm:$0xf]
      %v3607 = vld [vmem:[%s3591 + $0x3c] sm:$0xf]
      %v3608 = vunpack.c.l.b16 %v3213
      %v3609 = vunpack.c.l.b16 %v3222
      %v3610 = vunpack.c.l.b16 %v3235
      %v3611 = vunpack.c.l.b16 %v3244
      %v3612 = vunpack.c.l.b16 %v3257
      %v3613 = vunpack.c.l.b16 %v3266
      %v3614 = vunpack.c.l.b16 %v3279
      %v3615 = vunpack.c.l.b16 %v3288
      %v3616 = vunpack.c.l.b16 %v3301
      %v3617 = vunpack.c.l.b16 %v3310
      %v3618 = vunpack.c.l.b16 %v3323
      %v3619 = vunpack.c.l.b16 %v3332
      %v3620 = vunpack.c.l.b16 %v3345
      %v3621 = vunpack.c.l.b16 %v3354
      %v3622 = vunpack.c.l.b16 %v3367
      %v3623 = vunpack.c.l.b16 %v3376
      %v3624 = vunpack.c.l.b16 %v3389
      %v3625 = vunpack.c.l.b16 %v3398
      %v3626 = vunpack.c.l.b16 %v3411
      %v3627 = vunpack.c.l.b16 %v3420
      %v3628 = vunpack.c.l.b16 %v3433
      %v3629 = vunpack.c.l.b16 %v3442
      %v3630 = vunpack.c.l.b16 %v3455
      %v3631 = vunpack.c.l.b16 %v3464
      %v3632 = vunpack.c.l.b16 %v3477
      %v3633 = vunpack.c.l.b16 %v3486
      %v3634 = vunpack.c.l.b16 %v3499
      %v3635 = vunpack.c.l.b16 %v3508
      %v3636 = vunpack.c.l.b16 %v3521
      %v3637 = vunpack.c.l.b16 %v3530
      %v3638 = vunpack.c.l.b16 %v3543
      %v3639 = vunpack.c.l.b16 %v3552
      %v3640 = vpack.c.b16 %v3609, %v3608
      %v3641 = vpack.c.b16 %v3611, %v3610
      %v3642 = vpack.c.b16 %v3613, %v3612
      %v3643 = vpack.c.b16 %v3615, %v3614
      %v3644 = vpack.c.b16 %v3617, %v3616
      %v3645 = vpack.c.b16 %v3619, %v3618
      %v3646 = vpack.c.b16 %v3621, %v3620
      %v3647 = vpack.c.b16 %v3623, %v3622
      %v3648 = vpack.c.b16 %v3625, %v3624
      %v3649 = vpack.c.b16 %v3627, %v3626
      %v3650 = vpack.c.b16 %v3629, %v3628
      %v3651 = vpack.c.b16 %v3631, %v3630
      %v3652 = vpack.c.b16 %v3633, %v3632
      %v3653 = vpack.c.b16 %v3635, %v3634
      %v3654 = vpack.c.b16 %v3637, %v3636
      %v3655 = vpack.c.b16 %v3639, %v3638
      %v3688 = vunpack.c.l.b16 %v3592
      %v3689 = vunpack.c.l.b16 %v3593
      %v3690 = vunpack.c.l.b16 %v3594
      %v3691 = vunpack.c.l.b16 %v3595
      %v3692 = vunpack.c.l.b16 %v3596
      %v3693 = vunpack.c.l.b16 %v3597
      %v3694 = vunpack.c.l.b16 %v3598
      %v3695 = vunpack.c.l.b16 %v3599
      %v3696 = vunpack.c.l.b16 %v3600
      %v3697 = vunpack.c.l.b16 %v3601
      %v3698 = vunpack.c.l.b16 %v3602
      %v3699 = vunpack.c.l.b16 %v3603
      %v3700 = vunpack.c.l.b16 %v3604
      %v3701 = vunpack.c.l.b16 %v3605
      %v3702 = vunpack.c.l.b16 %v3606
      %v3703 = vunpack.c.l.b16 %v3607
      %v3704 = vpack.c.b16 %v3689, %v3688
      %v3705 = vpack.c.b16 %v3691, %v3690
      %v3706 = vpack.c.b16 %v3693, %v3692
      %v3707 = vpack.c.b16 %v3695, %v3694
      %v3708 = vpack.c.b16 %v3697, %v3696
      %v3709 = vpack.c.b16 %v3699, %v3698
      %v3710 = vpack.c.b16 %v3701, %v3700
      %v3711 = vpack.c.b16 %v3703, %v3702
      %3720 = vmatpush.bf16.msra.mxu0 %v3711
      %3721 = vmatpush.bf16.msra.mxu0 %v3710
      %3722 = vmatpush.bf16.msra.mxu0 %v3709
      %3723 = vmatpush.bf16.msra.mxu0 %v3708
      %3724 = vmatpush.bf16.msra.mxu0 %v3707
      %3725 = vmatpush.bf16.msra.mxu0 %v3706
      %3726 = vmatpush.bf16.msra.mxu0 %v3705
      %3727 = vmatpush.bf16.msra.mxu0 %v3704
      %3728 = vmatmul.bf16.gmra.mxu0 %v3640
      %v3729 = vpop.f32.mrf.mxu0
      %v3730 = vadd.f32 0.0, %v3729
      %v3731 = vpop.f32.mrf.mxu0
      %v3732 = vadd.f32 0.0, %v3731
      %3733 = vmatmul.bf16.gmra.mxu0 %v3641
      %v3734 = vpop.f32.mrf.mxu0
      %v3735 = vadd.f32 0.0, %v3734
      %v3736 = vpop.f32.mrf.mxu0
      %v3737 = vadd.f32 0.0, %v3736
      %3738 = vmatmul.bf16.gmra.mxu0 %v3642
      %v3739 = vpop.f32.mrf.mxu0
      %v3740 = vadd.f32 0.0, %v3739
      %v3741 = vpop.f32.mrf.mxu0
      %v3742 = vadd.f32 0.0, %v3741
      %3743 = vmatmul.bf16.gmra.mxu0 %v3643
      %v3744 = vpop.f32.mrf.mxu0
      %v3745 = vadd.f32 0.0, %v3744
      %v3746 = vpop.f32.mrf.mxu0
      %v3747 = vadd.f32 0.0, %v3746
      %3748 = vmatmul.bf16.gmra.mxu0 %v3644
      %v3749 = vpop.f32.mrf.mxu0
      %v3750 = vadd.f32 0.0, %v3749
      %v3751 = vpop.f32.mrf.mxu0
      %v3752 = vadd.f32 0.0, %v3751
      %3753 = vmatmul.bf16.gmra.mxu0 %v3645
      %v3754 = vpop.f32.mrf.mxu0
      %v3755 = vadd.f32 0.0, %v3754
      %v3756 = vpop.f32.mrf.mxu0
      %v3757 = vadd.f32 0.0, %v3756
      %3758 = vmatmul.bf16.gmra.mxu0 %v3646
      %v3759 = vpop.f32.mrf.mxu0
      %v3760 = vadd.f32 0.0, %v3759
      %v3761 = vpop.f32.mrf.mxu0
      %v3762 = vadd.f32 0.0, %v3761
      %3763 = vmatmul.bf16.gmra.mxu0 %v3647
      %v3764 = vpop.f32.mrf.mxu0
      %v3765 = vadd.f32 0.0, %v3764
      %v3766 = vpop.f32.mrf.mxu0
      %v3767 = vadd.f32 0.0, %v3766
      %3768 = vmatmul.bf16.gmra.mxu0 %v3648
      %v3769 = vpop.f32.mrf.mxu0
      %v3770 = vadd.f32 0.0, %v3769
      %v3771 = vpop.f32.mrf.mxu0
      %v3772 = vadd.f32 0.0, %v3771
      %3773 = vmatmul.bf16.gmra.mxu0 %v3649
      %v3774 = vpop.f32.mrf.mxu0
      %v3775 = vadd.f32 0.0, %v3774
      %v3776 = vpop.f32.mrf.mxu0
      %v3777 = vadd.f32 0.0, %v3776
      %3778 = vmatmul.bf16.gmra.mxu0 %v3650
      %v3779 = vpop.f32.mrf.mxu0
      %v3780 = vadd.f32 0.0, %v3779
      %v3781 = vpop.f32.mrf.mxu0
      %v3782 = vadd.f32 0.0, %v3781
      %3783 = vmatmul.bf16.gmra.mxu0 %v3651
      %v3784 = vpop.f32.mrf.mxu0
      %v3785 = vadd.f32 0.0, %v3784
      %v3786 = vpop.f32.mrf.mxu0
      %v3787 = vadd.f32 0.0, %v3786
      %3788 = vmatmul.bf16.gmra.mxu0 %v3652
      %v3789 = vpop.f32.mrf.mxu0
      %v3790 = vadd.f32 0.0, %v3789
      %v3791 = vpop.f32.mrf.mxu0
      %v3792 = vadd.f32 0.0, %v3791
      %3793 = vmatmul.bf16.gmra.mxu0 %v3653
      %v3794 = vpop.f32.mrf.mxu0
      %v3795 = vadd.f32 0.0, %v3794
      %v3796 = vpop.f32.mrf.mxu0
      %v3797 = vadd.f32 0.0, %v3796
      %3798 = vmatmul.bf16.gmra.mxu0 %v3654
      %v3799 = vpop.f32.mrf.mxu0
      %v3800 = vadd.f32 0.0, %v3799
      %v3801 = vpop.f32.mrf.mxu0
      %v3802 = vadd.f32 0.0, %v3801
      %3803 = vmatmul.bf16.gmra.mxu0 %v3655
      %v3804 = vpop.f32.mrf.mxu0
      %v3805 = vadd.f32 0.0, %v3804
      %v3806 = vpop.f32.mrf.mxu0
      %v3807 = vadd.f32 0.0, %v3806
      %3808 = vdwg.mxu0
      %v3809 = vunpack.c.l.b16 %v3191
      %v3810 = vunpack.c.l.b16 %v3200
      %v3811 = vpack.c.b16 %v3810, %v3809
      %v3829 = vunpack.c.l.b16 %v3575
      %v3830 = vunpack.c.l.b16 %v3576
      %v3831 = vunpack.c.l.b16 %v3577
      %v3832 = vunpack.c.l.b16 %v3578
      %v3833 = vunpack.c.l.b16 %v3579
      %v3834 = vunpack.c.l.b16 %v3580
      %v3835 = vunpack.c.l.b16 %v3581
      %v3836 = vunpack.c.l.b16 %v3582
      %v3837 = vunpack.c.l.b16 %v3583
      %v3838 = vunpack.c.l.b16 %v3584
      %v3839 = vunpack.c.l.b16 %v3585
      %v3840 = vunpack.c.l.b16 %v3586
      %v3841 = vunpack.c.l.b16 %v3587
      %v3842 = vunpack.c.l.b16 %v3588
      %v3843 = vunpack.c.l.b16 %v3589
      %v3844 = vunpack.c.l.b16 %v3590
      %v3845 = vpack.c.b16 %v3830, %v3829
      %v3846 = vpack.c.b16 %v3832, %v3831
      %v3847 = vpack.c.b16 %v3834, %v3833
      %v3848 = vpack.c.b16 %v3836, %v3835
      %v3849 = vpack.c.b16 %v3838, %v3837
      %v3850 = vpack.c.b16 %v3840, %v3839
      %v3851 = vpack.c.b16 %v3842, %v3841
      %v3852 = vpack.c.b16 %v3844, %v3843
      %3861 = vmatpush.bf16.msra.mxu0 %v3852
      %3862 = vmatpush.bf16.msra.mxu0 %v3851
      %3863 = vmatpush.bf16.msra.mxu0 %v3850
      %3864 = vmatpush.bf16.msra.mxu0 %v3849
      %3865 = vmatpush.bf16.msra.mxu0 %v3848
      %3866 = vmatpush.bf16.msra.mxu0 %v3847
      %3867 = vmatpush.bf16.msra.mxu0 %v3846
      %3868 = vmatpush.bf16.msra.mxu0 %v3845
      %3869 = vmatmul.bf16.gmra.mxu0 %v3811
      %v3870 = vpop.f32.mrf.mxu0
      %v3871 = vadd.f32 %v3730, %v3870
      %v3872 = vpop.f32.mrf.mxu0
      %v3873 = vadd.f32 %v3732, %v3872
      %3874 = vmatmul.bf16.gmra.mxu0 %v3640
      %v3875 = vpop.f32.mrf.mxu0
      %v3876 = vadd.f32 %v3735, %v3875
      %v3877 = vpop.f32.mrf.mxu0
      %v3878 = vadd.f32 %v3737, %v3877
      %3879 = vmatmul.bf16.gmra.mxu0 %v3641
      %v3880 = vpop.f32.mrf.mxu0
      %v3881 = vadd.f32 %v3740, %v3880
      %v3882 = vpop.f32.mrf.mxu0
      %v3883 = vadd.f32 %v3742, %v3882
      %3884 = vmatmul.bf16.gmra.mxu0 %v3642
      %v3885 = vpop.f32.mrf.mxu0
      %v3886 = vadd.f32 %v3745, %v3885
      %v3887 = vpop.f32.mrf.mxu0
      %v3888 = vadd.f32 %v3747, %v3887
      %3889 = vmatmul.bf16.gmra.mxu0 %v3643
      %v3890 = vpop.f32.mrf.mxu0
      %v3891 = vadd.f32 %v3750, %v3890
      %v3892 = vpop.f32.mrf.mxu0
      %v3893 = vadd.f32 %v3752, %v3892
      %3894 = vmatmul.bf16.gmra.mxu0 %v3644
      %v3895 = vpop.f32.mrf.mxu0
      %v3896 = vadd.f32 %v3755, %v3895
      %v3897 = vpop.f32.mrf.mxu0
      %v3898 = vadd.f32 %v3757, %v3897
      %3899 = vmatmul.bf16.gmra.mxu0 %v3645
      %v3900 = vpop.f32.mrf.mxu0
      %v3901 = vadd.f32 %v3760, %v3900
      %v3902 = vpop.f32.mrf.mxu0
      %v3903 = vadd.f32 %v3762, %v3902
      %3904 = vmatmul.bf16.gmra.mxu0 %v3646
      %v3905 = vpop.f32.mrf.mxu0
      %v3906 = vadd.f32 %v3765, %v3905
      %v3907 = vpop.f32.mrf.mxu0
      %v3908 = vadd.f32 %v3767, %v3907
      %3909 = vmatmul.bf16.gmra.mxu0 %v3647
      %v3910 = vpop.f32.mrf.mxu0
      %v3911 = vadd.f32 %v3770, %v3910
      %v3912 = vpop.f32.mrf.mxu0
      %v3913 = vadd.f32 %v3772, %v3912
      %3914 = vmatmul.bf16.gmra.mxu0 %v3648
      %v3915 = vpop.f32.mrf.mxu0
      %v3916 = vadd.f32 %v3775, %v3915
      %v3917 = vpop.f32.mrf.mxu0
      %v3918 = vadd.f32 %v3777, %v3917
      %3919 = vmatmul.bf16.gmra.mxu0 %v3649
      %v3920 = vpop.f32.mrf.mxu0
      %v3921 = vadd.f32 %v3780, %v3920
      %v3922 = vpop.f32.mrf.mxu0
      %v3923 = vadd.f32 %v3782, %v3922
      %3924 = vmatmul.bf16.gmra.mxu0 %v3650
      %v3925 = vpop.f32.mrf.mxu0
      %v3926 = vadd.f32 %v3785, %v3925
      %v3927 = vpop.f32.mrf.mxu0
      %v3928 = vadd.f32 %v3787, %v3927
      %3929 = vmatmul.bf16.gmra.mxu0 %v3651
      %v3930 = vpop.f32.mrf.mxu0
      %v3931 = vadd.f32 %v3790, %v3930
      %v3932 = vpop.f32.mrf.mxu0
      %v3933 = vadd.f32 %v3792, %v3932
      %3934 = vmatmul.bf16.gmra.mxu0 %v3652
      %v3935 = vpop.f32.mrf.mxu0
      %v3936 = vadd.f32 %v3795, %v3935
      %v3937 = vpop.f32.mrf.mxu0
      %v3938 = vadd.f32 %v3797, %v3937
      %3939 = vmatmul.bf16.gmra.mxu0 %v3653
      %v3940 = vpop.f32.mrf.mxu0
      %v3941 = vadd.f32 %v3800, %v3940
      %v3942 = vpop.f32.mrf.mxu0
      %v3943 = vadd.f32 %v3802, %v3942
      %3944 = vmatmul.bf16.gmra.mxu0 %v3654
      %v3945 = vpop.f32.mrf.mxu0
      %v3946 = vadd.f32 %v3805, %v3945
      %v3947 = vpop.f32.mrf.mxu0
      %v3948 = vadd.f32 %v3807, %v3947
      %3949 = vdwg.mxu0
      %s3950 = scalar_lea.vmem %s3, 384
      %v3951 = vld [vmem:[%s3950] sm:$0xf]
      %v3952 = vld [vmem:[%s3950 + $0x4] sm:$0xf]
      %v3953 = vld [vmem:[%s3950 + $0x8] sm:$0xf]
      %v3954 = vld [vmem:[%s3950 + $0xc] sm:$0xf]
      %v3955 = vld [vmem:[%s3950 + $0x10] sm:$0xf]
      %v3956 = vld [vmem:[%s3950 + $0x14] sm:$0xf]
      %v3957 = vld [vmem:[%s3950 + $0x18] sm:$0xf]
      %v3958 = vld [vmem:[%s3950 + $0x1c] sm:$0xf]
      %v3959 = vld [vmem:[%s3950 + $0x20] sm:$0xf]
      %v3960 = vld [vmem:[%s3950 + $0x24] sm:$0xf]
      %v3961 = vld [vmem:[%s3950 + $0x28] sm:$0xf]
      %v3962 = vld [vmem:[%s3950 + $0x2c] sm:$0xf]
      %v3963 = vld [vmem:[%s3950 + $0x30] sm:$0xf]
      %v3964 = vld [vmem:[%s3950 + $0x34] sm:$0xf]
      %v3965 = vld [vmem:[%s3950 + $0x38] sm:$0xf]
      %v3966 = vld [vmem:[%s3950 + $0x3c] sm:$0xf]
      %v3967 = vunpack.c.l.b16 %v3565
      %v3968 = vunpack.c.l.b16 %v3574
      %v3969 = vpack.c.b16 %v3968, %v3967
      %v3987 = vunpack.c.l.b16 %v3951
      %v3988 = vunpack.c.l.b16 %v3952
      %v3989 = vunpack.c.l.b16 %v3953
      %v3990 = vunpack.c.l.b16 %v3954
      %v3991 = vunpack.c.l.b16 %v3955
      %v3992 = vunpack.c.l.b16 %v3956
      %v3993 = vunpack.c.l.b16 %v3957
      %v3994 = vunpack.c.l.b16 %v3958
      %v3995 = vunpack.c.l.b16 %v3959
      %v3996 = vunpack.c.l.b16 %v3960
      %v3997 = vunpack.c.l.b16 %v3961
      %v3998 = vunpack.c.l.b16 %v3962
      %v3999 = vunpack.c.l.b16 %v3963
      %v4000 = vunpack.c.l.b16 %v3964
      %v4001 = vunpack.c.l.b16 %v3965
      %v4002 = vunpack.c.l.b16 %v3966
      %v4003 = vpack.c.b16 %v3988, %v3987
      %v4004 = vpack.c.b16 %v3990, %v3989
      %v4005 = vpack.c.b16 %v3992, %v3991
      %v4006 = vpack.c.b16 %v3994, %v3993
      %v4007 = vpack.c.b16 %v3996, %v3995
      %v4008 = vpack.c.b16 %v3998, %v3997
      %v4009 = vpack.c.b16 %v4000, %v3999
      %v4010 = vpack.c.b16 %v4002, %v4001
      %4019 = vmatpush.bf16.msra.mxu0 %v4010
      %4020 = vmatpush.bf16.msra.mxu0 %v4009
      %4021 = vmatpush.bf16.msra.mxu0 %v4008
      %4022 = vmatpush.bf16.msra.mxu0 %v4007
      %4023 = vmatpush.bf16.msra.mxu0 %v4006
      %4024 = vmatpush.bf16.msra.mxu0 %v4005
      %4025 = vmatpush.bf16.msra.mxu0 %v4004
      %4026 = vmatpush.bf16.msra.mxu0 %v4003
      %4027 = vmatmul.bf16.gmra.mxu0 %v3641
      %v4028 = vpop.f32.mrf.mxu0
      %v4029 = vadd.f32 0.0, %v4028
      %v4030 = vpop.f32.mrf.mxu0
      %v4031 = vadd.f32 0.0, %v4030
      %4032 = vmatmul.bf16.gmra.mxu0 %v3642
      %v4033 = vpop.f32.mrf.mxu0
      %v4034 = vadd.f32 0.0, %v4033
      %v4035 = vpop.f32.mrf.mxu0
      %v4036 = vadd.f32 0.0, %v4035
      %4037 = vmatmul.bf16.gmra.mxu0 %v3643
      %v4038 = vpop.f32.mrf.mxu0
      %v4039 = vadd.f32 0.0, %v4038
      %v4040 = vpop.f32.mrf.mxu0
      %v4041 = vadd.f32 0.0, %v4040
      %4042 = vmatmul.bf16.gmra.mxu0 %v3644
      %v4043 = vpop.f32.mrf.mxu0
      %v4044 = vadd.f32 0.0, %v4043
      %v4045 = vpop.f32.mrf.mxu0
      %v4046 = vadd.f32 0.0, %v4045
      %4047 = vmatmul.bf16.gmra.mxu0 %v3645
      %v4048 = vpop.f32.mrf.mxu0
      %v4049 = vadd.f32 0.0, %v4048
      %v4050 = vpop.f32.mrf.mxu0
      %v4051 = vadd.f32 0.0, %v4050
      %4052 = vmatmul.bf16.gmra.mxu0 %v3646
      %v4053 = vpop.f32.mrf.mxu0
      %v4054 = vadd.f32 0.0, %v4053
      %v4055 = vpop.f32.mrf.mxu0
      %v4056 = vadd.f32 0.0, %v4055
      %4057 = vmatmul.bf16.gmra.mxu0 %v3647
      %v4058 = vpop.f32.mrf.mxu0
      %v4059 = vadd.f32 0.0, %v4058
      %v4060 = vpop.f32.mrf.mxu0
      %v4061 = vadd.f32 0.0, %v4060
      %4062 = vmatmul.bf16.gmra.mxu0 %v3648
      %v4063 = vpop.f32.mrf.mxu0
      %v4064 = vadd.f32 0.0, %v4063
      %v4065 = vpop.f32.mrf.mxu0
      %v4066 = vadd.f32 0.0, %v4065
      %4067 = vmatmul.bf16.gmra.mxu0 %v3649
      %v4068 = vpop.f32.mrf.mxu0
      %v4069 = vadd.f32 0.0, %v4068
      %v4070 = vpop.f32.mrf.mxu0
      %v4071 = vadd.f32 0.0, %v4070
      %4072 = vmatmul.bf16.gmra.mxu0 %v3650
      %v4073 = vpop.f32.mrf.mxu0
      %v4074 = vadd.f32 0.0, %v4073
      %v4075 = vpop.f32.mrf.mxu0
      %v4076 = vadd.f32 0.0, %v4075
      %4077 = vmatmul.bf16.gmra.mxu0 %v3651
      %v4078 = vpop.f32.mrf.mxu0
      %v4079 = vadd.f32 0.0, %v4078
      %v4080 = vpop.f32.mrf.mxu0
      %v4081 = vadd.f32 0.0, %v4080
      %4082 = vmatmul.bf16.gmra.mxu0 %v3652
      %v4083 = vpop.f32.mrf.mxu0
      %v4084 = vadd.f32 0.0, %v4083
      %v4085 = vpop.f32.mrf.mxu0
      %v4086 = vadd.f32 0.0, %v4085
      %4087 = vmatmul.bf16.gmra.mxu0 %v3653
      %v4088 = vpop.f32.mrf.mxu0
      %v4089 = vadd.f32 0.0, %v4088
      %v4090 = vpop.f32.mrf.mxu0
      %v4091 = vadd.f32 0.0, %v4090
      %4092 = vmatmul.bf16.gmra.mxu0 %v3654
      %v4093 = vpop.f32.mrf.mxu0
      %v4094 = vadd.f32 0.0, %v4093
      %v4095 = vpop.f32.mrf.mxu0
      %v4096 = vadd.f32 0.0, %v4095
      %4097 = vmatmul.bf16.gmra.mxu0 %v3655
      %v4098 = vpop.f32.mrf.mxu0
      %v4099 = vadd.f32 0.0, %v4098
      %v4100 = vpop.f32.mrf.mxu0
      %v4101 = vadd.f32 0.0, %v4100
      %4102 = vmatmul.bf16.gmra.mxu0 %v3969
      %v4103 = vpop.f32.mrf.mxu0
      %v4104 = vadd.f32 0.0, %v4103
      %v4105 = vpop.f32.mrf.mxu0
      %v4106 = vadd.f32 0.0, %v4105
      %4107 = vdwg.mxu0
      %v4108 = vadd.f32 %v3871, %v4029
      %v4109 = vadd.f32 %v3873, %v4031
      %v4110 = vadd.f32 %v3876, %v4034
      %v4111 = vadd.f32 %v3878, %v4036
      %v4112 = vadd.f32 %v3881, %v4039
      %v4113 = vadd.f32 %v3883, %v4041
      %v4114 = vadd.f32 %v3886, %v4044
      %v4115 = vadd.f32 %v3888, %v4046
      %v4116 = vadd.f32 %v3891, %v4049
      %v4117 = vadd.f32 %v3893, %v4051
      %v4118 = vadd.f32 %v3896, %v4054
      %v4119 = vadd.f32 %v3898, %v4056
      %v4120 = vadd.f32 %v3901, %v4059
      %v4121 = vadd.f32 %v3903, %v4061
      %v4122 = vadd.f32 %v3906, %v4064
      %v4123 = vadd.f32 %v3908, %v4066
      %v4124 = vadd.f32 %v3911, %v4069
      %v4125 = vadd.f32 %v3913, %v4071
      %v4126 = vadd.f32 %v3916, %v4074
      %v4127 = vadd.f32 %v3918, %v4076
      %v4128 = vadd.f32 %v3921, %v4079
      %v4129 = vadd.f32 %v3923, %v4081
      %v4130 = vadd.f32 %v3926, %v4084
      %v4131 = vadd.f32 %v3928, %v4086
      %v4132 = vadd.f32 %v3931, %v4089
      %v4133 = vadd.f32 %v3933, %v4091
      %v4134 = vadd.f32 %v3936, %v4094
      %v4135 = vadd.f32 %v3938, %v4096
      %v4136 = vadd.f32 %v3941, %v4099
      %v4137 = vadd.f32 %v3943, %v4101
      %v4138 = vadd.f32 %v3946, %v4104
      %v4139 = vadd.f32 %v3948, %v4106
      %s4140 = scalar_lea.vmem %s3, 64
      %v4141 = vld [vmem:[%s4140] sm:$0xf]
      %v4142 = vld [vmem:[%s4140 + $0x4] sm:$0xf]
      %v4143 = vld [vmem:[%s4140 + $0x8] sm:$0xf]
      %v4144 = vld [vmem:[%s4140 + $0xc] sm:$0xf]
      %v4145 = vld [vmem:[%s4140 + $0x10] sm:$0xf]
      %v4146 = vld [vmem:[%s4140 + $0x14] sm:$0xf]
      %v4147 = vld [vmem:[%s4140 + $0x18] sm:$0xf]
      %v4148 = vld [vmem:[%s4140 + $0x1c] sm:$0xf]
      %v4149 = vld [vmem:[%s4140 + $0x20] sm:$0xf]
      %v4150 = vld [vmem:[%s4140 + $0x24] sm:$0xf]
      %v4151 = vld [vmem:[%s4140 + $0x28] sm:$0xf]
      %v4152 = vld [vmem:[%s4140 + $0x2c] sm:$0xf]
      %v4153 = vld [vmem:[%s4140 + $0x30] sm:$0xf]
      %v4154 = vld [vmem:[%s4140 + $0x34] sm:$0xf]
      %v4155 = vld [vmem:[%s4140 + $0x38] sm:$0xf]
      %v4156 = vld [vmem:[%s4140 + $0x3c] sm:$0xf]
      %v4189 = vunpack.c.l.b16 %v3126
      %v4190 = vunpack.c.l.b16 %v3127
      %v4191 = vunpack.c.l.b16 %v3129
      %v4192 = vunpack.c.l.b16 %v3130
      %v4193 = vunpack.c.l.b16 %v3132
      %v4194 = vunpack.c.l.b16 %v3133
      %v4195 = vunpack.c.l.b16 %v3135
      %v4196 = vunpack.c.l.b16 %v3136
      %v4197 = vunpack.c.l.b16 %v3138
      %v4198 = vunpack.c.l.b16 %v3139
      %v4199 = vunpack.c.l.b16 %v3141
      %v4200 = vunpack.c.l.b16 %v3142
      %v4201 = vunpack.c.l.b16 %v3144
      %v4202 = vunpack.c.l.b16 %v3145
      %v4203 = vunpack.c.l.b16 %v3147
      %v4204 = vunpack.c.l.b16 %v3148
      %v4205 = vunpack.c.l.b16 %v3150
      %v4206 = vunpack.c.l.b16 %v3151
      %v4207 = vunpack.c.l.b16 %v3153
      %v4208 = vunpack.c.l.b16 %v3154
      %v4209 = vunpack.c.l.b16 %v3156
      %v4210 = vunpack.c.l.b16 %v3157
      %v4211 = vunpack.c.l.b16 %v3159
      %v4212 = vunpack.c.l.b16 %v3160
      %v4213 = vunpack.c.l.b16 %v3162
      %v4214 = vunpack.c.l.b16 %v3163
      %v4215 = vunpack.c.l.b16 %v3165
      %v4216 = vunpack.c.l.b16 %v3166
      %v4217 = vunpack.c.l.b16 %v3168
      %v4218 = vunpack.c.l.b16 %v3169
      %v4219 = vunpack.c.l.b16 %v3171
      %v4220 = vunpack.c.l.b16 %v3172
      %v4221 = vpack.c.b16 %v4190, %v4189
      %v4222 = vpack.c.b16 %v4192, %v4191
      %v4223 = vpack.c.b16 %v4194, %v4193
      %v4224 = vpack.c.b16 %v4196, %v4195
      %v4225 = vpack.c.b16 %v4198, %v4197
      %v4226 = vpack.c.b16 %v4200, %v4199
      %v4227 = vpack.c.b16 %v4202, %v4201
      %v4228 = vpack.c.b16 %v4204, %v4203
      %v4229 = vpack.c.b16 %v4206, %v4205
      %v4230 = vpack.c.b16 %v4208, %v4207
      %v4231 = vpack.c.b16 %v4210, %v4209
      %v4232 = vpack.c.b16 %v4212, %v4211
      %v4233 = vpack.c.b16 %v4214, %v4213
      %v4234 = vpack.c.b16 %v4216, %v4215
      %v4235 = vpack.c.b16 %v4218, %v4217
      %v4236 = vpack.c.b16 %v4220, %v4219
      %v4269 = vunpack.c.l.b16 %v4141
      %v4270 = vunpack.c.l.b16 %v4142
      %v4271 = vunpack.c.l.b16 %v4143
      %v4272 = vunpack.c.l.b16 %v4144
      %v4273 = vunpack.c.l.b16 %v4145
      %v4274 = vunpack.c.l.b16 %v4146
      %v4275 = vunpack.c.l.b16 %v4147
      %v4276 = vunpack.c.l.b16 %v4148
      %v4277 = vunpack.c.l.b16 %v4149
      %v4278 = vunpack.c.l.b16 %v4150
      %v4279 = vunpack.c.l.b16 %v4151
      %v4280 = vunpack.c.l.b16 %v4152
      %v4281 = vunpack.c.l.b16 %v4153
      %v4282 = vunpack.c.l.b16 %v4154
      %v4283 = vunpack.c.l.b16 %v4155
      %v4284 = vunpack.c.l.b16 %v4156
      %v4285 = vpack.c.b16 %v4270, %v4269
      %v4286 = vpack.c.b16 %v4272, %v4271
      %v4287 = vpack.c.b16 %v4274, %v4273
      %v4288 = vpack.c.b16 %v4276, %v4275
      %v4289 = vpack.c.b16 %v4278, %v4277
      %v4290 = vpack.c.b16 %v4280, %v4279
      %v4291 = vpack.c.b16 %v4282, %v4281
      %v4292 = vpack.c.b16 %v4284, %v4283
      %4301 = vmatpush.bf16.msra.mxu0 %v4292
      %4302 = vmatpush.bf16.msra.mxu0 %v4291
      %4303 = vmatpush.bf16.msra.mxu0 %v4290
      %4304 = vmatpush.bf16.msra.mxu0 %v4289
      %4305 = vmatpush.bf16.msra.mxu0 %v4288
      %4306 = vmatpush.bf16.msra.mxu0 %v4287
      %4307 = vmatpush.bf16.msra.mxu0 %v4286
      %4308 = vmatpush.bf16.msra.mxu0 %v4285
      %4309 = vmatmul.bf16.gmra.mxu0 %v4221
      %v4310 = vpop.f32.mrf.mxu0
      %v4311 = vadd.f32 0.0, %v4310
      %v4312 = vpop.f32.mrf.mxu0
      %v4313 = vadd.f32 0.0, %v4312
      %4314 = vmatmul.bf16.gmra.mxu0 %v4222
      %v4315 = vpop.f32.mrf.mxu0
      %v4316 = vadd.f32 0.0, %v4315
      %v4317 = vpop.f32.mrf.mxu0
      %v4318 = vadd.f32 0.0, %v4317
      %4319 = vmatmul.bf16.gmra.mxu0 %v4223
      %v4320 = vpop.f32.mrf.mxu0
      %v4321 = vadd.f32 0.0, %v4320
      %v4322 = vpop.f32.mrf.mxu0
      %v4323 = vadd.f32 0.0, %v4322
      %4324 = vmatmul.bf16.gmra.mxu0 %v4224
      %v4325 = vpop.f32.mrf.mxu0
      %v4326 = vadd.f32 0.0, %v4325
      %v4327 = vpop.f32.mrf.mxu0
      %v4328 = vadd.f32 0.0, %v4327
      %4329 = vmatmul.bf16.gmra.mxu0 %v4225
      %v4330 = vpop.f32.mrf.mxu0
      %v4331 = vadd.f32 0.0, %v4330
      %v4332 = vpop.f32.mrf.mxu0
      %v4333 = vadd.f32 0.0, %v4332
      %4334 = vmatmul.bf16.gmra.mxu0 %v4226
      %v4335 = vpop.f32.mrf.mxu0
      %v4336 = vadd.f32 0.0, %v4335
      %v4337 = vpop.f32.mrf.mxu0
      %v4338 = vadd.f32 0.0, %v4337
      %4339 = vmatmul.bf16.gmra.mxu0 %v4227
      %v4340 = vpop.f32.mrf.mxu0
      %v4341 = vadd.f32 0.0, %v4340
      %v4342 = vpop.f32.mrf.mxu0
      %v4343 = vadd.f32 0.0, %v4342
      %4344 = vmatmul.bf16.gmra.mxu0 %v4228
      %v4345 = vpop.f32.mrf.mxu0
      %v4346 = vadd.f32 0.0, %v4345
      %v4347 = vpop.f32.mrf.mxu0
      %v4348 = vadd.f32 0.0, %v4347
      %4349 = vmatmul.bf16.gmra.mxu0 %v4229
      %v4350 = vpop.f32.mrf.mxu0
      %v4351 = vadd.f32 0.0, %v4350
      %v4352 = vpop.f32.mrf.mxu0
      %v4353 = vadd.f32 0.0, %v4352
      %4354 = vmatmul.bf16.gmra.mxu0 %v4230
      %v4355 = vpop.f32.mrf.mxu0
      %v4356 = vadd.f32 0.0, %v4355
      %v4357 = vpop.f32.mrf.mxu0
      %v4358 = vadd.f32 0.0, %v4357
      %4359 = vmatmul.bf16.gmra.mxu0 %v4231
      %v4360 = vpop.f32.mrf.mxu0
      %v4361 = vadd.f32 0.0, %v4360
      %v4362 = vpop.f32.mrf.mxu0
      %v4363 = vadd.f32 0.0, %v4362
      %4364 = vmatmul.bf16.gmra.mxu0 %v4232
      %v4365 = vpop.f32.mrf.mxu0
      %v4366 = vadd.f32 0.0, %v4365
      %v4367 = vpop.f32.mrf.mxu0
      %v4368 = vadd.f32 0.0, %v4367
      %4369 = vmatmul.bf16.gmra.mxu0 %v4233
      %v4370 = vpop.f32.mrf.mxu0
      %v4371 = vadd.f32 0.0, %v4370
      %v4372 = vpop.f32.mrf.mxu0
      %v4373 = vadd.f32 0.0, %v4372
      %4374 = vmatmul.bf16.gmra.mxu0 %v4234
      %v4375 = vpop.f32.mrf.mxu0
      %v4376 = vadd.f32 0.0, %v4375
      %v4377 = vpop.f32.mrf.mxu0
      %v4378 = vadd.f32 0.0, %v4377
      %4379 = vmatmul.bf16.gmra.mxu0 %v4235
      %v4380 = vpop.f32.mrf.mxu0
      %v4381 = vadd.f32 0.0, %v4380
      %v4382 = vpop.f32.mrf.mxu0
      %v4383 = vadd.f32 0.0, %v4382
      %4384 = vmatmul.bf16.gmra.mxu0 %v4236
      %v4385 = vpop.f32.mrf.mxu0
      %v4386 = vadd.f32 0.0, %v4385
      %v4387 = vpop.f32.mrf.mxu0
      %v4388 = vadd.f32 0.0, %v4387
      %4389 = vdwg.mxu0
      %v4390 = vadd.f32 %v4108, %v4311
      %v4391 = vadd.f32 %v4109, %v4313
      %v4392 = vadd.f32 %v4110, %v4316
      %v4393 = vadd.f32 %v4111, %v4318
      %v4394 = vadd.f32 %v4112, %v4321
      %v4395 = vadd.f32 %v4113, %v4323
      %v4396 = vadd.f32 %v4114, %v4326
      %v4397 = vadd.f32 %v4115, %v4328
      %v4398 = vadd.f32 %v4116, %v4331
      %v4399 = vadd.f32 %v4117, %v4333
      %v4400 = vadd.f32 %v4118, %v4336
      %v4401 = vadd.f32 %v4119, %v4338
      %v4402 = vadd.f32 %v4120, %v4341
      %v4403 = vadd.f32 %v4121, %v4343
      %v4404 = vadd.f32 %v4122, %v4346
      %v4405 = vadd.f32 %v4123, %v4348
      %v4406 = vadd.f32 %v4124, %v4351
      %v4407 = vadd.f32 %v4125, %v4353
      %v4408 = vadd.f32 %v4126, %v4356
      %v4409 = vadd.f32 %v4127, %v4358
      %v4410 = vadd.f32 %v4128, %v4361
      %v4411 = vadd.f32 %v4129, %v4363
      %v4412 = vadd.f32 %v4130, %v4366
      %v4413 = vadd.f32 %v4131, %v4368
      %v4414 = vadd.f32 %v4132, %v4371
      %v4415 = vadd.f32 %v4133, %v4373
      %v4416 = vadd.f32 %v4134, %v4376
      %v4417 = vadd.f32 %v4135, %v4378
      %v4418 = vadd.f32 %v4136, %v4381
      %v4419 = vadd.f32 %v4137, %v4383
      %v4420 = vadd.f32 %v4138, %v4386
      %v4421 = vadd.f32 %v4139, %v4388
      %s4422 = scalar_lea.vmem %s3, 256
      %v4423 = vld [vmem:[%s4422] sm:$0xf]
      %v4424 = vld [vmem:[%s4422 + $0x4] sm:$0xf]
      %v4425 = vld [vmem:[%s4422 + $0x8] sm:$0xf]
      %v4426 = vld [vmem:[%s4422 + $0xc] sm:$0xf]
      %v4427 = vld [vmem:[%s4422 + $0x10] sm:$0xf]
      %v4428 = vld [vmem:[%s4422 + $0x14] sm:$0xf]
      %v4429 = vld [vmem:[%s4422 + $0x18] sm:$0xf]
      %v4430 = vld [vmem:[%s4422 + $0x1c] sm:$0xf]
      %v4431 = vld [vmem:[%s4422 + $0x20] sm:$0xf]
      %v4432 = vld [vmem:[%s4422 + $0x24] sm:$0xf]
      %v4433 = vld [vmem:[%s4422 + $0x28] sm:$0xf]
      %v4434 = vld [vmem:[%s4422 + $0x2c] sm:$0xf]
      %v4435 = vld [vmem:[%s4422 + $0x30] sm:$0xf]
      %v4436 = vld [vmem:[%s4422 + $0x34] sm:$0xf]
      %v4437 = vld [vmem:[%s4422 + $0x38] sm:$0xf]
      %v4438 = vld [vmem:[%s4422 + $0x3c] sm:$0xf]
      %v4441 = vunpack.c.l.b16 %v3174
      %v4442 = vunpack.c.l.b16 %v3175
      %v4443 = vpack.c.b16 %v4442, %v4441
      %v4461 = vunpack.c.l.b16 %v4423
      %v4462 = vunpack.c.l.b16 %v4424
      %v4463 = vunpack.c.l.b16 %v4425
      %v4464 = vunpack.c.l.b16 %v4426
      %v4465 = vunpack.c.l.b16 %v4427
      %v4466 = vunpack.c.l.b16 %v4428
      %v4467 = vunpack.c.l.b16 %v4429
      %v4468 = vunpack.c.l.b16 %v4430
      %v4469 = vunpack.c.l.b16 %v4431
      %v4470 = vunpack.c.l.b16 %v4432
      %v4471 = vunpack.c.l.b16 %v4433
      %v4472 = vunpack.c.l.b16 %v4434
      %v4473 = vunpack.c.l.b16 %v4435
      %v4474 = vunpack.c.l.b16 %v4436
      %v4475 = vunpack.c.l.b16 %v4437
      %v4476 = vunpack.c.l.b16 %v4438
      %v4477 = vpack.c.b16 %v4462, %v4461
      %v4478 = vpack.c.b16 %v4464, %v4463
      %v4479 = vpack.c.b16 %v4466, %v4465
      %v4480 = vpack.c.b16 %v4468, %v4467
      %v4481 = vpack.c.b16 %v4470, %v4469
      %v4482 = vpack.c.b16 %v4472, %v4471
      %v4483 = vpack.c.b16 %v4474, %v4473
      %v4484 = vpack.c.b16 %v4476, %v4475
      %4493 = vmatpush.bf16.msra.mxu0 %v4484
      %4494 = vmatpush.bf16.msra.mxu0 %v4483
      %4495 = vmatpush.bf16.msra.mxu0 %v4482
      %4496 = vmatpush.bf16.msra.mxu0 %v4481
      %4497 = vmatpush.bf16.msra.mxu0 %v4480
      %4498 = vmatpush.bf16.msra.mxu0 %v4479
      %4499 = vmatpush.bf16.msra.mxu0 %v4478
      %4500 = vmatpush.bf16.msra.mxu0 %v4477
      %4501 = vmatmul.bf16.gmra.mxu0 %v4222
      %v4502 = vpop.f32.mrf.mxu0
      %v4503 = vadd.f32 0.0, %v4502
      %v4504 = vpop.f32.mrf.mxu0
      %v4505 = vadd.f32 0.0, %v4504
      %4506 = vmatmul.bf16.gmra.mxu0 %v4223
      %v4507 = vpop.f32.mrf.mxu0
      %v4508 = vadd.f32 0.0, %v4507
      %v4509 = vpop.f32.mrf.mxu0
      %v4510 = vadd.f32 0.0, %v4509
      %4511 = vmatmul.bf16.gmra.mxu0 %v4224
      %v4512 = vpop.f32.mrf.mxu0
      %v4513 = vadd.f32 0.0, %v4512
      %v4514 = vpop.f32.mrf.mxu0
      %v4515 = vadd.f32 0.0, %v4514
      %4516 = vmatmul.bf16.gmra.mxu0 %v4225
      %v4517 = vpop.f32.mrf.mxu0
      %v4518 = vadd.f32 0.0, %v4517
      %v4519 = vpop.f32.mrf.mxu0
      %v4520 = vadd.f32 0.0, %v4519
      %4521 = vmatmul.bf16.gmra.mxu0 %v4226
      %v4522 = vpop.f32.mrf.mxu0
      %v4523 = vadd.f32 0.0, %v4522
      %v4524 = vpop.f32.mrf.mxu0
      %v4525 = vadd.f32 0.0, %v4524
      %4526 = vmatmul.bf16.gmra.mxu0 %v4227
      %v4527 = vpop.f32.mrf.mxu0
      %v4528 = vadd.f32 0.0, %v4527
      %v4529 = vpop.f32.mrf.mxu0
      %v4530 = vadd.f32 0.0, %v4529
      %4531 = vmatmul.bf16.gmra.mxu0 %v4228
      %v4532 = vpop.f32.mrf.mxu0
      %v4533 = vadd.f32 0.0, %v4532
      %v4534 = vpop.f32.mrf.mxu0
      %v4535 = vadd.f32 0.0, %v4534
      %4536 = vmatmul.bf16.gmra.mxu0 %v4229
      %v4537 = vpop.f32.mrf.mxu0
      %v4538 = vadd.f32 0.0, %v4537
      %v4539 = vpop.f32.mrf.mxu0
      %v4540 = vadd.f32 0.0, %v4539
      %4541 = vmatmul.bf16.gmra.mxu0 %v4230
      %v4542 = vpop.f32.mrf.mxu0
      %v4543 = vadd.f32 0.0, %v4542
      %v4544 = vpop.f32.mrf.mxu0
      %v4545 = vadd.f32 0.0, %v4544
      %4546 = vmatmul.bf16.gmra.mxu0 %v4231
      %v4547 = vpop.f32.mrf.mxu0
      %v4548 = vadd.f32 0.0, %v4547
      %v4549 = vpop.f32.mrf.mxu0
      %v4550 = vadd.f32 0.0, %v4549
      %4551 = vmatmul.bf16.gmra.mxu0 %v4232
      %v4552 = vpop.f32.mrf.mxu0
      %v4553 = vadd.f32 0.0, %v4552
      %v4554 = vpop.f32.mrf.mxu0
      %v4555 = vadd.f32 0.0, %v4554
      %4556 = vmatmul.bf16.gmra.mxu0 %v4233
      %v4557 = vpop.f32.mrf.mxu0
      %v4558 = vadd.f32 0.0, %v4557
      %v4559 = vpop.f32.mrf.mxu0
      %v4560 = vadd.f32 0.0, %v4559
      %4561 = vmatmul.bf16.gmra.mxu0 %v4234
      %v4562 = vpop.f32.mrf.mxu0
      %v4563 = vadd.f32 0.0, %v4562
      %v4564 = vpop.f32.mrf.mxu0
      %v4565 = vadd.f32 0.0, %v4564
      %4566 = vmatmul.bf16.gmra.mxu0 %v4235
      %v4567 = vpop.f32.mrf.mxu0
      %v4568 = vadd.f32 0.0, %v4567
      %v4569 = vpop.f32.mrf.mxu0
      %v4570 = vadd.f32 0.0, %v4569
      %4571 = vmatmul.bf16.gmra.mxu0 %v4236
      %v4572 = vpop.f32.mrf.mxu0
      %v4573 = vadd.f32 0.0, %v4572
      %v4574 = vpop.f32.mrf.mxu0
      %v4575 = vadd.f32 0.0, %v4574
      %4576 = vmatmul.bf16.gmra.mxu0 %v4443
      %v4577 = vpop.f32.mrf.mxu0
      %v4578 = vadd.f32 0.0, %v4577
      %v4579 = vpop.f32.mrf.mxu0
      %v4580 = vadd.f32 0.0, %v4579
      %4581 = vdwg.mxu0
      %v4582 = vadd.f32 %v4390, %v4503
      %v4583 = vadd.f32 %v4391, %v4505
      %v4584 = vadd.f32 %v4392, %v4508
      %v4585 = vadd.f32 %v4393, %v4510
      %v4586 = vadd.f32 %v4394, %v4513
      %v4587 = vadd.f32 %v4395, %v4515
      %v4588 = vadd.f32 %v4396, %v4518
      %v4589 = vadd.f32 %v4397, %v4520
      %v4590 = vadd.f32 %v4398, %v4523
      %v4591 = vadd.f32 %v4399, %v4525
      %v4592 = vadd.f32 %v4400, %v4528
      %v4593 = vadd.f32 %v4401, %v4530
      %v4594 = vadd.f32 %v4402, %v4533
      %v4595 = vadd.f32 %v4403, %v4535
      %v4596 = vadd.f32 %v4404, %v4538
      %v4597 = vadd.f32 %v4405, %v4540
      %v4598 = vadd.f32 %v4406, %v4543
      %v4599 = vadd.f32 %v4407, %v4545
      %v4600 = vadd.f32 %v4408, %v4548
      %v4601 = vadd.f32 %v4409, %v4550
      %v4602 = vadd.f32 %v4410, %v4553
      %v4603 = vadd.f32 %v4411, %v4555
      %v4604 = vadd.f32 %v4412, %v4558
      %v4605 = vadd.f32 %v4413, %v4560
      %v4606 = vadd.f32 %v4414, %v4563
      %v4607 = vadd.f32 %v4415, %v4565
      %v4608 = vadd.f32 %v4416, %v4568
      %v4609 = vadd.f32 %v4417, %v4570
      %v4610 = vadd.f32 %v4418, %v4573
      %v4611 = vadd.f32 %v4419, %v4575
      %v4612 = vadd.f32 %v4420, %v4578
      %v4613 = vadd.f32 %v4421, %v4580
      %s4614 = scalar_lea.vmem %s3, 448
      %v4615 = vld [vmem:[%s4614] sm:$0xf]
      %v4616 = vld [vmem:[%s4614 + $0x4] sm:$0xf]
      %v4617 = vld [vmem:[%s4614 + $0x8] sm:$0xf]
      %v4618 = vld [vmem:[%s4614 + $0xc] sm:$0xf]
      %v4619 = vld [vmem:[%s4614 + $0x10] sm:$0xf]
      %v4620 = vld [vmem:[%s4614 + $0x14] sm:$0xf]
      %v4621 = vld [vmem:[%s4614 + $0x18] sm:$0xf]
      %v4622 = vld [vmem:[%s4614 + $0x1c] sm:$0xf]
      %v4623 = vld [vmem:[%s4614 + $0x20] sm:$0xf]
      %v4624 = vld [vmem:[%s4614 + $0x24] sm:$0xf]
      %v4625 = vld [vmem:[%s4614 + $0x28] sm:$0xf]
      %v4626 = vld [vmem:[%s4614 + $0x2c] sm:$0xf]
      %v4627 = vld [vmem:[%s4614 + $0x30] sm:$0xf]
      %v4628 = vld [vmem:[%s4614 + $0x34] sm:$0xf]
      %v4629 = vld [vmem:[%s4614 + $0x38] sm:$0xf]
      %v4630 = vld [vmem:[%s4614 + $0x3c] sm:$0xf]
      %v4633 = vunpack.c.l.b16 %v3177
      %v4634 = vunpack.c.l.b16 %v3178
      %v4635 = vpack.c.b16 %v4634, %v4633
      %v4653 = vunpack.c.l.b16 %v4615
      %v4654 = vunpack.c.l.b16 %v4616
      %v4655 = vunpack.c.l.b16 %v4617
      %v4656 = vunpack.c.l.b16 %v4618
      %v4657 = vunpack.c.l.b16 %v4619
      %v4658 = vunpack.c.l.b16 %v4620
      %v4659 = vunpack.c.l.b16 %v4621
      %v4660 = vunpack.c.l.b16 %v4622
      %v4661 = vunpack.c.l.b16 %v4623
      %v4662 = vunpack.c.l.b16 %v4624
      %v4663 = vunpack.c.l.b16 %v4625
      %v4664 = vunpack.c.l.b16 %v4626
      %v4665 = vunpack.c.l.b16 %v4627
      %v4666 = vunpack.c.l.b16 %v4628
      %v4667 = vunpack.c.l.b16 %v4629
      %v4668 = vunpack.c.l.b16 %v4630
      %v4669 = vpack.c.b16 %v4654, %v4653
      %v4670 = vpack.c.b16 %v4656, %v4655
      %v4671 = vpack.c.b16 %v4658, %v4657
      %v4672 = vpack.c.b16 %v4660, %v4659
      %v4673 = vpack.c.b16 %v4662, %v4661
      %v4674 = vpack.c.b16 %v4664, %v4663
      %v4675 = vpack.c.b16 %v4666, %v4665
      %v4676 = vpack.c.b16 %v4668, %v4667
      %4685 = vmatpush.bf16.msra.mxu0 %v4676
      %4686 = vmatpush.bf16.msra.mxu0 %v4675
      %4687 = vmatpush.bf16.msra.mxu0 %v4674
      %4688 = vmatpush.bf16.msra.mxu0 %v4673
      %4689 = vmatpush.bf16.msra.mxu0 %v4672
      %4690 = vmatpush.bf16.msra.mxu0 %v4671
      %4691 = vmatpush.bf16.msra.mxu0 %v4670
      %4692 = vmatpush.bf16.msra.mxu0 %v4669
      %4693 = vmatmul.bf16.gmra.mxu0 %v4223
      %v4694 = vpop.f32.mrf.mxu0
      %v4695 = vadd.f32 0.0, %v4694
      %v4696 = vpop.f32.mrf.mxu0
      %v4697 = vadd.f32 0.0, %v4696
      %4698 = vmatmul.bf16.gmra.mxu0 %v4224
      %v4699 = vpop.f32.mrf.mxu0
      %v4700 = vadd.f32 0.0, %v4699
      %v4701 = vpop.f32.mrf.mxu0
      %v4702 = vadd.f32 0.0, %v4701
      %4703 = vmatmul.bf16.gmra.mxu0 %v4225
      %v4704 = vpop.f32.mrf.mxu0
      %v4705 = vadd.f32 0.0, %v4704
      %v4706 = vpop.f32.mrf.mxu0
      %v4707 = vadd.f32 0.0, %v4706
      %4708 = vmatmul.bf16.gmra.mxu0 %v4226
      %v4709 = vpop.f32.mrf.mxu0
      %v4710 = vadd.f32 0.0, %v4709
      %v4711 = vpop.f32.mrf.mxu0
      %v4712 = vadd.f32 0.0, %v4711
      %4713 = vmatmul.bf16.gmra.mxu0 %v4227
      %v4714 = vpop.f32.mrf.mxu0
      %v4715 = vadd.f32 0.0, %v4714
      %v4716 = vpop.f32.mrf.mxu0
      %v4717 = vadd.f32 0.0, %v4716
      %4718 = vmatmul.bf16.gmra.mxu0 %v4228
      %v4719 = vpop.f32.mrf.mxu0
      %v4720 = vadd.f32 0.0, %v4719
      %v4721 = vpop.f32.mrf.mxu0
      %v4722 = vadd.f32 0.0, %v4721
      %4723 = vmatmul.bf16.gmra.mxu0 %v4229
      %v4724 = vpop.f32.mrf.mxu0
      %v4725 = vadd.f32 0.0, %v4724
      %v4726 = vpop.f32.mrf.mxu0
      %v4727 = vadd.f32 0.0, %v4726
      %4728 = vmatmul.bf16.gmra.mxu0 %v4230
      %v4729 = vpop.f32.mrf.mxu0
      %v4730 = vadd.f32 0.0, %v4729
      %v4731 = vpop.f32.mrf.mxu0
      %v4732 = vadd.f32 0.0, %v4731
      %4733 = vmatmul.bf16.gmra.mxu0 %v4231
      %v4734 = vpop.f32.mrf.mxu0
      %v4735 = vadd.f32 0.0, %v4734
      %v4736 = vpop.f32.mrf.mxu0
      %v4737 = vadd.f32 0.0, %v4736
      %4738 = vmatmul.bf16.gmra.mxu0 %v4232
      %v4739 = vpop.f32.mrf.mxu0
      %v4740 = vadd.f32 0.0, %v4739
      %v4741 = vpop.f32.mrf.mxu0
      %v4742 = vadd.f32 0.0, %v4741
      %4743 = vmatmul.bf16.gmra.mxu0 %v4233
      %v4744 = vpop.f32.mrf.mxu0
      %v4745 = vadd.f32 0.0, %v4744
      %v4746 = vpop.f32.mrf.mxu0
      %v4747 = vadd.f32 0.0, %v4746
      %4748 = vmatmul.bf16.gmra.mxu0 %v4234
      %v4749 = vpop.f32.mrf.mxu0
      %v4750 = vadd.f32 0.0, %v4749
      %v4751 = vpop.f32.mrf.mxu0
      %v4752 = vadd.f32 0.0, %v4751
      %4753 = vmatmul.bf16.gmra.mxu0 %v4235
      %v4754 = vpop.f32.mrf.mxu0
      %v4755 = vadd.f32 0.0, %v4754
      %v4756 = vpop.f32.mrf.mxu0
      %v4757 = vadd.f32 0.0, %v4756
      %4758 = vmatmul.bf16.gmra.mxu0 %v4236
      %v4759 = vpop.f32.mrf.mxu0
      %v4760 = vadd.f32 0.0, %v4759
      %v4761 = vpop.f32.mrf.mxu0
      %v4762 = vadd.f32 0.0, %v4761
      %4763 = vmatmul.bf16.gmra.mxu0 %v4443
      %v4764 = vpop.f32.mrf.mxu0
      %v4765 = vadd.f32 0.0, %v4764
      %v4766 = vpop.f32.mrf.mxu0
      %v4767 = vadd.f32 0.0, %v4766
      %4768 = vmatmul.bf16.gmra.mxu0 %v4635
      %v4769 = vpop.f32.mrf.mxu0
      %v4770 = vadd.f32 0.0, %v4769
      %v4771 = vpop.f32.mrf.mxu0
      %v4772 = vadd.f32 0.0, %v4771
      %4773 = vdwg.mxu0
      %v4774 = vadd.f32 %v4582, %v4695
      %v4775 = vadd.f32 %v4583, %v4697
      %v4776 = vadd.f32 %v4584, %v4700
      %v4777 = vadd.f32 %v4585, %v4702
      %v4778 = vadd.f32 %v4586, %v4705
      %v4779 = vadd.f32 %v4587, %v4707
      %v4780 = vadd.f32 %v4588, %v4710
      %v4781 = vadd.f32 %v4589, %v4712
      %v4782 = vadd.f32 %v4590, %v4715
      %v4783 = vadd.f32 %v4591, %v4717
      %v4784 = vadd.f32 %v4592, %v4720
      %v4785 = vadd.f32 %v4593, %v4722
      %v4786 = vadd.f32 %v4594, %v4725
      %v4787 = vadd.f32 %v4595, %v4727
      %v4788 = vadd.f32 %v4596, %v4730
      %v4789 = vadd.f32 %v4597, %v4732
      %v4790 = vadd.f32 %v4598, %v4735
      %v4791 = vadd.f32 %v4599, %v4737
      %v4792 = vadd.f32 %v4600, %v4740
      %v4793 = vadd.f32 %v4601, %v4742
      %v4794 = vadd.f32 %v4602, %v4745
      %v4795 = vadd.f32 %v4603, %v4747
      %v4796 = vadd.f32 %v4604, %v4750
      %v4797 = vadd.f32 %v4605, %v4752
      %v4798 = vadd.f32 %v4606, %v4755
      %v4799 = vadd.f32 %v4607, %v4757
      %v4800 = vadd.f32 %v4608, %v4760
      %v4801 = vadd.f32 %v4609, %v4762
      %v4802 = vadd.f32 %v4610, %v4765
      %v4803 = vadd.f32 %v4611, %v4767
      %v4804 = vadd.f32 %v4612, %v4770
      %v4805 = vadd.f32 %v4613, %v4772
      %v4806 = vld [vmem:[#allocation3 + $0x14] sm:$0xf]
      %v4807 = vld [vmem:[#allocation3 + $0x18] sm:$0xf]
      %v4808 = vld [vmem:[#allocation3 + $0x1c] sm:$0x1]
      %v4809 = vld [vmem:[#allocation3 + $0x24] sm:$0xf]
      %v4810 = vld [vmem:[#allocation3 + $0x28] sm:$0xf]
      %v4811 = vld [vmem:[#allocation3 + $0x2c] sm:$0x1]
      %v4812 = vld [vmem:[#allocation3 + $0x34] sm:$0xf]
      %v4813 = vld [vmem:[#allocation3 + $0x38] sm:$0xf]
      %v4814 = vld [vmem:[#allocation3 + $0x3c] sm:$0x1]
      %v4815 = vld [vmem:[#allocation3 + $0x44] sm:$0xf]
      %v4816 = vld [vmem:[#allocation3 + $0x48] sm:$0xf]
      %v4817 = vld [vmem:[#allocation3 + $0x4c] sm:$0x1]
      %v4818 = vld [vmem:[#allocation3 + $0x54] sm:$0xf]
      %v4819 = vld [vmem:[#allocation3 + $0x58] sm:$0xf]
      %v4820 = vld [vmem:[#allocation3 + $0x5c] sm:$0x1]
      %v4821 = vld [vmem:[#allocation3 + $0x64] sm:$0xf]
      %v4822 = vld [vmem:[#allocation3 + $0x68] sm:$0xf]
      %v4823 = vld [vmem:[#allocation3 + $0x6c] sm:$0x1]
      %v4824 = vld [vmem:[#allocation3 + $0x74] sm:$0xf]
      %v4825 = vld [vmem:[#allocation3 + $0x78] sm:$0xf]
      %v4826 = vld [vmem:[#allocation3 + $0x7c] sm:$0x1]
      %v4827 = vld [vmem:[#allocation3 + $0x84] sm:$0xf]
      %v4828 = vld [vmem:[#allocation3 + $0x88] sm:$0xf]
      %v4829 = vld [vmem:[#allocation3 + $0x8c] sm:$0x1]
      %v4830 = vld [vmem:[#allocation3 + $0x94] sm:$0xf]
      %v4831 = vld [vmem:[#allocation3 + $0x98] sm:$0xf]
      %v4832 = vld [vmem:[#allocation3 + $0x9c] sm:$0x1]
      %v4833 = vld [vmem:[#allocation3 + $0xa4] sm:$0xf]
      %v4834 = vld [vmem:[#allocation3 + $0xa8] sm:$0xf]
      %v4835 = vld [vmem:[#allocation3 + $0xac] sm:$0x1]
      %v4836 = vld [vmem:[#allocation3 + $0xb4] sm:$0xf]
      %v4837 = vld [vmem:[#allocation3 + $0xb8] sm:$0xf]
      %v4838 = vld [vmem:[#allocation3 + $0xbc] sm:$0x1]
      %v4839 = vld [vmem:[#allocation3 + $0xc4] sm:$0xf]
      %v4840 = vld [vmem:[#allocation3 + $0xc8] sm:$0xf]
      %v4841 = vld [vmem:[#allocation3 + $0xcc] sm:$0x1]
      %v4842 = vld [vmem:[#allocation3 + $0xd4] sm:$0xf]
      %v4843 = vld [vmem:[#allocation3 + $0xd8] sm:$0xf]
      %v4844 = vld [vmem:[#allocation3 + $0xdc] sm:$0x1]
      %v4845 = vld [vmem:[#allocation3 + $0xe4] sm:$0xf]
      %v4846 = vld [vmem:[#allocation3 + $0xe8] sm:$0xf]
      %v4847 = vld [vmem:[#allocation3 + $0xec] sm:$0x1]
      %v4848 = vld [vmem:[#allocation3 + $0xf4] sm:$0xf]
      %v4849 = vld [vmem:[#allocation3 + $0xf8] sm:$0xf]
      %v4850 = vld [vmem:[#allocation3 + $0xfc] sm:$0x1]
      %v4851 = vld [vmem:[#allocation3 + $0x104] sm:$0xf]
      %v4852 = vld [vmem:[#allocation3 + $0x108] sm:$0xf]
      %v4853 = vld [vmem:[#allocation3 + $0x10c] sm:$0x1]
      %v4854 = vld [vmem:[#allocation3 + $0x114] sm:$0xf]
      %v4855 = vld [vmem:[#allocation3 + $0x118] sm:$0xf]
      %v4856 = vld [vmem:[#allocation3 + $0x11c] sm:$0x1]
      %v4857 = vld [vmem:[#allocation3 + $0x124] sm:$0xf]
      %v4858 = vld [vmem:[#allocation3 + $0x128] sm:$0xf]
      %v4859 = vld [vmem:[#allocation3 + $0x12c] sm:$0x1]
      %v4861 = vshrl.u32 %v4806, 16
      %v4863 = vrot.slane %v4861, 4
      %v4864 = vshll.u32 %v4806, 16
      %v4866 = vrot.slane %v4864, 5
      %v4867 = vor.u32 %v4863, %v4866
      %v4868 = vrot.slane %v4867, 4
      %v4870 = vshll.u32 %v4807, 16
      %v4872 = vrot.slane %v4870, 5
      %v4873 = vsel %vm1992, %v4868, %v4872
      %v4874 = vshrl.u32 %v4807, 16
      %v4876 = vrot.slane %v4874, 4
      %v4877 = vor.u32 %v4876, %v4872
      %v4878 = vrot.slane %v4877, 4
      %v4880 = vshll.u32 %v4808, 16
      %v4882 = vrot.slane %v4880, 5
      %v4883 = vsel %vm1992, %v4878, %v4882
      %v4885 = vshrl.u32 %v4809, 16
      %v4887 = vrot.slane %v4885, 4
      %v4888 = vshll.u32 %v4809, 16
      %v4890 = vrot.slane %v4888, 5
      %v4891 = vor.u32 %v4887, %v4890
      %v4892 = vrot.slane %v4891, 4
      %v4894 = vshll.u32 %v4810, 16
      %v4896 = vrot.slane %v4894, 5
      %v4897 = vsel %vm1992, %v4892, %v4896
      %v4898 = vshrl.u32 %v4810, 16
      %v4900 = vrot.slane %v4898, 4
      %v4901 = vor.u32 %v4900, %v4896
      %v4902 = vrot.slane %v4901, 4
      %v4904 = vshll.u32 %v4811, 16
      %v4906 = vrot.slane %v4904, 5
      %v4907 = vsel %vm1992, %v4902, %v4906
      %v4909 = vshrl.u32 %v4812, 16
      %v4911 = vrot.slane %v4909, 4
      %v4912 = vshll.u32 %v4812, 16
      %v4914 = vrot.slane %v4912, 5
      %v4915 = vor.u32 %v4911, %v4914
      %v4916 = vrot.slane %v4915, 4
      %v4918 = vshll.u32 %v4813, 16
      %v4920 = vrot.slane %v4918, 5
      %v4921 = vsel %vm1992, %v4916, %v4920
      %v4922 = vshrl.u32 %v4813, 16
      %v4924 = vrot.slane %v4922, 4
      %v4925 = vor.u32 %v4924, %v4920
      %v4926 = vrot.slane %v4925, 4
      %v4928 = vshll.u32 %v4814, 16
      %v4930 = vrot.slane %v4928, 5
      %v4931 = vsel %vm1992, %v4926, %v4930
      %v4933 = vshrl.u32 %v4815, 16
      %v4935 = vrot.slane %v4933, 4
      %v4936 = vshll.u32 %v4815, 16
      %v4938 = vrot.slane %v4936, 5
      %v4939 = vor.u32 %v4935, %v4938
      %v4940 = vrot.slane %v4939, 4
      %v4942 = vshll.u32 %v4816, 16
      %v4944 = vrot.slane %v4942, 5
      %v4945 = vsel %vm1992, %v4940, %v4944
      %v4946 = vshrl.u32 %v4816, 16
      %v4948 = vrot.slane %v4946, 4
      %v4949 = vor.u32 %v4948, %v4944
      %v4950 = vrot.slane %v4949, 4
      %v4952 = vshll.u32 %v4817, 16
      %v4954 = vrot.slane %v4952, 5
      %v4955 = vsel %vm1992, %v4950, %v4954
      %v4957 = vshrl.u32 %v4818, 16
      %v4959 = vrot.slane %v4957, 4
      %v4960 = vshll.u32 %v4818, 16
      %v4962 = vrot.slane %v4960, 5
      %v4963 = vor.u32 %v4959, %v4962
      %v4964 = vrot.slane %v4963, 4
      %v4966 = vshll.u32 %v4819, 16
      %v4968 = vrot.slane %v4966, 5
      %v4969 = vsel %vm1992, %v4964, %v4968
      %v4970 = vshrl.u32 %v4819, 16
      %v4972 = vrot.slane %v4970, 4
      %v4973 = vor.u32 %v4972, %v4968
      %v4974 = vrot.slane %v4973, 4
      %v4976 = vshll.u32 %v4820, 16
      %v4978 = vrot.slane %v4976, 5
      %v4979 = vsel %vm1992, %v4974, %v4978
      %v4981 = vshrl.u32 %v4821, 16
      %v4983 = vrot.slane %v4981, 4
      %v4984 = vshll.u32 %v4821, 16
      %v4986 = vrot.slane %v4984, 5
      %v4987 = vor.u32 %v4983, %v4986
      %v4988 = vrot.slane %v4987, 4
      %v4990 = vshll.u32 %v4822, 16
      %v4992 = vrot.slane %v4990, 5
      %v4993 = vsel %vm1992, %v4988, %v4992
      %v4994 = vshrl.u32 %v4822, 16
      %v4996 = vrot.slane %v4994, 4
      %v4997 = vor.u32 %v4996, %v4992
      %v4998 = vrot.slane %v4997, 4
      %v5000 = vshll.u32 %v4823, 16
      %v5002 = vrot.slane %v5000, 5
      %v5003 = vsel %vm1992, %v4998, %v5002
      %v5005 = vshrl.u32 %v4824, 16
      %v5007 = vrot.slane %v5005, 4
      %v5008 = vshll.u32 %v4824, 16
      %v5010 = vrot.slane %v5008, 5
      %v5011 = vor.u32 %v5007, %v5010
      %v5012 = vrot.slane %v5011, 4
      %v5014 = vshll.u32 %v4825, 16
      %v5016 = vrot.slane %v5014, 5
      %v5017 = vsel %vm1992, %v5012, %v5016
      %v5018 = vshrl.u32 %v4825, 16
      %v5020 = vrot.slane %v5018, 4
      %v5021 = vor.u32 %v5020, %v5016
      %v5022 = vrot.slane %v5021, 4
      %v5024 = vshll.u32 %v4826, 16
      %v5026 = vrot.slane %v5024, 5
      %v5027 = vsel %vm1992, %v5022, %v5026
      %v5029 = vshrl.u32 %v4827, 16
      %v5031 = vrot.slane %v5029, 4
      %v5032 = vshll.u32 %v4827, 16
      %v5034 = vrot.slane %v5032, 5
      %v5035 = vor.u32 %v5031, %v5034
      %v5036 = vrot.slane %v5035, 4
      %v5038 = vshll.u32 %v4828, 16
      %v5040 = vrot.slane %v5038, 5
      %v5041 = vsel %vm1992, %v5036, %v5040
      %v5042 = vshrl.u32 %v4828, 16
      %v5044 = vrot.slane %v5042, 4
      %v5045 = vor.u32 %v5044, %v5040
      %v5046 = vrot.slane %v5045, 4
      %v5048 = vshll.u32 %v4829, 16
      %v5050 = vrot.slane %v5048, 5
      %v5051 = vsel %vm1992, %v5046, %v5050
      %v5053 = vshrl.u32 %v4830, 16
      %v5055 = vrot.slane %v5053, 4
      %v5056 = vshll.u32 %v4830, 16
      %v5058 = vrot.slane %v5056, 5
      %v5059 = vor.u32 %v5055, %v5058
      %v5060 = vrot.slane %v5059, 4
      %v5062 = vshll.u32 %v4831, 16
      %v5064 = vrot.slane %v5062, 5
      %v5065 = vsel %vm1992, %v5060, %v5064
      %v5066 = vshrl.u32 %v4831, 16
      %v5068 = vrot.slane %v5066, 4
      %v5069 = vor.u32 %v5068, %v5064
      %v5070 = vrot.slane %v5069, 4
      %v5072 = vshll.u32 %v4832, 16
      %v5074 = vrot.slane %v5072, 5
      %v5075 = vsel %vm1992, %v5070, %v5074
      %v5077 = vshrl.u32 %v4833, 16
      %v5079 = vrot.slane %v5077, 4
      %v5080 = vshll.u32 %v4833, 16
      %v5082 = vrot.slane %v5080, 5
      %v5083 = vor.u32 %v5079, %v5082
      %v5084 = vrot.slane %v5083, 4
      %v5086 = vshll.u32 %v4834, 16
      %v5088 = vrot.slane %v5086, 5
      %v5089 = vsel %vm1992, %v5084, %v5088
      %v5090 = vshrl.u32 %v4834, 16
      %v5092 = vrot.slane %v5090, 4
      %v5093 = vor.u32 %v5092, %v5088
      %v5094 = vrot.slane %v5093, 4
      %v5096 = vshll.u32 %v4835, 16
      %v5098 = vrot.slane %v5096, 5
      %v5099 = vsel %vm1992, %v5094, %v5098
      %v5101 = vshrl.u32 %v4836, 16
      %v5103 = vrot.slane %v5101, 4
      %v5104 = vshll.u32 %v4836, 16
      %v5106 = vrot.slane %v5104, 5
      %v5107 = vor.u32 %v5103, %v5106
      %v5108 = vrot.slane %v5107, 4
      %v5110 = vshll.u32 %v4837, 16
      %v5112 = vrot.slane %v5110, 5
      %v5113 = vsel %vm1992, %v5108, %v5112
      %v5114 = vshrl.u32 %v4837, 16
      %v5116 = vrot.slane %v5114, 4
      %v5117 = vor.u32 %v5116, %v5112
      %v5118 = vrot.slane %v5117, 4
      %v5120 = vshll.u32 %v4838, 16
      %v5122 = vrot.slane %v5120, 5
      %v5123 = vsel %vm1992, %v5118, %v5122
      %v5125 = vshrl.u32 %v4839, 16
      %v5127 = vrot.slane %v5125, 4
      %v5128 = vshll.u32 %v4839, 16
      %v5130 = vrot.slane %v5128, 5
      %v5131 = vor.u32 %v5127, %v5130
      %v5132 = vrot.slane %v5131, 4
      %v5134 = vshll.u32 %v4840, 16
      %v5136 = vrot.slane %v5134, 5
      %v5137 = vsel %vm1992, %v5132, %v5136
      %v5138 = vshrl.u32 %v4840, 16
      %v5140 = vrot.slane %v5138, 4
      %v5141 = vor.u32 %v5140, %v5136
      %v5142 = vrot.slane %v5141, 4
      %v5144 = vshll.u32 %v4841, 16
      %v5146 = vrot.slane %v5144, 5
      %v5147 = vsel %vm1992, %v5142, %v5146
      %v5149 = vshrl.u32 %v4842, 16
      %v5151 = vrot.slane %v5149, 4
      %v5152 = vshll.u32 %v4842, 16
      %v5154 = vrot.slane %v5152, 5
      %v5155 = vor.u32 %v5151, %v5154
      %v5156 = vrot.slane %v5155, 4
      %v5158 = vshll.u32 %v4843, 16
      %v5160 = vrot.slane %v5158, 5
      %v5161 = vsel %vm1992, %v5156, %v5160
      %v5162 = vshrl.u32 %v4843, 16
      %v5164 = vrot.slane %v5162, 4
      %v5165 = vor.u32 %v5164, %v5160
      %v5166 = vrot.slane %v5165, 4
      %v5168 = vshll.u32 %v4844, 16
      %v5170 = vrot.slane %v5168, 5
      %v5171 = vsel %vm1992, %v5166, %v5170
      %v5173 = vshrl.u32 %v4845, 16
      %v5175 = vrot.slane %v5173, 4
      %v5176 = vshll.u32 %v4845, 16
      %v5178 = vrot.slane %v5176, 5
      %v5179 = vor.u32 %v5175, %v5178
      %v5180 = vrot.slane %v5179, 4
      %v5182 = vshll.u32 %v4846, 16
      %v5184 = vrot.slane %v5182, 5
      %v5185 = vsel %vm1992, %v5180, %v5184
      %v5186 = vshrl.u32 %v4846, 16
      %v5188 = vrot.slane %v5186, 4
      %v5189 = vor.u32 %v5188, %v5184
      %v5190 = vrot.slane %v5189, 4
      %v5192 = vshll.u32 %v4847, 16
      %v5194 = vrot.slane %v5192, 5
      %v5195 = vsel %vm1992, %v5190, %v5194
      %v5197 = vshrl.u32 %v4848, 16
      %v5199 = vrot.slane %v5197, 4
      %v5200 = vshll.u32 %v4848, 16
      %v5202 = vrot.slane %v5200, 5
      %v5203 = vor.u32 %v5199, %v5202
      %v5204 = vrot.slane %v5203, 4
      %v5206 = vshll.u32 %v4849, 16
      %v5208 = vrot.slane %v5206, 5
      %v5209 = vsel %vm1992, %v5204, %v5208
      %v5210 = vshrl.u32 %v4849, 16
      %v5212 = vrot.slane %v5210, 4
      %v5213 = vor.u32 %v5212, %v5208
      %v5214 = vrot.slane %v5213, 4
      %v5216 = vshll.u32 %v4850, 16
      %v5218 = vrot.slane %v5216, 5
      %v5219 = vsel %vm1992, %v5214, %v5218
      %v5221 = vshrl.u32 %v4851, 16
      %v5223 = vrot.slane %v5221, 4
      %v5224 = vshll.u32 %v4851, 16
      %v5226 = vrot.slane %v5224, 5
      %v5227 = vor.u32 %v5223, %v5226
      %v5228 = vrot.slane %v5227, 4
      %v5230 = vshll.u32 %v4852, 16
      %v5232 = vrot.slane %v5230, 5
      %v5233 = vsel %vm1992, %v5228, %v5232
      %v5234 = vshrl.u32 %v4852, 16
      %v5236 = vrot.slane %v5234, 4
      %v5237 = vor.u32 %v5236, %v5232
      %v5238 = vrot.slane %v5237, 4
      %v5240 = vshll.u32 %v4853, 16
      %v5242 = vrot.slane %v5240, 5
      %v5243 = vsel %vm1992, %v5238, %v5242
      %v5245 = vshrl.u32 %v4854, 16
      %v5247 = vrot.slane %v5245, 4
      %v5248 = vshll.u32 %v4854, 16
      %v5250 = vrot.slane %v5248, 5
      %v5251 = vor.u32 %v5247, %v5250
      %v5252 = vrot.slane %v5251, 4
      %v5254 = vshll.u32 %v4855, 16
      %v5256 = vrot.slane %v5254, 5
      %v5257 = vsel %vm1992, %v5252, %v5256
      %v5258 = vshrl.u32 %v4855, 16
      %v5260 = vrot.slane %v5258, 4
      %v5261 = vor.u32 %v5260, %v5256
      %v5262 = vrot.slane %v5261, 4
      %v5264 = vshll.u32 %v4856, 16
      %v5266 = vrot.slane %v5264, 5
      %v5267 = vsel %vm1992, %v5262, %v5266
      %v5269 = vshrl.u32 %v4857, 16
      %v5271 = vrot.slane %v5269, 4
      %v5272 = vshll.u32 %v4857, 16
      %v5274 = vrot.slane %v5272, 5
      %v5275 = vor.u32 %v5271, %v5274
      %v5276 = vrot.slane %v5275, 4
      %v5278 = vshll.u32 %v4858, 16
      %v5280 = vrot.slane %v5278, 5
      %v5281 = vsel %vm1992, %v5276, %v5280
      %v5282 = vshrl.u32 %v4858, 16
      %v5284 = vrot.slane %v5282, 4
      %v5285 = vor.u32 %v5284, %v5280
      %v5286 = vrot.slane %v5285, 4
      %v5288 = vshll.u32 %v4859, 16
      %v5290 = vrot.slane %v5288, 5
      %v5291 = vsel %vm1992, %v5286, %v5290
      %s5292 = scalar_lea.vmem %s3, 128
      %v5293 = vld [vmem:[%s5292] sm:$0xf]
      %v5294 = vld [vmem:[%s5292 + $0x4] sm:$0xf]
      %v5295 = vld [vmem:[%s5292 + $0x8] sm:$0xf]
      %v5296 = vld [vmem:[%s5292 + $0xc] sm:$0xf]
      %v5297 = vld [vmem:[%s5292 + $0x10] sm:$0xf]
      %v5298 = vld [vmem:[%s5292 + $0x14] sm:$0xf]
      %v5299 = vld [vmem:[%s5292 + $0x18] sm:$0xf]
      %v5300 = vld [vmem:[%s5292 + $0x1c] sm:$0xf]
      %v5301 = vld [vmem:[%s5292 + $0x20] sm:$0xf]
      %v5302 = vld [vmem:[%s5292 + $0x24] sm:$0xf]
      %v5303 = vld [vmem:[%s5292 + $0x28] sm:$0xf]
      %v5304 = vld [vmem:[%s5292 + $0x2c] sm:$0xf]
      %v5305 = vld [vmem:[%s5292 + $0x30] sm:$0xf]
      %v5306 = vld [vmem:[%s5292 + $0x34] sm:$0xf]
      %v5307 = vld [vmem:[%s5292 + $0x38] sm:$0xf]
      %v5308 = vld [vmem:[%s5292 + $0x3c] sm:$0xf]
      %v5309 = vunpack.c.l.b16 %v4873
      %v5310 = vunpack.c.l.b16 %v4883
      %v5311 = vunpack.c.l.b16 %v4897
      %v5312 = vunpack.c.l.b16 %v4907
      %v5313 = vunpack.c.l.b16 %v4921
      %v5314 = vunpack.c.l.b16 %v4931
      %v5315 = vunpack.c.l.b16 %v4945
      %v5316 = vunpack.c.l.b16 %v4955
      %v5317 = vunpack.c.l.b16 %v4969
      %v5318 = vunpack.c.l.b16 %v4979
      %v5319 = vunpack.c.l.b16 %v4993
      %v5320 = vunpack.c.l.b16 %v5003
      %v5321 = vunpack.c.l.b16 %v5017
      %v5322 = vunpack.c.l.b16 %v5027
      %v5323 = vunpack.c.l.b16 %v5041
      %v5324 = vunpack.c.l.b16 %v5051
      %v5325 = vunpack.c.l.b16 %v5065
      %v5326 = vunpack.c.l.b16 %v5075
      %v5327 = vunpack.c.l.b16 %v5089
      %v5328 = vunpack.c.l.b16 %v5099
      %v5329 = vunpack.c.l.b16 %v5113
      %v5330 = vunpack.c.l.b16 %v5123
      %v5331 = vunpack.c.l.b16 %v5137
      %v5332 = vunpack.c.l.b16 %v5147
      %v5333 = vunpack.c.l.b16 %v5161
      %v5334 = vunpack.c.l.b16 %v5171
      %v5335 = vunpack.c.l.b16 %v5185
      %v5336 = vunpack.c.l.b16 %v5195
      %v5337 = vunpack.c.l.b16 %v5209
      %v5338 = vunpack.c.l.b16 %v5219
      %v5339 = vunpack.c.l.b16 %v5233
      %v5340 = vunpack.c.l.b16 %v5243
      %v5341 = vpack.c.b16 %v5310, %v5309
      %v5342 = vpack.c.b16 %v5312, %v5311
      %v5343 = vpack.c.b16 %v5314, %v5313
      %v5344 = vpack.c.b16 %v5316, %v5315
      %v5345 = vpack.c.b16 %v5318, %v5317
      %v5346 = vpack.c.b16 %v5320, %v5319
      %v5347 = vpack.c.b16 %v5322, %v5321
      %v5348 = vpack.c.b16 %v5324, %v5323
      %v5349 = vpack.c.b16 %v5326, %v5325
      %v5350 = vpack.c.b16 %v5328, %v5327
      %v5351 = vpack.c.b16 %v5330, %v5329
      %v5352 = vpack.c.b16 %v5332, %v5331
      %v5353 = vpack.c.b16 %v5334, %v5333
      %v5354 = vpack.c.b16 %v5336, %v5335
      %v5355 = vpack.c.b16 %v5338, %v5337
      %v5356 = vpack.c.b16 %v5340, %v5339
      %v5389 = vunpack.c.l.b16 %v5293
      %v5390 = vunpack.c.l.b16 %v5294
      %v5391 = vunpack.c.l.b16 %v5295
      %v5392 = vunpack.c.l.b16 %v5296
      %v5393 = vunpack.c.l.b16 %v5297
      %v5394 = vunpack.c.l.b16 %v5298
      %v5395 = vunpack.c.l.b16 %v5299
      %v5396 = vunpack.c.l.b16 %v5300
      %v5397 = vunpack.c.l.b16 %v5301
      %v5398 = vunpack.c.l.b16 %v5302
      %v5399 = vunpack.c.l.b16 %v5303
      %v5400 = vunpack.c.l.b16 %v5304
      %v5401 = vunpack.c.l.b16 %v5305
      %v5402 = vunpack.c.l.b16 %v5306
      %v5403 = vunpack.c.l.b16 %v5307
      %v5404 = vunpack.c.l.b16 %v5308
      %v5405 = vpack.c.b16 %v5390, %v5389
      %v5406 = vpack.c.b16 %v5392, %v5391
      %v5407 = vpack.c.b16 %v5394, %v5393
      %v5408 = vpack.c.b16 %v5396, %v5395
      %v5409 = vpack.c.b16 %v5398, %v5397
      %v5410 = vpack.c.b16 %v5400, %v5399
      %v5411 = vpack.c.b16 %v5402, %v5401
      %v5412 = vpack.c.b16 %v5404, %v5403
      %5421 = vmatpush.bf16.msra.mxu0 %v5412
      %5422 = vmatpush.bf16.msra.mxu0 %v5411
      %5423 = vmatpush.bf16.msra.mxu0 %v5410
      %5424 = vmatpush.bf16.msra.mxu0 %v5409
      %5425 = vmatpush.bf16.msra.mxu0 %v5408
      %5426 = vmatpush.bf16.msra.mxu0 %v5407
      %5427 = vmatpush.bf16.msra.mxu0 %v5406
      %5428 = vmatpush.bf16.msra.mxu0 %v5405
      %5429 = vmatmul.bf16.gmra.mxu0 %v5341
      %v5430 = vpop.f32.mrf.mxu0
      %v5431 = vadd.f32 0.0, %v5430
      %v5432 = vpop.f32.mrf.mxu0
      %v5433 = vadd.f32 0.0, %v5432
      %5434 = vmatmul.bf16.gmra.mxu0 %v5342
      %v5435 = vpop.f32.mrf.mxu0
      %v5436 = vadd.f32 0.0, %v5435
      %v5437 = vpop.f32.mrf.mxu0
      %v5438 = vadd.f32 0.0, %v5437
      %5439 = vmatmul.bf16.gmra.mxu0 %v5343
      %v5440 = vpop.f32.mrf.mxu0
      %v5441 = vadd.f32 0.0, %v5440
      %v5442 = vpop.f32.mrf.mxu0
      %v5443 = vadd.f32 0.0, %v5442
      %5444 = vmatmul.bf16.gmra.mxu0 %v5344
      %v5445 = vpop.f32.mrf.mxu0
      %v5446 = vadd.f32 0.0, %v5445
      %v5447 = vpop.f32.mrf.mxu0
      %v5448 = vadd.f32 0.0, %v5447
      %5449 = vmatmul.bf16.gmra.mxu0 %v5345
      %v5450 = vpop.f32.mrf.mxu0
      %v5451 = vadd.f32 0.0, %v5450
      %v5452 = vpop.f32.mrf.mxu0
      %v5453 = vadd.f32 0.0, %v5452
      %5454 = vmatmul.bf16.gmra.mxu0 %v5346
      %v5455 = vpop.f32.mrf.mxu0
      %v5456 = vadd.f32 0.0, %v5455
      %v5457 = vpop.f32.mrf.mxu0
      %v5458 = vadd.f32 0.0, %v5457
      %5459 = vmatmul.bf16.gmra.mxu0 %v5347
      %v5460 = vpop.f32.mrf.mxu0
      %v5461 = vadd.f32 0.0, %v5460
      %v5462 = vpop.f32.mrf.mxu0
      %v5463 = vadd.f32 0.0, %v5462
      %5464 = vmatmul.bf16.gmra.mxu0 %v5348
      %v5465 = vpop.f32.mrf.mxu0
      %v5466 = vadd.f32 0.0, %v5465
      %v5467 = vpop.f32.mrf.mxu0
      %v5468 = vadd.f32 0.0, %v5467
      %5469 = vmatmul.bf16.gmra.mxu0 %v5349
      %v5470 = vpop.f32.mrf.mxu0
      %v5471 = vadd.f32 0.0, %v5470
      %v5472 = vpop.f32.mrf.mxu0
      %v5473 = vadd.f32 0.0, %v5472
      %5474 = vmatmul.bf16.gmra.mxu0 %v5350
      %v5475 = vpop.f32.mrf.mxu0
      %v5476 = vadd.f32 0.0, %v5475
      %v5477 = vpop.f32.mrf.mxu0
      %v5478 = vadd.f32 0.0, %v5477
      %5479 = vmatmul.bf16.gmra.mxu0 %v5351
      %v5480 = vpop.f32.mrf.mxu0
      %v5481 = vadd.f32 0.0, %v5480
      %v5482 = vpop.f32.mrf.mxu0
      %v5483 = vadd.f32 0.0, %v5482
      %5484 = vmatmul.bf16.gmra.mxu0 %v5352
      %v5485 = vpop.f32.mrf.mxu0
      %v5486 = vadd.f32 0.0, %v5485
      %v5487 = vpop.f32.mrf.mxu0
      %v5488 = vadd.f32 0.0, %v5487
      %5489 = vmatmul.bf16.gmra.mxu0 %v5353
      %v5490 = vpop.f32.mrf.mxu0
      %v5491 = vadd.f32 0.0, %v5490
      %v5492 = vpop.f32.mrf.mxu0
      %v5493 = vadd.f32 0.0, %v5492
      %5494 = vmatmul.bf16.gmra.mxu0 %v5354
      %v5495 = vpop.f32.mrf.mxu0
      %v5496 = vadd.f32 0.0, %v5495
      %v5497 = vpop.f32.mrf.mxu0
      %v5498 = vadd.f32 0.0, %v5497
      %5499 = vmatmul.bf16.gmra.mxu0 %v5355
      %v5500 = vpop.f32.mrf.mxu0
      %v5501 = vadd.f32 0.0, %v5500
      %v5502 = vpop.f32.mrf.mxu0
      %v5503 = vadd.f32 0.0, %v5502
      %5504 = vmatmul.bf16.gmra.mxu0 %v5356
      %v5505 = vpop.f32.mrf.mxu0
      %v5506 = vadd.f32 0.0, %v5505
      %v5507 = vpop.f32.mrf.mxu0
      %v5508 = vadd.f32 0.0, %v5507
      %5509 = vdwg.mxu0
      %v5510 = vadd.f32 %v4774, %v5431
      %v5511 = vadd.f32 %v4775, %v5433
      %v5512 = vadd.f32 %v4776, %v5436
      %v5513 = vadd.f32 %v4777, %v5438
      %v5514 = vadd.f32 %v4778, %v5441
      %v5515 = vadd.f32 %v4779, %v5443
      %v5516 = vadd.f32 %v4780, %v5446
      %v5517 = vadd.f32 %v4781, %v5448
      %v5518 = vadd.f32 %v4782, %v5451
      %v5519 = vadd.f32 %v4783, %v5453
      %v5520 = vadd.f32 %v4784, %v5456
      %v5521 = vadd.f32 %v4785, %v5458
      %v5522 = vadd.f32 %v4786, %v5461
      %v5523 = vadd.f32 %v4787, %v5463
      %v5524 = vadd.f32 %v4788, %v5466
      %v5525 = vadd.f32 %v4789, %v5468
      %v5526 = vadd.f32 %v4790, %v5471
      %v5527 = vadd.f32 %v4791, %v5473
      %v5528 = vadd.f32 %v4792, %v5476
      %v5529 = vadd.f32 %v4793, %v5478
      %v5530 = vadd.f32 %v4794, %v5481
      %v5531 = vadd.f32 %v4795, %v5483
      %v5532 = vadd.f32 %v4796, %v5486
      %v5533 = vadd.f32 %v4797, %v5488
      %v5534 = vadd.f32 %v4798, %v5491
      %v5535 = vadd.f32 %v4799, %v5493
      %v5536 = vadd.f32 %v4800, %v5496
      %v5537 = vadd.f32 %v4801, %v5498
      %v5538 = vadd.f32 %v4802, %v5501
      %v5539 = vadd.f32 %v4803, %v5503
      %v5540 = vadd.f32 %v4804, %v5506
      %v5541 = vadd.f32 %v4805, %v5508
      %s5542 = scalar_lea.vmem %s3, 320
      %v5543 = vld [vmem:[%s5542] sm:$0xf]
      %v5544 = vld [vmem:[%s5542 + $0x4] sm:$0xf]
      %v5545 = vld [vmem:[%s5542 + $0x8] sm:$0xf]
      %v5546 = vld [vmem:[%s5542 + $0xc] sm:$0xf]
      %v5547 = vld [vmem:[%s5542 + $0x10] sm:$0xf]
      %v5548 = vld [vmem:[%s5542 + $0x14] sm:$0xf]
      %v5549 = vld [vmem:[%s5542 + $0x18] sm:$0xf]
      %v5550 = vld [vmem:[%s5542 + $0x1c] sm:$0xf]
      %v5551 = vld [vmem:[%s5542 + $0x20] sm:$0xf]
      %v5552 = vld [vmem:[%s5542 + $0x24] sm:$0xf]
      %v5553 = vld [vmem:[%s5542 + $0x28] sm:$0xf]
      %v5554 = vld [vmem:[%s5542 + $0x2c] sm:$0xf]
      %v5555 = vld [vmem:[%s5542 + $0x30] sm:$0xf]
      %v5556 = vld [vmem:[%s5542 + $0x34] sm:$0xf]
      %v5557 = vld [vmem:[%s5542 + $0x38] sm:$0xf]
      %v5558 = vld [vmem:[%s5542 + $0x3c] sm:$0xf]
      %v5559 = vunpack.c.l.b16 %v5257
      %v5560 = vunpack.c.l.b16 %v5267
      %v5561 = vpack.c.b16 %v5560, %v5559
      %v5579 = vunpack.c.l.b16 %v5543
      %v5580 = vunpack.c.l.b16 %v5544
      %v5581 = vunpack.c.l.b16 %v5545
      %v5582 = vunpack.c.l.b16 %v5546
      %v5583 = vunpack.c.l.b16 %v5547
      %v5584 = vunpack.c.l.b16 %v5548
      %v5585 = vunpack.c.l.b16 %v5549
      %v5586 = vunpack.c.l.b16 %v5550
      %v5587 = vunpack.c.l.b16 %v5551
      %v5588 = vunpack.c.l.b16 %v5552
      %v5589 = vunpack.c.l.b16 %v5553
      %v5590 = vunpack.c.l.b16 %v5554
      %v5591 = vunpack.c.l.b16 %v5555
      %v5592 = vunpack.c.l.b16 %v5556
      %v5593 = vunpack.c.l.b16 %v5557
      %v5594 = vunpack.c.l.b16 %v5558
      %v5595 = vpack.c.b16 %v5580, %v5579
      %v5596 = vpack.c.b16 %v5582, %v5581
      %v5597 = vpack.c.b16 %v5584, %v5583
      %v5598 = vpack.c.b16 %v5586, %v5585
      %v5599 = vpack.c.b16 %v5588, %v5587
      %v5600 = vpack.c.b16 %v5590, %v5589
      %v5601 = vpack.c.b16 %v5592, %v5591
      %v5602 = vpack.c.b16 %v5594, %v5593
      %5611 = vmatpush.bf16.msra.mxu0 %v5602
      %5612 = vmatpush.bf16.msra.mxu0 %v5601
      %5613 = vmatpush.bf16.msra.mxu0 %v5600
      %5614 = vmatpush.bf16.msra.mxu0 %v5599
      %5615 = vmatpush.bf16.msra.mxu0 %v5598
      %5616 = vmatpush.bf16.msra.mxu0 %v5597
      %5617 = vmatpush.bf16.msra.mxu0 %v5596
      %5618 = vmatpush.bf16.msra.mxu0 %v5595
      %5619 = vmatmul.bf16.gmra.mxu0 %v5342
      %v5620 = vpop.f32.mrf.mxu0
      %v5621 = vadd.f32 0.0, %v5620
      %v5622 = vpop.f32.mrf.mxu0
      %v5623 = vadd.f32 0.0, %v5622
      %5624 = vmatmul.bf16.gmra.mxu0 %v5343
      %v5625 = vpop.f32.mrf.mxu0
      %v5626 = vadd.f32 0.0, %v5625
      %v5627 = vpop.f32.mrf.mxu0
      %v5628 = vadd.f32 0.0, %v5627
      %5629 = vmatmul.bf16.gmra.mxu0 %v5344
      %v5630 = vpop.f32.mrf.mxu0
      %v5631 = vadd.f32 0.0, %v5630
      %v5632 = vpop.f32.mrf.mxu0
      %v5633 = vadd.f32 0.0, %v5632
      %5634 = vmatmul.bf16.gmra.mxu0 %v5345
      %v5635 = vpop.f32.mrf.mxu0
      %v5636 = vadd.f32 0.0, %v5635
      %v5637 = vpop.f32.mrf.mxu0
      %v5638 = vadd.f32 0.0, %v5637
      %5639 = vmatmul.bf16.gmra.mxu0 %v5346
      %v5640 = vpop.f32.mrf.mxu0
      %v5641 = vadd.f32 0.0, %v5640
      %v5642 = vpop.f32.mrf.mxu0
      %v5643 = vadd.f32 0.0, %v5642
      %5644 = vmatmul.bf16.gmra.mxu0 %v5347
      %v5645 = vpop.f32.mrf.mxu0
      %v5646 = vadd.f32 0.0, %v5645
      %v5647 = vpop.f32.mrf.mxu0
      %v5648 = vadd.f32 0.0, %v5647
      %5649 = vmatmul.bf16.gmra.mxu0 %v5348
      %v5650 = vpop.f32.mrf.mxu0
      %v5651 = vadd.f32 0.0, %v5650
      %v5652 = vpop.f32.mrf.mxu0
      %v5653 = vadd.f32 0.0, %v5652
      %5654 = vmatmul.bf16.gmra.mxu0 %v5349
      %v5655 = vpop.f32.mrf.mxu0
      %v5656 = vadd.f32 0.0, %v5655
      %v5657 = vpop.f32.mrf.mxu0
      %v5658 = vadd.f32 0.0, %v5657
      %5659 = vmatmul.bf16.gmra.mxu0 %v5350
      %v5660 = vpop.f32.mrf.mxu0
      %v5661 = vadd.f32 0.0, %v5660
      %v5662 = vpop.f32.mrf.mxu0
      %v5663 = vadd.f32 0.0, %v5662
      %5664 = vmatmul.bf16.gmra.mxu0 %v5351
      %v5665 = vpop.f32.mrf.mxu0
      %v5666 = vadd.f32 0.0, %v5665
      %v5667 = vpop.f32.mrf.mxu0
      %v5668 = vadd.f32 0.0, %v5667
      %5669 = vmatmul.bf16.gmra.mxu0 %v5352
      %v5670 = vpop.f32.mrf.mxu0
      %v5671 = vadd.f32 0.0, %v5670
      %v5672 = vpop.f32.mrf.mxu0
      %v5673 = vadd.f32 0.0, %v5672
      %5674 = vmatmul.bf16.gmra.mxu0 %v5353
      %v5675 = vpop.f32.mrf.mxu0
      %v5676 = vadd.f32 0.0, %v5675
      %v5677 = vpop.f32.mrf.mxu0
      %v5678 = vadd.f32 0.0, %v5677
      %5679 = vmatmul.bf16.gmra.mxu0 %v5354
      %v5680 = vpop.f32.mrf.mxu0
      %v5681 = vadd.f32 0.0, %v5680
      %v5682 = vpop.f32.mrf.mxu0
      %v5683 = vadd.f32 0.0, %v5682
      %5684 = vmatmul.bf16.gmra.mxu0 %v5355
      %v5685 = vpop.f32.mrf.mxu0
      %v5686 = vadd.f32 0.0, %v5685
      %v5687 = vpop.f32.mrf.mxu0
      %v5688 = vadd.f32 0.0, %v5687
      %5689 = vmatmul.bf16.gmra.mxu0 %v5356
      %v5690 = vpop.f32.mrf.mxu0
      %v5691 = vadd.f32 0.0, %v5690
      %v5692 = vpop.f32.mrf.mxu0
      %v5693 = vadd.f32 0.0, %v5692
      %5694 = vmatmul.bf16.gmra.mxu0 %v5561
      %v5695 = vpop.f32.mrf.mxu0
      %v5696 = vadd.f32 0.0, %v5695
      %v5697 = vpop.f32.mrf.mxu0
      %v5698 = vadd.f32 0.0, %v5697
      %5699 = vdwg.mxu0
      %v5700 = vadd.f32 %v5510, %v5621
      %v5701 = vadd.f32 %v5511, %v5623
      %v5702 = vadd.f32 %v5512, %v5626
      %v5703 = vadd.f32 %v5513, %v5628
      %v5704 = vadd.f32 %v5514, %v5631
      %v5705 = vadd.f32 %v5515, %v5633
      %v5706 = vadd.f32 %v5516, %v5636
      %v5707 = vadd.f32 %v5517, %v5638
      %v5708 = vadd.f32 %v5518, %v5641
      %v5709 = vadd.f32 %v5519, %v5643
      %v5710 = vadd.f32 %v5520, %v5646
      %v5711 = vadd.f32 %v5521, %v5648
      %v5712 = vadd.f32 %v5522, %v5651
      %v5713 = vadd.f32 %v5523, %v5653
      %v5714 = vadd.f32 %v5524, %v5656
      %v5715 = vadd.f32 %v5525, %v5658
      %v5716 = vadd.f32 %v5526, %v5661
      %v5717 = vadd.f32 %v5527, %v5663
      %v5718 = vadd.f32 %v5528, %v5666
      %v5719 = vadd.f32 %v5529, %v5668
      %v5720 = vadd.f32 %v5530, %v5671
      %v5721 = vadd.f32 %v5531, %v5673
      %v5722 = vadd.f32 %v5532, %v5676
      %v5723 = vadd.f32 %v5533, %v5678
      %v5724 = vadd.f32 %v5534, %v5681
      %v5725 = vadd.f32 %v5535, %v5683
      %v5726 = vadd.f32 %v5536, %v5686
      %v5727 = vadd.f32 %v5537, %v5688
      %v5728 = vadd.f32 %v5538, %v5691
      %v5729 = vadd.f32 %v5539, %v5693
      %v5730 = vadd.f32 %v5540, %v5696
      %v5731 = vadd.f32 %v5541, %v5698
      %s5732 = scalar_lea.vmem %s3, 512
      %v5733 = vld [vmem:[%s5732] sm:$0xf]
      %v5734 = vld [vmem:[%s5732 + $0x4] sm:$0xf]
      %v5735 = vld [vmem:[%s5732 + $0x8] sm:$0xf]
      %v5736 = vld [vmem:[%s5732 + $0xc] sm:$0xf]
      %v5737 = vld [vmem:[%s5732 + $0x10] sm:$0xf]
      %v5738 = vld [vmem:[%s5732 + $0x14] sm:$0xf]
      %v5739 = vld [vmem:[%s5732 + $0x18] sm:$0xf]
      %v5740 = vld [vmem:[%s5732 + $0x1c] sm:$0xf]
      %v5741 = vld [vmem:[%s5732 + $0x20] sm:$0xf]
      %v5742 = vld [vmem:[%s5732 + $0x24] sm:$0xf]
      %v5743 = vld [vmem:[%s5732 + $0x28] sm:$0xf]
      %v5744 = vld [vmem:[%s5732 + $0x2c] sm:$0xf]
      %v5745 = vld [vmem:[%s5732 + $0x30] sm:$0xf]
      %v5746 = vld [vmem:[%s5732 + $0x34] sm:$0xf]
      %v5747 = vld [vmem:[%s5732 + $0x38] sm:$0xf]
      %v5748 = vld [vmem:[%s5732 + $0x3c] sm:$0xf]
      %v5749 = vunpack.c.l.b16 %v5281
      %v5750 = vunpack.c.l.b16 %v5291
      %v5751 = vpack.c.b16 %v5750, %v5749
      %v5769 = vunpack.c.l.b16 %v5733
      %v5770 = vunpack.c.l.b16 %v5734
      %v5771 = vunpack.c.l.b16 %v5735
      %v5772 = vunpack.c.l.b16 %v5736
      %v5773 = vunpack.c.l.b16 %v5737
      %v5774 = vunpack.c.l.b16 %v5738
      %v5775 = vunpack.c.l.b16 %v5739
      %v5776 = vunpack.c.l.b16 %v5740
      %v5777 = vunpack.c.l.b16 %v5741
      %v5778 = vunpack.c.l.b16 %v5742
      %v5779 = vunpack.c.l.b16 %v5743
      %v5780 = vunpack.c.l.b16 %v5744
      %v5781 = vunpack.c.l.b16 %v5745
      %v5782 = vunpack.c.l.b16 %v5746
      %v5783 = vunpack.c.l.b16 %v5747
      %v5784 = vunpack.c.l.b16 %v5748
      %v5785 = vpack.c.b16 %v5770, %v5769
      %v5786 = vpack.c.b16 %v5772, %v5771
      %v5787 = vpack.c.b16 %v5774, %v5773
      %v5788 = vpack.c.b16 %v5776, %v5775
      %v5789 = vpack.c.b16 %v5778, %v5777
      %v5790 = vpack.c.b16 %v5780, %v5779
      %v5791 = vpack.c.b16 %v5782, %v5781
      %v5792 = vpack.c.b16 %v5784, %v5783
      %5801 = vmatpush.bf16.msra.mxu0 %v5792
      %5802 = vmatpush.bf16.msra.mxu0 %v5791
      %5803 = vmatpush.bf16.msra.mxu0 %v5790
      %5804 = vmatpush.bf16.msra.mxu0 %v5789
      %5805 = vmatpush.bf16.msra.mxu0 %v5788
      %5806 = vmatpush.bf16.msra.mxu0 %v5787
      %5807 = vmatpush.bf16.msra.mxu0 %v5786
      %5808 = vmatpush.bf16.msra.mxu0 %v5785
      %5809 = vmatmul.bf16.gmra.mxu0 %v5343
      %v5810 = vpop.f32.mrf.mxu0
      %v5811 = vadd.f32 0.0, %v5810
      %v5812 = vpop.f32.mrf.mxu0
      %v5813 = vadd.f32 0.0, %v5812
      %5814 = vmatmul.bf16.gmra.mxu0 %v5344
      %v5815 = vpop.f32.mrf.mxu0
      %v5816 = vadd.f32 0.0, %v5815
      %v5817 = vpop.f32.mrf.mxu0
      %v5818 = vadd.f32 0.0, %v5817
      %5819 = vmatmul.bf16.gmra.mxu0 %v5345
      %v5820 = vpop.f32.mrf.mxu0
      %v5821 = vadd.f32 0.0, %v5820
      %v5822 = vpop.f32.mrf.mxu0
      %v5823 = vadd.f32 0.0, %v5822
      %5824 = vmatmul.bf16.gmra.mxu0 %v5346
      %v5825 = vpop.f32.mrf.mxu0
      %v5826 = vadd.f32 0.0, %v5825
      %v5827 = vpop.f32.mrf.mxu0
      %v5828 = vadd.f32 0.0, %v5827
      %5829 = vmatmul.bf16.gmra.mxu0 %v5347
      %v5830 = vpop.f32.mrf.mxu0
      %v5831 = vadd.f32 0.0, %v5830
      %v5832 = vpop.f32.mrf.mxu0
      %v5833 = vadd.f32 0.0, %v5832
      %5834 = vmatmul.bf16.gmra.mxu0 %v5348
      %v5835 = vpop.f32.mrf.mxu0
      %v5836 = vadd.f32 0.0, %v5835
      %v5837 = vpop.f32.mrf.mxu0
      %v5838 = vadd.f32 0.0, %v5837
      %5839 = vmatmul.bf16.gmra.mxu0 %v5349
      %v5840 = vpop.f32.mrf.mxu0
      %v5841 = vadd.f32 0.0, %v5840
      %v5842 = vpop.f32.mrf.mxu0
      %v5843 = vadd.f32 0.0, %v5842
      %5844 = vmatmul.bf16.gmra.mxu0 %v5350
      %v5845 = vpop.f32.mrf.mxu0
      %v5846 = vadd.f32 0.0, %v5845
      %v5847 = vpop.f32.mrf.mxu0
      %v5848 = vadd.f32 0.0, %v5847
      %5849 = vmatmul.bf16.gmra.mxu0 %v5351
      %v5850 = vpop.f32.mrf.mxu0
      %v5851 = vadd.f32 0.0, %v5850
      %v5852 = vpop.f32.mrf.mxu0
      %v5853 = vadd.f32 0.0, %v5852
      %5854 = vmatmul.bf16.gmra.mxu0 %v5352
      %v5855 = vpop.f32.mrf.mxu0
      %v5856 = vadd.f32 0.0, %v5855
      %v5857 = vpop.f32.mrf.mxu0
      %v5858 = vadd.f32 0.0, %v5857
      %5859 = vmatmul.bf16.gmra.mxu0 %v5353
      %v5860 = vpop.f32.mrf.mxu0
      %v5861 = vadd.f32 0.0, %v5860
      %v5862 = vpop.f32.mrf.mxu0
      %v5863 = vadd.f32 0.0, %v5862
      %5864 = vmatmul.bf16.gmra.mxu0 %v5354
      %v5865 = vpop.f32.mrf.mxu0
      %v5866 = vadd.f32 0.0, %v5865
      %v5867 = vpop.f32.mrf.mxu0
      %v5868 = vadd.f32 0.0, %v5867
      %5869 = vmatmul.bf16.gmra.mxu0 %v5355
      %v5870 = vpop.f32.mrf.mxu0
      %v5871 = vadd.f32 0.0, %v5870
      %v5872 = vpop.f32.mrf.mxu0
      %v5873 = vadd.f32 0.0, %v5872
      %5874 = vmatmul.bf16.gmra.mxu0 %v5356
      %v5875 = vpop.f32.mrf.mxu0
      %v5876 = vadd.f32 0.0, %v5875
      %v5877 = vpop.f32.mrf.mxu0
      %v5878 = vadd.f32 0.0, %v5877
      %5879 = vmatmul.bf16.gmra.mxu0 %v5561
      %v5880 = vpop.f32.mrf.mxu0
      %v5881 = vadd.f32 0.0, %v5880
      %v5882 = vpop.f32.mrf.mxu0
      %v5883 = vadd.f32 0.0, %v5882
      %5884 = vmatmul.bf16.gmra.mxu0 %v5751
      %v5885 = vpop.f32.mrf.mxu0
      %v5886 = vadd.f32 0.0, %v5885
      %v5887 = vpop.f32.mrf.mxu0
      %v5888 = vadd.f32 0.0, %v5887
      %5889 = vdwg.mxu0
      %v5890 = vadd.f32 %v5700, %v5811
      %v5891 = vadd.f32 %v5701, %v5813
      %v5892 = vadd.f32 %v5702, %v5816
      %v5893 = vadd.f32 %v5703, %v5818
      %v5894 = vadd.f32 %v5704, %v5821
      %v5895 = vadd.f32 %v5705, %v5823
      %v5896 = vadd.f32 %v5706, %v5826
      %v5897 = vadd.f32 %v5707, %v5828
      %v5898 = vadd.f32 %v5708, %v5831
      %v5899 = vadd.f32 %v5709, %v5833
      %v5900 = vadd.f32 %v5710, %v5836
      %v5901 = vadd.f32 %v5711, %v5838
      %v5902 = vadd.f32 %v5712, %v5841
      %v5903 = vadd.f32 %v5713, %v5843
      %v5904 = vadd.f32 %v5714, %v5846
      %v5905 = vadd.f32 %v5715, %v5848
      %v5906 = vadd.f32 %v5716, %v5851
      %v5907 = vadd.f32 %v5717, %v5853
      %v5908 = vadd.f32 %v5718, %v5856
      %v5909 = vadd.f32 %v5719, %v5858
      %v5910 = vadd.f32 %v5720, %v5861
      %v5911 = vadd.f32 %v5721, %v5863
      %v5912 = vadd.f32 %v5722, %v5866
      %v5913 = vadd.f32 %v5723, %v5868
      %v5914 = vadd.f32 %v5724, %v5871
      %v5915 = vadd.f32 %v5725, %v5873
      %v5916 = vadd.f32 %v5726, %v5876
      %v5917 = vadd.f32 %v5727, %v5878
      %v5918 = vadd.f32 %v5728, %v5881
      %v5919 = vadd.f32 %v5729, %v5883
      %v5920 = vadd.f32 %v5730, %v5886
      %v5921 = vadd.f32 %v5731, %v5888
      %v5922 = vld [vmem:[%s4] sm:$0x1]
      %v5924 = vperm.slane %v5922, 0
      %v5926 = vadd.f32 %v5890, %v5924
      %v5927 = vadd.f32 %v5891, %v5924
      %v5928 = vadd.f32 %v5892, %v5924
      %v5929 = vadd.f32 %v5893, %v5924
      %v5930 = vadd.f32 %v5894, %v5924
      %v5931 = vadd.f32 %v5895, %v5924
      %v5932 = vadd.f32 %v5896, %v5924
      %v5933 = vadd.f32 %v5897, %v5924
      %v5934 = vadd.f32 %v5898, %v5924
      %v5935 = vadd.f32 %v5899, %v5924
      %v5936 = vadd.f32 %v5900, %v5924
      %v5937 = vadd.f32 %v5901, %v5924
      %v5938 = vadd.f32 %v5902, %v5924
      %v5939 = vadd.f32 %v5903, %v5924
      %v5940 = vadd.f32 %v5904, %v5924
      %v5941 = vadd.f32 %v5905, %v5924
      %v5942 = vadd.f32 %v5906, %v5924
      %v5943 = vadd.f32 %v5907, %v5924
      %v5944 = vadd.f32 %v5908, %v5924
      %v5945 = vadd.f32 %v5909, %v5924
      %v5946 = vadd.f32 %v5910, %v5924
      %v5947 = vadd.f32 %v5911, %v5924
      %v5948 = vadd.f32 %v5912, %v5924
      %v5949 = vadd.f32 %v5913, %v5924
      %v5950 = vadd.f32 %v5914, %v5924
      %v5951 = vadd.f32 %v5915, %v5924
      %v5952 = vadd.f32 %v5916, %v5924
      %v5953 = vadd.f32 %v5917, %v5924
      %v5954 = vadd.f32 %v5918, %v5924
      %v5955 = vadd.f32 %v5919, %v5924
      %v5956 = vadd.f32 %v5920, %v5924
      %v5957 = vadd.f32 %v5921, %v5924
      %v5958 = vmax.f32 %v5926, 0.0
      %v5959 = vmax.f32 %v5927, 0.0
      %v5960 = vmax.f32 %v5928, 0.0
      %v5961 = vmax.f32 %v5929, 0.0
      %v5962 = vmax.f32 %v5930, 0.0
      %v5963 = vmax.f32 %v5931, 0.0
      %v5964 = vmax.f32 %v5932, 0.0
      %v5965 = vmax.f32 %v5933, 0.0
      %v5966 = vmax.f32 %v5934, 0.0
      %v5967 = vmax.f32 %v5935, 0.0
      %v5968 = vmax.f32 %v5936, 0.0
      %v5969 = vmax.f32 %v5937, 0.0
      %v5970 = vmax.f32 %v5938, 0.0
      %v5971 = vmax.f32 %v5939, 0.0
      %v5972 = vmax.f32 %v5940, 0.0
      %v5973 = vmax.f32 %v5941, 0.0
      %v5974 = vmax.f32 %v5942, 0.0
      %v5975 = vmax.f32 %v5943, 0.0
      %v5976 = vmax.f32 %v5944, 0.0
      %v5977 = vmax.f32 %v5945, 0.0
      %v5978 = vmax.f32 %v5946, 0.0
      %v5979 = vmax.f32 %v5947, 0.0
      %v5980 = vmax.f32 %v5948, 0.0
      %v5981 = vmax.f32 %v5949, 0.0
      %v5982 = vmax.f32 %v5950, 0.0
      %v5983 = vmax.f32 %v5951, 0.0
      %v5984 = vmax.f32 %v5952, 0.0
      %v5985 = vmax.f32 %v5953, 0.0
      %v5986 = vmax.f32 %v5954, 0.0
      %v5987 = vmax.f32 %v5955, 0.0
      %v5988 = vmax.f32 %v5956, 0.0
      %v5989 = vmax.f32 %v5957, 0.0
      %v5990 = vpack.c.bf16 %v5959, %v5958
      %v5991 = vpack.c.bf16 %v5961, %v5960
      %v5992 = vpack.c.bf16 %v5963, %v5962
      %v5993 = vpack.c.bf16 %v5965, %v5964
      %v5994 = vpack.c.bf16 %v5967, %v5966
      %v5995 = vpack.c.bf16 %v5969, %v5968
      %v5996 = vpack.c.bf16 %v5971, %v5970
      %v5997 = vpack.c.bf16 %v5973, %v5972
      %v5998 = vpack.c.bf16 %v5975, %v5974
      %v5999 = vpack.c.bf16 %v5977, %v5976
      %v6000 = vpack.c.bf16 %v5979, %v5978
      %v6001 = vpack.c.bf16 %v5981, %v5980
      %v6002 = vpack.c.bf16 %v5983, %v5982
      %v6003 = vpack.c.bf16 %v5985, %v5984
      %v6004 = vpack.c.bf16 %v5987, %v5986
      %v6005 = vpack.c.bf16 %v5989, %v5988
      %v6006 = vld [vmem:[%s5] sm:$0xf]
      %v6007 = vld [vmem:[%s5 + $0x4] sm:$0xf]
      %v6008 = vld [vmem:[%s5 + $0x8] sm:$0xf]
      %v6009 = vld [vmem:[%s5 + $0xc] sm:$0xf]
      %v6010 = vld [vmem:[%s5 + $0x10] sm:$0xf]
      %v6011 = vld [vmem:[%s5 + $0x14] sm:$0xf]
      %v6012 = vld [vmem:[%s5 + $0x18] sm:$0xf]
      %v6013 = vld [vmem:[%s5 + $0x1c] sm:$0xf]
      %v6014 = vld [vmem:[%s5 + $0x20] sm:$0xf]
      %v6015 = vld [vmem:[%s5 + $0x24] sm:$0xf]
      %v6016 = vld [vmem:[%s5 + $0x28] sm:$0xf]
      %v6017 = vld [vmem:[%s5 + $0x2c] sm:$0xf]
      %v6018 = vld [vmem:[%s5 + $0x30] sm:$0xf]
      %v6019 = vld [vmem:[%s5 + $0x34] sm:$0xf]
      %v6020 = vld [vmem:[%s5 + $0x38] sm:$0xf]
      %v6021 = vld [vmem:[%s5 + $0x3c] sm:$0xf]
      %v6022 = vld [vmem:[%s6] sm:$0x1]
      %v6024 = vperm.slane %v6022, 0
      %v6042 = vunpack.c.l.b16 %v6006
      %v6043 = vunpack.c.l.b16 %v6007
      %v6044 = vunpack.c.l.b16 %v6008
      %v6045 = vunpack.c.l.b16 %v6009
      %v6046 = vunpack.c.l.b16 %v6010
      %v6047 = vunpack.c.l.b16 %v6011
      %v6048 = vunpack.c.l.b16 %v6012
      %v6049 = vunpack.c.l.b16 %v6013
      %v6050 = vunpack.c.l.b16 %v6014
      %v6051 = vunpack.c.l.b16 %v6015
      %v6052 = vunpack.c.l.b16 %v6016
      %v6053 = vunpack.c.l.b16 %v6017
      %v6054 = vunpack.c.l.b16 %v6018
      %v6055 = vunpack.c.l.b16 %v6019
      %v6056 = vunpack.c.l.b16 %v6020
      %v6057 = vunpack.c.l.b16 %v6021
      %v6058 = vpack.c.b16 %v6043, %v6042
      %v6059 = vpack.c.b16 %v6045, %v6044
      %v6060 = vpack.c.b16 %v6047, %v6046
      %v6061 = vpack.c.b16 %v6049, %v6048
      %v6062 = vpack.c.b16 %v6051, %v6050
      %v6063 = vpack.c.b16 %v6053, %v6052
      %v6064 = vpack.c.b16 %v6055, %v6054
      %v6065 = vpack.c.b16 %v6057, %v6056
      %6074 = vmatpush.bf16.msra.mxu0 %v6065
      %6075 = vmatpush.bf16.msra.mxu0 %v6064
      %6076 = vmatpush.bf16.msra.mxu0 %v6063
      %6077 = vmatpush.bf16.msra.mxu0 %v6062
      %6078 = vmatpush.bf16.msra.mxu0 %v6061
      %6079 = vmatpush.bf16.msra.mxu0 %v6060
      %6080 = vmatpush.bf16.msra.mxu0 %v6059
      %6081 = vmatpush.bf16.msra.mxu0 %v6058
      %6082 = vmatmul.bf16.gmra.mxu0 %v5990
      %v6083 = vpop.f32.mrf.mxu0
      %v6084 = vadd.f32 %v6024, %v6083
      %v6085 = vpop.f32.mrf.mxu0
      %v6086 = vadd.f32 %v6024, %v6085
      %6087 = vmatmul.bf16.gmra.mxu0 %v5991
      %v6088 = vpop.f32.mrf.mxu0
      %v6089 = vadd.f32 %v6024, %v6088
      %v6090 = vpop.f32.mrf.mxu0
      %v6091 = vadd.f32 %v6024, %v6090
      %6092 = vmatmul.bf16.gmra.mxu0 %v5992
      %v6093 = vpop.f32.mrf.mxu0
      %v6094 = vadd.f32 %v6024, %v6093
      %v6095 = vpop.f32.mrf.mxu0
      %v6096 = vadd.f32 %v6024, %v6095
      %6097 = vmatmul.bf16.gmra.mxu0 %v5993
      %v6098 = vpop.f32.mrf.mxu0
      %v6099 = vadd.f32 %v6024, %v6098
      %v6100 = vpop.f32.mrf.mxu0
      %v6101 = vadd.f32 %v6024, %v6100
      %6102 = vmatmul.bf16.gmra.mxu0 %v5994
      %v6103 = vpop.f32.mrf.mxu0
      %v6104 = vadd.f32 %v6024, %v6103
      %v6105 = vpop.f32.mrf.mxu0
      %v6106 = vadd.f32 %v6024, %v6105
      %6107 = vmatmul.bf16.gmra.mxu0 %v5995
      %v6108 = vpop.f32.mrf.mxu0
      %v6109 = vadd.f32 %v6024, %v6108
      %v6110 = vpop.f32.mrf.mxu0
      %v6111 = vadd.f32 %v6024, %v6110
      %6112 = vmatmul.bf16.gmra.mxu0 %v5996
      %v6113 = vpop.f32.mrf.mxu0
      %v6114 = vadd.f32 %v6024, %v6113
      %v6115 = vpop.f32.mrf.mxu0
      %v6116 = vadd.f32 %v6024, %v6115
      %6117 = vmatmul.bf16.gmra.mxu0 %v5997
      %v6118 = vpop.f32.mrf.mxu0
      %v6119 = vadd.f32 %v6024, %v6118
      %v6120 = vpop.f32.mrf.mxu0
      %v6121 = vadd.f32 %v6024, %v6120
      %6122 = vmatmul.bf16.gmra.mxu0 %v5998
      %v6123 = vpop.f32.mrf.mxu0
      %v6124 = vadd.f32 %v6024, %v6123
      %v6125 = vpop.f32.mrf.mxu0
      %v6126 = vadd.f32 %v6024, %v6125
      %6127 = vmatmul.bf16.gmra.mxu0 %v5999
      %v6128 = vpop.f32.mrf.mxu0
      %v6129 = vadd.f32 %v6024, %v6128
      %v6130 = vpop.f32.mrf.mxu0
      %v6131 = vadd.f32 %v6024, %v6130
      %6132 = vmatmul.bf16.gmra.mxu0 %v6000
      %v6133 = vpop.f32.mrf.mxu0
      %v6134 = vadd.f32 %v6024, %v6133
      %v6135 = vpop.f32.mrf.mxu0
      %v6136 = vadd.f32 %v6024, %v6135
      %6137 = vmatmul.bf16.gmra.mxu0 %v6001
      %v6138 = vpop.f32.mrf.mxu0
      %v6139 = vadd.f32 %v6024, %v6138
      %v6140 = vpop.f32.mrf.mxu0
      %v6141 = vadd.f32 %v6024, %v6140
      %6142 = vmatmul.bf16.gmra.mxu0 %v6002
      %v6143 = vpop.f32.mrf.mxu0
      %v6144 = vadd.f32 %v6024, %v6143
      %v6145 = vpop.f32.mrf.mxu0
      %v6146 = vadd.f32 %v6024, %v6145
      %6147 = vmatmul.bf16.gmra.mxu0 %v6003
      %v6148 = vpop.f32.mrf.mxu0
      %v6149 = vadd.f32 %v6024, %v6148
      %v6150 = vpop.f32.mrf.mxu0
      %v6151 = vadd.f32 %v6024, %v6150
      %6152 = vmatmul.bf16.gmra.mxu0 %v6004
      %v6153 = vpop.f32.mrf.mxu0
      %v6154 = vadd.f32 %v6024, %v6153
      %v6155 = vpop.f32.mrf.mxu0
      %v6156 = vadd.f32 %v6024, %v6155
      %6157 = vmatmul.bf16.gmra.mxu0 %v6005
      %v6158 = vpop.f32.mrf.mxu0
      %v6159 = vadd.f32 %v6024, %v6158
      %v6160 = vpop.f32.mrf.mxu0
      %v6161 = vadd.f32 %v6024, %v6160
      %6162 = vdwg.mxu0
      %v6163 = vld [vmem:[#allocation4] sm:$0xff]
      %v6164 = vld [vmem:[#allocation4 + $0x8] sm:$0xff]
      %v6165 = vld [vmem:[#allocation4 + $0x10] sm:$0xff]
      %v6166 = vld [vmem:[#allocation4 + $0x18] sm:$0xff]
      %v6167 = vld [vmem:[#allocation4 + $0x20] sm:$0xff]
      %v6168 = vld [vmem:[#allocation4 + $0x28] sm:$0xff]
      %v6169 = vld [vmem:[#allocation4 + $0x30] sm:$0xff]
      %v6170 = vld [vmem:[#allocation4 + $0x38] sm:$0xff]
      %v6171 = vld [vmem:[#allocation4 + $0x40] sm:$0xff]
      %v6172 = vld [vmem:[#allocation4 + $0x48] sm:$0xff]
      %v6173 = vld [vmem:[#allocation4 + $0x50] sm:$0xff]
      %v6174 = vld [vmem:[#allocation4 + $0x58] sm:$0xff]
      %v6175 = vld [vmem:[#allocation4 + $0x60] sm:$0xff]
      %v6176 = vld [vmem:[#allocation4 + $0x68] sm:$0xff]
      %v6177 = vld [vmem:[#allocation4 + $0x70] sm:$0xff]
      %v6178 = vld [vmem:[#allocation4 + $0x78] sm:$0xff]
      %v6179 = vld [vmem:[#allocation4 + $0x80] sm:$0xff]
      %v6180 = vld [vmem:[#allocation4 + $0x88] sm:$0xff]
      %v6181 = vld [vmem:[#allocation4 + $0x90] sm:$0xff]
      %v6182 = vld [vmem:[#allocation4 + $0x98] sm:$0xff]
      %v6183 = vld [vmem:[#allocation4 + $0xa0] sm:$0xff]
      %v6184 = vld [vmem:[#allocation4 + $0xa8] sm:$0xff]
      %v6185 = vld [vmem:[#allocation4 + $0xb0] sm:$0xff]
      %v6186 = vld [vmem:[#allocation4 + $0xb8] sm:$0xff]
      %v6187 = vld [vmem:[#allocation4 + $0xc0] sm:$0xff]
      %v6188 = vld [vmem:[#allocation4 + $0xc8] sm:$0xff]
      %v6189 = vld [vmem:[#allocation4 + $0xd0] sm:$0xff]
      %v6190 = vld [vmem:[#allocation4 + $0xd8] sm:$0xff]
      %v6191 = vld [vmem:[#allocation4 + $0xe0] sm:$0xff]
      %v6192 = vld [vmem:[#allocation4 + $0xe8] sm:$0xff]
      %v6193 = vld [vmem:[#allocation4 + $0xf0] sm:$0xff]
      %v6194 = vld [vmem:[#allocation4 + $0xf8] sm:$0xff]
      %v6195 = vadd.f32 %v6084, %v6163
      %v6196 = vadd.f32 %v6086, %v6164
      %v6197 = vadd.f32 %v6089, %v6165
      %v6198 = vadd.f32 %v6091, %v6166
      %v6199 = vadd.f32 %v6094, %v6167
      %v6200 = vadd.f32 %v6096, %v6168
      %v6201 = vadd.f32 %v6099, %v6169
      %v6202 = vadd.f32 %v6101, %v6170
      %v6203 = vadd.f32 %v6104, %v6171
      %v6204 = vadd.f32 %v6106, %v6172
      %v6205 = vadd.f32 %v6109, %v6173
      %v6206 = vadd.f32 %v6111, %v6174
      %v6207 = vadd.f32 %v6114, %v6175
      %v6208 = vadd.f32 %v6116, %v6176
      %v6209 = vadd.f32 %v6119, %v6177
      %v6210 = vadd.f32 %v6121, %v6178
      %v6211 = vadd.f32 %v6124, %v6179
      %v6212 = vadd.f32 %v6126, %v6180
      %v6213 = vadd.f32 %v6129, %v6181
      %v6214 = vadd.f32 %v6131, %v6182
      %v6215 = vadd.f32 %v6134, %v6183
      %v6216 = vadd.f32 %v6136, %v6184
      %v6217 = vadd.f32 %v6139, %v6185
      %v6218 = vadd.f32 %v6141, %v6186
      %v6219 = vadd.f32 %v6144, %v6187
      %v6220 = vadd.f32 %v6146, %v6188
      %v6221 = vadd.f32 %v6149, %v6189
      %v6222 = vadd.f32 %v6151, %v6190
      %v6223 = vadd.f32 %v6154, %v6191
      %v6224 = vadd.f32 %v6156, %v6192
      %v6225 = vadd.f32 %v6159, %v6193
      %v6226 = vadd.f32 %v6161, %v6194
      %6227 = vst [vmem:[#allocation4] sm:$0xff] %v6195
      %6228 = vst [vmem:[#allocation4 + $0x8] sm:$0xff] %v6196
      %6229 = vst [vmem:[#allocation4 + $0x10] sm:$0xff] %v6197
      %6230 = vst [vmem:[#allocation4 + $0x18] sm:$0xff] %v6198
      %6231 = vst [vmem:[#allocation4 + $0x20] sm:$0xff] %v6199
      %6232 = vst [vmem:[#allocation4 + $0x28] sm:$0xff] %v6200
      %6233 = vst [vmem:[#allocation4 + $0x30] sm:$0xff] %v6201
      %6234 = vst [vmem:[#allocation4 + $0x38] sm:$0xff] %v6202
      %6235 = vst [vmem:[#allocation4 + $0x40] sm:$0xff] %v6203
      %6236 = vst [vmem:[#allocation4 + $0x48] sm:$0xff] %v6204
      %6237 = vst [vmem:[#allocation4 + $0x50] sm:$0xff] %v6205
      %6238 = vst [vmem:[#allocation4 + $0x58] sm:$0xff] %v6206
      %6239 = vst [vmem:[#allocation4 + $0x60] sm:$0xff] %v6207
      %6240 = vst [vmem:[#allocation4 + $0x68] sm:$0xff] %v6208
      %6241 = vst [vmem:[#allocation4 + $0x70] sm:$0xff] %v6209
      %6242 = vst [vmem:[#allocation4 + $0x78] sm:$0xff] %v6210
      %6243 = vst [vmem:[#allocation4 + $0x80] sm:$0xff] %v6211
      %6244 = vst [vmem:[#allocation4 + $0x88] sm:$0xff] %v6212
      %6245 = vst [vmem:[#allocation4 + $0x90] sm:$0xff] %v6213
      %6246 = vst [vmem:[#allocation4 + $0x98] sm:$0xff] %v6214
      %6247 = vst [vmem:[#allocation4 + $0xa0] sm:$0xff] %v6215
      %6248 = vst [vmem:[#allocation4 + $0xa8] sm:$0xff] %v6216
      %6249 = vst [vmem:[#allocation4 + $0xb0] sm:$0xff] %v6217
      %6250 = vst [vmem:[#allocation4 + $0xb8] sm:$0xff] %v6218
      %6251 = vst [vmem:[#allocation4 + $0xc0] sm:$0xff] %v6219
      %6252 = vst [vmem:[#allocation4 + $0xc8] sm:$0xff] %v6220
      %6253 = vst [vmem:[#allocation4 + $0xd0] sm:$0xff] %v6221
      %6254 = vst [vmem:[#allocation4 + $0xd8] sm:$0xff] %v6222
      %6255 = vst [vmem:[#allocation4 + $0xe0] sm:$0xff] %v6223
      %6256 = vst [vmem:[#allocation4 + $0xe8] sm:$0xff] %v6224
      %6257 = vst [vmem:[#allocation4 + $0xf0] sm:$0xff] %v6225
      %6258 = vst [vmem:[#allocation4 + $0xf8] sm:$0xff] %v6226
      %v6259 = vld [vmem:[#allocation4] sm:$0xff]
      %v6260 = vld [vmem:[#allocation4 + $0x8] sm:$0xff]
      %v6261 = vld [vmem:[#allocation4 + $0x10] sm:$0xff]
      %v6262 = vld [vmem:[#allocation4 + $0x18] sm:$0xff]
      %v6263 = vld [vmem:[#allocation4 + $0x20] sm:$0xff]
      %v6264 = vld [vmem:[#allocation4 + $0x28] sm:$0xff]
      %v6265 = vld [vmem:[#allocation4 + $0x30] sm:$0xff]
      %v6266 = vld [vmem:[#allocation4 + $0x38] sm:$0xff]
      %v6267 = vld [vmem:[#allocation4 + $0x40] sm:$0xff]
      %v6268 = vld [vmem:[#allocation4 + $0x48] sm:$0xff]
      %v6269 = vld [vmem:[#allocation4 + $0x50] sm:$0xff]
      %v6270 = vld [vmem:[#allocation4 + $0x58] sm:$0xff]
      %v6271 = vld [vmem:[#allocation4 + $0x60] sm:$0xff]
      %v6272 = vld [vmem:[#allocation4 + $0x68] sm:$0xff]
      %v6273 = vld [vmem:[#allocation4 + $0x70] sm:$0xff]
      %v6274 = vld [vmem:[#allocation4 + $0x78] sm:$0xff]
      %v6275 = vld [vmem:[#allocation4 + $0x80] sm:$0xff]
      %v6276 = vld [vmem:[#allocation4 + $0x88] sm:$0xff]
      %v6277 = vld [vmem:[#allocation4 + $0x90] sm:$0xff]
      %v6278 = vld [vmem:[#allocation4 + $0x98] sm:$0xff]
      %v6279 = vld [vmem:[#allocation4 + $0xa0] sm:$0xff]
      %v6280 = vld [vmem:[#allocation4 + $0xa8] sm:$0xff]
      %v6281 = vld [vmem:[#allocation4 + $0xb0] sm:$0xff]
      %v6282 = vld [vmem:[#allocation4 + $0xb8] sm:$0xff]
      %v6283 = vld [vmem:[#allocation4 + $0xc0] sm:$0xff]
      %v6284 = vld [vmem:[#allocation4 + $0xc8] sm:$0xff]
      %v6285 = vld [vmem:[#allocation4 + $0xd0] sm:$0xff]
      %v6286 = vld [vmem:[#allocation4 + $0xd8] sm:$0xff]
      %v6287 = vld [vmem:[#allocation4 + $0xe0] sm:$0xff]
      %v6288 = vld [vmem:[#allocation4 + $0xe8] sm:$0xff]
      %v6289 = vld [vmem:[#allocation4 + $0xf0] sm:$0xff]
      %v6290 = vld [vmem:[#allocation4 + $0xf8] sm:$0xff]
      %v6291 = vpack.c.bf16 %v6259, %v6259
      %v6292 = vpack.c.bf16 %v6260, %v6260
      %v6293 = vpack.c.bf16 %v6261, %v6261
      %v6294 = vpack.c.bf16 %v6262, %v6262
      %v6295 = vpack.c.bf16 %v6263, %v6263
      %v6296 = vpack.c.bf16 %v6264, %v6264
      %v6297 = vpack.c.bf16 %v6265, %v6265
      %v6298 = vpack.c.bf16 %v6266, %v6266
      %v6299 = vpack.c.bf16 %v6267, %v6267
      %v6300 = vpack.c.bf16 %v6268, %v6268
      %v6301 = vpack.c.bf16 %v6269, %v6269
      %v6302 = vpack.c.bf16 %v6270, %v6270
      %v6303 = vpack.c.bf16 %v6271, %v6271
      %v6304 = vpack.c.bf16 %v6272, %v6272
      %v6305 = vpack.c.bf16 %v6273, %v6273
      %v6306 = vpack.c.bf16 %v6274, %v6274
      %v6307 = vpack.c.bf16 %v6275, %v6275
      %v6308 = vpack.c.bf16 %v6276, %v6276
      %v6309 = vpack.c.bf16 %v6277, %v6277
      %v6310 = vpack.c.bf16 %v6278, %v6278
      %v6311 = vpack.c.bf16 %v6279, %v6279
      %v6312 = vpack.c.bf16 %v6280, %v6280
      %v6313 = vpack.c.bf16 %v6281, %v6281
      %v6314 = vpack.c.bf16 %v6282, %v6282
      %v6315 = vpack.c.bf16 %v6283, %v6283
      %v6316 = vpack.c.bf16 %v6284, %v6284
      %v6317 = vpack.c.bf16 %v6285, %v6285
      %v6318 = vpack.c.bf16 %v6286, %v6286
      %v6319 = vpack.c.bf16 %v6287, %v6287
      %v6320 = vpack.c.bf16 %v6288, %v6288
      %v6321 = vpack.c.bf16 %v6289, %v6289
      %v6322 = vpack.c.bf16 %v6290, %v6290
      %6323 = vst [vmem:[%s2996 + $0x4] sm:$0xf] %v6291
      %6324 = vst [vmem:[%s2996 + $0x8] sm:$0xf] %v6292
      %6325 = vst [vmem:[%s2996 + $0x14] sm:$0xf] %v6293
      %6326 = vst [vmem:[%s2996 + $0x18] sm:$0xf] %v6294
      %6327 = vst [vmem:[%s2996 + $0x24] sm:$0xf] %v6295
      %6328 = vst [vmem:[%s2996 + $0x28] sm:$0xf] %v6296
      %6329 = vst [vmem:[%s2996 + $0x34] sm:$0xf] %v6297
      %6330 = vst [vmem:[%s2996 + $0x38] sm:$0xf] %v6298
      %6331 = vst [vmem:[%s2996 + $0x44] sm:$0xf] %v6299
      %6332 = vst [vmem:[%s2996 + $0x48] sm:$0xf] %v6300
      %6333 = vst [vmem:[%s2996 + $0x54] sm:$0xf] %v6301
      %6334 = vst [vmem:[%s2996 + $0x58] sm:$0xf] %v6302
      %6335 = vst [vmem:[%s2996 + $0x64] sm:$0xf] %v6303
      %6336 = vst [vmem:[%s2996 + $0x68] sm:$0xf] %v6304
      %6337 = vst [vmem:[%s2996 + $0x74] sm:$0xf] %v6305
      %6338 = vst [vmem:[%s2996 + $0x78] sm:$0xf] %v6306
      %6339 = vst [vmem:[%s2996 + $0x84] sm:$0xf] %v6307
      %6340 = vst [vmem:[%s2996 + $0x88] sm:$0xf] %v6308
      %6341 = vst [vmem:[%s2996 + $0x94] sm:$0xf] %v6309
      %6342 = vst [vmem:[%s2996 + $0x98] sm:$0xf] %v6310
      %6343 = vst [vmem:[%s2996 + $0xa4] sm:$0xf] %v6311
      %6344 = vst [vmem:[%s2996 + $0xa8] sm:$0xf] %v6312
      %6345 = vst [vmem:[%s2996 + $0xb4] sm:$0xf] %v6313
      %6346 = vst [vmem:[%s2996 + $0xb8] sm:$0xf] %v6314
      %6347 = vst [vmem:[%s2996 + $0xc4] sm:$0xf] %v6315
      %6348 = vst [vmem:[%s2996 + $0xc8] sm:$0xf] %v6316
      %6349 = vst [vmem:[%s2996 + $0xd4] sm:$0xf] %v6317
      %6350 = vst [vmem:[%s2996 + $0xd8] sm:$0xf] %v6318
      %6351 = vst [vmem:[%s2996 + $0xe4] sm:$0xf] %v6319
      %6352 = vst [vmem:[%s2996 + $0xe8] sm:$0xf] %v6320
      %6353 = vst [vmem:[%s2996 + $0xf4] sm:$0xf] %v6321
      %6354 = vst [vmem:[%s2996 + $0xf8] sm:$0xf] %v6322
      %v6355 = vld [vmem:[#allocation3] sm:$0x8]
      %v6356 = vld [vmem:[#allocation3 + $0x4] sm:$0xf]
      %v6357 = vld [vmem:[#allocation3 + $0x8] sm:$0x7]
      %v6358 = vld [vmem:[#allocation3 + $0x10] sm:$0x8]
      %v6359 = vld [vmem:[#allocation3 + $0x14] sm:$0xf]
      %v6360 = vld [vmem:[#allocation3 + $0x18] sm:$0x7]
      %v6361 = vld [vmem:[#allocation3 + $0x20] sm:$0x8]
      %v6362 = vld [vmem:[#allocation3 + $0x24] sm:$0xf]
      %v6363 = vld [vmem:[#allocation3 + $0x28] sm:$0x7]
      %v6364 = vld [vmem:[#allocation3 + $0x30] sm:$0x8]
      %v6365 = vld [vmem:[#allocation3 + $0x34] sm:$0xf]
      %v6366 = vld [vmem:[#allocation3 + $0x38] sm:$0x7]
      %v6367 = vld [vmem:[#allocation3 + $0x40] sm:$0x8]
      %v6368 = vld [vmem:[#allocation3 + $0x44] sm:$0xf]
      %v6369 = vld [vmem:[#allocation3 + $0x48] sm:$0x7]
      %v6370 = vld [vmem:[#allocation3 + $0x50] sm:$0x8]
      %v6371 = vld [vmem:[#allocation3 + $0x54] sm:$0xf]
      %v6372 = vld [vmem:[#allocation3 + $0x58] sm:$0x7]
      %v6373 = vld [vmem:[#allocation3 + $0x60] sm:$0x8]
      %v6374 = vld [vmem:[#allocation3 + $0x64] sm:$0xf]
      %v6375 = vld [vmem:[#allocation3 + $0x68] sm:$0x7]
      %v6376 = vld [vmem:[#allocation3 + $0x70] sm:$0x8]
      %v6377 = vld [vmem:[#allocation3 + $0x74] sm:$0xf]
      %v6378 = vld [vmem:[#allocation3 + $0x78] sm:$0x7]
      %v6379 = vld [vmem:[#allocation3 + $0x80] sm:$0x8]
      %v6380 = vld [vmem:[#allocation3 + $0x84] sm:$0xf]
      %v6381 = vld [vmem:[#allocation3 + $0x88] sm:$0x7]
      %v6382 = vld [vmem:[#allocation3 + $0x90] sm:$0x8]
      %v6383 = vld [vmem:[#allocation3 + $0x94] sm:$0xf]
      %v6384 = vld [vmem:[#allocation3 + $0x98] sm:$0x7]
      %v6385 = vld [vmem:[#allocation3 + $0xa0] sm:$0x8]
      %v6386 = vld [vmem:[#allocation3 + $0xa4] sm:$0xf]
      %v6387 = vld [vmem:[#allocation3 + $0xa8] sm:$0x7]
      %v6388 = vld [vmem:[#allocation3 + $0xb0] sm:$0x8]
      %v6389 = vld [vmem:[#allocation3 + $0xb4] sm:$0xf]
      %v6390 = vld [vmem:[#allocation3 + $0xb8] sm:$0x7]
      %v6391 = vld [vmem:[#allocation3 + $0xc0] sm:$0x8]
      %v6392 = vld [vmem:[#allocation3 + $0xc4] sm:$0xf]
      %v6393 = vld [vmem:[#allocation3 + $0xc8] sm:$0x7]
      %v6394 = vld [vmem:[#allocation3 + $0xd0] sm:$0x8]
      %v6395 = vld [vmem:[#allocation3 + $0xd4] sm:$0xf]
      %v6396 = vld [vmem:[#allocation3 + $0xd8] sm:$0x7]
      %v6397 = vld [vmem:[#allocation3 + $0xe0] sm:$0x8]
      %v6398 = vld [vmem:[#allocation3 + $0xe4] sm:$0xf]
      %v6399 = vld [vmem:[#allocation3 + $0xe8] sm:$0x7]
      %v6400 = vld [vmem:[#allocation3 + $0xf0] sm:$0x8]
      %v6401 = vld [vmem:[#allocation3 + $0xf4] sm:$0xf]
      %v6402 = vld [vmem:[#allocation3 + $0xf8] sm:$0x7]
      %v6403 = vld [vmem:[#allocation3 + $0x100] sm:$0x8]
      %v6404 = vld [vmem:[#allocation3 + $0x104] sm:$0xf]
      %v6405 = vld [vmem:[#allocation3 + $0x108] sm:$0x7]
      %v6406 = vld [vmem:[#allocation3 + $0x110] sm:$0x8]
      %v6407 = vld [vmem:[#allocation3 + $0x114] sm:$0xf]
      %v6408 = vld [vmem:[#allocation3 + $0x118] sm:$0x7]
      %v6409 = vld [vmem:[#allocation3 + $0x120] sm:$0x8]
      %v6410 = vld [vmem:[#allocation3 + $0x124] sm:$0xf]
      %v6411 = vld [vmem:[#allocation3 + $0x128] sm:$0x7]
      %v6412 = vld [vmem:[#allocation3 + $0x130] sm:$0x8]
      %v6413 = vld [vmem:[#allocation3 + $0x134] sm:$0xf]
      %v6414 = vld [vmem:[#allocation3 + $0x138] sm:$0x7]
      %vm6475 = vcmask 1040384
      %vm6476 = vcmask 1044484
      %vm6477 = vmor %vm6475, %vm6476
      %v6478 = vrot.slane %v6355, 7
      %v6479 = vrot.slane %v6478, 4
      %v6480 = vrot.slane %v6356, 7
      %v6481 = vsel %vm6477, %v6479, %v6480
      %v6482 = vrot.slane %v6480, 4
      %v6483 = vrot.slane %v6357, 7
      %v6484 = vsel %vm6477, %v6482, %v6483
      %v6485 = vrot.slane %v6358, 7
      %v6486 = vrot.slane %v6485, 4
      %v6487 = vrot.slane %v6359, 7
      %v6488 = vsel %vm6477, %v6486, %v6487
      %v6489 = vrot.slane %v6487, 4
      %v6490 = vrot.slane %v6360, 7
      %v6491 = vsel %vm6477, %v6489, %v6490
      %v6492 = vrot.slane %v6361, 7
      %v6493 = vrot.slane %v6492, 4
      %v6494 = vrot.slane %v6362, 7
      %v6495 = vsel %vm6477, %v6493, %v6494
      %v6496 = vrot.slane %v6494, 4
      %v6497 = vrot.slane %v6363, 7
      %v6498 = vsel %vm6477, %v6496, %v6497
      %v6499 = vrot.slane %v6364, 7
      %v6500 = vrot.slane %v6499, 4
      %v6501 = vrot.slane %v6365, 7
      %v6502 = vsel %vm6477, %v6500, %v6501
      %v6503 = vrot.slane %v6501, 4
      %v6504 = vrot.slane %v6366, 7
      %v6505 = vsel %vm6477, %v6503, %v6504
      %v6506 = vrot.slane %v6367, 7
      %v6507 = vrot.slane %v6506, 4
      %v6508 = vrot.slane %v6368, 7
      %v6509 = vsel %vm6477, %v6507, %v6508
      %v6510 = vrot.slane %v6508, 4
      %v6511 = vrot.slane %v6369, 7
      %v6512 = vsel %vm6477, %v6510, %v6511
      %v6513 = vrot.slane %v6370, 7
      %v6514 = vrot.slane %v6513, 4
      %v6515 = vrot.slane %v6371, 7
      %v6516 = vsel %vm6477, %v6514, %v6515
      %v6517 = vrot.slane %v6515, 4
      %v6518 = vrot.slane %v6372, 7
      %v6519 = vsel %vm6477, %v6517, %v6518
      %v6520 = vrot.slane %v6373, 7
      %v6521 = vrot.slane %v6520, 4
      %v6522 = vrot.slane %v6374, 7
      %v6523 = vsel %vm6477, %v6521, %v6522
      %v6524 = vrot.slane %v6522, 4
      %v6525 = vrot.slane %v6375, 7
      %v6526 = vsel %vm6477, %v6524, %v6525
      %v6527 = vrot.slane %v6376, 7
      %v6528 = vrot.slane %v6527, 4
      %v6529 = vrot.slane %v6377, 7
      %v6530 = vsel %vm6477, %v6528, %v6529
      %v6531 = vrot.slane %v6529, 4
      %v6532 = vrot.slane %v6378, 7
      %v6533 = vsel %vm6477, %v6531, %v6532
      %v6534 = vrot.slane %v6379, 7
      %v6535 = vrot.slane %v6534, 4
      %v6536 = vrot.slane %v6380, 7
      %v6537 = vsel %vm6477, %v6535, %v6536
      %v6538 = vrot.slane %v6536, 4
      %v6539 = vrot.slane %v6381, 7
      %v6540 = vsel %vm6477, %v6538, %v6539
      %v6541 = vrot.slane %v6382, 7
      %v6542 = vrot.slane %v6541, 4
      %v6543 = vrot.slane %v6383, 7
      %v6544 = vsel %vm6477, %v6542, %v6543
      %v6545 = vrot.slane %v6543, 4
      %v6546 = vrot.slane %v6384, 7
      %v6547 = vsel %vm6477, %v6545, %v6546
      %v6548 = vrot.slane %v6385, 7
      %v6549 = vrot.slane %v6548, 4
      %v6550 = vrot.slane %v6386, 7
      %v6551 = vsel %vm6477, %v6549, %v6550
      %v6552 = vrot.slane %v6550, 4
      %v6553 = vrot.slane %v6387, 7
      %v6554 = vsel %vm6477, %v6552, %v6553
      %v6555 = vrot.slane %v6388, 7
      %v6556 = vrot.slane %v6555, 4
      %v6557 = vrot.slane %v6389, 7
      %v6558 = vsel %vm6477, %v6556, %v6557
      %v6559 = vrot.slane %v6557, 4
      %v6560 = vrot.slane %v6390, 7
      %v6561 = vsel %vm6477, %v6559, %v6560
      %v6562 = vrot.slane %v6391, 7
      %v6563 = vrot.slane %v6562, 4
      %v6564 = vrot.slane %v6392, 7
      %v6565 = vsel %vm6477, %v6563, %v6564
      %v6566 = vrot.slane %v6564, 4
      %v6567 = vrot.slane %v6393, 7
      %v6568 = vsel %vm6477, %v6566, %v6567
      %v6569 = vrot.slane %v6394, 7
      %v6570 = vrot.slane %v6569, 4
      %v6571 = vrot.slane %v6395, 7
      %v6572 = vsel %vm6477, %v6570, %v6571
      %v6573 = vrot.slane %v6571, 4
      %v6574 = vrot.slane %v6396, 7
      %v6575 = vsel %vm6477, %v6573, %v6574
      %v6576 = vrot.slane %v6397, 7
      %v6577 = vrot.slane %v6576, 4
      %v6578 = vrot.slane %v6398, 7
      %v6579 = vsel %vm6477, %v6577, %v6578
      %v6580 = vrot.slane %v6578, 4
      %v6581 = vrot.slane %v6399, 7
      %v6582 = vsel %vm6477, %v6580, %v6581
      %v6583 = vrot.slane %v6400, 7
      %v6584 = vrot.slane %v6583, 4
      %v6585 = vrot.slane %v6401, 7
      %v6586 = vsel %vm6477, %v6584, %v6585
      %v6587 = vrot.slane %v6585, 4
      %v6588 = vrot.slane %v6402, 7
      %v6589 = vsel %vm6477, %v6587, %v6588
      %v6590 = vrot.slane %v6403, 7
      %v6591 = vrot.slane %v6590, 4
      %v6592 = vrot.slane %v6404, 7
      %v6593 = vsel %vm6477, %v6591, %v6592
      %v6594 = vrot.slane %v6592, 4
      %v6595 = vrot.slane %v6405, 7
      %v6596 = vsel %vm6477, %v6594, %v6595
      %v6597 = vrot.slane %v6406, 7
      %v6598 = vrot.slane %v6597, 4
      %v6599 = vrot.slane %v6407, 7
      %v6600 = vsel %vm6477, %v6598, %v6599
      %v6601 = vrot.slane %v6599, 4
      %v6602 = vrot.slane %v6408, 7
      %v6603 = vsel %vm6477, %v6601, %v6602
      %v6604 = vrot.slane %v6409, 7
      %v6605 = vrot.slane %v6604, 4
      %v6606 = vrot.slane %v6410, 7
      %v6607 = vsel %vm6477, %v6605, %v6606
      %v6608 = vrot.slane %v6606, 4
      %v6609 = vrot.slane %v6411, 7
      %v6610 = vsel %vm6477, %v6608, %v6609
      %v6611 = vrot.slane %v6412, 7
      %v6612 = vrot.slane %v6611, 4
      %v6613 = vrot.slane %v6413, 7
      %v6614 = vsel %vm6477, %v6612, %v6613
      %v6615 = vrot.slane %v6613, 4
      %v6616 = vrot.slane %v6414, 7
      %v6617 = vsel %vm6477, %v6615, %v6616
      %v6618 = vld [vmem:[%s7] sm:$0xf]
      %v6619 = vld [vmem:[%s7 + $0x4] sm:$0xf]
      %v6620 = vld [vmem:[%s7 + $0x8] sm:$0xf]
      %v6621 = vld [vmem:[%s7 + $0xc] sm:$0xf]
      %v6622 = vld [vmem:[%s7 + $0x10] sm:$0xf]
      %v6623 = vld [vmem:[%s7 + $0x14] sm:$0xf]
      %v6624 = vld [vmem:[%s7 + $0x18] sm:$0xf]
      %v6625 = vld [vmem:[%s7 + $0x1c] sm:$0xf]
      %v6626 = vld [vmem:[%s7 + $0x20] sm:$0xf]
      %v6627 = vld [vmem:[%s7 + $0x24] sm:$0xf]
      %v6628 = vld [vmem:[%s7 + $0x28] sm:$0xf]
      %v6629 = vld [vmem:[%s7 + $0x2c] sm:$0xf]
      %v6630 = vld [vmem:[%s7 + $0x30] sm:$0xf]
      %v6631 = vld [vmem:[%s7 + $0x34] sm:$0xf]
      %v6632 = vld [vmem:[%s7 + $0x38] sm:$0xf]
      %v6633 = vld [vmem:[%s7 + $0x3c] sm:$0xf]
      %s6634 = scalar_lea.vmem %s7, 192
      %v6635 = vld [vmem:[%s6634] sm:$0xf]
      %v6636 = vld [vmem:[%s6634 + $0x4] sm:$0xf]
      %v6637 = vld [vmem:[%s6634 + $0x8] sm:$0xf]
      %v6638 = vld [vmem:[%s6634 + $0xc] sm:$0xf]
      %v6639 = vld [vmem:[%s6634 + $0x10] sm:$0xf]
      %v6640 = vld [vmem:[%s6634 + $0x14] sm:$0xf]
      %v6641 = vld [vmem:[%s6634 + $0x18] sm:$0xf]
      %v6642 = vld [vmem:[%s6634 + $0x1c] sm:$0xf]
      %v6643 = vld [vmem:[%s6634 + $0x20] sm:$0xf]
      %v6644 = vld [vmem:[%s6634 + $0x24] sm:$0xf]
      %v6645 = vld [vmem:[%s6634 + $0x28] sm:$0xf]
      %v6646 = vld [vmem:[%s6634 + $0x2c] sm:$0xf]
      %v6647 = vld [vmem:[%s6634 + $0x30] sm:$0xf]
      %v6648 = vld [vmem:[%s6634 + $0x34] sm:$0xf]
      %v6649 = vld [vmem:[%s6634 + $0x38] sm:$0xf]
      %v6650 = vld [vmem:[%s6634 + $0x3c] sm:$0xf]
      %v6651 = vunpack.c.l.b16 %v6495
      %v6652 = vunpack.c.l.b16 %v6498
      %v6653 = vunpack.c.l.b16 %v6502
      %v6654 = vunpack.c.l.b16 %v6505
      %v6655 = vunpack.c.l.b16 %v6509
      %v6656 = vunpack.c.l.b16 %v6512
      %v6657 = vunpack.c.l.b16 %v6516
      %v6658 = vunpack.c.l.b16 %v6519
      %v6659 = vunpack.c.l.b16 %v6523
      %v6660 = vunpack.c.l.b16 %v6526
      %v6661 = vunpack.c.l.b16 %v6530
      %v6662 = vunpack.c.l.b16 %v6533
      %v6663 = vunpack.c.l.b16 %v6537
      %v6664 = vunpack.c.l.b16 %v6540
      %v6665 = vunpack.c.l.b16 %v6544
      %v6666 = vunpack.c.l.b16 %v6547
      %v6667 = vunpack.c.l.b16 %v6551
      %v6668 = vunpack.c.l.b16 %v6554
      %v6669 = vunpack.c.l.b16 %v6558
      %v6670 = vunpack.c.l.b16 %v6561
      %v6671 = vunpack.c.l.b16 %v6565
      %v6672 = vunpack.c.l.b16 %v6568
      %v6673 = vunpack.c.l.b16 %v6572
      %v6674 = vunpack.c.l.b16 %v6575
      %v6675 = vunpack.c.l.b16 %v6579
      %v6676 = vunpack.c.l.b16 %v6582
      %v6677 = vunpack.c.l.b16 %v6586
      %v6678 = vunpack.c.l.b16 %v6589
      %v6679 = vunpack.c.l.b16 %v6593
      %v6680 = vunpack.c.l.b16 %v6596
      %v6681 = vunpack.c.l.b16 %v6600
      %v6682 = vunpack.c.l.b16 %v6603
      %v6683 = vpack.c.b16 %v6652, %v6651
      %v6684 = vpack.c.b16 %v6654, %v6653
      %v6685 = vpack.c.b16 %v6656, %v6655
      %v6686 = vpack.c.b16 %v6658, %v6657
      %v6687 = vpack.c.b16 %v6660, %v6659
      %v6688 = vpack.c.b16 %v6662, %v6661
      %v6689 = vpack.c.b16 %v6664, %v6663
      %v6690 = vpack.c.b16 %v6666, %v6665
      %v6691 = vpack.c.b16 %v6668, %v6667
      %v6692 = vpack.c.b16 %v6670, %v6669
      %v6693 = vpack.c.b16 %v6672, %v6671
      %v6694 = vpack.c.b16 %v6674, %v6673
      %v6695 = vpack.c.b16 %v6676, %v6675
      %v6696 = vpack.c.b16 %v6678, %v6677
      %v6697 = vpack.c.b16 %v6680, %v6679
      %v6698 = vpack.c.b16 %v6682, %v6681
      %v6731 = vunpack.c.l.b16 %v6635
      %v6732 = vunpack.c.l.b16 %v6636
      %v6733 = vunpack.c.l.b16 %v6637
      %v6734 = vunpack.c.l.b16 %v6638
      %v6735 = vunpack.c.l.b16 %v6639
      %v6736 = vunpack.c.l.b16 %v6640
      %v6737 = vunpack.c.l.b16 %v6641
      %v6738 = vunpack.c.l.b16 %v6642
      %v6739 = vunpack.c.l.b16 %v6643
      %v6740 = vunpack.c.l.b16 %v6644
      %v6741 = vunpack.c.l.b16 %v6645
      %v6742 = vunpack.c.l.b16 %v6646
      %v6743 = vunpack.c.l.b16 %v6647
      %v6744 = vunpack.c.l.b16 %v6648
      %v6745 = vunpack.c.l.b16 %v6649
      %v6746 = vunpack.c.l.b16 %v6650
      %v6747 = vpack.c.b16 %v6732, %v6731
      %v6748 = vpack.c.b16 %v6734, %v6733
      %v6749 = vpack.c.b16 %v6736, %v6735
      %v6750 = vpack.c.b16 %v6738, %v6737
      %v6751 = vpack.c.b16 %v6740, %v6739
      %v6752 = vpack.c.b16 %v6742, %v6741
      %v6753 = vpack.c.b16 %v6744, %v6743
      %v6754 = vpack.c.b16 %v6746, %v6745
      %6763 = vmatpush.bf16.msra.mxu0 %v6754
      %6764 = vmatpush.bf16.msra.mxu0 %v6753
      %6765 = vmatpush.bf16.msra.mxu0 %v6752
      %6766 = vmatpush.bf16.msra.mxu0 %v6751
      %6767 = vmatpush.bf16.msra.mxu0 %v6750
      %6768 = vmatpush.bf16.msra.mxu0 %v6749
      %6769 = vmatpush.bf16.msra.mxu0 %v6748
      %6770 = vmatpush.bf16.msra.mxu0 %v6747
      %6771 = vmatmul.bf16.gmra.mxu0 %v6683
      %v6772 = vpop.f32.mrf.mxu0
      %v6773 = vadd.f32 0.0, %v6772
      %v6774 = vpop.f32.mrf.mxu0
      %v6775 = vadd.f32 0.0, %v6774
      %6776 = vmatmul.bf16.gmra.mxu0 %v6684
      %v6777 = vpop.f32.mrf.mxu0
      %v6778 = vadd.f32 0.0, %v6777
      %v6779 = vpop.f32.mrf.mxu0
      %v6780 = vadd.f32 0.0, %v6779
      %6781 = vmatmul.bf16.gmra.mxu0 %v6685
      %v6782 = vpop.f32.mrf.mxu0
      %v6783 = vadd.f32 0.0, %v6782
      %v6784 = vpop.f32.mrf.mxu0
      %v6785 = vadd.f32 0.0, %v6784
      %6786 = vmatmul.bf16.gmra.mxu0 %v6686
      %v6787 = vpop.f32.mrf.mxu0
      %v6788 = vadd.f32 0.0, %v6787
      %v6789 = vpop.f32.mrf.mxu0
      %v6790 = vadd.f32 0.0, %v6789
      %6791 = vmatmul.bf16.gmra.mxu0 %v6687
      %v6792 = vpop.f32.mrf.mxu0
      %v6793 = vadd.f32 0.0, %v6792
      %v6794 = vpop.f32.mrf.mxu0
      %v6795 = vadd.f32 0.0, %v6794
      %6796 = vmatmul.bf16.gmra.mxu0 %v6688
      %v6797 = vpop.f32.mrf.mxu0
      %v6798 = vadd.f32 0.0, %v6797
      %v6799 = vpop.f32.mrf.mxu0
      %v6800 = vadd.f32 0.0, %v6799
      %6801 = vmatmul.bf16.gmra.mxu0 %v6689
      %v6802 = vpop.f32.mrf.mxu0
      %v6803 = vadd.f32 0.0, %v6802
      %v6804 = vpop.f32.mrf.mxu0
      %v6805 = vadd.f32 0.0, %v6804
      %6806 = vmatmul.bf16.gmra.mxu0 %v6690
      %v6807 = vpop.f32.mrf.mxu0
      %v6808 = vadd.f32 0.0, %v6807
      %v6809 = vpop.f32.mrf.mxu0
      %v6810 = vadd.f32 0.0, %v6809
      %6811 = vmatmul.bf16.gmra.mxu0 %v6691
      %v6812 = vpop.f32.mrf.mxu0
      %v6813 = vadd.f32 0.0, %v6812
      %v6814 = vpop.f32.mrf.mxu0
      %v6815 = vadd.f32 0.0, %v6814
      %6816 = vmatmul.bf16.gmra.mxu0 %v6692
      %v6817 = vpop.f32.mrf.mxu0
      %v6818 = vadd.f32 0.0, %v6817
      %v6819 = vpop.f32.mrf.mxu0
      %v6820 = vadd.f32 0.0, %v6819
      %6821 = vmatmul.bf16.gmra.mxu0 %v6693
      %v6822 = vpop.f32.mrf.mxu0
      %v6823 = vadd.f32 0.0, %v6822
      %v6824 = vpop.f32.mrf.mxu0
      %v6825 = vadd.f32 0.0, %v6824
      %6826 = vmatmul.bf16.gmra.mxu0 %v6694
      %v6827 = vpop.f32.mrf.mxu0
      %v6828 = vadd.f32 0.0, %v6827
      %v6829 = vpop.f32.mrf.mxu0
      %v6830 = vadd.f32 0.0, %v6829
      %6831 = vmatmul.bf16.gmra.mxu0 %v6695
      %v6832 = vpop.f32.mrf.mxu0
      %v6833 = vadd.f32 0.0, %v6832
      %v6834 = vpop.f32.mrf.mxu0
      %v6835 = vadd.f32 0.0, %v6834
      %6836 = vmatmul.bf16.gmra.mxu0 %v6696
      %v6837 = vpop.f32.mrf.mxu0
      %v6838 = vadd.f32 0.0, %v6837
      %v6839 = vpop.f32.mrf.mxu0
      %v6840 = vadd.f32 0.0, %v6839
      %6841 = vmatmul.bf16.gmra.mxu0 %v6697
      %v6842 = vpop.f32.mrf.mxu0
      %v6843 = vadd.f32 0.0, %v6842
      %v6844 = vpop.f32.mrf.mxu0
      %v6845 = vadd.f32 0.0, %v6844
      %6846 = vmatmul.bf16.gmra.mxu0 %v6698
      %v6847 = vpop.f32.mrf.mxu0
      %v6848 = vadd.f32 0.0, %v6847
      %v6849 = vpop.f32.mrf.mxu0
      %v6850 = vadd.f32 0.0, %v6849
      %6851 = vdwg.mxu0
      %v6852 = vunpack.c.l.b16 %v6481
      %v6853 = vunpack.c.l.b16 %v6484
      %v6854 = vunpack.c.l.b16 %v6488
      %v6855 = vunpack.c.l.b16 %v6491
      %v6856 = vpack.c.b16 %v6853, %v6852
      %v6857 = vpack.c.b16 %v6855, %v6854
      %v6876 = vunpack.c.l.b16 %v6618
      %v6877 = vunpack.c.l.b16 %v6619
      %v6878 = vunpack.c.l.b16 %v6620
      %v6879 = vunpack.c.l.b16 %v6621
      %v6880 = vunpack.c.l.b16 %v6622
      %v6881 = vunpack.c.l.b16 %v6623
      %v6882 = vunpack.c.l.b16 %v6624
      %v6883 = vunpack.c.l.b16 %v6625
      %v6884 = vunpack.c.l.b16 %v6626
      %v6885 = vunpack.c.l.b16 %v6627
      %v6886 = vunpack.c.l.b16 %v6628
      %v6887 = vunpack.c.l.b16 %v6629
      %v6888 = vunpack.c.l.b16 %v6630
      %v6889 = vunpack.c.l.b16 %v6631
      %v6890 = vunpack.c.l.b16 %v6632
      %v6891 = vunpack.c.l.b16 %v6633
      %v6892 = vpack.c.b16 %v6877, %v6876
      %v6893 = vpack.c.b16 %v6879, %v6878
      %v6894 = vpack.c.b16 %v6881, %v6880
      %v6895 = vpack.c.b16 %v6883, %v6882
      %v6896 = vpack.c.b16 %v6885, %v6884
      %v6897 = vpack.c.b16 %v6887, %v6886
      %v6898 = vpack.c.b16 %v6889, %v6888
      %v6899 = vpack.c.b16 %v6891, %v6890
      %6908 = vmatpush.bf16.msra.mxu0 %v6899
      %6909 = vmatpush.bf16.msra.mxu0 %v6898
      %6910 = vmatpush.bf16.msra.mxu0 %v6897
      %6911 = vmatpush.bf16.msra.mxu0 %v6896
      %6912 = vmatpush.bf16.msra.mxu0 %v6895
      %6913 = vmatpush.bf16.msra.mxu0 %v6894
      %6914 = vmatpush.bf16.msra.mxu0 %v6893
      %6915 = vmatpush.bf16.msra.mxu0 %v6892
      %6916 = vmatmul.bf16.gmra.mxu0 %v6856
      %v6917 = vpop.f32.mrf.mxu0
      %v6918 = vadd.f32 %v6773, %v6917
      %v6919 = vpop.f32.mrf.mxu0
      %v6920 = vadd.f32 %v6775, %v6919
      %6921 = vmatmul.bf16.gmra.mxu0 %v6857
      %v6922 = vpop.f32.mrf.mxu0
      %v6923 = vadd.f32 %v6778, %v6922
      %v6924 = vpop.f32.mrf.mxu0
      %v6925 = vadd.f32 %v6780, %v6924
      %6926 = vmatmul.bf16.gmra.mxu0 %v6683
      %v6927 = vpop.f32.mrf.mxu0
      %v6928 = vadd.f32 %v6783, %v6927
      %v6929 = vpop.f32.mrf.mxu0
      %v6930 = vadd.f32 %v6785, %v6929
      %6931 = vmatmul.bf16.gmra.mxu0 %v6684
      %v6932 = vpop.f32.mrf.mxu0
      %v6933 = vadd.f32 %v6788, %v6932
      %v6934 = vpop.f32.mrf.mxu0
      %v6935 = vadd.f32 %v6790, %v6934
      %6936 = vmatmul.bf16.gmra.mxu0 %v6685
      %v6937 = vpop.f32.mrf.mxu0
      %v6938 = vadd.f32 %v6793, %v6937
      %v6939 = vpop.f32.mrf.mxu0
      %v6940 = vadd.f32 %v6795, %v6939
      %6941 = vmatmul.bf16.gmra.mxu0 %v6686
      %v6942 = vpop.f32.mrf.mxu0
      %v6943 = vadd.f32 %v6798, %v6942
      %v6944 = vpop.f32.mrf.mxu0
      %v6945 = vadd.f32 %v6800, %v6944
      %6946 = vmatmul.bf16.gmra.mxu0 %v6687
      %v6947 = vpop.f32.mrf.mxu0
      %v6948 = vadd.f32 %v6803, %v6947
      %v6949 = vpop.f32.mrf.mxu0
      %v6950 = vadd.f32 %v6805, %v6949
      %6951 = vmatmul.bf16.gmra.mxu0 %v6688
      %v6952 = vpop.f32.mrf.mxu0
      %v6953 = vadd.f32 %v6808, %v6952
      %v6954 = vpop.f32.mrf.mxu0
      %v6955 = vadd.f32 %v6810, %v6954
      %6956 = vmatmul.bf16.gmra.mxu0 %v6689
      %v6957 = vpop.f32.mrf.mxu0
      %v6958 = vadd.f32 %v6813, %v6957
      %v6959 = vpop.f32.mrf.mxu0
      %v6960 = vadd.f32 %v6815, %v6959
      %6961 = vmatmul.bf16.gmra.mxu0 %v6690
      %v6962 = vpop.f32.mrf.mxu0
      %v6963 = vadd.f32 %v6818, %v6962
      %v6964 = vpop.f32.mrf.mxu0
      %v6965 = vadd.f32 %v6820, %v6964
      %6966 = vmatmul.bf16.gmra.mxu0 %v6691
      %v6967 = vpop.f32.mrf.mxu0
      %v6968 = vadd.f32 %v6823, %v6967
      %v6969 = vpop.f32.mrf.mxu0
      %v6970 = vadd.f32 %v6825, %v6969
      %6971 = vmatmul.bf16.gmra.mxu0 %v6692
      %v6972 = vpop.f32.mrf.mxu0
      %v6973 = vadd.f32 %v6828, %v6972
      %v6974 = vpop.f32.mrf.mxu0
      %v6975 = vadd.f32 %v6830, %v6974
      %6976 = vmatmul.bf16.gmra.mxu0 %v6693
      %v6977 = vpop.f32.mrf.mxu0
      %v6978 = vadd.f32 %v6833, %v6977
      %v6979 = vpop.f32.mrf.mxu0
      %v6980 = vadd.f32 %v6835, %v6979
      %6981 = vmatmul.bf16.gmra.mxu0 %v6694
      %v6982 = vpop.f32.mrf.mxu0
      %v6983 = vadd.f32 %v6838, %v6982
      %v6984 = vpop.f32.mrf.mxu0
      %v6985 = vadd.f32 %v6840, %v6984
      %6986 = vmatmul.bf16.gmra.mxu0 %v6695
      %v6987 = vpop.f32.mrf.mxu0
      %v6988 = vadd.f32 %v6843, %v6987
      %v6989 = vpop.f32.mrf.mxu0
      %v6990 = vadd.f32 %v6845, %v6989
      %6991 = vmatmul.bf16.gmra.mxu0 %v6696
      %v6992 = vpop.f32.mrf.mxu0
      %v6993 = vadd.f32 %v6848, %v6992
      %v6994 = vpop.f32.mrf.mxu0
      %v6995 = vadd.f32 %v6850, %v6994
      %6996 = vdwg.mxu0
      %s6997 = scalar_lea.vmem %s7, 384
      %v6998 = vld [vmem:[%s6997] sm:$0xf]
      %v6999 = vld [vmem:[%s6997 + $0x4] sm:$0xf]
      %v7000 = vld [vmem:[%s6997 + $0x8] sm:$0xf]
      %v7001 = vld [vmem:[%s6997 + $0xc] sm:$0xf]
      %v7002 = vld [vmem:[%s6997 + $0x10] sm:$0xf]
      %v7003 = vld [vmem:[%s6997 + $0x14] sm:$0xf]
      %v7004 = vld [vmem:[%s6997 + $0x18] sm:$0xf]
      %v7005 = vld [vmem:[%s6997 + $0x1c] sm:$0xf]
      %v7006 = vld [vmem:[%s6997 + $0x20] sm:$0xf]
      %v7007 = vld [vmem:[%s6997 + $0x24] sm:$0xf]
      %v7008 = vld [vmem:[%s6997 + $0x28] sm:$0xf]
      %v7009 = vld [vmem:[%s6997 + $0x2c] sm:$0xf]
      %v7010 = vld [vmem:[%s6997 + $0x30] sm:$0xf]
      %v7011 = vld [vmem:[%s6997 + $0x34] sm:$0xf]
      %v7012 = vld [vmem:[%s6997 + $0x38] sm:$0xf]
      %v7013 = vld [vmem:[%s6997 + $0x3c] sm:$0xf]
      %v7014 = vunpack.c.l.b16 %v6607
      %v7015 = vunpack.c.l.b16 %v6610
      %v7016 = vunpack.c.l.b16 %v6614
      %v7017 = vunpack.c.l.b16 %v6617
      %v7018 = vpack.c.b16 %v7015, %v7014
      %v7019 = vpack.c.b16 %v7017, %v7016
      %v7038 = vunpack.c.l.b16 %v6998
      %v7039 = vunpack.c.l.b16 %v6999
      %v7040 = vunpack.c.l.b16 %v7000
      %v7041 = vunpack.c.l.b16 %v7001
      %v7042 = vunpack.c.l.b16 %v7002
      %v7043 = vunpack.c.l.b16 %v7003
      %v7044 = vunpack.c.l.b16 %v7004
      %v7045 = vunpack.c.l.b16 %v7005
      %v7046 = vunpack.c.l.b16 %v7006
      %v7047 = vunpack.c.l.b16 %v7007
      %v7048 = vunpack.c.l.b16 %v7008
      %v7049 = vunpack.c.l.b16 %v7009
      %v7050 = vunpack.c.l.b16 %v7010
      %v7051 = vunpack.c.l.b16 %v7011
      %v7052 = vunpack.c.l.b16 %v7012
      %v7053 = vunpack.c.l.b16 %v7013
      %v7054 = vpack.c.b16 %v7039, %v7038
      %v7055 = vpack.c.b16 %v7041, %v7040
      %v7056 = vpack.c.b16 %v7043, %v7042
      %v7057 = vpack.c.b16 %v7045, %v7044
      %v7058 = vpack.c.b16 %v7047, %v7046
      %v7059 = vpack.c.b16 %v7049, %v7048
      %v7060 = vpack.c.b16 %v7051, %v7050
      %v7061 = vpack.c.b16 %v7053, %v7052
      %7070 = vmatpush.bf16.msra.mxu0 %v7061
      %7071 = vmatpush.bf16.msra.mxu0 %v7060
      %7072 = vmatpush.bf16.msra.mxu0 %v7059
      %7073 = vmatpush.bf16.msra.mxu0 %v7058
      %7074 = vmatpush.bf16.msra.mxu0 %v7057
      %7075 = vmatpush.bf16.msra.mxu0 %v7056
      %7076 = vmatpush.bf16.msra.mxu0 %v7055
      %7077 = vmatpush.bf16.msra.mxu0 %v7054
      %7078 = vmatmul.bf16.gmra.mxu0 %v6685
      %v7079 = vpop.f32.mrf.mxu0
      %v7080 = vadd.f32 0.0, %v7079
      %v7081 = vpop.f32.mrf.mxu0
      %v7082 = vadd.f32 0.0, %v7081
      %7083 = vmatmul.bf16.gmra.mxu0 %v6686
      %v7084 = vpop.f32.mrf.mxu0
      %v7085 = vadd.f32 0.0, %v7084
      %v7086 = vpop.f32.mrf.mxu0
      %v7087 = vadd.f32 0.0, %v7086
      %7088 = vmatmul.bf16.gmra.mxu0 %v6687
      %v7089 = vpop.f32.mrf.mxu0
      %v7090 = vadd.f32 0.0, %v7089
      %v7091 = vpop.f32.mrf.mxu0
      %v7092 = vadd.f32 0.0, %v7091
      %7093 = vmatmul.bf16.gmra.mxu0 %v6688
      %v7094 = vpop.f32.mrf.mxu0
      %v7095 = vadd.f32 0.0, %v7094
      %v7096 = vpop.f32.mrf.mxu0
      %v7097 = vadd.f32 0.0, %v7096
      %7098 = vmatmul.bf16.gmra.mxu0 %v6689
      %v7099 = vpop.f32.mrf.mxu0
      %v7100 = vadd.f32 0.0, %v7099
      %v7101 = vpop.f32.mrf.mxu0
      %v7102 = vadd.f32 0.0, %v7101
      %7103 = vmatmul.bf16.gmra.mxu0 %v6690
      %v7104 = vpop.f32.mrf.mxu0
      %v7105 = vadd.f32 0.0, %v7104
      %v7106 = vpop.f32.mrf.mxu0
      %v7107 = vadd.f32 0.0, %v7106
      %7108 = vmatmul.bf16.gmra.mxu0 %v6691
      %v7109 = vpop.f32.mrf.mxu0
      %v7110 = vadd.f32 0.0, %v7109
      %v7111 = vpop.f32.mrf.mxu0
      %v7112 = vadd.f32 0.0, %v7111
      %7113 = vmatmul.bf16.gmra.mxu0 %v6692
      %v7114 = vpop.f32.mrf.mxu0
      %v7115 = vadd.f32 0.0, %v7114
      %v7116 = vpop.f32.mrf.mxu0
      %v7117 = vadd.f32 0.0, %v7116
      %7118 = vmatmul.bf16.gmra.mxu0 %v6693
      %v7119 = vpop.f32.mrf.mxu0
      %v7120 = vadd.f32 0.0, %v7119
      %v7121 = vpop.f32.mrf.mxu0
      %v7122 = vadd.f32 0.0, %v7121
      %7123 = vmatmul.bf16.gmra.mxu0 %v6694
      %v7124 = vpop.f32.mrf.mxu0
      %v7125 = vadd.f32 0.0, %v7124
      %v7126 = vpop.f32.mrf.mxu0
      %v7127 = vadd.f32 0.0, %v7126
      %7128 = vmatmul.bf16.gmra.mxu0 %v6695
      %v7129 = vpop.f32.mrf.mxu0
      %v7130 = vadd.f32 0.0, %v7129
      %v7131 = vpop.f32.mrf.mxu0
      %v7132 = vadd.f32 0.0, %v7131
      %7133 = vmatmul.bf16.gmra.mxu0 %v6696
      %v7134 = vpop.f32.mrf.mxu0
      %v7135 = vadd.f32 0.0, %v7134
      %v7136 = vpop.f32.mrf.mxu0
      %v7137 = vadd.f32 0.0, %v7136
      %7138 = vmatmul.bf16.gmra.mxu0 %v6697
      %v7139 = vpop.f32.mrf.mxu0
      %v7140 = vadd.f32 0.0, %v7139
      %v7141 = vpop.f32.mrf.mxu0
      %v7142 = vadd.f32 0.0, %v7141
      %7143 = vmatmul.bf16.gmra.mxu0 %v6698
      %v7144 = vpop.f32.mrf.mxu0
      %v7145 = vadd.f32 0.0, %v7144
      %v7146 = vpop.f32.mrf.mxu0
      %v7147 = vadd.f32 0.0, %v7146
      %7148 = vmatmul.bf16.gmra.mxu0 %v7018
      %v7149 = vpop.f32.mrf.mxu0
      %v7150 = vadd.f32 0.0, %v7149
      %v7151 = vpop.f32.mrf.mxu0
      %v7152 = vadd.f32 0.0, %v7151
      %7153 = vmatmul.bf16.gmra.mxu0 %v7019
      %v7154 = vpop.f32.mrf.mxu0
      %v7155 = vadd.f32 0.0, %v7154
      %v7156 = vpop.f32.mrf.mxu0
      %v7157 = vadd.f32 0.0, %v7156
      %7158 = vdwg.mxu0
      %v7159 = vadd.f32 %v6918, %v7080
      %v7160 = vadd.f32 %v6920, %v7082
      %v7161 = vadd.f32 %v6923, %v7085
      %v7162 = vadd.f32 %v6925, %v7087
      %v7163 = vadd.f32 %v6928, %v7090
      %v7164 = vadd.f32 %v6930, %v7092
      %v7165 = vadd.f32 %v6933, %v7095
      %v7166 = vadd.f32 %v6935, %v7097
      %v7167 = vadd.f32 %v6938, %v7100
      %v7168 = vadd.f32 %v6940, %v7102
      %v7169 = vadd.f32 %v6943, %v7105
      %v7170 = vadd.f32 %v6945, %v7107
      %v7171 = vadd.f32 %v6948, %v7110
      %v7172 = vadd.f32 %v6950, %v7112
      %v7173 = vadd.f32 %v6953, %v7115
      %v7174 = vadd.f32 %v6955, %v7117
      %v7175 = vadd.f32 %v6958, %v7120
      %v7176 = vadd.f32 %v6960, %v7122
      %v7177 = vadd.f32 %v6963, %v7125
      %v7178 = vadd.f32 %v6965, %v7127
      %v7179 = vadd.f32 %v6968, %v7130
      %v7180 = vadd.f32 %v6970, %v7132
      %v7181 = vadd.f32 %v6973, %v7135
      %v7182 = vadd.f32 %v6975, %v7137
      %v7183 = vadd.f32 %v6978, %v7140
      %v7184 = vadd.f32 %v6980, %v7142
      %v7185 = vadd.f32 %v6983, %v7145
      %v7186 = vadd.f32 %v6985, %v7147
      %v7187 = vadd.f32 %v6988, %v7150
      %v7188 = vadd.f32 %v6990, %v7152
      %v7189 = vadd.f32 %v6993, %v7155
      %v7190 = vadd.f32 %v6995, %v7157
      %v7191 = vld [vmem:[#allocation3 + $0x8] sm:$0xf]
      %v7192 = vld [vmem:[#allocation3 + $0x18] sm:$0xf]
      %v7193 = vld [vmem:[#allocation3 + $0x28] sm:$0xf]
      %v7194 = vld [vmem:[#allocation3 + $0x38] sm:$0xf]
      %v7195 = vld [vmem:[#allocation3 + $0x48] sm:$0xf]
      %v7196 = vld [vmem:[#allocation3 + $0x58] sm:$0xf]
      %v7197 = vld [vmem:[#allocation3 + $0x68] sm:$0xf]
      %v7198 = vld [vmem:[#allocation3 + $0x78] sm:$0xf]
      %v7199 = vld [vmem:[#allocation3 + $0x88] sm:$0xf]
      %v7200 = vld [vmem:[#allocation3 + $0x98] sm:$0xf]
      %v7201 = vld [vmem:[#allocation3 + $0xa8] sm:$0xf]
      %v7202 = vld [vmem:[#allocation3 + $0xb8] sm:$0xf]
      %v7203 = vld [vmem:[#allocation3 + $0xc8] sm:$0xf]
      %v7204 = vld [vmem:[#allocation3 + $0xd8] sm:$0xf]
      %v7205 = vld [vmem:[#allocation3 + $0xe8] sm:$0xf]
      %v7206 = vld [vmem:[#allocation3 + $0xf8] sm:$0xf]
      %v7207 = vld [vmem:[#allocation3 + $0x108] sm:$0xf]
      %v7208 = vld [vmem:[#allocation3 + $0x118] sm:$0xf]
      %v7209 = vld [vmem:[#allocation3 + $0x128] sm:$0xf]
      %v7210 = vld [vmem:[#allocation3 + $0x138] sm:$0xf]
      %s7211 = scalar_lea.vmem %s7, 64
      %v7212 = vld [vmem:[%s7211] sm:$0xf]
      %v7213 = vld [vmem:[%s7211 + $0x4] sm:$0xf]
      %v7214 = vld [vmem:[%s7211 + $0x8] sm:$0xf]
      %v7215 = vld [vmem:[%s7211 + $0xc] sm:$0xf]
      %v7216 = vld [vmem:[%s7211 + $0x10] sm:$0xf]
      %v7217 = vld [vmem:[%s7211 + $0x14] sm:$0xf]
      %v7218 = vld [vmem:[%s7211 + $0x18] sm:$0xf]
      %v7219 = vld [vmem:[%s7211 + $0x1c] sm:$0xf]
      %v7220 = vld [vmem:[%s7211 + $0x20] sm:$0xf]
      %v7221 = vld [vmem:[%s7211 + $0x24] sm:$0xf]
      %v7222 = vld [vmem:[%s7211 + $0x28] sm:$0xf]
      %v7223 = vld [vmem:[%s7211 + $0x2c] sm:$0xf]
      %v7224 = vld [vmem:[%s7211 + $0x30] sm:$0xf]
      %v7225 = vld [vmem:[%s7211 + $0x34] sm:$0xf]
      %v7226 = vld [vmem:[%s7211 + $0x38] sm:$0xf]
      %v7227 = vld [vmem:[%s7211 + $0x3c] sm:$0xf]
      %v7244 = vunpack.c.l.b16 %v6356
      %v7245 = vunpack.c.l.b16 %v7191
      %v7246 = vunpack.c.l.b16 %v6359
      %v7247 = vunpack.c.l.b16 %v7192
      %v7248 = vunpack.c.l.b16 %v6362
      %v7249 = vunpack.c.l.b16 %v7193
      %v7250 = vunpack.c.l.b16 %v6365
      %v7251 = vunpack.c.l.b16 %v7194
      %v7252 = vunpack.c.l.b16 %v6368
      %v7253 = vunpack.c.l.b16 %v7195
      %v7254 = vunpack.c.l.b16 %v6371
      %v7255 = vunpack.c.l.b16 %v7196
      %v7256 = vunpack.c.l.b16 %v6374
      %v7257 = vunpack.c.l.b16 %v7197
      %v7258 = vunpack.c.l.b16 %v6377
      %v7259 = vunpack.c.l.b16 %v7198
      %v7260 = vunpack.c.l.b16 %v6380
      %v7261 = vunpack.c.l.b16 %v7199
      %v7262 = vunpack.c.l.b16 %v6383
      %v7263 = vunpack.c.l.b16 %v7200
      %v7264 = vunpack.c.l.b16 %v6386
      %v7265 = vunpack.c.l.b16 %v7201
      %v7266 = vunpack.c.l.b16 %v6389
      %v7267 = vunpack.c.l.b16 %v7202
      %v7268 = vunpack.c.l.b16 %v6392
      %v7269 = vunpack.c.l.b16 %v7203
      %v7270 = vunpack.c.l.b16 %v6395
      %v7271 = vunpack.c.l.b16 %v7204
      %v7272 = vunpack.c.l.b16 %v6398
      %v7273 = vunpack.c.l.b16 %v7205
      %v7274 = vunpack.c.l.b16 %v6401
      %v7275 = vunpack.c.l.b16 %v7206
      %v7276 = vpack.c.b16 %v7245, %v7244
      %v7277 = vpack.c.b16 %v7247, %v7246
      %v7278 = vpack.c.b16 %v7249, %v7248
      %v7279 = vpack.c.b16 %v7251, %v7250
      %v7280 = vpack.c.b16 %v7253, %v7252
      %v7281 = vpack.c.b16 %v7255, %v7254
      %v7282 = vpack.c.b16 %v7257, %v7256
      %v7283 = vpack.c.b16 %v7259, %v7258
      %v7284 = vpack.c.b16 %v7261, %v7260
      %v7285 = vpack.c.b16 %v7263, %v7262
      %v7286 = vpack.c.b16 %v7265, %v7264
      %v7287 = vpack.c.b16 %v7267, %v7266
      %v7288 = vpack.c.b16 %v7269, %v7268
      %v7289 = vpack.c.b16 %v7271, %v7270
      %v7290 = vpack.c.b16 %v7273, %v7272
      %v7291 = vpack.c.b16 %v7275, %v7274
      %v7324 = vunpack.c.l.b16 %v7212
      %v7325 = vunpack.c.l.b16 %v7213
      %v7326 = vunpack.c.l.b16 %v7214
      %v7327 = vunpack.c.l.b16 %v7215
      %v7328 = vunpack.c.l.b16 %v7216
      %v7329 = vunpack.c.l.b16 %v7217
      %v7330 = vunpack.c.l.b16 %v7218
      %v7331 = vunpack.c.l.b16 %v7219
      %v7332 = vunpack.c.l.b16 %v7220
      %v7333 = vunpack.c.l.b16 %v7221
      %v7334 = vunpack.c.l.b16 %v7222
      %v7335 = vunpack.c.l.b16 %v7223
      %v7336 = vunpack.c.l.b16 %v7224
      %v7337 = vunpack.c.l.b16 %v7225
      %v7338 = vunpack.c.l.b16 %v7226
      %v7339 = vunpack.c.l.b16 %v7227
      %v7340 = vpack.c.b16 %v7325, %v7324
      %v7341 = vpack.c.b16 %v7327, %v7326
      %v7342 = vpack.c.b16 %v7329, %v7328
      %v7343 = vpack.c.b16 %v7331, %v7330
      %v7344 = vpack.c.b16 %v7333, %v7332
      %v7345 = vpack.c.b16 %v7335, %v7334
      %v7346 = vpack.c.b16 %v7337, %v7336
      %v7347 = vpack.c.b16 %v7339, %v7338
      %7356 = vmatpush.bf16.msra.mxu0 %v7347
      %7357 = vmatpush.bf16.msra.mxu0 %v7346
      %7358 = vmatpush.bf16.msra.mxu0 %v7345
      %7359 = vmatpush.bf16.msra.mxu0 %v7344
      %7360 = vmatpush.bf16.msra.mxu0 %v7343
      %7361 = vmatpush.bf16.msra.mxu0 %v7342
      %7362 = vmatpush.bf16.msra.mxu0 %v7341
      %7363 = vmatpush.bf16.msra.mxu0 %v7340
      %7364 = vmatmul.bf16.gmra.mxu0 %v7276
      %v7365 = vpop.f32.mrf.mxu0
      %v7366 = vadd.f32 0.0, %v7365
      %v7367 = vpop.f32.mrf.mxu0
      %v7368 = vadd.f32 0.0, %v7367
      %7369 = vmatmul.bf16.gmra.mxu0 %v7277
      %v7370 = vpop.f32.mrf.mxu0
      %v7371 = vadd.f32 0.0, %v7370
      %v7372 = vpop.f32.mrf.mxu0
      %v7373 = vadd.f32 0.0, %v7372
      %7374 = vmatmul.bf16.gmra.mxu0 %v7278
      %v7375 = vpop.f32.mrf.mxu0
      %v7376 = vadd.f32 0.0, %v7375
      %v7377 = vpop.f32.mrf.mxu0
      %v7378 = vadd.f32 0.0, %v7377
      %7379 = vmatmul.bf16.gmra.mxu0 %v7279
      %v7380 = vpop.f32.mrf.mxu0
      %v7381 = vadd.f32 0.0, %v7380
      %v7382 = vpop.f32.mrf.mxu0
      %v7383 = vadd.f32 0.0, %v7382
      %7384 = vmatmul.bf16.gmra.mxu0 %v7280
      %v7385 = vpop.f32.mrf.mxu0
      %v7386 = vadd.f32 0.0, %v7385
      %v7387 = vpop.f32.mrf.mxu0
      %v7388 = vadd.f32 0.0, %v7387
      %7389 = vmatmul.bf16.gmra.mxu0 %v7281
      %v7390 = vpop.f32.mrf.mxu0
      %v7391 = vadd.f32 0.0, %v7390
      %v7392 = vpop.f32.mrf.mxu0
      %v7393 = vadd.f32 0.0, %v7392
      %7394 = vmatmul.bf16.gmra.mxu0 %v7282
      %v7395 = vpop.f32.mrf.mxu0
      %v7396 = vadd.f32 0.0, %v7395
      %v7397 = vpop.f32.mrf.mxu0
      %v7398 = vadd.f32 0.0, %v7397
      %7399 = vmatmul.bf16.gmra.mxu0 %v7283
      %v7400 = vpop.f32.mrf.mxu0
      %v7401 = vadd.f32 0.0, %v7400
      %v7402 = vpop.f32.mrf.mxu0
      %v7403 = vadd.f32 0.0, %v7402
      %7404 = vmatmul.bf16.gmra.mxu0 %v7284
      %v7405 = vpop.f32.mrf.mxu0
      %v7406 = vadd.f32 0.0, %v7405
      %v7407 = vpop.f32.mrf.mxu0
      %v7408 = vadd.f32 0.0, %v7407
      %7409 = vmatmul.bf16.gmra.mxu0 %v7285
      %v7410 = vpop.f32.mrf.mxu0
      %v7411 = vadd.f32 0.0, %v7410
      %v7412 = vpop.f32.mrf.mxu0
      %v7413 = vadd.f32 0.0, %v7412
      %7414 = vmatmul.bf16.gmra.mxu0 %v7286
      %v7415 = vpop.f32.mrf.mxu0
      %v7416 = vadd.f32 0.0, %v7415
      %v7417 = vpop.f32.mrf.mxu0
      %v7418 = vadd.f32 0.0, %v7417
      %7419 = vmatmul.bf16.gmra.mxu0 %v7287
      %v7420 = vpop.f32.mrf.mxu0
      %v7421 = vadd.f32 0.0, %v7420
      %v7422 = vpop.f32.mrf.mxu0
      %v7423 = vadd.f32 0.0, %v7422
      %7424 = vmatmul.bf16.gmra.mxu0 %v7288
      %v7425 = vpop.f32.mrf.mxu0
      %v7426 = vadd.f32 0.0, %v7425
      %v7427 = vpop.f32.mrf.mxu0
      %v7428 = vadd.f32 0.0, %v7427
      %7429 = vmatmul.bf16.gmra.mxu0 %v7289
      %v7430 = vpop.f32.mrf.mxu0
      %v7431 = vadd.f32 0.0, %v7430
      %v7432 = vpop.f32.mrf.mxu0
      %v7433 = vadd.f32 0.0, %v7432
      %7434 = vmatmul.bf16.gmra.mxu0 %v7290
      %v7435 = vpop.f32.mrf.mxu0
      %v7436 = vadd.f32 0.0, %v7435
      %v7437 = vpop.f32.mrf.mxu0
      %v7438 = vadd.f32 0.0, %v7437
      %7439 = vmatmul.bf16.gmra.mxu0 %v7291
      %v7440 = vpop.f32.mrf.mxu0
      %v7441 = vadd.f32 0.0, %v7440
      %v7442 = vpop.f32.mrf.mxu0
      %v7443 = vadd.f32 0.0, %v7442
      %7444 = vdwg.mxu0
      %v7445 = vadd.f32 %v7159, %v7366
      %v7446 = vadd.f32 %v7160, %v7368
      %v7447 = vadd.f32 %v7161, %v7371
      %v7448 = vadd.f32 %v7162, %v7373
      %v7449 = vadd.f32 %v7163, %v7376
      %v7450 = vadd.f32 %v7164, %v7378
      %v7451 = vadd.f32 %v7165, %v7381
      %v7452 = vadd.f32 %v7166, %v7383
      %v7453 = vadd.f32 %v7167, %v7386
      %v7454 = vadd.f32 %v7168, %v7388
      %v7455 = vadd.f32 %v7169, %v7391
      %v7456 = vadd.f32 %v7170, %v7393
      %v7457 = vadd.f32 %v7171, %v7396
      %v7458 = vadd.f32 %v7172, %v7398
      %v7459 = vadd.f32 %v7173, %v7401
      %v7460 = vadd.f32 %v7174, %v7403
      %v7461 = vadd.f32 %v7175, %v7406
      %v7462 = vadd.f32 %v7176, %v7408
      %v7463 = vadd.f32 %v7177, %v7411
      %v7464 = vadd.f32 %v7178, %v7413
      %v7465 = vadd.f32 %v7179, %v7416
      %v7466 = vadd.f32 %v7180, %v7418
      %v7467 = vadd.f32 %v7181, %v7421
      %v7468 = vadd.f32 %v7182, %v7423
      %v7469 = vadd.f32 %v7183, %v7426
      %v7470 = vadd.f32 %v7184, %v7428
      %v7471 = vadd.f32 %v7185, %v7431
      %v7472 = vadd.f32 %v7186, %v7433
      %v7473 = vadd.f32 %v7187, %v7436
      %v7474 = vadd.f32 %v7188, %v7438
      %v7475 = vadd.f32 %v7189, %v7441
      %v7476 = vadd.f32 %v7190, %v7443
      %s7477 = scalar_lea.vmem %s7, 256
      %v7478 = vld [vmem:[%s7477] sm:$0xf]
      %v7479 = vld [vmem:[%s7477 + $0x4] sm:$0xf]
      %v7480 = vld [vmem:[%s7477 + $0x8] sm:$0xf]
      %v7481 = vld [vmem:[%s7477 + $0xc] sm:$0xf]
      %v7482 = vld [vmem:[%s7477 + $0x10] sm:$0xf]
      %v7483 = vld [vmem:[%s7477 + $0x14] sm:$0xf]
      %v7484 = vld [vmem:[%s7477 + $0x18] sm:$0xf]
      %v7485 = vld [vmem:[%s7477 + $0x1c] sm:$0xf]
      %v7486 = vld [vmem:[%s7477 + $0x20] sm:$0xf]
      %v7487 = vld [vmem:[%s7477 + $0x24] sm:$0xf]
      %v7488 = vld [vmem:[%s7477 + $0x28] sm:$0xf]
      %v7489 = vld [vmem:[%s7477 + $0x2c] sm:$0xf]
      %v7490 = vld [vmem:[%s7477 + $0x30] sm:$0xf]
      %v7491 = vld [vmem:[%s7477 + $0x34] sm:$0xf]
      %v7492 = vld [vmem:[%s7477 + $0x38] sm:$0xf]
      %v7493 = vld [vmem:[%s7477 + $0x3c] sm:$0xf]
      %v7496 = vunpack.c.l.b16 %v6404
      %v7497 = vunpack.c.l.b16 %v7207
      %v7498 = vunpack.c.l.b16 %v6407
      %v7499 = vunpack.c.l.b16 %v7208
      %v7500 = vpack.c.b16 %v7497, %v7496
      %v7501 = vpack.c.b16 %v7499, %v7498
      %v7520 = vunpack.c.l.b16 %v7478
      %v7521 = vunpack.c.l.b16 %v7479
      %v7522 = vunpack.c.l.b16 %v7480
      %v7523 = vunpack.c.l.b16 %v7481
      %v7524 = vunpack.c.l.b16 %v7482
      %v7525 = vunpack.c.l.b16 %v7483
      %v7526 = vunpack.c.l.b16 %v7484
      %v7527 = vunpack.c.l.b16 %v7485
      %v7528 = vunpack.c.l.b16 %v7486
      %v7529 = vunpack.c.l.b16 %v7487
      %v7530 = vunpack.c.l.b16 %v7488
      %v7531 = vunpack.c.l.b16 %v7489
      %v7532 = vunpack.c.l.b16 %v7490
      %v7533 = vunpack.c.l.b16 %v7491
      %v7534 = vunpack.c.l.b16 %v7492
      %v7535 = vunpack.c.l.b16 %v7493
      %v7536 = vpack.c.b16 %v7521, %v7520
      %v7537 = vpack.c.b16 %v7523, %v7522
      %v7538 = vpack.c.b16 %v7525, %v7524
      %v7539 = vpack.c.b16 %v7527, %v7526
      %v7540 = vpack.c.b16 %v7529, %v7528
      %v7541 = vpack.c.b16 %v7531, %v7530
      %v7542 = vpack.c.b16 %v7533, %v7532
      %v7543 = vpack.c.b16 %v7535, %v7534
      %7552 = vmatpush.bf16.msra.mxu0 %v7543
      %7553 = vmatpush.bf16.msra.mxu0 %v7542
      %7554 = vmatpush.bf16.msra.mxu0 %v7541
      %7555 = vmatpush.bf16.msra.mxu0 %v7540
      %7556 = vmatpush.bf16.msra.mxu0 %v7539
      %7557 = vmatpush.bf16.msra.mxu0 %v7538
      %7558 = vmatpush.bf16.msra.mxu0 %v7537
      %7559 = vmatpush.bf16.msra.mxu0 %v7536
      %7560 = vmatmul.bf16.gmra.mxu0 %v7278
      %v7561 = vpop.f32.mrf.mxu0
      %v7562 = vadd.f32 0.0, %v7561
      %v7563 = vpop.f32.mrf.mxu0
      %v7564 = vadd.f32 0.0, %v7563
      %7565 = vmatmul.bf16.gmra.mxu0 %v7279
      %v7566 = vpop.f32.mrf.mxu0
      %v7567 = vadd.f32 0.0, %v7566
      %v7568 = vpop.f32.mrf.mxu0
      %v7569 = vadd.f32 0.0, %v7568
      %7570 = vmatmul.bf16.gmra.mxu0 %v7280
      %v7571 = vpop.f32.mrf.mxu0
      %v7572 = vadd.f32 0.0, %v7571
      %v7573 = vpop.f32.mrf.mxu0
      %v7574 = vadd.f32 0.0, %v7573
      %7575 = vmatmul.bf16.gmra.mxu0 %v7281
      %v7576 = vpop.f32.mrf.mxu0
      %v7577 = vadd.f32 0.0, %v7576
      %v7578 = vpop.f32.mrf.mxu0
      %v7579 = vadd.f32 0.0, %v7578
      %7580 = vmatmul.bf16.gmra.mxu0 %v7282
      %v7581 = vpop.f32.mrf.mxu0
      %v7582 = vadd.f32 0.0, %v7581
      %v7583 = vpop.f32.mrf.mxu0
      %v7584 = vadd.f32 0.0, %v7583
      %7585 = vmatmul.bf16.gmra.mxu0 %v7283
      %v7586 = vpop.f32.mrf.mxu0
      %v7587 = vadd.f32 0.0, %v7586
      %v7588 = vpop.f32.mrf.mxu0
      %v7589 = vadd.f32 0.0, %v7588
      %7590 = vmatmul.bf16.gmra.mxu0 %v7284
      %v7591 = vpop.f32.mrf.mxu0
      %v7592 = vadd.f32 0.0, %v7591
      %v7593 = vpop.f32.mrf.mxu0
      %v7594 = vadd.f32 0.0, %v7593
      %7595 = vmatmul.bf16.gmra.mxu0 %v7285
      %v7596 = vpop.f32.mrf.mxu0
      %v7597 = vadd.f32 0.0, %v7596
      %v7598 = vpop.f32.mrf.mxu0
      %v7599 = vadd.f32 0.0, %v7598
      %7600 = vmatmul.bf16.gmra.mxu0 %v7286
      %v7601 = vpop.f32.mrf.mxu0
      %v7602 = vadd.f32 0.0, %v7601
      %v7603 = vpop.f32.mrf.mxu0
      %v7604 = vadd.f32 0.0, %v7603
      %7605 = vmatmul.bf16.gmra.mxu0 %v7287
      %v7606 = vpop.f32.mrf.mxu0
      %v7607 = vadd.f32 0.0, %v7606
      %v7608 = vpop.f32.mrf.mxu0
      %v7609 = vadd.f32 0.0, %v7608
      %7610 = vmatmul.bf16.gmra.mxu0 %v7288
      %v7611 = vpop.f32.mrf.mxu0
      %v7612 = vadd.f32 0.0, %v7611
      %v7613 = vpop.f32.mrf.mxu0
      %v7614 = vadd.f32 0.0, %v7613
      %7615 = vmatmul.bf16.gmra.mxu0 %v7289
      %v7616 = vpop.f32.mrf.mxu0
      %v7617 = vadd.f32 0.0, %v7616
      %v7618 = vpop.f32.mrf.mxu0
      %v7619 = vadd.f32 0.0, %v7618
      %7620 = vmatmul.bf16.gmra.mxu0 %v7290
      %v7621 = vpop.f32.mrf.mxu0
      %v7622 = vadd.f32 0.0, %v7621
      %v7623 = vpop.f32.mrf.mxu0
      %v7624 = vadd.f32 0.0, %v7623
      %7625 = vmatmul.bf16.gmra.mxu0 %v7291
      %v7626 = vpop.f32.mrf.mxu0
      %v7627 = vadd.f32 0.0, %v7626
      %v7628 = vpop.f32.mrf.mxu0
      %v7629 = vadd.f32 0.0, %v7628
      %7630 = vmatmul.bf16.gmra.mxu0 %v7500
      %v7631 = vpop.f32.mrf.mxu0
      %v7632 = vadd.f32 0.0, %v7631
      %v7633 = vpop.f32.mrf.mxu0
      %v7634 = vadd.f32 0.0, %v7633
      %7635 = vmatmul.bf16.gmra.mxu0 %v7501
      %v7636 = vpop.f32.mrf.mxu0
      %v7637 = vadd.f32 0.0, %v7636
      %v7638 = vpop.f32.mrf.mxu0
      %v7639 = vadd.f32 0.0, %v7638
      %7640 = vdwg.mxu0
      %v7641 = vadd.f32 %v7445, %v7562
      %v7642 = vadd.f32 %v7446, %v7564
      %v7643 = vadd.f32 %v7447, %v7567
      %v7644 = vadd.f32 %v7448, %v7569
      %v7645 = vadd.f32 %v7449, %v7572
      %v7646 = vadd.f32 %v7450, %v7574
      %v7647 = vadd.f32 %v7451, %v7577
      %v7648 = vadd.f32 %v7452, %v7579
      %v7649 = vadd.f32 %v7453, %v7582
      %v7650 = vadd.f32 %v7454, %v7584
      %v7651 = vadd.f32 %v7455, %v7587
      %v7652 = vadd.f32 %v7456, %v7589
      %v7653 = vadd.f32 %v7457, %v7592
      %v7654 = vadd.f32 %v7458, %v7594
      %v7655 = vadd.f32 %v7459, %v7597
      %v7656 = vadd.f32 %v7460, %v7599
      %v7657 = vadd.f32 %v7461, %v7602
      %v7658 = vadd.f32 %v7462, %v7604
      %v7659 = vadd.f32 %v7463, %v7607
      %v7660 = vadd.f32 %v7464, %v7609
      %v7661 = vadd.f32 %v7465, %v7612
      %v7662 = vadd.f32 %v7466, %v7614
      %v7663 = vadd.f32 %v7467, %v7617
      %v7664 = vadd.f32 %v7468, %v7619
      %v7665 = vadd.f32 %v7469, %v7622
      %v7666 = vadd.f32 %v7470, %v7624
      %v7667 = vadd.f32 %v7471, %v7627
      %v7668 = vadd.f32 %v7472, %v7629
      %v7669 = vadd.f32 %v7473, %v7632
      %v7670 = vadd.f32 %v7474, %v7634
      %v7671 = vadd.f32 %v7475, %v7637
      %v7672 = vadd.f32 %v7476, %v7639
      %s7673 = scalar_lea.vmem %s7, 448
      %v7674 = vld [vmem:[%s7673] sm:$0xf]
      %v7675 = vld [vmem:[%s7673 + $0x4] sm:$0xf]
      %v7676 = vld [vmem:[%s7673 + $0x8] sm:$0xf]
      %v7677 = vld [vmem:[%s7673 + $0xc] sm:$0xf]
      %v7678 = vld [vmem:[%s7673 + $0x10] sm:$0xf]
      %v7679 = vld [vmem:[%s7673 + $0x14] sm:$0xf]
      %v7680 = vld [vmem:[%s7673 + $0x18] sm:$0xf]
      %v7681 = vld [vmem:[%s7673 + $0x1c] sm:$0xf]
      %v7682 = vld [vmem:[%s7673 + $0x20] sm:$0xf]
      %v7683 = vld [vmem:[%s7673 + $0x24] sm:$0xf]
      %v7684 = vld [vmem:[%s7673 + $0x28] sm:$0xf]
      %v7685 = vld [vmem:[%s7673 + $0x2c] sm:$0xf]
      %v7686 = vld [vmem:[%s7673 + $0x30] sm:$0xf]
      %v7687 = vld [vmem:[%s7673 + $0x34] sm:$0xf]
      %v7688 = vld [vmem:[%s7673 + $0x38] sm:$0xf]
      %v7689 = vld [vmem:[%s7673 + $0x3c] sm:$0xf]
      %v7692 = vunpack.c.l.b16 %v6410
      %v7693 = vunpack.c.l.b16 %v7209
      %v7694 = vunpack.c.l.b16 %v6413
      %v7695 = vunpack.c.l.b16 %v7210
      %v7696 = vpack.c.b16 %v7693, %v7692
      %v7697 = vpack.c.b16 %v7695, %v7694
      %v7716 = vunpack.c.l.b16 %v7674
      %v7717 = vunpack.c.l.b16 %v7675
      %v7718 = vunpack.c.l.b16 %v7676
      %v7719 = vunpack.c.l.b16 %v7677
      %v7720 = vunpack.c.l.b16 %v7678
      %v7721 = vunpack.c.l.b16 %v7679
      %v7722 = vunpack.c.l.b16 %v7680
      %v7723 = vunpack.c.l.b16 %v7681
      %v7724 = vunpack.c.l.b16 %v7682
      %v7725 = vunpack.c.l.b16 %v7683
      %v7726 = vunpack.c.l.b16 %v7684
      %v7727 = vunpack.c.l.b16 %v7685
      %v7728 = vunpack.c.l.b16 %v7686
      %v7729 = vunpack.c.l.b16 %v7687
      %v7730 = vunpack.c.l.b16 %v7688
      %v7731 = vunpack.c.l.b16 %v7689
      %v7732 = vpack.c.b16 %v7717, %v7716
      %v7733 = vpack.c.b16 %v7719, %v7718
      %v7734 = vpack.c.b16 %v7721, %v7720
      %v7735 = vpack.c.b16 %v7723, %v7722
      %v7736 = vpack.c.b16 %v7725, %v7724
      %v7737 = vpack.c.b16 %v7727, %v7726
      %v7738 = vpack.c.b16 %v7729, %v7728
      %v7739 = vpack.c.b16 %v7731, %v7730
      %7748 = vmatpush.bf16.msra.mxu0 %v7739
      %7749 = vmatpush.bf16.msra.mxu0 %v7738
      %7750 = vmatpush.bf16.msra.mxu0 %v7737
      %7751 = vmatpush.bf16.msra.mxu0 %v7736
      %7752 = vmatpush.bf16.msra.mxu0 %v7735
      %7753 = vmatpush.bf16.msra.mxu0 %v7734
      %7754 = vmatpush.bf16.msra.mxu0 %v7733
      %7755 = vmatpush.bf16.msra.mxu0 %v7732
      %7756 = vmatmul.bf16.gmra.mxu0 %v7280
      %v7757 = vpop.f32.mrf.mxu0
      %v7758 = vadd.f32 0.0, %v7757
      %v7759 = vpop.f32.mrf.mxu0
      %v7760 = vadd.f32 0.0, %v7759
      %7761 = vmatmul.bf16.gmra.mxu0 %v7281
      %v7762 = vpop.f32.mrf.mxu0
      %v7763 = vadd.f32 0.0, %v7762
      %v7764 = vpop.f32.mrf.mxu0
      %v7765 = vadd.f32 0.0, %v7764
      %7766 = vmatmul.bf16.gmra.mxu0 %v7282
      %v7767 = vpop.f32.mrf.mxu0
      %v7768 = vadd.f32 0.0, %v7767
      %v7769 = vpop.f32.mrf.mxu0
      %v7770 = vadd.f32 0.0, %v7769
      %7771 = vmatmul.bf16.gmra.mxu0 %v7283
      %v7772 = vpop.f32.mrf.mxu0
      %v7773 = vadd.f32 0.0, %v7772
      %v7774 = vpop.f32.mrf.mxu0
      %v7775 = vadd.f32 0.0, %v7774
      %7776 = vmatmul.bf16.gmra.mxu0 %v7284
      %v7777 = vpop.f32.mrf.mxu0
      %v7778 = vadd.f32 0.0, %v7777
      %v7779 = vpop.f32.mrf.mxu0
      %v7780 = vadd.f32 0.0, %v7779
      %7781 = vmatmul.bf16.gmra.mxu0 %v7285
      %v7782 = vpop.f32.mrf.mxu0
      %v7783 = vadd.f32 0.0, %v7782
      %v7784 = vpop.f32.mrf.mxu0
      %v7785 = vadd.f32 0.0, %v7784
      %7786 = vmatmul.bf16.gmra.mxu0 %v7286
      %v7787 = vpop.f32.mrf.mxu0
      %v7788 = vadd.f32 0.0, %v7787
      %v7789 = vpop.f32.mrf.mxu0
      %v7790 = vadd.f32 0.0, %v7789
      %7791 = vmatmul.bf16.gmra.mxu0 %v7287
      %v7792 = vpop.f32.mrf.mxu0
      %v7793 = vadd.f32 0.0, %v7792
      %v7794 = vpop.f32.mrf.mxu0
      %v7795 = vadd.f32 0.0, %v7794
      %7796 = vmatmul.bf16.gmra.mxu0 %v7288
      %v7797 = vpop.f32.mrf.mxu0
      %v7798 = vadd.f32 0.0, %v7797
      %v7799 = vpop.f32.mrf.mxu0
      %v7800 = vadd.f32 0.0, %v7799
      %7801 = vmatmul.bf16.gmra.mxu0 %v7289
      %v7802 = vpop.f32.mrf.mxu0
      %v7803 = vadd.f32 0.0, %v7802
      %v7804 = vpop.f32.mrf.mxu0
      %v7805 = vadd.f32 0.0, %v7804
      %7806 = vmatmul.bf16.gmra.mxu0 %v7290
      %v7807 = vpop.f32.mrf.mxu0
      %v7808 = vadd.f32 0.0, %v7807
      %v7809 = vpop.f32.mrf.mxu0
      %v7810 = vadd.f32 0.0, %v7809
      %7811 = vmatmul.bf16.gmra.mxu0 %v7291
      %v7812 = vpop.f32.mrf.mxu0
      %v7813 = vadd.f32 0.0, %v7812
      %v7814 = vpop.f32.mrf.mxu0
      %v7815 = vadd.f32 0.0, %v7814
      %7816 = vmatmul.bf16.gmra.mxu0 %v7500
      %v7817 = vpop.f32.mrf.mxu0
      %v7818 = vadd.f32 0.0, %v7817
      %v7819 = vpop.f32.mrf.mxu0
      %v7820 = vadd.f32 0.0, %v7819
      %7821 = vmatmul.bf16.gmra.mxu0 %v7501
      %v7822 = vpop.f32.mrf.mxu0
      %v7823 = vadd.f32 0.0, %v7822
      %v7824 = vpop.f32.mrf.mxu0
      %v7825 = vadd.f32 0.0, %v7824
      %7826 = vmatmul.bf16.gmra.mxu0 %v7696
      %v7827 = vpop.f32.mrf.mxu0
      %v7828 = vadd.f32 0.0, %v7827
      %v7829 = vpop.f32.mrf.mxu0
      %v7830 = vadd.f32 0.0, %v7829
      %7831 = vmatmul.bf16.gmra.mxu0 %v7697
      %v7832 = vpop.f32.mrf.mxu0
      %v7833 = vadd.f32 0.0, %v7832
      %v7834 = vpop.f32.mrf.mxu0
      %v7835 = vadd.f32 0.0, %v7834
      %7836 = vdwg.mxu0
      %v7837 = vadd.f32 %v7641, %v7758
      %v7838 = vadd.f32 %v7642, %v7760
      %v7839 = vadd.f32 %v7643, %v7763
      %v7840 = vadd.f32 %v7644, %v7765
      %v7841 = vadd.f32 %v7645, %v7768
      %v7842 = vadd.f32 %v7646, %v7770
      %v7843 = vadd.f32 %v7647, %v7773
      %v7844 = vadd.f32 %v7648, %v7775
      %v7845 = vadd.f32 %v7649, %v7778
      %v7846 = vadd.f32 %v7650, %v7780
      %v7847 = vadd.f32 %v7651, %v7783
      %v7848 = vadd.f32 %v7652, %v7785
      %v7849 = vadd.f32 %v7653, %v7788
      %v7850 = vadd.f32 %v7654, %v7790
      %v7851 = vadd.f32 %v7655, %v7793
      %v7852 = vadd.f32 %v7656, %v7795
      %v7853 = vadd.f32 %v7657, %v7798
      %v7854 = vadd.f32 %v7658, %v7800
      %v7855 = vadd.f32 %v7659, %v7803
      %v7856 = vadd.f32 %v7660, %v7805
      %v7857 = vadd.f32 %v7661, %v7808
      %v7858 = vadd.f32 %v7662, %v7810
      %v7859 = vadd.f32 %v7663, %v7813
      %v7860 = vadd.f32 %v7664, %v7815
      %v7861 = vadd.f32 %v7665, %v7818
      %v7862 = vadd.f32 %v7666, %v7820
      %v7863 = vadd.f32 %v7667, %v7823
      %v7864 = vadd.f32 %v7668, %v7825
      %v7865 = vadd.f32 %v7669, %v7828
      %v7866 = vadd.f32 %v7670, %v7830
      %v7867 = vadd.f32 %v7671, %v7833
      %v7868 = vadd.f32 %v7672, %v7835
      %v7869 = vld [vmem:[#allocation3 + $0x4] sm:$0xe]
      %v7870 = vld [vmem:[#allocation3 + $0x8] sm:$0xf]
      %v7871 = vld [vmem:[#allocation3 + $0xc] sm:$0x1]
      %v7872 = vld [vmem:[#allocation3 + $0x14] sm:$0xe]
      %v7873 = vld [vmem:[#allocation3 + $0x18] sm:$0xf]
      %v7874 = vld [vmem:[#allocation3 + $0x1c] sm:$0x1]
      %v7875 = vld [vmem:[#allocation3 + $0x24] sm:$0xe]
      %v7876 = vld [vmem:[#allocation3 + $0x28] sm:$0xf]
      %v7877 = vld [vmem:[#allocation3 + $0x2c] sm:$0x1]
      %v7878 = vld [vmem:[#allocation3 + $0x34] sm:$0xe]
      %v7879 = vld [vmem:[#allocation3 + $0x38] sm:$0xf]
      %v7880 = vld [vmem:[#allocation3 + $0x3c] sm:$0x1]
      %v7881 = vld [vmem:[#allocation3 + $0x44] sm:$0xe]
      %v7882 = vld [vmem:[#allocation3 + $0x48] sm:$0xf]
      %v7883 = vld [vmem:[#allocation3 + $0x4c] sm:$0x1]
      %v7884 = vld [vmem:[#allocation3 + $0x54] sm:$0xe]
      %v7885 = vld [vmem:[#allocation3 + $0x58] sm:$0xf]
      %v7886 = vld [vmem:[#allocation3 + $0x5c] sm:$0x1]
      %v7887 = vld [vmem:[#allocation3 + $0x64] sm:$0xe]
      %v7888 = vld [vmem:[#allocation3 + $0x68] sm:$0xf]
      %v7889 = vld [vmem:[#allocation3 + $0x6c] sm:$0x1]
      %v7890 = vld [vmem:[#allocation3 + $0x74] sm:$0xe]
      %v7891 = vld [vmem:[#allocation3 + $0x78] sm:$0xf]
      %v7892 = vld [vmem:[#allocation3 + $0x7c] sm:$0x1]
      %v7893 = vld [vmem:[#allocation3 + $0x84] sm:$0xe]
      %v7894 = vld [vmem:[#allocation3 + $0x88] sm:$0xf]
      %v7895 = vld [vmem:[#allocation3 + $0x8c] sm:$0x1]
      %v7896 = vld [vmem:[#allocation3 + $0x94] sm:$0xe]
      %v7897 = vld [vmem:[#allocation3 + $0x98] sm:$0xf]
      %v7898 = vld [vmem:[#allocation3 + $0x9c] sm:$0x1]
      %v7899 = vld [vmem:[#allocation3 + $0xa4] sm:$0xe]
      %v7900 = vld [vmem:[#allocation3 + $0xa8] sm:$0xf]
      %v7901 = vld [vmem:[#allocation3 + $0xac] sm:$0x1]
      %v7902 = vld [vmem:[#allocation3 + $0xb4] sm:$0xe]
      %v7903 = vld [vmem:[#allocation3 + $0xb8] sm:$0xf]
      %v7904 = vld [vmem:[#allocation3 + $0xbc] sm:$0x1]
      %v7905 = vld [vmem:[#allocation3 + $0xc4] sm:$0xe]
      %v7906 = vld [vmem:[#allocation3 + $0xc8] sm:$0xf]
      %v7907 = vld [vmem:[#allocation3 + $0xcc] sm:$0x1]
      %v7908 = vld [vmem:[#allocation3 + $0xd4] sm:$0xe]
      %v7909 = vld [vmem:[#allocation3 + $0xd8] sm:$0xf]
      %v7910 = vld [vmem:[#allocation3 + $0xdc] sm:$0x1]
      %v7911 = vld [vmem:[#allocation3 + $0xe4] sm:$0xe]
      %v7912 = vld [vmem:[#allocation3 + $0xe8] sm:$0xf]
      %v7913 = vld [vmem:[#allocation3 + $0xec] sm:$0x1]
      %v7914 = vld [vmem:[#allocation3 + $0xf4] sm:$0xe]
      %v7915 = vld [vmem:[#allocation3 + $0xf8] sm:$0xf]
      %v7916 = vld [vmem:[#allocation3 + $0xfc] sm:$0x1]
      %v7917 = vld [vmem:[#allocation3 + $0x104] sm:$0xe]
      %v7918 = vld [vmem:[#allocation3 + $0x108] sm:$0xf]
      %v7919 = vld [vmem:[#allocation3 + $0x10c] sm:$0x1]
      %v7920 = vld [vmem:[#allocation3 + $0x114] sm:$0xe]
      %v7921 = vld [vmem:[#allocation3 + $0x118] sm:$0xf]
      %v7922 = vld [vmem:[#allocation3 + $0x11c] sm:$0x1]
      %v7923 = vld [vmem:[#allocation3 + $0x124] sm:$0xe]
      %v7924 = vld [vmem:[#allocation3 + $0x128] sm:$0xf]
      %v7925 = vld [vmem:[#allocation3 + $0x12c] sm:$0x1]
      %v7926 = vld [vmem:[#allocation3 + $0x134] sm:$0xe]
      %v7927 = vld [vmem:[#allocation3 + $0x138] sm:$0xf]
      %v7928 = vld [vmem:[#allocation3 + $0x13c] sm:$0x1]
      %vm7989 = vcmask 1042432
      %vm7990 = vcmask 1046532
      %vm7991 = vmor %vm7989, %vm7990
      %v7992 = vrot.slane %v7869, 5
      %v7993 = vrot.slane %v7992, 4
      %v7994 = vrot.slane %v7870, 5
      %v7995 = vsel %vm7991, %v7993, %v7994
      %v7996 = vrot.slane %v7994, 4
      %v7997 = vrot.slane %v7871, 5
      %v7998 = vsel %vm7991, %v7996, %v7997
      %v7999 = vrot.slane %v7872, 5
      %v8000 = vrot.slane %v7999, 4
      %v8001 = vrot.slane %v7873, 5
      %v8002 = vsel %vm7991, %v8000, %v8001
      %v8003 = vrot.slane %v8001, 4
      %v8004 = vrot.slane %v7874, 5
      %v8005 = vsel %vm7991, %v8003, %v8004
      %v8006 = vrot.slane %v7875, 5
      %v8007 = vrot.slane %v8006, 4
      %v8008 = vrot.slane %v7876, 5
      %v8009 = vsel %vm7991, %v8007, %v8008
      %v8010 = vrot.slane %v8008, 4
      %v8011 = vrot.slane %v7877, 5
      %v8012 = vsel %vm7991, %v8010, %v8011
      %v8013 = vrot.slane %v7878, 5
      %v8014 = vrot.slane %v8013, 4
      %v8015 = vrot.slane %v7879, 5
      %v8016 = vsel %vm7991, %v8014, %v8015
      %v8017 = vrot.slane %v8015, 4
      %v8018 = vrot.slane %v7880, 5
      %v8019 = vsel %vm7991, %v8017, %v8018
      %v8020 = vrot.slane %v7881, 5
      %v8021 = vrot.slane %v8020, 4
      %v8022 = vrot.slane %v7882, 5
      %v8023 = vsel %vm7991, %v8021, %v8022
      %v8024 = vrot.slane %v8022, 4
      %v8025 = vrot.slane %v7883, 5
      %v8026 = vsel %vm7991, %v8024, %v8025
      %v8027 = vrot.slane %v7884, 5
      %v8028 = vrot.slane %v8027, 4
      %v8029 = vrot.slane %v7885, 5
      %v8030 = vsel %vm7991, %v8028, %v8029
      %v8031 = vrot.slane %v8029, 4
      %v8032 = vrot.slane %v7886, 5
      %v8033 = vsel %vm7991, %v8031, %v8032
      %v8034 = vrot.slane %v7887, 5
      %v8035 = vrot.slane %v8034, 4
      %v8036 = vrot.slane %v7888, 5
      %v8037 = vsel %vm7991, %v8035, %v8036
      %v8038 = vrot.slane %v8036, 4
      %v8039 = vrot.slane %v7889, 5
      %v8040 = vsel %vm7991, %v8038, %v8039
      %v8041 = vrot.slane %v7890, 5
      %v8042 = vrot.slane %v8041, 4
      %v8043 = vrot.slane %v7891, 5
      %v8044 = vsel %vm7991, %v8042, %v8043
      %v8045 = vrot.slane %v8043, 4
      %v8046 = vrot.slane %v7892, 5
      %v8047 = vsel %vm7991, %v8045, %v8046
      %v8048 = vrot.slane %v7893, 5
      %v8049 = vrot.slane %v8048, 4
      %v8050 = vrot.slane %v7894, 5
      %v8051 = vsel %vm7991, %v8049, %v8050
      %v8052 = vrot.slane %v8050, 4
      %v8053 = vrot.slane %v7895, 5
      %v8054 = vsel %vm7991, %v8052, %v8053
      %v8055 = vrot.slane %v7896, 5
      %v8056 = vrot.slane %v8055, 4
      %v8057 = vrot.slane %v7897, 5
      %v8058 = vsel %vm7991, %v8056, %v8057
      %v8059 = vrot.slane %v8057, 4
      %v8060 = vrot.slane %v7898, 5
      %v8061 = vsel %vm7991, %v8059, %v8060
      %v8062 = vrot.slane %v7899, 5
      %v8063 = vrot.slane %v8062, 4
      %v8064 = vrot.slane %v7900, 5
      %v8065 = vsel %vm7991, %v8063, %v8064
      %v8066 = vrot.slane %v8064, 4
      %v8067 = vrot.slane %v7901, 5
      %v8068 = vsel %vm7991, %v8066, %v8067
      %v8069 = vrot.slane %v7902, 5
      %v8070 = vrot.slane %v8069, 4
      %v8071 = vrot.slane %v7903, 5
      %v8072 = vsel %vm7991, %v8070, %v8071
      %v8073 = vrot.slane %v8071, 4
      %v8074 = vrot.slane %v7904, 5
      %v8075 = vsel %vm7991, %v8073, %v8074
      %v8076 = vrot.slane %v7905, 5
      %v8077 = vrot.slane %v8076, 4
      %v8078 = vrot.slane %v7906, 5
      %v8079 = vsel %vm7991, %v8077, %v8078
      %v8080 = vrot.slane %v8078, 4
      %v8081 = vrot.slane %v7907, 5
      %v8082 = vsel %vm7991, %v8080, %v8081
      %v8083 = vrot.slane %v7908, 5
      %v8084 = vrot.slane %v8083, 4
      %v8085 = vrot.slane %v7909, 5
      %v8086 = vsel %vm7991, %v8084, %v8085
      %v8087 = vrot.slane %v8085, 4
      %v8088 = vrot.slane %v7910, 5
      %v8089 = vsel %vm7991, %v8087, %v8088
      %v8090 = vrot.slane %v7911, 5
      %v8091 = vrot.slane %v8090, 4
      %v8092 = vrot.slane %v7912, 5
      %v8093 = vsel %vm7991, %v8091, %v8092
      %v8094 = vrot.slane %v8092, 4
      %v8095 = vrot.slane %v7913, 5
      %v8096 = vsel %vm7991, %v8094, %v8095
      %v8097 = vrot.slane %v7914, 5
      %v8098 = vrot.slane %v8097, 4
      %v8099 = vrot.slane %v7915, 5
      %v8100 = vsel %vm7991, %v8098, %v8099
      %v8101 = vrot.slane %v8099, 4
      %v8102 = vrot.slane %v7916, 5
      %v8103 = vsel %vm7991, %v8101, %v8102
      %v8104 = vrot.slane %v7917, 5
      %v8105 = vrot.slane %v8104, 4
      %v8106 = vrot.slane %v7918, 5
      %v8107 = vsel %vm7991, %v8105, %v8106
      %v8108 = vrot.slane %v8106, 4
      %v8109 = vrot.slane %v7919, 5
      %v8110 = vsel %vm7991, %v8108, %v8109
      %v8111 = vrot.slane %v7920, 5
      %v8112 = vrot.slane %v8111, 4
      %v8113 = vrot.slane %v7921, 5
      %v8114 = vsel %vm7991, %v8112, %v8113
      %v8115 = vrot.slane %v8113, 4
      %v8116 = vrot.slane %v7922, 5
      %v8117 = vsel %vm7991, %v8115, %v8116
      %v8118 = vrot.slane %v7923, 5
      %v8119 = vrot.slane %v8118, 4
      %v8120 = vrot.slane %v7924, 5
      %v8121 = vsel %vm7991, %v8119, %v8120
      %v8122 = vrot.slane %v8120, 4
      %v8123 = vrot.slane %v7925, 5
      %v8124 = vsel %vm7991, %v8122, %v8123
      %v8125 = vrot.slane %v7926, 5
      %v8126 = vrot.slane %v8125, 4
      %v8127 = vrot.slane %v7927, 5
      %v8128 = vsel %vm7991, %v8126, %v8127
      %v8129 = vrot.slane %v8127, 4
      %v8130 = vrot.slane %v7928, 5
      %v8131 = vsel %vm7991, %v8129, %v8130
      %s8132 = scalar_lea.vmem %s7, 128
      %v8133 = vld [vmem:[%s8132] sm:$0xf]
      %v8134 = vld [vmem:[%s8132 + $0x4] sm:$0xf]
      %v8135 = vld [vmem:[%s8132 + $0x8] sm:$0xf]
      %v8136 = vld [vmem:[%s8132 + $0xc] sm:$0xf]
      %v8137 = vld [vmem:[%s8132 + $0x10] sm:$0xf]
      %v8138 = vld [vmem:[%s8132 + $0x14] sm:$0xf]
      %v8139 = vld [vmem:[%s8132 + $0x18] sm:$0xf]
      %v8140 = vld [vmem:[%s8132 + $0x1c] sm:$0xf]
      %v8141 = vld [vmem:[%s8132 + $0x20] sm:$0xf]
      %v8142 = vld [vmem:[%s8132 + $0x24] sm:$0xf]
      %v8143 = vld [vmem:[%s8132 + $0x28] sm:$0xf]
      %v8144 = vld [vmem:[%s8132 + $0x2c] sm:$0xf]
      %v8145 = vld [vmem:[%s8132 + $0x30] sm:$0xf]
      %v8146 = vld [vmem:[%s8132 + $0x34] sm:$0xf]
      %v8147 = vld [vmem:[%s8132 + $0x38] sm:$0xf]
      %v8148 = vld [vmem:[%s8132 + $0x3c] sm:$0xf]
      %v8149 = vunpack.c.l.b16 %v7995
      %v8150 = vunpack.c.l.b16 %v7998
      %v8151 = vunpack.c.l.b16 %v8002
      %v8152 = vunpack.c.l.b16 %v8005
      %v8153 = vunpack.c.l.b16 %v8009
      %v8154 = vunpack.c.l.b16 %v8012
      %v8155 = vunpack.c.l.b16 %v8016
      %v8156 = vunpack.c.l.b16 %v8019
      %v8157 = vunpack.c.l.b16 %v8023
      %v8158 = vunpack.c.l.b16 %v8026
      %v8159 = vunpack.c.l.b16 %v8030
      %v8160 = vunpack.c.l.b16 %v8033
      %v8161 = vunpack.c.l.b16 %v8037
      %v8162 = vunpack.c.l.b16 %v8040
      %v8163 = vunpack.c.l.b16 %v8044
      %v8164 = vunpack.c.l.b16 %v8047
      %v8165 = vunpack.c.l.b16 %v8051
      %v8166 = vunpack.c.l.b16 %v8054
      %v8167 = vunpack.c.l.b16 %v8058
      %v8168 = vunpack.c.l.b16 %v8061
      %v8169 = vunpack.c.l.b16 %v8065
      %v8170 = vunpack.c.l.b16 %v8068
      %v8171 = vunpack.c.l.b16 %v8072
      %v8172 = vunpack.c.l.b16 %v8075
      %v8173 = vunpack.c.l.b16 %v8079
      %v8174 = vunpack.c.l.b16 %v8082
      %v8175 = vunpack.c.l.b16 %v8086
      %v8176 = vunpack.c.l.b16 %v8089
      %v8177 = vunpack.c.l.b16 %v8093
      %v8178 = vunpack.c.l.b16 %v8096
      %v8179 = vunpack.c.l.b16 %v8100
      %v8180 = vunpack.c.l.b16 %v8103
      %v8181 = vpack.c.b16 %v8150, %v8149
      %v8182 = vpack.c.b16 %v8152, %v8151
      %v8183 = vpack.c.b16 %v8154, %v8153
      %v8184 = vpack.c.b16 %v8156, %v8155
      %v8185 = vpack.c.b16 %v8158, %v8157
      %v8186 = vpack.c.b16 %v8160, %v8159
      %v8187 = vpack.c.b16 %v8162, %v8161
      %v8188 = vpack.c.b16 %v8164, %v8163
      %v8189 = vpack.c.b16 %v8166, %v8165
      %v8190 = vpack.c.b16 %v8168, %v8167
      %v8191 = vpack.c.b16 %v8170, %v8169
      %v8192 = vpack.c.b16 %v8172, %v8171
      %v8193 = vpack.c.b16 %v8174, %v8173
      %v8194 = vpack.c.b16 %v8176, %v8175
      %v8195 = vpack.c.b16 %v8178, %v8177
      %v8196 = vpack.c.b16 %v8180, %v8179
      %v8229 = vunpack.c.l.b16 %v8133
      %v8230 = vunpack.c.l.b16 %v8134
      %v8231 = vunpack.c.l.b16 %v8135
      %v8232 = vunpack.c.l.b16 %v8136
      %v8233 = vunpack.c.l.b16 %v8137
      %v8234 = vunpack.c.l.b16 %v8138
      %v8235 = vunpack.c.l.b16 %v8139
      %v8236 = vunpack.c.l.b16 %v8140
      %v8237 = vunpack.c.l.b16 %v8141
      %v8238 = vunpack.c.l.b16 %v8142
      %v8239 = vunpack.c.l.b16 %v8143
      %v8240 = vunpack.c.l.b16 %v8144
      %v8241 = vunpack.c.l.b16 %v8145
      %v8242 = vunpack.c.l.b16 %v8146
      %v8243 = vunpack.c.l.b16 %v8147
      %v8244 = vunpack.c.l.b16 %v8148
      %v8245 = vpack.c.b16 %v8230, %v8229
      %v8246 = vpack.c.b16 %v8232, %v8231
      %v8247 = vpack.c.b16 %v8234, %v8233
      %v8248 = vpack.c.b16 %v8236, %v8235
      %v8249 = vpack.c.b16 %v8238, %v8237
      %v8250 = vpack.c.b16 %v8240, %v8239
      %v8251 = vpack.c.b16 %v8242, %v8241
      %v8252 = vpack.c.b16 %v8244, %v8243
      %8261 = vmatpush.bf16.msra.mxu0 %v8252
      %8262 = vmatpush.bf16.msra.mxu0 %v8251
      %8263 = vmatpush.bf16.msra.mxu0 %v8250
      %8264 = vmatpush.bf16.msra.mxu0 %v8249
      %8265 = vmatpush.bf16.msra.mxu0 %v8248
      %8266 = vmatpush.bf16.msra.mxu0 %v8247
      %8267 = vmatpush.bf16.msra.mxu0 %v8246
      %8268 = vmatpush.bf16.msra.mxu0 %v8245
      %8269 = vmatmul.bf16.gmra.mxu0 %v8181
      %v8270 = vpop.f32.mrf.mxu0
      %v8271 = vadd.f32 0.0, %v8270
      %v8272 = vpop.f32.mrf.mxu0
      %v8273 = vadd.f32 0.0, %v8272
      %8274 = vmatmul.bf16.gmra.mxu0 %v8182
      %v8275 = vpop.f32.mrf.mxu0
      %v8276 = vadd.f32 0.0, %v8275
      %v8277 = vpop.f32.mrf.mxu0
      %v8278 = vadd.f32 0.0, %v8277
      %8279 = vmatmul.bf16.gmra.mxu0 %v8183
      %v8280 = vpop.f32.mrf.mxu0
      %v8281 = vadd.f32 0.0, %v8280
      %v8282 = vpop.f32.mrf.mxu0
      %v8283 = vadd.f32 0.0, %v8282
      %8284 = vmatmul.bf16.gmra.mxu0 %v8184
      %v8285 = vpop.f32.mrf.mxu0
      %v8286 = vadd.f32 0.0, %v8285
      %v8287 = vpop.f32.mrf.mxu0
      %v8288 = vadd.f32 0.0, %v8287
      %8289 = vmatmul.bf16.gmra.mxu0 %v8185
      %v8290 = vpop.f32.mrf.mxu0
      %v8291 = vadd.f32 0.0, %v8290
      %v8292 = vpop.f32.mrf.mxu0
      %v8293 = vadd.f32 0.0, %v8292
      %8294 = vmatmul.bf16.gmra.mxu0 %v8186
      %v8295 = vpop.f32.mrf.mxu0
      %v8296 = vadd.f32 0.0, %v8295
      %v8297 = vpop.f32.mrf.mxu0
      %v8298 = vadd.f32 0.0, %v8297
      %8299 = vmatmul.bf16.gmra.mxu0 %v8187
      %v8300 = vpop.f32.mrf.mxu0
      %v8301 = vadd.f32 0.0, %v8300
      %v8302 = vpop.f32.mrf.mxu0
      %v8303 = vadd.f32 0.0, %v8302
      %8304 = vmatmul.bf16.gmra.mxu0 %v8188
      %v8305 = vpop.f32.mrf.mxu0
      %v8306 = vadd.f32 0.0, %v8305
      %v8307 = vpop.f32.mrf.mxu0
      %v8308 = vadd.f32 0.0, %v8307
      %8309 = vmatmul.bf16.gmra.mxu0 %v8189
      %v8310 = vpop.f32.mrf.mxu0
      %v8311 = vadd.f32 0.0, %v8310
      %v8312 = vpop.f32.mrf.mxu0
      %v8313 = vadd.f32 0.0, %v8312
      %8314 = vmatmul.bf16.gmra.mxu0 %v8190
      %v8315 = vpop.f32.mrf.mxu0
      %v8316 = vadd.f32 0.0, %v8315
      %v8317 = vpop.f32.mrf.mxu0
      %v8318 = vadd.f32 0.0, %v8317
      %8319 = vmatmul.bf16.gmra.mxu0 %v8191
      %v8320 = vpop.f32.mrf.mxu0
      %v8321 = vadd.f32 0.0, %v8320
      %v8322 = vpop.f32.mrf.mxu0
      %v8323 = vadd.f32 0.0, %v8322
      %8324 = vmatmul.bf16.gmra.mxu0 %v8192
      %v8325 = vpop.f32.mrf.mxu0
      %v8326 = vadd.f32 0.0, %v8325
      %v8327 = vpop.f32.mrf.mxu0
      %v8328 = vadd.f32 0.0, %v8327
      %8329 = vmatmul.bf16.gmra.mxu0 %v8193
      %v8330 = vpop.f32.mrf.mxu0
      %v8331 = vadd.f32 0.0, %v8330
      %v8332 = vpop.f32.mrf.mxu0
      %v8333 = vadd.f32 0.0, %v8332
      %8334 = vmatmul.bf16.gmra.mxu0 %v8194
      %v8335 = vpop.f32.mrf.mxu0
      %v8336 = vadd.f32 0.0, %v8335
      %v8337 = vpop.f32.mrf.mxu0
      %v8338 = vadd.f32 0.0, %v8337
      %8339 = vmatmul.bf16.gmra.mxu0 %v8195
      %v8340 = vpop.f32.mrf.mxu0
      %v8341 = vadd.f32 0.0, %v8340
      %v8342 = vpop.f32.mrf.mxu0
      %v8343 = vadd.f32 0.0, %v8342
      %8344 = vmatmul.bf16.gmra.mxu0 %v8196
      %v8345 = vpop.f32.mrf.mxu0
      %v8346 = vadd.f32 0.0, %v8345
      %v8347 = vpop.f32.mrf.mxu0
      %v8348 = vadd.f32 0.0, %v8347
      %8349 = vdwg.mxu0
      %v8350 = vadd.f32 %v7837, %v8271
      %v8351 = vadd.f32 %v7838, %v8273
      %v8352 = vadd.f32 %v7839, %v8276
      %v8353 = vadd.f32 %v7840, %v8278
      %v8354 = vadd.f32 %v7841, %v8281
      %v8355 = vadd.f32 %v7842, %v8283
      %v8356 = vadd.f32 %v7843, %v8286
      %v8357 = vadd.f32 %v7844, %v8288
      %v8358 = vadd.f32 %v7845, %v8291
      %v8359 = vadd.f32 %v7846, %v8293
      %v8360 = vadd.f32 %v7847, %v8296
      %v8361 = vadd.f32 %v7848, %v8298
      %v8362 = vadd.f32 %v7849, %v8301
      %v8363 = vadd.f32 %v7850, %v8303
      %v8364 = vadd.f32 %v7851, %v8306
      %v8365 = vadd.f32 %v7852, %v8308
      %v8366 = vadd.f32 %v7853, %v8311
      %v8367 = vadd.f32 %v7854, %v8313
      %v8368 = vadd.f32 %v7855, %v8316
      %v8369 = vadd.f32 %v7856, %v8318
      %v8370 = vadd.f32 %v7857, %v8321
      %v8371 = vadd.f32 %v7858, %v8323
      %v8372 = vadd.f32 %v7859, %v8326
      %v8373 = vadd.f32 %v7860, %v8328
      %v8374 = vadd.f32 %v7861, %v8331
      %v8375 = vadd.f32 %v7862, %v8333
      %v8376 = vadd.f32 %v7863, %v8336
      %v8377 = vadd.f32 %v7864, %v8338
      %v8378 = vadd.f32 %v7865, %v8341
      %v8379 = vadd.f32 %v7866, %v8343
      %v8380 = vadd.f32 %v7867, %v8346
      %v8381 = vadd.f32 %v7868, %v8348
      %s8382 = scalar_lea.vmem %s7, 320
      %v8383 = vld [vmem:[%s8382] sm:$0xf]
      %v8384 = vld [vmem:[%s8382 + $0x4] sm:$0xf]
      %v8385 = vld [vmem:[%s8382 + $0x8] sm:$0xf]
      %v8386 = vld [vmem:[%s8382 + $0xc] sm:$0xf]
      %v8387 = vld [vmem:[%s8382 + $0x10] sm:$0xf]
      %v8388 = vld [vmem:[%s8382 + $0x14] sm:$0xf]
      %v8389 = vld [vmem:[%s8382 + $0x18] sm:$0xf]
      %v8390 = vld [vmem:[%s8382 + $0x1c] sm:$0xf]
      %v8391 = vld [vmem:[%s8382 + $0x20] sm:$0xf]
      %v8392 = vld [vmem:[%s8382 + $0x24] sm:$0xf]
      %v8393 = vld [vmem:[%s8382 + $0x28] sm:$0xf]
      %v8394 = vld [vmem:[%s8382 + $0x2c] sm:$0xf]
      %v8395 = vld [vmem:[%s8382 + $0x30] sm:$0xf]
      %v8396 = vld [vmem:[%s8382 + $0x34] sm:$0xf]
      %v8397 = vld [vmem:[%s8382 + $0x38] sm:$0xf]
      %v8398 = vld [vmem:[%s8382 + $0x3c] sm:$0xf]
      %v8399 = vunpack.c.l.b16 %v8107
      %v8400 = vunpack.c.l.b16 %v8110
      %v8401 = vunpack.c.l.b16 %v8114
      %v8402 = vunpack.c.l.b16 %v8117
      %v8403 = vpack.c.b16 %v8400, %v8399
      %v8404 = vpack.c.b16 %v8402, %v8401
      %v8423 = vunpack.c.l.b16 %v8383
      %v8424 = vunpack.c.l.b16 %v8384
      %v8425 = vunpack.c.l.b16 %v8385
      %v8426 = vunpack.c.l.b16 %v8386
      %v8427 = vunpack.c.l.b16 %v8387
      %v8428 = vunpack.c.l.b16 %v8388
      %v8429 = vunpack.c.l.b16 %v8389
      %v8430 = vunpack.c.l.b16 %v8390
      %v8431 = vunpack.c.l.b16 %v8391
      %v8432 = vunpack.c.l.b16 %v8392
      %v8433 = vunpack.c.l.b16 %v8393
      %v8434 = vunpack.c.l.b16 %v8394
      %v8435 = vunpack.c.l.b16 %v8395
      %v8436 = vunpack.c.l.b16 %v8396
      %v8437 = vunpack.c.l.b16 %v8397
      %v8438 = vunpack.c.l.b16 %v8398
      %v8439 = vpack.c.b16 %v8424, %v8423
      %v8440 = vpack.c.b16 %v8426, %v8425
      %v8441 = vpack.c.b16 %v8428, %v8427
      %v8442 = vpack.c.b16 %v8430, %v8429
      %v8443 = vpack.c.b16 %v8432, %v8431
      %v8444 = vpack.c.b16 %v8434, %v8433
      %v8445 = vpack.c.b16 %v8436, %v8435
      %v8446 = vpack.c.b16 %v8438, %v8437
      %8455 = vmatpush.bf16.msra.mxu0 %v8446
      %8456 = vmatpush.bf16.msra.mxu0 %v8445
      %8457 = vmatpush.bf16.msra.mxu0 %v8444
      %8458 = vmatpush.bf16.msra.mxu0 %v8443
      %8459 = vmatpush.bf16.msra.mxu0 %v8442
      %8460 = vmatpush.bf16.msra.mxu0 %v8441
      %8461 = vmatpush.bf16.msra.mxu0 %v8440
      %8462 = vmatpush.bf16.msra.mxu0 %v8439
      %8463 = vmatmul.bf16.gmra.mxu0 %v8183
      %v8464 = vpop.f32.mrf.mxu0
      %v8465 = vadd.f32 0.0, %v8464
      %v8466 = vpop.f32.mrf.mxu0
      %v8467 = vadd.f32 0.0, %v8466
      %8468 = vmatmul.bf16.gmra.mxu0 %v8184
      %v8469 = vpop.f32.mrf.mxu0
      %v8470 = vadd.f32 0.0, %v8469
      %v8471 = vpop.f32.mrf.mxu0
      %v8472 = vadd.f32 0.0, %v8471
      %8473 = vmatmul.bf16.gmra.mxu0 %v8185
      %v8474 = vpop.f32.mrf.mxu0
      %v8475 = vadd.f32 0.0, %v8474
      %v8476 = vpop.f32.mrf.mxu0
      %v8477 = vadd.f32 0.0, %v8476
      %8478 = vmatmul.bf16.gmra.mxu0 %v8186
      %v8479 = vpop.f32.mrf.mxu0
      %v8480 = vadd.f32 0.0, %v8479
      %v8481 = vpop.f32.mrf.mxu0
      %v8482 = vadd.f32 0.0, %v8481
      %8483 = vmatmul.bf16.gmra.mxu0 %v8187
      %v8484 = vpop.f32.mrf.mxu0
      %v8485 = vadd.f32 0.0, %v8484
      %v8486 = vpop.f32.mrf.mxu0
      %v8487 = vadd.f32 0.0, %v8486
      %8488 = vmatmul.bf16.gmra.mxu0 %v8188
      %v8489 = vpop.f32.mrf.mxu0
      %v8490 = vadd.f32 0.0, %v8489
      %v8491 = vpop.f32.mrf.mxu0
      %v8492 = vadd.f32 0.0, %v8491
      %8493 = vmatmul.bf16.gmra.mxu0 %v8189
      %v8494 = vpop.f32.mrf.mxu0
      %v8495 = vadd.f32 0.0, %v8494
      %v8496 = vpop.f32.mrf.mxu0
      %v8497 = vadd.f32 0.0, %v8496
      %8498 = vmatmul.bf16.gmra.mxu0 %v8190
      %v8499 = vpop.f32.mrf.mxu0
      %v8500 = vadd.f32 0.0, %v8499
      %v8501 = vpop.f32.mrf.mxu0
      %v8502 = vadd.f32 0.0, %v8501
      %8503 = vmatmul.bf16.gmra.mxu0 %v8191
      %v8504 = vpop.f32.mrf.mxu0
      %v8505 = vadd.f32 0.0, %v8504
      %v8506 = vpop.f32.mrf.mxu0
      %v8507 = vadd.f32 0.0, %v8506
      %8508 = vmatmul.bf16.gmra.mxu0 %v8192
      %v8509 = vpop.f32.mrf.mxu0
      %v8510 = vadd.f32 0.0, %v8509
      %v8511 = vpop.f32.mrf.mxu0
      %v8512 = vadd.f32 0.0, %v8511
      %8513 = vmatmul.bf16.gmra.mxu0 %v8193
      %v8514 = vpop.f32.mrf.mxu0
      %v8515 = vadd.f32 0.0, %v8514
      %v8516 = vpop.f32.mrf.mxu0
      %v8517 = vadd.f32 0.0, %v8516
      %8518 = vmatmul.bf16.gmra.mxu0 %v8194
      %v8519 = vpop.f32.mrf.mxu0
      %v8520 = vadd.f32 0.0, %v8519
      %v8521 = vpop.f32.mrf.mxu0
      %v8522 = vadd.f32 0.0, %v8521
      %8523 = vmatmul.bf16.gmra.mxu0 %v8195
      %v8524 = vpop.f32.mrf.mxu0
      %v8525 = vadd.f32 0.0, %v8524
      %v8526 = vpop.f32.mrf.mxu0
      %v8527 = vadd.f32 0.0, %v8526
      %8528 = vmatmul.bf16.gmra.mxu0 %v8196
      %v8529 = vpop.f32.mrf.mxu0
      %v8530 = vadd.f32 0.0, %v8529
      %v8531 = vpop.f32.mrf.mxu0
      %v8532 = vadd.f32 0.0, %v8531
      %8533 = vmatmul.bf16.gmra.mxu0 %v8403
      %v8534 = vpop.f32.mrf.mxu0
      %v8535 = vadd.f32 0.0, %v8534
      %v8536 = vpop.f32.mrf.mxu0
      %v8537 = vadd.f32 0.0, %v8536
      %8538 = vmatmul.bf16.gmra.mxu0 %v8404
      %v8539 = vpop.f32.mrf.mxu0
      %v8540 = vadd.f32 0.0, %v8539
      %v8541 = vpop.f32.mrf.mxu0
      %v8542 = vadd.f32 0.0, %v8541
      %8543 = vdwg.mxu0
      %v8544 = vadd.f32 %v8350, %v8465
      %v8545 = vadd.f32 %v8351, %v8467
      %v8546 = vadd.f32 %v8352, %v8470
      %v8547 = vadd.f32 %v8353, %v8472
      %v8548 = vadd.f32 %v8354, %v8475
      %v8549 = vadd.f32 %v8355, %v8477
      %v8550 = vadd.f32 %v8356, %v8480
      %v8551 = vadd.f32 %v8357, %v8482
      %v8552 = vadd.f32 %v8358, %v8485
      %v8553 = vadd.f32 %v8359, %v8487
      %v8554 = vadd.f32 %v8360, %v8490
      %v8555 = vadd.f32 %v8361, %v8492
      %v8556 = vadd.f32 %v8362, %v8495
      %v8557 = vadd.f32 %v8363, %v8497
      %v8558 = vadd.f32 %v8364, %v8500
      %v8559 = vadd.f32 %v8365, %v8502
      %v8560 = vadd.f32 %v8366, %v8505
      %v8561 = vadd.f32 %v8367, %v8507
      %v8562 = vadd.f32 %v8368, %v8510
      %v8563 = vadd.f32 %v8369, %v8512
      %v8564 = vadd.f32 %v8370, %v8515
      %v8565 = vadd.f32 %v8371, %v8517
      %v8566 = vadd.f32 %v8372, %v8520
      %v8567 = vadd.f32 %v8373, %v8522
      %v8568 = vadd.f32 %v8374, %v8525
      %v8569 = vadd.f32 %v8375, %v8527
      %v8570 = vadd.f32 %v8376, %v8530
      %v8571 = vadd.f32 %v8377, %v8532
      %v8572 = vadd.f32 %v8378, %v8535
      %v8573 = vadd.f32 %v8379, %v8537
      %v8574 = vadd.f32 %v8380, %v8540
      %v8575 = vadd.f32 %v8381, %v8542
      %s8576 = scalar_lea.vmem %s7, 512
      %v8577 = vld [vmem:[%s8576] sm:$0xf]
      %v8578 = vld [vmem:[%s8576 + $0x4] sm:$0xf]
      %v8579 = vld [vmem:[%s8576 + $0x8] sm:$0xf]
      %v8580 = vld [vmem:[%s8576 + $0xc] sm:$0xf]
      %v8581 = vld [vmem:[%s8576 + $0x10] sm:$0xf]
      %v8582 = vld [vmem:[%s8576 + $0x14] sm:$0xf]
      %v8583 = vld [vmem:[%s8576 + $0x18] sm:$0xf]
      %v8584 = vld [vmem:[%s8576 + $0x1c] sm:$0xf]
      %v8585 = vld [vmem:[%s8576 + $0x20] sm:$0xf]
      %v8586 = vld [vmem:[%s8576 + $0x24] sm:$0xf]
      %v8587 = vld [vmem:[%s8576 + $0x28] sm:$0xf]
      %v8588 = vld [vmem:[%s8576 + $0x2c] sm:$0xf]
      %v8589 = vld [vmem:[%s8576 + $0x30] sm:$0xf]
      %v8590 = vld [vmem:[%s8576 + $0x34] sm:$0xf]
      %v8591 = vld [vmem:[%s8576 + $0x38] sm:$0xf]
      %v8592 = vld [vmem:[%s8576 + $0x3c] sm:$0xf]
      %v8593 = vunpack.c.l.b16 %v8121
      %v8594 = vunpack.c.l.b16 %v8124
      %v8595 = vunpack.c.l.b16 %v8128
      %v8596 = vunpack.c.l.b16 %v8131
      %v8597 = vpack.c.b16 %v8594, %v8593
      %v8598 = vpack.c.b16 %v8596, %v8595
      %v8617 = vunpack.c.l.b16 %v8577
      %v8618 = vunpack.c.l.b16 %v8578
      %v8619 = vunpack.c.l.b16 %v8579
      %v8620 = vunpack.c.l.b16 %v8580
      %v8621 = vunpack.c.l.b16 %v8581
      %v8622 = vunpack.c.l.b16 %v8582
      %v8623 = vunpack.c.l.b16 %v8583
      %v8624 = vunpack.c.l.b16 %v8584
      %v8625 = vunpack.c.l.b16 %v8585
      %v8626 = vunpack.c.l.b16 %v8586
      %v8627 = vunpack.c.l.b16 %v8587
      %v8628 = vunpack.c.l.b16 %v8588
      %v8629 = vunpack.c.l.b16 %v8589
      %v8630 = vunpack.c.l.b16 %v8590
      %v8631 = vunpack.c.l.b16 %v8591
      %v8632 = vunpack.c.l.b16 %v8592
      %v8633 = vpack.c.b16 %v8618, %v8617
      %v8634 = vpack.c.b16 %v8620, %v8619
      %v8635 = vpack.c.b16 %v8622, %v8621
      %v8636 = vpack.c.b16 %v8624, %v8623
      %v8637 = vpack.c.b16 %v8626, %v8625
      %v8638 = vpack.c.b16 %v8628, %v8627
      %v8639 = vpack.c.b16 %v8630, %v8629
      %v8640 = vpack.c.b16 %v8632, %v8631
      %8649 = vmatpush.bf16.msra.mxu0 %v8640
      %8650 = vmatpush.bf16.msra.mxu0 %v8639
      %8651 = vmatpush.bf16.msra.mxu0 %v8638
      %8652 = vmatpush.bf16.msra.mxu0 %v8637
      %8653 = vmatpush.bf16.msra.mxu0 %v8636
      %8654 = vmatpush.bf16.msra.mxu0 %v8635
      %8655 = vmatpush.bf16.msra.mxu0 %v8634
      %8656 = vmatpush.bf16.msra.mxu0 %v8633
      %8657 = vmatmul.bf16.gmra.mxu0 %v8185
      %v8658 = vpop.f32.mrf.mxu0
      %v8659 = vadd.f32 0.0, %v8658
      %v8660 = vpop.f32.mrf.mxu0
      %v8661 = vadd.f32 0.0, %v8660
      %8662 = vmatmul.bf16.gmra.mxu0 %v8186
      %v8663 = vpop.f32.mrf.mxu0
      %v8664 = vadd.f32 0.0, %v8663
      %v8665 = vpop.f32.mrf.mxu0
      %v8666 = vadd.f32 0.0, %v8665
      %8667 = vmatmul.bf16.gmra.mxu0 %v8187
      %v8668 = vpop.f32.mrf.mxu0
      %v8669 = vadd.f32 0.0, %v8668
      %v8670 = vpop.f32.mrf.mxu0
      %v8671 = vadd.f32 0.0, %v8670
      %8672 = vmatmul.bf16.gmra.mxu0 %v8188
      %v8673 = vpop.f32.mrf.mxu0
      %v8674 = vadd.f32 0.0, %v8673
      %v8675 = vpop.f32.mrf.mxu0
      %v8676 = vadd.f32 0.0, %v8675
      %8677 = vmatmul.bf16.gmra.mxu0 %v8189
      %v8678 = vpop.f32.mrf.mxu0
      %v8679 = vadd.f32 0.0, %v8678
      %v8680 = vpop.f32.mrf.mxu0
      %v8681 = vadd.f32 0.0, %v8680
      %8682 = vmatmul.bf16.gmra.mxu0 %v8190
      %v8683 = vpop.f32.mrf.mxu0
      %v8684 = vadd.f32 0.0, %v8683
      %v8685 = vpop.f32.mrf.mxu0
      %v8686 = vadd.f32 0.0, %v8685
      %8687 = vmatmul.bf16.gmra.mxu0 %v8191
      %v8688 = vpop.f32.mrf.mxu0
      %v8689 = vadd.f32 0.0, %v8688
      %v8690 = vpop.f32.mrf.mxu0
      %v8691 = vadd.f32 0.0, %v8690
      %8692 = vmatmul.bf16.gmra.mxu0 %v8192
      %v8693 = vpop.f32.mrf.mxu0
      %v8694 = vadd.f32 0.0, %v8693
      %v8695 = vpop.f32.mrf.mxu0
      %v8696 = vadd.f32 0.0, %v8695
      %8697 = vmatmul.bf16.gmra.mxu0 %v8193
      %v8698 = vpop.f32.mrf.mxu0
      %v8699 = vadd.f32 0.0, %v8698
      %v8700 = vpop.f32.mrf.mxu0
      %v8701 = vadd.f32 0.0, %v8700
      %8702 = vmatmul.bf16.gmra.mxu0 %v8194
      %v8703 = vpop.f32.mrf.mxu0
      %v8704 = vadd.f32 0.0, %v8703
      %v8705 = vpop.f32.mrf.mxu0
      %v8706 = vadd.f32 0.0, %v8705
      %8707 = vmatmul.bf16.gmra.mxu0 %v8195
      %v8708 = vpop.f32.mrf.mxu0
      %v8709 = vadd.f32 0.0, %v8708
      %v8710 = vpop.f32.mrf.mxu0
      %v8711 = vadd.f32 0.0, %v8710
      %8712 = vmatmul.bf16.gmra.mxu0 %v8196
      %v8713 = vpop.f32.mrf.mxu0
      %v8714 = vadd.f32 0.0, %v8713
      %v8715 = vpop.f32.mrf.mxu0
      %v8716 = vadd.f32 0.0, %v8715
      %8717 = vmatmul.bf16.gmra.mxu0 %v8403
      %v8718 = vpop.f32.mrf.mxu0
      %v8719 = vadd.f32 0.0, %v8718
      %v8720 = vpop.f32.mrf.mxu0
      %v8721 = vadd.f32 0.0, %v8720
      %8722 = vmatmul.bf16.gmra.mxu0 %v8404
      %v8723 = vpop.f32.mrf.mxu0
      %v8724 = vadd.f32 0.0, %v8723
      %v8725 = vpop.f32.mrf.mxu0
      %v8726 = vadd.f32 0.0, %v8725
      %8727 = vmatmul.bf16.gmra.mxu0 %v8597
      %v8728 = vpop.f32.mrf.mxu0
      %v8729 = vadd.f32 0.0, %v8728
      %v8730 = vpop.f32.mrf.mxu0
      %v8731 = vadd.f32 0.0, %v8730
      %8732 = vmatmul.bf16.gmra.mxu0 %v8598
      %v8733 = vpop.f32.mrf.mxu0
      %v8734 = vadd.f32 0.0, %v8733
      %v8735 = vpop.f32.mrf.mxu0
      %v8736 = vadd.f32 0.0, %v8735
      %8737 = vdwg.mxu0
      %v8738 = vadd.f32 %v8544, %v8659
      %v8739 = vadd.f32 %v8545, %v8661
      %v8740 = vadd.f32 %v8546, %v8664
      %v8741 = vadd.f32 %v8547, %v8666
      %v8742 = vadd.f32 %v8548, %v8669
      %v8743 = vadd.f32 %v8549, %v8671
      %v8744 = vadd.f32 %v8550, %v8674
      %v8745 = vadd.f32 %v8551, %v8676
      %v8746 = vadd.f32 %v8552, %v8679
      %v8747 = vadd.f32 %v8553, %v8681
      %v8748 = vadd.f32 %v8554, %v8684
      %v8749 = vadd.f32 %v8555, %v8686
      %v8750 = vadd.f32 %v8556, %v8689
      %v8751 = vadd.f32 %v8557, %v8691
      %v8752 = vadd.f32 %v8558, %v8694
      %v8753 = vadd.f32 %v8559, %v8696
      %v8754 = vadd.f32 %v8560, %v8699
      %v8755 = vadd.f32 %v8561, %v8701
      %v8756 = vadd.f32 %v8562, %v8704
      %v8757 = vadd.f32 %v8563, %v8706
      %v8758 = vadd.f32 %v8564, %v8709
      %v8759 = vadd.f32 %v8565, %v8711
      %v8760 = vadd.f32 %v8566, %v8714
      %v8761 = vadd.f32 %v8567, %v8716
      %v8762 = vadd.f32 %v8568, %v8719
      %v8763 = vadd.f32 %v8569, %v8721
      %v8764 = vadd.f32 %v8570, %v8724
      %v8765 = vadd.f32 %v8571, %v8726
      %v8766 = vadd.f32 %v8572, %v8729
      %v8767 = vadd.f32 %v8573, %v8731
      %v8768 = vadd.f32 %v8574, %v8734
      %v8769 = vadd.f32 %v8575, %v8736
      %v8770 = vld [vmem:[%s8] sm:$0x1]
      %v8772 = vperm.slane %v8770, 0
      %v8774 = vadd.f32 %v8738, %v8772
      %v8775 = vadd.f32 %v8739, %v8772
      %v8776 = vadd.f32 %v8740, %v8772
      %v8777 = vadd.f32 %v8741, %v8772
      %v8778 = vadd.f32 %v8742, %v8772
      %v8779 = vadd.f32 %v8743, %v8772
      %v8780 = vadd.f32 %v8744, %v8772
      %v8781 = vadd.f32 %v8745, %v8772
      %v8782 = vadd.f32 %v8746, %v8772
      %v8783 = vadd.f32 %v8747, %v8772
      %v8784 = vadd.f32 %v8748, %v8772
      %v8785 = vadd.f32 %v8749, %v8772
      %v8786 = vadd.f32 %v8750, %v8772
      %v8787 = vadd.f32 %v8751, %v8772
      %v8788 = vadd.f32 %v8752, %v8772
      %v8789 = vadd.f32 %v8753, %v8772
      %v8790 = vadd.f32 %v8754, %v8772
      %v8791 = vadd.f32 %v8755, %v8772
      %v8792 = vadd.f32 %v8756, %v8772
      %v8793 = vadd.f32 %v8757, %v8772
      %v8794 = vadd.f32 %v8758, %v8772
      %v8795 = vadd.f32 %v8759, %v8772
      %v8796 = vadd.f32 %v8760, %v8772
      %v8797 = vadd.f32 %v8761, %v8772
      %v8798 = vadd.f32 %v8762, %v8772
      %v8799 = vadd.f32 %v8763, %v8772
      %v8800 = vadd.f32 %v8764, %v8772
      %v8801 = vadd.f32 %v8765, %v8772
      %v8802 = vadd.f32 %v8766, %v8772
      %v8803 = vadd.f32 %v8767, %v8772
      %v8804 = vadd.f32 %v8768, %v8772
      %v8805 = vadd.f32 %v8769, %v8772
      %v8806 = vmax.f32 %v8774, 0.0
      %v8807 = vmax.f32 %v8775, 0.0
      %v8808 = vmax.f32 %v8776, 0.0
      %v8809 = vmax.f32 %v8777, 0.0
      %v8810 = vmax.f32 %v8778, 0.0
      %v8811 = vmax.f32 %v8779, 0.0
      %v8812 = vmax.f32 %v8780, 0.0
      %v8813 = vmax.f32 %v8781, 0.0
      %v8814 = vmax.f32 %v8782, 0.0
      %v8815 = vmax.f32 %v8783, 0.0
      %v8816 = vmax.f32 %v8784, 0.0
      %v8817 = vmax.f32 %v8785, 0.0
      %v8818 = vmax.f32 %v8786, 0.0
      %v8819 = vmax.f32 %v8787, 0.0
      %v8820 = vmax.f32 %v8788, 0.0
      %v8821 = vmax.f32 %v8789, 0.0
      %v8822 = vmax.f32 %v8790, 0.0
      %v8823 = vmax.f32 %v8791, 0.0
      %v8824 = vmax.f32 %v8792, 0.0
      %v8825 = vmax.f32 %v8793, 0.0
      %v8826 = vmax.f32 %v8794, 0.0
      %v8827 = vmax.f32 %v8795, 0.0
      %v8828 = vmax.f32 %v8796, 0.0
      %v8829 = vmax.f32 %v8797, 0.0
      %v8830 = vmax.f32 %v8798, 0.0
      %v8831 = vmax.f32 %v8799, 0.0
      %v8832 = vmax.f32 %v8800, 0.0
      %v8833 = vmax.f32 %v8801, 0.0
      %v8834 = vmax.f32 %v8802, 0.0
      %v8835 = vmax.f32 %v8803, 0.0
      %v8836 = vmax.f32 %v8804, 0.0
      %v8837 = vmax.f32 %v8805, 0.0
      %v8838 = vpack.c.bf16 %v8807, %v8806
      %v8839 = vpack.c.bf16 %v8809, %v8808
      %v8840 = vpack.c.bf16 %v8811, %v8810
      %v8841 = vpack.c.bf16 %v8813, %v8812
      %v8842 = vpack.c.bf16 %v8815, %v8814
      %v8843 = vpack.c.bf16 %v8817, %v8816
      %v8844 = vpack.c.bf16 %v8819, %v8818
      %v8845 = vpack.c.bf16 %v8821, %v8820
      %v8846 = vpack.c.bf16 %v8823, %v8822
      %v8847 = vpack.c.bf16 %v8825, %v8824
      %v8848 = vpack.c.bf16 %v8827, %v8826
      %v8849 = vpack.c.bf16 %v8829, %v8828
      %v8850 = vpack.c.bf16 %v8831, %v8830
      %v8851 = vpack.c.bf16 %v8833, %v8832
      %v8852 = vpack.c.bf16 %v8835, %v8834
      %v8853 = vpack.c.bf16 %v8837, %v8836
      %v8854 = vld [vmem:[%s9] sm:$0xf]
      %v8855 = vld [vmem:[%s9 + $0x4] sm:$0xf]
      %v8856 = vld [vmem:[%s9 + $0x8] sm:$0xf]
      %v8857 = vld [vmem:[%s9 + $0xc] sm:$0xf]
      %v8858 = vld [vmem:[%s9 + $0x10] sm:$0xf]
      %v8859 = vld [vmem:[%s9 + $0x14] sm:$0xf]
      %v8860 = vld [vmem:[%s9 + $0x18] sm:$0xf]
      %v8861 = vld [vmem:[%s9 + $0x1c] sm:$0xf]
      %v8862 = vld [vmem:[%s9 + $0x20] sm:$0xf]
      %v8863 = vld [vmem:[%s9 + $0x24] sm:$0xf]
      %v8864 = vld [vmem:[%s9 + $0x28] sm:$0xf]
      %v8865 = vld [vmem:[%s9 + $0x2c] sm:$0xf]
      %v8866 = vld [vmem:[%s9 + $0x30] sm:$0xf]
      %v8867 = vld [vmem:[%s9 + $0x34] sm:$0xf]
      %v8868 = vld [vmem:[%s9 + $0x38] sm:$0xf]
      %v8869 = vld [vmem:[%s9 + $0x3c] sm:$0xf]
      %v8870 = vld [vmem:[%s10] sm:$0x1]
      %v8872 = vperm.slane %v8870, 0
      %v8890 = vunpack.c.l.b16 %v8854
      %v8891 = vunpack.c.l.b16 %v8855
      %v8892 = vunpack.c.l.b16 %v8856
      %v8893 = vunpack.c.l.b16 %v8857
      %v8894 = vunpack.c.l.b16 %v8858
      %v8895 = vunpack.c.l.b16 %v8859
      %v8896 = vunpack.c.l.b16 %v8860
      %v8897 = vunpack.c.l.b16 %v8861
      %v8898 = vunpack.c.l.b16 %v8862
      %v8899 = vunpack.c.l.b16 %v8863
      %v8900 = vunpack.c.l.b16 %v8864
      %v8901 = vunpack.c.l.b16 %v8865
      %v8902 = vunpack.c.l.b16 %v8866
      %v8903 = vunpack.c.l.b16 %v8867
      %v8904 = vunpack.c.l.b16 %v8868
      %v8905 = vunpack.c.l.b16 %v8869
      %v8906 = vpack.c.b16 %v8891, %v8890
      %v8907 = vpack.c.b16 %v8893, %v8892
      %v8908 = vpack.c.b16 %v8895, %v8894
      %v8909 = vpack.c.b16 %v8897, %v8896
      %v8910 = vpack.c.b16 %v8899, %v8898
      %v8911 = vpack.c.b16 %v8901, %v8900
      %v8912 = vpack.c.b16 %v8903, %v8902
      %v8913 = vpack.c.b16 %v8905, %v8904
      %8922 = vmatpush.bf16.msra.mxu0 %v8913
      %8923 = vmatpush.bf16.msra.mxu0 %v8912
      %8924 = vmatpush.bf16.msra.mxu0 %v8911
      %8925 = vmatpush.bf16.msra.mxu0 %v8910
      %8926 = vmatpush.bf16.msra.mxu0 %v8909
      %8927 = vmatpush.bf16.msra.mxu0 %v8908
      %8928 = vmatpush.bf16.msra.mxu0 %v8907
      %8929 = vmatpush.bf16.msra.mxu0 %v8906
      %8930 = vmatmul.bf16.gmra.mxu0 %v8838
      %v8931 = vpop.f32.mrf.mxu0
      %v8932 = vadd.f32 %v8872, %v8931
      %v8933 = vpop.f32.mrf.mxu0
      %v8934 = vadd.f32 %v8872, %v8933
      %8935 = vmatmul.bf16.gmra.mxu0 %v8839
      %v8936 = vpop.f32.mrf.mxu0
      %v8937 = vadd.f32 %v8872, %v8936
      %v8938 = vpop.f32.mrf.mxu0
      %v8939 = vadd.f32 %v8872, %v8938
      %8940 = vmatmul.bf16.gmra.mxu0 %v8840
      %v8941 = vpop.f32.mrf.mxu0
      %v8942 = vadd.f32 %v8872, %v8941
      %v8943 = vpop.f32.mrf.mxu0
      %v8944 = vadd.f32 %v8872, %v8943
      %8945 = vmatmul.bf16.gmra.mxu0 %v8841
      %v8946 = vpop.f32.mrf.mxu0
      %v8947 = vadd.f32 %v8872, %v8946
      %v8948 = vpop.f32.mrf.mxu0
      %v8949 = vadd.f32 %v8872, %v8948
      %8950 = vmatmul.bf16.gmra.mxu0 %v8842
      %v8951 = vpop.f32.mrf.mxu0
      %v8952 = vadd.f32 %v8872, %v8951
      %v8953 = vpop.f32.mrf.mxu0
      %v8954 = vadd.f32 %v8872, %v8953
      %8955 = vmatmul.bf16.gmra.mxu0 %v8843
      %v8956 = vpop.f32.mrf.mxu0
      %v8957 = vadd.f32 %v8872, %v8956
      %v8958 = vpop.f32.mrf.mxu0
      %v8959 = vadd.f32 %v8872, %v8958
      %8960 = vmatmul.bf16.gmra.mxu0 %v8844
      %v8961 = vpop.f32.mrf.mxu0
      %v8962 = vadd.f32 %v8872, %v8961
      %v8963 = vpop.f32.mrf.mxu0
      %v8964 = vadd.f32 %v8872, %v8963
      %8965 = vmatmul.bf16.gmra.mxu0 %v8845
      %v8966 = vpop.f32.mrf.mxu0
      %v8967 = vadd.f32 %v8872, %v8966
      %v8968 = vpop.f32.mrf.mxu0
      %v8969 = vadd.f32 %v8872, %v8968
      %8970 = vmatmul.bf16.gmra.mxu0 %v8846
      %v8971 = vpop.f32.mrf.mxu0
      %v8972 = vadd.f32 %v8872, %v8971
      %v8973 = vpop.f32.mrf.mxu0
      %v8974 = vadd.f32 %v8872, %v8973
      %8975 = vmatmul.bf16.gmra.mxu0 %v8847
      %v8976 = vpop.f32.mrf.mxu0
      %v8977 = vadd.f32 %v8872, %v8976
      %v8978 = vpop.f32.mrf.mxu0
      %v8979 = vadd.f32 %v8872, %v8978
      %8980 = vmatmul.bf16.gmra.mxu0 %v8848
      %v8981 = vpop.f32.mrf.mxu0
      %v8982 = vadd.f32 %v8872, %v8981
      %v8983 = vpop.f32.mrf.mxu0
      %v8984 = vadd.f32 %v8872, %v8983
      %8985 = vmatmul.bf16.gmra.mxu0 %v8849
      %v8986 = vpop.f32.mrf.mxu0
      %v8987 = vadd.f32 %v8872, %v8986
      %v8988 = vpop.f32.mrf.mxu0
      %v8989 = vadd.f32 %v8872, %v8988
      %8990 = vmatmul.bf16.gmra.mxu0 %v8850
      %v8991 = vpop.f32.mrf.mxu0
      %v8992 = vadd.f32 %v8872, %v8991
      %v8993 = vpop.f32.mrf.mxu0
      %v8994 = vadd.f32 %v8872, %v8993
      %8995 = vmatmul.bf16.gmra.mxu0 %v8851
      %v8996 = vpop.f32.mrf.mxu0
      %v8997 = vadd.f32 %v8872, %v8996
      %v8998 = vpop.f32.mrf.mxu0
      %v8999 = vadd.f32 %v8872, %v8998
      %9000 = vmatmul.bf16.gmra.mxu0 %v8852
      %v9001 = vpop.f32.mrf.mxu0
      %v9002 = vadd.f32 %v8872, %v9001
      %v9003 = vpop.f32.mrf.mxu0
      %v9004 = vadd.f32 %v8872, %v9003
      %9005 = vmatmul.bf16.gmra.mxu0 %v8853
      %v9006 = vpop.f32.mrf.mxu0
      %v9007 = vadd.f32 %v8872, %v9006
      %v9008 = vpop.f32.mrf.mxu0
      %v9009 = vadd.f32 %v8872, %v9008
      %9010 = vdwg.mxu0
      %v9011 = vld [vmem:[#allocation4] sm:$0xff]
      %v9012 = vld [vmem:[#allocation4 + $0x8] sm:$0xff]
      %v9013 = vld [vmem:[#allocation4 + $0x10] sm:$0xff]
      %v9014 = vld [vmem:[#allocation4 + $0x18] sm:$0xff]
      %v9015 = vld [vmem:[#allocation4 + $0x20] sm:$0xff]
      %v9016 = vld [vmem:[#allocation4 + $0x28] sm:$0xff]
      %v9017 = vld [vmem:[#allocation4 + $0x30] sm:$0xff]
      %v9018 = vld [vmem:[#allocation4 + $0x38] sm:$0xff]
      %v9019 = vld [vmem:[#allocation4 + $0x40] sm:$0xff]
      %v9020 = vld [vmem:[#allocation4 + $0x48] sm:$0xff]
      %v9021 = vld [vmem:[#allocation4 + $0x50] sm:$0xff]
      %v9022 = vld [vmem:[#allocation4 + $0x58] sm:$0xff]
      %v9023 = vld [vmem:[#allocation4 + $0x60] sm:$0xff]
      %v9024 = vld [vmem:[#allocation4 + $0x68] sm:$0xff]
      %v9025 = vld [vmem:[#allocation4 + $0x70] sm:$0xff]
      %v9026 = vld [vmem:[#allocation4 + $0x78] sm:$0xff]
      %v9027 = vld [vmem:[#allocation4 + $0x80] sm:$0xff]
      %v9028 = vld [vmem:[#allocation4 + $0x88] sm:$0xff]
      %v9029 = vld [vmem:[#allocation4 + $0x90] sm:$0xff]
      %v9030 = vld [vmem:[#allocation4 + $0x98] sm:$0xff]
      %v9031 = vld [vmem:[#allocation4 + $0xa0] sm:$0xff]
      %v9032 = vld [vmem:[#allocation4 + $0xa8] sm:$0xff]
      %v9033 = vld [vmem:[#allocation4 + $0xb0] sm:$0xff]
      %v9034 = vld [vmem:[#allocation4 + $0xb8] sm:$0xff]
      %v9035 = vld [vmem:[#allocation4 + $0xc0] sm:$0xff]
      %v9036 = vld [vmem:[#allocation4 + $0xc8] sm:$0xff]
      %v9037 = vld [vmem:[#allocation4 + $0xd0] sm:$0xff]
      %v9038 = vld [vmem:[#allocation4 + $0xd8] sm:$0xff]
      %v9039 = vld [vmem:[#allocation4 + $0xe0] sm:$0xff]
      %v9040 = vld [vmem:[#allocation4 + $0xe8] sm:$0xff]
      %v9041 = vld [vmem:[#allocation4 + $0xf0] sm:$0xff]
      %v9042 = vld [vmem:[#allocation4 + $0xf8] sm:$0xff]
      %v9043 = vadd.f32 %v8932, %v9011
      %v9044 = vadd.f32 %v8934, %v9012
      %v9045 = vadd.f32 %v8937, %v9013
      %v9046 = vadd.f32 %v8939, %v9014
      %v9047 = vadd.f32 %v8942, %v9015
      %v9048 = vadd.f32 %v8944, %v9016
      %v9049 = vadd.f32 %v8947, %v9017
      %v9050 = vadd.f32 %v8949, %v9018
      %v9051 = vadd.f32 %v8952, %v9019
      %v9052 = vadd.f32 %v8954, %v9020
      %v9053 = vadd.f32 %v8957, %v9021
      %v9054 = vadd.f32 %v8959, %v9022
      %v9055 = vadd.f32 %v8962, %v9023
      %v9056 = vadd.f32 %v8964, %v9024
      %v9057 = vadd.f32 %v8967, %v9025
      %v9058 = vadd.f32 %v8969, %v9026
      %v9059 = vadd.f32 %v8972, %v9027
      %v9060 = vadd.f32 %v8974, %v9028
      %v9061 = vadd.f32 %v8977, %v9029
      %v9062 = vadd.f32 %v8979, %v9030
      %v9063 = vadd.f32 %v8982, %v9031
      %v9064 = vadd.f32 %v8984, %v9032
      %v9065 = vadd.f32 %v8987, %v9033
      %v9066 = vadd.f32 %v8989, %v9034
      %v9067 = vadd.f32 %v8992, %v9035
      %v9068 = vadd.f32 %v8994, %v9036
      %v9069 = vadd.f32 %v8997, %v9037
      %v9070 = vadd.f32 %v8999, %v9038
      %v9071 = vadd.f32 %v9002, %v9039
      %v9072 = vadd.f32 %v9004, %v9040
      %v9073 = vadd.f32 %v9007, %v9041
      %v9074 = vadd.f32 %v9009, %v9042
      %9075 = vst [vmem:[#allocation4] sm:$0xff] %v9043
      %9076 = vst [vmem:[#allocation4 + $0x8] sm:$0xff] %v9044
      %9077 = vst [vmem:[#allocation4 + $0x10] sm:$0xff] %v9045
      %9078 = vst [vmem:[#allocation4 + $0x18] sm:$0xff] %v9046
      %9079 = vst [vmem:[#allocation4 + $0x20] sm:$0xff] %v9047
      %9080 = vst [vmem:[#allocation4 + $0x28] sm:$0xff] %v9048
      %9081 = vst [vmem:[#allocation4 + $0x30] sm:$0xff] %v9049
      %9082 = vst [vmem:[#allocation4 + $0x38] sm:$0xff] %v9050
      %9083 = vst [vmem:[#allocation4 + $0x40] sm:$0xff] %v9051
      %9084 = vst [vmem:[#allocation4 + $0x48] sm:$0xff] %v9052
      %9085 = vst [vmem:[#allocation4 + $0x50] sm:$0xff] %v9053
      %9086 = vst [vmem:[#allocation4 + $0x58] sm:$0xff] %v9054
      %9087 = vst [vmem:[#allocation4 + $0x60] sm:$0xff] %v9055
      %9088 = vst [vmem:[#allocation4 + $0x68] sm:$0xff] %v9056
      %9089 = vst [vmem:[#allocation4 + $0x70] sm:$0xff] %v9057
      %9090 = vst [vmem:[#allocation4 + $0x78] sm:$0xff] %v9058
      %9091 = vst [vmem:[#allocation4 + $0x80] sm:$0xff] %v9059
      %9092 = vst [vmem:[#allocation4 + $0x88] sm:$0xff] %v9060
      %9093 = vst [vmem:[#allocation4 + $0x90] sm:$0xff] %v9061
      %9094 = vst [vmem:[#allocation4 + $0x98] sm:$0xff] %v9062
      %9095 = vst [vmem:[#allocation4 + $0xa0] sm:$0xff] %v9063
      %9096 = vst [vmem:[#allocation4 + $0xa8] sm:$0xff] %v9064
      %9097 = vst [vmem:[#allocation4 + $0xb0] sm:$0xff] %v9065
      %9098 = vst [vmem:[#allocation4 + $0xb8] sm:$0xff] %v9066
      %9099 = vst [vmem:[#allocation4 + $0xc0] sm:$0xff] %v9067
      %9100 = vst [vmem:[#allocation4 + $0xc8] sm:$0xff] %v9068
      %9101 = vst [vmem:[#allocation4 + $0xd0] sm:$0xff] %v9069
      %9102 = vst [vmem:[#allocation4 + $0xd8] sm:$0xff] %v9070
      %9103 = vst [vmem:[#allocation4 + $0xe0] sm:$0xff] %v9071
      %9104 = vst [vmem:[#allocation4 + $0xe8] sm:$0xff] %v9072
      %9105 = vst [vmem:[#allocation4 + $0xf0] sm:$0xff] %v9073
      %9106 = vst [vmem:[#allocation4 + $0xf8] sm:$0xff] %v9074
      %v9107 = vld [vmem:[#allocation4] sm:$0xff]
      %v9108 = vld [vmem:[#allocation4 + $0x8] sm:$0xff]
      %v9109 = vld [vmem:[#allocation4 + $0x10] sm:$0xff]
      %v9110 = vld [vmem:[#allocation4 + $0x18] sm:$0xff]
      %v9111 = vld [vmem:[#allocation4 + $0x20] sm:$0xff]
      %v9112 = vld [vmem:[#allocation4 + $0x28] sm:$0xff]
      %v9113 = vld [vmem:[#allocation4 + $0x30] sm:$0xff]
      %v9114 = vld [vmem:[#allocation4 + $0x38] sm:$0xff]
      %v9115 = vld [vmem:[#allocation4 + $0x40] sm:$0xff]
      %v9116 = vld [vmem:[#allocation4 + $0x48] sm:$0xff]
      %v9117 = vld [vmem:[#allocation4 + $0x50] sm:$0xff]
      %v9118 = vld [vmem:[#allocation4 + $0x58] sm:$0xff]
      %v9119 = vld [vmem:[#allocation4 + $0x60] sm:$0xff]
      %v9120 = vld [vmem:[#allocation4 + $0x68] sm:$0xff]
      %v9121 = vld [vmem:[#allocation4 + $0x70] sm:$0xff]
      %v9122 = vld [vmem:[#allocation4 + $0x78] sm:$0xff]
      %v9123 = vld [vmem:[#allocation4 + $0x80] sm:$0xff]
      %v9124 = vld [vmem:[#allocation4 + $0x88] sm:$0xff]
      %v9125 = vld [vmem:[#allocation4 + $0x90] sm:$0xff]
      %v9126 = vld [vmem:[#allocation4 + $0x98] sm:$0xff]
      %v9127 = vld [vmem:[#allocation4 + $0xa0] sm:$0xff]
      %v9128 = vld [vmem:[#allocation4 + $0xa8] sm:$0xff]
      %v9129 = vld [vmem:[#allocation4 + $0xb0] sm:$0xff]
      %v9130 = vld [vmem:[#allocation4 + $0xb8] sm:$0xff]
      %v9131 = vld [vmem:[#allocation4 + $0xc0] sm:$0xff]
      %v9132 = vld [vmem:[#allocation4 + $0xc8] sm:$0xff]
      %v9133 = vld [vmem:[#allocation4 + $0xd0] sm:$0xff]
      %v9134 = vld [vmem:[#allocation4 + $0xd8] sm:$0xff]
      %v9135 = vld [vmem:[#allocation4 + $0xe0] sm:$0xff]
      %v9136 = vld [vmem:[#allocation4 + $0xe8] sm:$0xff]
      %v9137 = vld [vmem:[#allocation4 + $0xf0] sm:$0xff]
      %v9138 = vld [vmem:[#allocation4 + $0xf8] sm:$0xff]
      %9139 = vst [vmem:[%s386] sm:$0xff] %v9107
      %9140 = vst [vmem:[%s386 + $0x8] sm:$0xff] %v9108
      %9141 = vst [vmem:[%s386 + $0x10] sm:$0xff] %v9109
      %9142 = vst [vmem:[%s386 + $0x18] sm:$0xff] %v9110
      %9143 = vst [vmem:[%s386 + $0x20] sm:$0xff] %v9111
      %9144 = vst [vmem:[%s386 + $0x28] sm:$0xff] %v9112
      %9145 = vst [vmem:[%s386 + $0x30] sm:$0xff] %v9113
      %9146 = vst [vmem:[%s386 + $0x38] sm:$0xff] %v9114
      %9147 = vst [vmem:[%s386 + $0x40] sm:$0xff] %v9115
      %9148 = vst [vmem:[%s386 + $0x48] sm:$0xff] %v9116
      %9149 = vst [vmem:[%s386 + $0x50] sm:$0xff] %v9117
      %9150 = vst [vmem:[%s386 + $0x58] sm:$0xff] %v9118
      %9151 = vst [vmem:[%s386 + $0x60] sm:$0xff] %v9119
      %9152 = vst [vmem:[%s386 + $0x68] sm:$0xff] %v9120
      %9153 = vst [vmem:[%s386 + $0x70] sm:$0xff] %v9121
      %9154 = vst [vmem:[%s386 + $0x78] sm:$0xff] %v9122
      %9155 = vst [vmem:[%s386 + $0x80] sm:$0xff] %v9123
      %9156 = vst [vmem:[%s386 + $0x88] sm:$0xff] %v9124
      %9157 = vst [vmem:[%s386 + $0x90] sm:$0xff] %v9125
      %9158 = vst [vmem:[%s386 + $0x98] sm:$0xff] %v9126
      %9159 = vst [vmem:[%s386 + $0xa0] sm:$0xff] %v9127
      %9160 = vst [vmem:[%s386 + $0xa8] sm:$0xff] %v9128
      %9161 = vst [vmem:[%s386 + $0xb0] sm:$0xff] %v9129
      %9162 = vst [vmem:[%s386 + $0xb8] sm:$0xff] %v9130
      %9163 = vst [vmem:[%s386 + $0xc0] sm:$0xff] %v9131
      %9164 = vst [vmem:[%s386 + $0xc8] sm:$0xff] %v9132
      %9165 = vst [vmem:[%s386 + $0xd0] sm:$0xff] %v9133
      %9166 = vst [vmem:[%s386 + $0xd8] sm:$0xff] %v9134
      %9167 = vst [vmem:[%s386 + $0xe0] sm:$0xff] %v9135
      %9168 = vst [vmem:[%s386 + $0xe8] sm:$0xff] %v9136
      %9169 = vst [vmem:[%s386 + $0xf0] sm:$0xff] %v9137
      %9170 = vst [vmem:[%s386 + $0xf8] sm:$0xff] %v9138
      %p9171 = scmp.lt.s32.totalorder %s22, 1
      %s9172 = scalar_select %p9171, %s22, 1
      %s9173 = smul.addr %s9172, 32
      %s9174 = smul.addr %s9173, 8
      %s9175 = scalar_lea.vmem %s11, %s9174
      // Predicated region
      $region65: #{tcn_branch_forward.1} parent=63 // pred_check
        %p9176 = pneg %p276
      $region66: #{tcn_branch_forward.1} parent=63 // pred_check_branch
        %9178 = sbr.rel (%p9176) target = $region68
      $region67: #{tcn_branch_forward.1} parent=63 // pred_region
        _
      $region68: #{tcn_branch_forward.1} parent=63 // pred_fallthru
        _
    $region64: #{tcn_branch_forward.1} parent=5 // pred_fallthru
      _
    %p9179 = scmp.le.s32.totalorder 2, %s17
    // Predicated region
    $region69: #{tcn_branch_forward.1} parent=5 // pred_check
      %p9180 = pneg %p9179
    $region70: #{tcn_branch_forward.1} parent=5 // pred_check_branch
      %9182 = sbr.rel (%p9180) target = $region72
    $region71: #{tcn_branch_forward.1} parent=5 // pred_region
      %s9183 = ssub.s32 %s17, 2
      // Predicated region
      $region73: #{tcn_branch_forward.1} parent=71 // pred_check
        %p9184 = pneg %p282
      $region74: #{tcn_branch_forward.1} parent=71 // pred_check_branch
        %9186 = sbr.rel (%p9184) target = $region76
      $region75: #{tcn_branch_forward.1} parent=71 // pred_region
        %p9187 = scmp.lt.s32.totalorder %s23, 1
        %s9188 = scalar_select %p9187, %s23, 1
        %s9189 = smul.addr %s9188, 32
        %s9190 = smul.addr %s9189, 8
        %s9191 = scalar_lea.vmem %s11, %s9190
      $region76: #{tcn_branch_forward.1} parent=71 // pred_fallthru
        _
    $region72: #{tcn_branch_forward.1} parent=5 // pred_fallthru
      _
  $region6: #{tcn_branch_forward.1} parent=0 // loop_footer
    %s21 = sadd.s32 1, %s17
  $region7: #{tcn_branch_forward.1} parent=0 // loop_footer_branch
    %16 = sbr.rel target = $region3
  $region8: #{tcn_branch_forward.1} parent=0 // loop_exit
    _

</llo_original>
